<compile_context>
chip_gen: v6e
topology: v6e:2x2x1
jax: 0.10.0
libtpu: 0.0.40
codegen_flags: <defaults>
</compile_context>

<pallas_src>
import functools
import math

import jax
import jax.numpy as jnp
import numpy as np
from jax import lax
from jax.experimental import pallas as pl
from jax.experimental.pallas import tpu as pltpu


_VMEM_LIMIT_BYTES = 48 * 1024 * 1024   # above v5e/v6e scoped defaults, below v7x 64 MiB phys
_VMEM_BUDGET_BYTES = 40 * 1024 * 1024  # target for block sizing (leave pipeline headroom)


def _round_up(x, m):
    return ((x + m - 1) // m) * m


def _largest_divisor_at_most(n, cap, step):
    """Largest multiple of `step` that divides n and is <= cap (n % step == 0 assumed)."""
    best = step if n % step == 0 else n
    d = step
    while d <= min(n, cap):
        if n % d == 0:
            best = d
        d += step
    return best


def _choose_batch_block(B, sublane):
    """Pad B to the dtype sublane width, grow blocks toward 256 (MXU M dim), keep >=2 blocks
    when the batch allows so v7x megacore has work on the 'parallel' axis."""
    Bp = _round_up(B, sublane)
    if Bp >= 2 * sublane:
        b_blk = min(256, max(sublane, _round_up(Bp // 2, sublane)))
        Bp = _round_up(Bp, b_blk)
    else:
        b_blk = Bp
    return Bp, b_blk


def _recurrence_vmem_bytes(t_chunk, b_blk, Dp, Hp, cdt_bytes, fused):
    """Rough per-grid-step VMEM estimate (double-buffered inputs/outputs + scratch)."""
    g = 4 * Hp
    n = 0
    if fused:
        n += 2 * t_chunk * b_blk * Dp * cdt_bytes      # x chunk
        n += 2 * Dp * g * cdt_bytes                    # W_ih^T
        n += t_chunk * b_blk * g * 4                   # gx scratch (f32)
        n += 2 * g * 4                                 # bias
    else:
        n += 2 * t_chunk * b_blk * g * cdt_bytes       # precomputed gx chunk
    n += 2 * Hp * g * cdt_bytes                        # W_hh^T
    n += 2 * t_chunk * b_blk * Hp * cdt_bytes          # out chunk
    n += 2 * b_blk * Hp * 4                            # h, c state
    return n


# ----------------------------------------------------------------------------
# Recurrence kernels
# ----------------------------------------------------------------------------
def _sigmoid_via_tanh(x):
    # one EUP op instead of exp + reciprocal
    return 0.5 * jnp.tanh(0.5 * x) + 0.5


def _run_recurrence(get_gx, whh_ref, out_ref, h_ref, c_ref, n_steps, unroll):
    """Shared per-chunk time loop.  gates = gx(t) + h @ W_hh^T (bias already inside gx)."""
    Hp = h_ref.shape[-1]

    def step(i, carry):
        h = h_ref[...]
        gates = jnp.dot(h.astype(whh_ref.dtype), whh_ref[...],
                        preferred_element_type=jnp.float32)
        gates = gates + get_gx(i)
        # Hp is a multiple of 128 -> lane-aligned gate slices.
        i_g = _sigmoid_via_tanh(gates[:, 0 * Hp:1 * Hp])
        f_g = _sigmoid_via_tanh(gates[:, 1 * Hp:2 * Hp])
        g_g = jnp.tanh(gates[:, 2 * Hp:3 * Hp])
        o_g = _sigmoid_via_tanh(gates[:, 3 * Hp:4 * Hp])
        c_new = f_g * c_ref[...] + i_g * g_g            # elementwise stays f32
        h_new = o_g * jnp.tanh(c_new)
        c_ref[...] = c_new
        h_ref[...] = h_new
        out_ref[i] = h_new.astype(out_ref.dtype)
        return carry

    lax.fori_loop(0, n_steps, step, 0, unroll=unroll)


def _lstm_chunk_kernel_gx(gx_ref, whh_ref, out_ref, h_ref, c_ref, *, unroll):
    """Layer 0: gx (with bias folded) was produced by a row-gather outside the kernel.

    grid = (batch_blocks, time_chunks); time is sequential ('arbitrary').
    gx_ref:  (t_chunk, b_blk, 4Hp)   whh_ref: (Hp, 4Hp)
    out_ref: (t_chunk, b_blk, Hp)    h_ref/c_ref: (b_blk, Hp) f32 scratch (persist over grid)
    """
    @pl.when(pl.program_id(1) == 0)
    def _():
        h_ref[...] = jnp.zeros_like(h_ref)
        c_ref[...] = jnp.zeros_like(c_ref)

    n_steps = gx_ref.shape[0]
    _run_recurrence(lambda i: gx_ref[i].astype(jnp.float32),
                    whh_ref, out_ref, h_ref, c_ref, n_steps, unroll)


def _lstm_chunk_kernel_fused(x_ref, wih_ref, whh_ref, b_ref, out_ref,
                             h_ref, c_ref, gx_ref, *, unroll):
    """Layers >= 1: fused input projection.  The chunk's gx is computed here as one big MXU
    matmul into VMEM scratch (never written to HBM), bias added once in the epilogue.

    x_ref:   (t_chunk, b_blk, Dp)    wih_ref: (Dp, 4Hp)   whh_ref: (Hp, 4Hp)   b_ref: (1, 4Hp)
    out_ref: (t_chunk, b_blk, Hp)
    h_ref/c_ref: (b_blk, Hp) f32     gx_ref: (t_chunk*b_blk, 4Hp) f32 scratch
    """
    @pl.when(pl.program_id(1) == 0)
    def _():
        h_ref[...] = jnp.zeros_like(h_ref)
        c_ref[...] = jnp.zeros_like(c_ref)

    t_chunk, b_blk, Dp = x_ref.shape
    xm = x_ref[...].reshape(t_chunk * b_blk, Dp)
    gx_ref[...] = jnp.dot(xm, wih_ref[...],
                          preferred_element_type=jnp.float32) + b_ref[...]

    def get_gx(i):
        base = pl.multiple_of(i * b_blk, b_blk)
        return gx_ref[pl.ds(base, b_blk), :]

    _run_recurrence(get_gx, whh_ref, out_ref, h_ref, c_ref, t_chunk, unroll)


def lstm_layer0(gx, whh_t, Hp, out_dtype, t_chunk, b_blk, unroll):
    Tp, Bp, G = gx.shape
    kern = functools.partial(_lstm_chunk_kernel_gx, unroll=unroll)
    return pl.pallas_call(
        kern,
        out_shape=jax.ShapeDtypeStruct((Tp, Bp, Hp), out_dtype),
        grid_spec=pltpu.PrefetchScalarGridSpec(
            num_scalar_prefetch=0,
            grid=(Bp // b_blk, Tp // t_chunk),
            in_specs=[
                pl.BlockSpec((t_chunk, b_blk, G), lambda b, t: (t, b, 0)),
                pl.BlockSpec((Hp, G), lambda b, t: (0, 0)),
            ],
            out_specs=pl.BlockSpec((t_chunk, b_blk, Hp), lambda b, t: (t, b, 0)),
            scratch_shapes=[
                pltpu.VMEM((b_blk, Hp), jnp.float32),
                pltpu.VMEM((b_blk, Hp), jnp.float32),
            ],
        ),
        compiler_params=pltpu.CompilerParams(
            dimension_semantics=("parallel", "arbitrary"),
            vmem_limit_bytes=_VMEM_LIMIT_BYTES),
    )(gx, whh_t)


def lstm_layer_fused(x, wih_t, whh_t, bias, Hp, out_dtype, t_chunk, b_blk, unroll):
    Tp, Bp, Dp = x.shape
    G = 4 * Hp
    kern = functools.partial(_lstm_chunk_kernel_fused, unroll=unroll)
    return pl.pallas_call(
        kern,
        out_shape=jax.ShapeDtypeStruct((Tp, Bp, Hp), out_dtype),
        grid_spec=pltpu.PrefetchScalarGridSpec(
            num_scalar_prefetch=0,
            grid=(Bp // b_blk, Tp // t_chunk),
            in_specs=[
                pl.BlockSpec((t_chunk, b_blk, Dp), lambda b, t: (t, b, 0)),
                pl.BlockSpec((Dp, G), lambda b, t: (0, 0)),
                pl.BlockSpec((Hp, G), lambda b, t: (0, 0)),
                pl.BlockSpec((1, G), lambda b, t: (0, 0)),
            ],
            out_specs=pl.BlockSpec((t_chunk, b_blk, Hp), lambda b, t: (t, b, 0)),
            scratch_shapes=[
                pltpu.VMEM((b_blk, Hp), jnp.float32),
                pltpu.VMEM((b_blk, Hp), jnp.float32),
                pltpu.VMEM((t_chunk * b_blk, G), jnp.float32),
            ],
        ),
        compiler_params=pltpu.CompilerParams(
            dimension_semantics=("parallel", "arbitrary"),
            vmem_limit_bytes=_VMEM_LIMIT_BYTES),
    )(x, wih_t, whh_t, bias)


# ----------------------------------------------------------------------------
# Head: Linear + LogSoftmax, vocab-tiled with online logsumexp (two kernels)
# ----------------------------------------------------------------------------
def _head_logits_kernel(x_ref, w_ref, b_ref, logits_ref, lse_ref, m_sc, l_sc):
    j = pl.program_id(1)

    @pl.when(j == 0)
    def _():
        m_sc[...] = jnp.full_like(m_sc, -jnp.inf)
        l_sc[...] = jnp.zeros_like(l_sc)

    logits = jnp.dot(x_ref[...], w_ref[...],
                     preferred_element_type=jnp.float32) + b_ref[...]
    logits_ref[...] = logits

    m_prev = m_sc[...]
    m_new = jnp.maximum(m_prev, jnp.max(logits, axis=-1, keepdims=True))
    alpha = jnp.exp(m_prev - m_new)
    l_sc[...] = alpha * l_sc[...] + jnp.sum(jnp.exp(logits - m_new), axis=-1,
                                            keepdims=True)
    m_sc[...] = m_new

    @pl.when(j == pl.num_programs(1) - 1)
    def _():
        lse_ref[...] = m_sc[...] + jnp.log(l_sc[...])


def _head_sub_kernel(logits_ref, lse_ref, o_ref):
    o_ref[...] = logits_ref[...] - lse_ref[...]


def head_log_softmax(x2d, w_t, b_row, tr, tv):
    """x2d: (N, Hp), w_t: (Hp, Vp), b_row: (1, Vp) with -1e9 in padded vocab cols.
    tr divides N, tv divides Vp (no activation padding)."""
    N, Hp = x2d.shape
    Vp = w_t.shape[1]
    nr, nv = N // tr, Vp // tv

    logits, lse = pl.pallas_call(
        _head_logits_kernel,
        out_shape=(jax.ShapeDtypeStruct((N, Vp), jnp.float32),
                   jax.ShapeDtypeStruct((N, 1), jnp.float32)),
        grid_spec=pltpu.PrefetchScalarGridSpec(
            num_scalar_prefetch=0,
            grid=(nr, nv),
            in_specs=[
                pl.BlockSpec((tr, Hp), lambda i, j: (i, 0)),
                pl.BlockSpec((Hp, tv), lambda i, j: (0, j)),
                pl.BlockSpec((1, tv), lambda i, j: (0, j)),
            ],
            out_specs=(pl.BlockSpec((tr, tv), lambda i, j: (i, j)),
                       pl.BlockSpec((tr, 1), lambda i, j: (i, 0))),
            scratch_shapes=[pltpu.VMEM((tr, 1), jnp.float32),
                            pltpu.VMEM((tr, 1), jnp.float32)],
        ),
        compiler_params=pltpu.CompilerParams(
            dimension_semantics=("parallel", "arbitrary"),
            vmem_limit_bytes=_VMEM_LIMIT_BYTES),
    )(x2d, w_t, b_row)

    logp = pl.pallas_call(
        _head_sub_kernel,
        out_shape=jax.ShapeDtypeStruct((N, Vp), jnp.float32),
        grid_spec=pltpu.PrefetchScalarGridSpec(
            num_scalar_prefetch=0,
            grid=(nr, nv),
            in_specs=[
                pl.BlockSpec((tr, tv), lambda i, j: (i, j)),
                pl.BlockSpec((tr, 1), lambda i, j: (i, 0)),
            ],
            out_specs=pl.BlockSpec((tr, tv), lambda i, j: (i, j)),
        ),
        compiler_params=pltpu.CompilerParams(
            dimension_semantics=("parallel", "parallel"),
            vmem_limit_bytes=_VMEM_LIMIT_BYTES),
    )(logits, lse)
    return logp


# ----------------------------------------------------------------------------
# Parameter prep (done ONCE, outside the jitted forward)
# ----------------------------------------------------------------------------
def _pad_gate_weight(w, H, Hp, D, Dp):
    """w: (4H, D) PyTorch layout [Wi;Wf;Wg;Wo] -> transposed & per-gate padded (Dp, 4Hp)."""
    w4 = w.reshape(4, H, D)
    w4 = jnp.pad(w4, ((0, 0), (0, Hp - H), (0, Dp - D)))
    return jnp.transpose(w4, (2, 0, 1)).reshape(Dp, 4 * Hp)


def _pad_gate_bias(b_ih, b_hh, H, Hp):
    b = (b_ih + b_hh).reshape(4, H)
    b = jnp.pad(b, ((0, 0), (0, Hp - H)))
    return b.reshape(1, 4 * Hp).astype(jnp.float32)


def prepare_params(params, vocab_size, compute_dtype=jnp.bfloat16):
    """Pad / per-gate re-layout / transpose / cast all weights once (outside jit)."""
    V = vocab_size
    Vp = _round_up(V, 128)
    layers = []
    lhu, lhu_p = V, Vp
    for li, lp in enumerate(params["lstms"]):
        H = lp["w_hh"].shape[1]
        Hp = _round_up(H, 128)
        wih_t = _pad_gate_weight(lp["w_ih"], H, Hp, lhu, lhu_p)   # (Dp, 4Hp) f32
        whh_t = _pad_gate_weight(lp["w_hh"], H, Hp, H, Hp)        # (Hp, 4Hp) f32
        bias = _pad_gate_bias(lp["b_ih"], lp["b_hh"], H, Hp)      # (1, 4Hp) f32
        if li == 0:
            # one_hot(x) @ W_ih^T + b == row-gather of (W_ih^T + b) by token id (exact).
            layers.append({"table": (wih_t + bias).astype(compute_dtype),
                           "whh_t": whh_t.astype(compute_dtype)})
        else:
            layers.append({"wih_t": wih_t.astype(compute_dtype),
                           "whh_t": whh_t.astype(compute_dtype),
                           "bias": bias})
        lhu, lhu_p = H, Hp
    out_w_t = jnp.pad(jnp.transpose(params["out_w"]),
                      ((0, lhu_p - lhu), (0, Vp - V))).astype(compute_dtype)
    out_b = jnp.pad(params["out_b"], (0, Vp - V),
                    constant_values=-1e9).reshape(1, Vp).astype(jnp.float32)
    return {"layers": layers, "out_w_t": out_w_t, "out_b": out_b}


def init_params(key, vocab_size, hidden_units):
    """Deterministic init mirroring PyTorch LSTM/Linear default U(-1/sqrt(H), 1/sqrt(H))."""
    params = {"lstms": []}
    lhu = vocab_size
    for hu in hidden_units:
        k = 1.0 / math.sqrt(hu)
        key, k0, k1, k2, k3 = jax.random.split(key, 5)
        params["lstms"].append({
            "w_ih": jax.random.uniform(k0, (4 * hu, lhu), jnp.float32, -k, k),
            "w_hh": jax.random.uniform(k1, (4 * hu, hu), jnp.float32, -k, k),
            "b_ih": jax.random.uniform(k2, (4 * hu,), jnp.float32, -k, k),
            "b_hh": jax.random.uniform(k3, (4 * hu,), jnp.float32, -k, k),
        })
        lhu = hu
    k = 1.0 / math.sqrt(lhu)
    key, k0, k1 = jax.random.split(key, 3)
    params["out_w"] = jax.random.uniform(k0, (vocab_size, lhu), jnp.float32, -k, k)
    params["out_b"] = jax.random.uniform(k1, (vocab_size,), jnp.float32, -k, k)
    return params


# ----------------------------------------------------------------------------
# Model forward
# ----------------------------------------------------------------------------
def lstm_model_forward(prep, x_idx, *, vocab_size, t_chunk=16):
    """x_idx: (B, T) int32 token indices. Returns (B, T, V) float32 log-probs."""
    B, T = x_idx.shape
    V = vocab_size
    layers = prep["layers"]
    cdt = prep["out_w_t"].dtype
    cdt_bytes = jnp.dtype(cdt).itemsize
    sublane = 8 * (4 // cdt_bytes)        # 8 for f32, 16 for bf16 (vreg sublane packing)

    Bp, b_blk = _choose_batch_block(B, sublane)

    # Time chunk: amortize per-grid-step overhead, clamped to an explicit VMEM budget so the
    # recurrence fits the v7x 64 MiB parts as well as v5e's 16 MiB scoped default (raised via
    # vmem_limit_bytes).
    tc = max(1, min(t_chunk, T))

    def worst_layer_bytes(tc_):
        worst = 0
        for li, lp in enumerate(layers):
            Hp_ = lp["whh_t"].shape[0]
            if li == 0:
                worst = max(worst, _recurrence_vmem_bytes(tc_, b_blk, 0, Hp_,
                                                          cdt_bytes, fused=False))
            else:
                Dp_ = lp["wih_t"].shape[0]
                worst = max(worst, _recurrence_vmem_bytes(tc_, b_blk, Dp_, Hp_,
                                                          cdt_bytes, fused=True))
        return worst

    while tc > 1 and worst_layer_bytes(tc) > _VMEM_BUDGET_BYTES:
        tc = max(1, tc // 2)

    Tp = _round_up(T, tc)
    unroll = max(1, min(8, tc))           # bounded unroll keeps the live vreg set small

    # Token ids, time-major, padded (padded rows/steps compute garbage that is sliced away;
    # padded hidden units provably stay exactly 0).
    ids = jnp.transpose(x_idx).astype(jnp.int32)        # (T, B)
    ids = jnp.pad(ids, ((0, Tp - T), (0, Bp - B)))      # (Tp, Bp)

    x = None
    for li, lp in enumerate(layers):
        Hp = lp["whh_t"].shape[0]
        if li == 0:
            # Row-gather of (W_ih^T + b) by token id replaces one_hot + dense matmul.
            gx = jnp.take(lp["table"], ids, axis=0)     # (Tp, Bp, 4Hp)
            x = lstm_layer0(gx, lp["whh_t"], Hp, cdt, tc, b_blk, unroll)
        else:
            x = lstm_layer_fused(x, lp["wih_t"], lp["whh_t"], lp["bias"],
                                 Hp, cdt, tc, b_blk, unroll)     # (Tp, Bp, Hp)

    # Head: vocab-tiled Linear + LogSoftmax; tiles chosen as exact divisors (no row padding).
    Hp_last = layers[-1]["whh_t"].shape[0]
    Vp = prep["out_w_t"].shape[1]
    N = Tp * Bp
    tr = _largest_divisor_at_most(N, 256, sublane)
    tv = _largest_divisor_at_most(Vp, 512, 128)
    logp = head_log_softmax(x.reshape(N, Hp_last), prep["out_w_t"], prep["out_b"], tr, tv)
    logp = logp.reshape(Tp, Bp, Vp)[:T, :B, :V]
    return jnp.transpose(logp, (1, 0, 2))               # (B, T, V)


# ----------------------------------------------------------------------------
# Pure-JAX f32 reference (PyTorch semantics) for correctness check
# ----------------------------------------------------------------------------
def _ref_forward(params, x_idx, vocab_size):
    x = jax.nn.one_hot(x_idx, vocab_size, dtype=jnp.float32)  # (B, T, V)
    for lp in params["lstms"]:
        B, T, D = x.shape
        H = lp["w_hh"].shape[1]
        h = jnp.zeros((B, H), jnp.float32)
        c = jnp.zeros((B, H), jnp.float32)
        outs = []
        for t in range(T):
            gates = x[:, t, :] @ lp["w_ih"].T + h @ lp["w_hh"].T + lp["b_ih"] + lp["b_hh"]
            i_g = jax.nn.sigmoid(gates[:, 0 * H:1 * H])
            f_g = jax.nn.sigmoid(gates[:, 1 * H:2 * H])
            g_g = jnp.tanh(gates[:, 2 * H:3 * H])
            o_g = jax.nn.sigmoid(gates[:, 3 * H:4 * H])
            c = f_g * c + i_g * g_g
            h = o_g * jnp.tanh(c)
            outs.append(h)
        x = jnp.stack(outs, axis=1)
    logits = x @ params["out_w"].T + params["out_b"]
    return jax.nn.log_softmax(logits, axis=-1)


if __name__ == "__main__":
    VOCAB = 16
    HIDDEN_UNITS = [32, 32]
    B, T = 2, 8

    key = jax.random.PRNGKey(0)
    pkey, xkey = jax.random.split(key)
    params = init_params(pkey, VOCAB, HIDDEN_UNITS)
    x_idx = jax.random.randint(xkey, (B, T), 0, VOCAB, dtype=jnp.int32)

    ref = _ref_forward(params, x_idx, VOCAB)

    fwd = jax.jit(functools.partial(lstm_model_forward, vocab_size=VOCAB))

    # f32 compute path: tight check of kernel math.
    prep_f32 = prepare_params(params, VOCAB, compute_dtype=jnp.float32)
    out_f32 = jax.block_until_ready(fwd(prep_f32, x_idx))
    assert out_f32.shape == (B, T, VOCAB)
    np.testing.assert_allclose(np.asarray(out_f32), np.asarray(ref),
                               atol=1e-3, rtol=1e-3)

    # bf16 fast path (bf16 matmul operands, f32 accumulation / elementwise): loose check.
    prep_bf16 = prepare_params(params, VOCAB, compute_dtype=jnp.bfloat16)
    out_bf16 = jax.block_until_ready(fwd(prep_bf16, x_idx))
    assert out_bf16.shape == (B, T, VOCAB)
    np.testing.assert_allclose(np.asarray(out_bf16), np.asarray(ref),
                               atol=5e-2, rtol=5e-2)

    print("KERNEL_OK")
</pallas_src>

<mosaic_0001>
module attributes {stable_mosaic.version = 11 : i64} {
  func.func @_head_logits_kernel(%arg0: i32, %arg1: i32, %arg2: memref<64x128xf32, #tpu.memory_space<vmem>>, %arg3: memref<128x128xf32, #tpu.memory_space<vmem>>, %arg4: memref<1x128xf32, #tpu.memory_space<vmem>>, %arg5: memref<64x128xf32, #tpu.memory_space<vmem>>, %arg6: memref<64x1xf32, #tpu.memory_space<vmem>>, %arg7: memref<64x1xf32, #tpu.memory_space<vmem>>, %arg8: memref<64x1xf32, #tpu.memory_space<vmem>>) attributes {dimension_semantics = [#tpu.dimension_semantics<parallel>, #tpu.dimension_semantics<arbitrary>], iteration_bounds = array<i64: 1, 1>, scalar_prefetch = 0 : i64, scratch_operands = 2 : i64, tpu.core_type = #tpu.core_type<tc>, window_params = [{transform_indices = @transform_0, window_bounds = array<i64: 64, 128>}, {transform_indices = @transform_1, window_bounds = array<i64: 128, 128>}, {transform_indices = @transform_2, window_bounds = array<i64: 1, 128>}, {transform_indices = @transform_3, window_bounds = array<i64: 64, 128>}, {transform_indices = @transform_4, window_bounds = array<i64: 64, 1>}]} {
    %c0_i32 = arith.constant 0 : i32
    %0 = arith.cmpi eq, %arg1, %c0_i32 : i32
    %1 = arith.extui %0 : i1 to i32
    %c0_i32_0 = arith.constant 0 : i32
    %2 = arith.cmpi ne, %1, %c0_i32_0 : i32
    scf.if %2 {
      %cst_20 = arith.constant 0xFF800000 : f32
      %29 = vector.broadcast %cst_20 : f32 to vector<64x1xf32>
      %c0_21 = arith.constant 0 : index
      %c0_22 = arith.constant 0 : index
      %30 = vector.load %arg7[%c0_21, %c0_22] : memref<64x1xf32, #tpu.memory_space<vmem>>, vector<64x1xf32>
      tpu.vector_store %arg7[%c0_21, %c0_22], %29 {strides = array<i32>} : memref<64x1xf32, #tpu.memory_space<vmem>>, vector<64x1xf32>,
      %cst_23 = arith.constant 0.000000e+00 : f32
      %31 = vector.broadcast %cst_23 : f32 to vector<64x1xf32>
      %c0_24 = arith.constant 0 : index
      %c0_25 = arith.constant 0 : index
      %32 = vector.load %arg8[%c0_24, %c0_25] : memref<64x1xf32, #tpu.memory_space<vmem>>, vector<64x1xf32>
      tpu.vector_store %arg8[%c0_24, %c0_25], %31 {strides = array<i32>} : memref<64x1xf32, #tpu.memory_space<vmem>>, vector<64x1xf32>,
    } else {
    }
    %c0 = arith.constant 0 : index
    %c0_1 = arith.constant 0 : index
    %3 = vector.load %arg2[%c0, %c0_1] : memref<64x128xf32, #tpu.memory_space<vmem>>, vector<64x128xf32>
    %c0_2 = arith.constant 0 : index
    %c0_3 = arith.constant 0 : index
    %4 = vector.load %arg3[%c0_2, %c0_3] : memref<128x128xf32, #tpu.memory_space<vmem>>, vector<128x128xf32>
    %cst = arith.constant dense<0.000000e+00> : vector<64x128xf32>
    %5 = tpu.matmul %3, %4, %cst {dimension_numbers = #tpu.dot_dimension_numbers<[1], [0], [0], [1], [0, 0, 1, 1], [], []>} : vector<64x128xf32>, vector<128x128xf32>, vector<64x128xf32> -> vector<64x128xf32>
    %c0_4 = arith.constant 0 : index
    %c0_5 = arith.constant 0 : index
    %6 = vector.load %arg4[%c0_4, %c0_5] : memref<1x128xf32, #tpu.memory_space<vmem>>, vector<1x128xf32>
    %7 = vector.broadcast %6 : vector<1x128xf32> to vector<64x128xf32>
    %8 = arith.addf %5, %7 : vector<64x128xf32>
    %c0_6 = arith.constant 0 : index
    %c0_7 = arith.constant 0 : index
    %9 = vector.load %arg5[%c0_6, %c0_7] : memref<64x128xf32, #tpu.memory_space<vmem>>, vector<64x128xf32>
    tpu.vector_store %arg5[%c0_6, %c0_7], %8 {strides = array<i32>} : memref<64x128xf32, #tpu.memory_space<vmem>>, vector<64x128xf32>,
    %c0_8 = arith.constant 0 : index
    %c0_9 = arith.constant 0 : index
    %10 = vector.load %arg7[%c0_8, %c0_9] : memref<64x1xf32, #tpu.memory_space<vmem>>, vector<64x1xf32>
    %cst_10 = arith.constant dense<0xFF800000> : vector<64xf32>
    %11 = vector.multi_reduction <maximumf>, %8, %cst_10 [1] : vector<64x128xf32> to vector<64xf32>
    %12 = vector.shape_cast %11 : vector<64xf32> to vector<64x1xf32>
    %13 = arith.maximumf %10, %12 : vector<64x1xf32>
    %14 = arith.subf %10, %13 : vector<64x1xf32>
    %15 = math.exp %14 : vector<64x1xf32>
    %c0_11 = arith.constant 0 : index
    %c0_12 = arith.constant 0 : index
    %16 = vector.load %arg8[%c0_11, %c0_12] : memref<64x1xf32, #tpu.memory_space<vmem>>, vector<64x1xf32>
    %17 = arith.mulf %15, %16 : vector<64x1xf32>
    %18 = vector.broadcast %13 : vector<64x1xf32> to vector<64x128xf32>
    %19 = arith.subf %8, %18 : vector<64x128xf32>
    %20 = math.exp %19 : vector<64x128xf32>
    %cst_13 = arith.constant dense<0.000000e+00> : vector<64xf32>
    %21 = vector.multi_reduction <add>, %20, %cst_13 [1] : vector<64x128xf32> to vector<64xf32>
    %22 = vector.shape_cast %21 : vector<64xf32> to vector<64x1xf32>
    %23 = arith.addf %17, %22 : vector<64x1xf32>
    %c0_14 = arith.constant 0 : index
    %c0_15 = arith.constant 0 : index
    %24 = vector.load %arg8[%c0_14, %c0_15] : memref<64x1xf32, #tpu.memory_space<vmem>>, vector<64x1xf32>
    tpu.vector_store %arg8[%c0_14, %c0_15], %23 {strides = array<i32>} : memref<64x1xf32, #tpu.memory_space<vmem>>, vector<64x1xf32>,
    %c0_16 = arith.constant 0 : index
    %c0_17 = arith.constant 0 : index
    %25 = vector.load %arg7[%c0_16, %c0_17] : memref<64x1xf32, #tpu.memory_space<vmem>>, vector<64x1xf32>
    tpu.vector_store %arg7[%c0_16, %c0_17], %13 {strides = array<i32>} : memref<64x1xf32, #tpu.memory_space<vmem>>, vector<64x1xf32>,
    %c0_i32_18 = arith.constant 0 : i32
    %26 = arith.cmpi eq, %arg1, %c0_i32_18 : i32
    %27 = arith.extui %26 : i1 to i32
    %c0_i32_19 = arith.constant 0 : i32
    %28 = arith.cmpi ne, %27, %c0_i32_19 : i32
    scf.if %28 {
      %c0_20 = arith.constant 0 : index
      %c0_21 = arith.constant 0 : index
      %29 = vector.load %arg7[%c0_20, %c0_21] : memref<64x1xf32, #tpu.memory_space<vmem>>, vector<64x1xf32>
      %c0_22 = arith.constant 0 : index
      %c0_23 = arith.constant 0 : index
      %30 = vector.load %arg8[%c0_22, %c0_23] : memref<64x1xf32, #tpu.memory_space<vmem>>, vector<64x1xf32>
      %31 = math.log %30 : vector<64x1xf32>
      %32 = arith.addf %29, %31 : vector<64x1xf32>
      %c0_24 = arith.constant 0 : index
      %c0_25 = arith.constant 0 : index
      %33 = vector.load %arg6[%c0_24, %c0_25] : memref<64x1xf32, #tpu.memory_space<vmem>>, vector<64x1xf32>
      tpu.vector_store %arg6[%c0_24, %c0_25], %32 {strides = array<i32>} : memref<64x1xf32, #tpu.memory_space<vmem>>, vector<64x1xf32>,
    } else {
    }
    return
  }
  func.func @transform_0(%arg0: i32, %arg1: i32) -> (i32, i32) {
    %c0_i32 = arith.constant 0 : i32
    %c0_i32_0 = arith.constant 0 : i32
    return %arg0, %c0_i32 : i32, i32
  }
  func.func @transform_1(%arg0: i32, %arg1: i32) -> (i32, i32) {
    %c0_i32 = arith.constant 0 : i32
    %c0_i32_0 = arith.constant 0 : i32
    return %c0_i32, %arg1 : i32, i32
  }
  func.func @transform_2(%arg0: i32, %arg1: i32) -> (i32, i32) {
    %c0_i32 = arith.constant 0 : i32
    %c0_i32_0 = arith.constant 0 : i32
    return %c0_i32, %arg1 : i32, i32
  }
  func.func @transform_3(%arg0: i32, %arg1: i32) -> (i32, i32) {
    %c0_i32 = arith.constant 0 : i32
    return %arg0, %arg1 : i32, i32
  }
  func.func @transform_4(%arg0: i32, %arg1: i32) -> (i32, i32) {
    %c0_i32 = arith.constant 0 : i32
    %c0_i32_0 = arith.constant 0 : i32
    return %arg0, %c0_i32 : i32, i32
  }
}

module attributes {stable_mosaic.version = 11 : i64} {
  func.func @_lstm_chunk_kernel_fused(%arg0: i32, %arg1: i32, %arg2: memref<8x8x128xf32, #tpu.memory_space<vmem>>, %arg3: memref<128x512xf32, #tpu.memory_space<vmem>>, %arg4: memref<128x512xf32, #tpu.memory_space<vmem>>, %arg5: memref<1x512xf32, #tpu.memory_space<vmem>>, %arg6: memref<8x8x128xf32, #tpu.memory_space<vmem>>, %arg7: memref<8x128xf32, #tpu.memory_space<vmem>>, %arg8: memref<8x128xf32, #tpu.memory_space<vmem>>, %arg9: memref<64x512xf32, #tpu.memory_space<vmem>>) attributes {dimension_semantics = [#tpu.dimension_semantics<parallel>, #tpu.dimension_semantics<arbitrary>], iteration_bounds = array<i64: 1, 1>, scalar_prefetch = 0 : i64, scratch_operands = 3 : i64, tpu.core_type = #tpu.core_type<tc>, window_params = [{transform_indices = @transform_0, window_bounds = array<i64: 8, 8, 128>}, {pipeline_mode = #tpu.pipeline_mode<synchronous>, transform_indices = @transform_1, window_bounds = array<i64: 128, 512>}, {pipeline_mode = #tpu.pipeline_mode<synchronous>, transform_indices = @transform_2, window_bounds = array<i64: 128, 512>}, {pipeline_mode = #tpu.pipeline_mode<synchronous>, transform_indices = @transform_3, window_bounds = array<i64: 1, 512>}, {transform_indices = @transform_4, window_bounds = array<i64: 8, 8, 128>}]} {
    %c0_i32 = arith.constant 0 : i32
    %0 = arith.cmpi eq, %arg1, %c0_i32 : i32
    %1 = arith.extui %0 : i1 to i32
    %c0_i32_0 = arith.constant 0 : i32
    %2 = arith.cmpi ne, %1, %c0_i32_0 : i32
    scf.if %2 {
      %cst_202 = arith.constant 0.000000e+00 : f32
      %379 = vector.broadcast %cst_202 : f32 to vector<8x128xf32>
      %c0_203 = arith.constant 0 : index
      %c0_204 = arith.constant 0 : index
      %380 = vector.load %arg7[%c0_203, %c0_204] : memref<8x128xf32, #tpu.memory_space<vmem>>, vector<8x128xf32>
      tpu.vector_store %arg7[%c0_203, %c0_204], %379 {strides = array<i32>} : memref<8x128xf32, #tpu.memory_space<vmem>>, vector<8x128xf32>,
      %cst_205 = arith.constant 0.000000e+00 : f32
      %381 = vector.broadcast %cst_205 : f32 to vector<8x128xf32>
      %c0_206 = arith.constant 0 : index
      %c0_207 = arith.constant 0 : index
      %382 = vector.load %arg8[%c0_206, %c0_207] : memref<8x128xf32, #tpu.memory_space<vmem>>, vector<8x128xf32>
      tpu.vector_store %arg8[%c0_206, %c0_207], %381 {strides = array<i32>} : memref<8x128xf32, #tpu.memory_space<vmem>>, vector<8x128xf32>,
    } else {
    }
    %c0 = arith.constant 0 : index
    %c0_1 = arith.constant 0 : index
    %c0_2 = arith.constant 0 : index
    %3 = vector.load %arg2[%c0, %c0_1, %c0_2] : memref<8x8x128xf32, #tpu.memory_space<vmem>>, vector<8x8x128xf32>
    %4 = vector.shape_cast %3 : vector<8x8x128xf32> to vector<64x128xf32>
    %c0_3 = arith.constant 0 : index
    %c0_4 = arith.constant 0 : index
    %5 = vector.load %arg3[%c0_3, %c0_4] : memref<128x512xf32, #tpu.memory_space<vmem>>, vector<128x512xf32>
    %cst = arith.constant dense<0.000000e+00> : vector<64x512xf32>
    %6 = tpu.matmul %4, %5, %cst {dimension_numbers = #tpu.dot_dimension_numbers<[1], [0], [0], [1], [0, 0, 1, 1], [], []>} : vector<64x128xf32>, vector<128x512xf32>, vector<64x512xf32> -> vector<64x512xf32>
    %c0_5 = arith.constant 0 : index
    %c0_6 = arith.constant 0 : index
    %7 = vector.load %arg5[%c0_5, %c0_6] : memref<1x512xf32, #tpu.memory_space<vmem>>, vector<1x512xf32>
    %8 = vector.broadcast %7 : vector<1x512xf32> to vector<64x512xf32>
    %9 = arith.addf %6, %8 : vector<64x512xf32>
    %c0_7 = arith.constant 0 : index
    %c0_8 = arith.constant 0 : index
    %10 = vector.load %arg9[%c0_7, %c0_8] : memref<64x512xf32, #tpu.memory_space<vmem>>, vector<64x512xf32>
    tpu.vector_store %arg9[%c0_7, %c0_8], %9 {strides = array<i32>} : memref<64x512xf32, #tpu.memory_space<vmem>>, vector<64x512xf32>,
    %c0_i32_9 = arith.constant 0 : i32
    %c0_10 = arith.constant 0 : index
    %c0_11 = arith.constant 0 : index
    %11 = vector.load %arg7[%c0_10, %c0_11] : memref<8x128xf32, #tpu.memory_space<vmem>>, vector<8x128xf32>
    %c0_12 = arith.constant 0 : index
    %c0_13 = arith.constant 0 : index
    %12 = vector.load %arg4[%c0_12, %c0_13] : memref<128x512xf32, #tpu.memory_space<vmem>>, vector<128x512xf32>
    %cst_14 = arith.constant dense<0.000000e+00> : vector<8x512xf32>
    %13 = tpu.matmul %11, %12, %cst_14 {dimension_numbers = #tpu.dot_dimension_numbers<[1], [0], [0], [1], [0, 0, 1, 1], [], []>} : vector<8x128xf32>, vector<128x512xf32>, vector<8x512xf32> -> vector<8x512xf32>
    %c8_i32 = arith.constant 8 : i32
    %14 = arith.muli %c0_i32_9, %c8_i32 : i32
    %15 = tpu.assume_multiple %14, 8 : i32
    %16 = arith.index_cast %15 : i32 to index
    %c0_15 = arith.constant 0 : index
    %17 = vector.load %arg9[%16, %c0_15] : memref<64x512xf32, #tpu.memory_space<vmem>>, vector<8x512xf32>
    %18 = arith.addf %13, %17 : vector<8x512xf32>
    %19 = vector.extract_strided_slice %18 {offsets = [0, 0], sizes = [8, 128], strides = [1, 1]} : vector<8x512xf32> to vector<8x128xf32>
    %cst_16 = arith.constant 5.000000e-01 : f32
    %20 = vector.broadcast %cst_16 : f32 to vector<8x128xf32>
    %21 = arith.mulf %20, %19 : vector<8x128xf32>
    %22 = math.tanh %21 : vector<8x128xf32>
    %cst_17 = arith.constant 5.000000e-01 : f32
    %23 = vector.broadcast %cst_17 : f32 to vector<8x128xf32>
    %24 = arith.mulf %23, %22 : vector<8x128xf32>
    %cst_18 = arith.constant 5.000000e-01 : f32
    %25 = vector.broadcast %cst_18 : f32 to vector<8x128xf32>
    %26 = arith.addf %24, %25 : vector<8x128xf32>
    %27 = vector.extract_strided_slice %18 {offsets = [0, 128], sizes = [8, 128], strides = [1, 1]} : vector<8x512xf32> to vector<8x128xf32>
    %cst_19 = arith.constant 5.000000e-01 : f32
    %28 = vector.broadcast %cst_19 : f32 to vector<8x128xf32>
    %29 = arith.mulf %28, %27 : vector<8x128xf32>
    %30 = math.tanh %29 : vector<8x128xf32>
    %cst_20 = arith.constant 5.000000e-01 : f32
    %31 = vector.broadcast %cst_20 : f32 to vector<8x128xf32>
    %32 = arith.mulf %31, %30 : vector<8x128xf32>
    %cst_21 = arith.constant 5.000000e-01 : f32
    %33 = vector.broadcast %cst_21 : f32 to vector<8x128xf32>
    %34 = arith.addf %32, %33 : vector<8x128xf32>
    %35 = vector.extract_strided_slice %18 {offsets = [0, 256], sizes = [8, 128], strides = [1, 1]} : vector<8x512xf32> to vector<8x128xf32>
    %36 = math.tanh %35 : vector<8x128xf32>
    %37 = vector.extract_strided_slice %18 {offsets = [0, 384], sizes = [8, 128], strides = [1, 1]} : vector<8x512xf32> to vector<8x128xf32>
    %cst_22 = arith.constant 5.000000e-01 : f32
    %38 = vector.broadcast %cst_22 : f32 to vector<8x128xf32>
    %39 = arith.mulf %38, %37 : vector<8x128xf32>
    %40 = math.tanh %39 : vector<8x128xf32>
    %cst_23 = arith.constant 5.000000e-01 : f32
    %41 = vector.broadcast %cst_23 : f32 to vector<8x128xf32>
    %42 = arith.mulf %41, %40 : vector<8x128xf32>
    %cst_24 = arith.constant 5.000000e-01 : f32
    %43 = vector.broadcast %cst_24 : f32 to vector<8x128xf32>
    %44 = arith.addf %42, %43 : vector<8x128xf32>
    %c0_25 = arith.constant 0 : index
    %c0_26 = arith.constant 0 : index
    %45 = vector.load %arg8[%c0_25, %c0_26] : memref<8x128xf32, #tpu.memory_space<vmem>>, vector<8x128xf32>
    %46 = arith.mulf %34, %45 : vector<8x128xf32>
    %47 = arith.mulf %26, %36 : vector<8x128xf32>
    %48 = arith.addf %46, %47 : vector<8x128xf32>
    %49 = math.tanh %48 : vector<8x128xf32>
    %50 = arith.mulf %44, %49 : vector<8x128xf32>
    %c0_27 = arith.constant 0 : index
    %c0_28 = arith.constant 0 : index
    %51 = vector.load %arg8[%c0_27, %c0_28] : memref<8x128xf32, #tpu.memory_space<vmem>>, vector<8x128xf32>
    tpu.vector_store %arg8[%c0_27, %c0_28], %48 {strides = array<i32>} : memref<8x128xf32, #tpu.memory_space<vmem>>, vector<8x128xf32>,
    %c0_29 = arith.constant 0 : index
    %c0_30 = arith.constant 0 : index
    %52 = vector.load %arg7[%c0_29, %c0_30] : memref<8x128xf32, #tpu.memory_space<vmem>>, vector<8x128xf32>
    tpu.vector_store %arg7[%c0_29, %c0_30], %50 {strides = array<i32>} : memref<8x128xf32, #tpu.memory_space<vmem>>, vector<8x128xf32>,
    %53 = arith.index_cast %c0_i32_9 : i32 to index
    %c0_31 = arith.constant 0 : index
    %c0_32 = arith.constant 0 : index
    %54 = vector.load %arg6[%53, %c0_31, %c0_32] : memref<8x8x128xf32, #tpu.memory_space<vmem>>, vector<1x8x128xf32>
    %55 = vector.shape_cast %54 : vector<1x8x128xf32> to vector<8x128xf32>
    %56 = vector.shape_cast %50 : vector<8x128xf32> to vector<1x8x128xf32>
    tpu.vector_store %arg6[%53, %c0_31, %c0_32], %56 {strides = array<i32>} : memref<8x8x128xf32, #tpu.memory_space<vmem>>, vector<1x8x128xf32>,
    %c1_i32 = arith.constant 1 : i32
    %c0_33 = arith.constant 0 : index
    %c0_34 = arith.constant 0 : index
    %57 = vector.load %arg7[%c0_33, %c0_34] : memref<8x128xf32, #tpu.memory_space<vmem>>, vector<8x128xf32>
    %c0_35 = arith.constant 0 : index
    %c0_36 = arith.constant 0 : index
    %58 = vector.load %arg4[%c0_35, %c0_36] : memref<128x512xf32, #tpu.memory_space<vmem>>, vector<128x512xf32>
    %cst_37 = arith.constant dense<0.000000e+00> : vector<8x512xf32>
    %59 = tpu.matmul %57, %58, %cst_37 {dimension_numbers = #tpu.dot_dimension_numbers<[1], [0], [0], [1], [0, 0, 1, 1], [], []>} : vector<8x128xf32>, vector<128x512xf32>, vector<8x512xf32> -> vector<8x512xf32>
    %c8_i32_38 = arith.constant 8 : i32
    %60 = arith.muli %c1_i32, %c8_i32_38 : i32
    %61 = tpu.assume_multiple %60, 8 : i32
    %62 = arith.index_cast %61 : i32 to index
    %c0_39 = arith.constant 0 : index
    %63 = vector.load %arg9[%62, %c0_39] : memref<64x512xf32, #tpu.memory_space<vmem>>, vector<8x512xf32>
    %64 = arith.addf %59, %63 : vector<8x512xf32>
    %65 = vector.extract_strided_slice %64 {offsets = [0, 0], sizes = [8, 128], strides = [1, 1]} : vector<8x512xf32> to vector<8x128xf32>
    %cst_40 = arith.constant 5.000000e-01 : f32
    %66 = vector.broadcast %cst_40 : f32 to vector<8x128xf32>
    %67 = arith.mulf %66, %65 : vector<8x128xf32>
    %68 = math.tanh %67 : vector<8x128xf32>
    %cst_41 = arith.constant 5.000000e-01 : f32
    %69 = vector.broadcast %cst_41 : f32 to vector<8x128xf32>
    %70 = arith.mulf %69, %68 : vector<8x128xf32>
    %cst_42 = arith.constant 5.000000e-01 : f32
    %71 = vector.broadcast %cst_42 : f32 to vector<8x128xf32>
    %72 = arith.addf %70, %71 : vector<8x128xf32>
    %73 = vector.extract_strided_slice %64 {offsets = [0, 128], sizes = [8, 128], strides = [1, 1]} : vector<8x512xf32> to vector<8x128xf32>
    %cst_43 = arith.constant 5.000000e-01 : f32
    %74 = vector.broadcast %cst_43 : f32 to vector<8x128xf32>
    %75 = arith.mulf %74, %73 : vector<8x128xf32>
    %76 = math.tanh %75 : vector<8x128xf32>
    %cst_44 = arith.constant 5.000000e-01 : f32
    %77 = vector.broadcast %cst_44 : f32 to vector<8x128xf32>
    %78 = arith.mulf %77, %76 : vector<8x128xf32>
    %cst_45 = arith.constant 5.000000e-01 : f32
    %79 = vector.broadcast %cst_45 : f32 to vector<8x128xf32>
    %80 = arith.addf %78, %79 : vector<8x128xf32>
    %81 = vector.extract_strided_slice %64 {offsets = [0, 256], sizes = [8, 128], strides = [1, 1]} : vector<8x512xf32> to vector<8x128xf32>
    %82 = math.tanh %81 : vector<8x128xf32>
    %83 = vector.extract_strided_slice %64 {offsets = [0, 384], sizes = [8, 128], strides = [1, 1]} : vector<8x512xf32> to vector<8x128xf32>
    %cst_46 = arith.constant 5.000000e-01 : f32
    %84 = vector.broadcast %cst_46 : f32 to vector<8x128xf32>
    %85 = arith.mulf %84, %83 : vector<8x128xf32>
    %86 = math.tanh %85 : vector<8x128xf32>
    %cst_47 = arith.constant 5.000000e-01 : f32
    %87 = vector.broadcast %cst_47 : f32 to vector<8x128xf32>
    %88 = arith.mulf %87, %86 : vector<8x128xf32>
    %cst_48 = arith.constant 5.000000e-01 : f32
    %89 = vector.broadcast %cst_48 : f32 to vector<8x128xf32>
    %90 = arith.addf %88, %89 : vector<8x128xf32>
    %c0_49 = arith.constant 0 : index
    %c0_50 = arith.constant 0 : index
    %91 = vector.load %arg8[%c0_49, %c0_50] : memref<8x128xf32, #tpu.memory_space<vmem>>, vector<8x128xf32>
    %92 = arith.mulf %80, %91 : vector<8x128xf32>
    %93 = arith.mulf %72, %82 : vector<8x128xf32>
    %94 = arith.addf %92, %93 : vector<8x128xf32>
    %95 = math.tanh %94 : vector<8x128xf32>
    %96 = arith.mulf %90, %95 : vector<8x128xf32>
    %c0_51 = arith.constant 0 : index
    %c0_52 = arith.constant 0 : index
    %97 = vector.load %arg8[%c0_51, %c0_52] : memref<8x128xf32, #tpu.memory_space<vmem>>, vector<8x128xf32>
    tpu.vector_store %arg8[%c0_51, %c0_52], %94 {strides = array<i32>} : memref<8x128xf32, #tpu.memory_space<vmem>>, vector<8x128xf32>,
    %c0_53 = arith.constant 0 : index
    %c0_54 = arith.constant 0 : index
    %98 = vector.load %arg7[%c0_53, %c0_54] : memref<8x128xf32, #tpu.memory_space<vmem>>, vector<8x128xf32>
    tpu.vector_store %arg7[%c0_53, %c0_54], %96 {strides = array<i32>} : memref<8x128xf32, #tpu.memory_space<vmem>>, vector<8x128xf32>,
    %99 = arith.index_cast %c1_i32 : i32 to index
    %c0_55 = arith.constant 0 : index
    %c0_56 = arith.constant 0 : index
    %100 = vector.load %arg6[%99, %c0_55, %c0_56] : memref<8x8x128xf32, #tpu.memory_space<vmem>>, vector<1x8x128xf32>
    %101 = vector.shape_cast %100 : vector<1x8x128xf32> to vector<8x128xf32>
    %102 = vector.shape_cast %96 : vector<8x128xf32> to vector<1x8x128xf32>
    tpu.vector_store %arg6[%99, %c0_55, %c0_56], %102 {strides = array<i32>} : memref<8x8x128xf32, #tpu.memory_space<vmem>>, vector<1x8x128xf32>,
    %c2_i32 = arith.constant 2 : i32
    %c0_57 = arith.constant 0 : index
    %c0_58 = arith.constant 0 : index
    %103 = vector.load %arg7[%c0_57, %c0_58] : memref<8x128xf32, #tpu.memory_space<vmem>>, vector<8x128xf32>
    %c0_59 = arith.constant 0 : index
    %c0_60 = arith.constant 0 : index
    %104 = vector.load %arg4[%c0_59, %c0_60] : memref<128x512xf32, #tpu.memory_space<vmem>>, vector<128x512xf32>
    %cst_61 = arith.constant dense<0.000000e+00> : vector<8x512xf32>
    %105 = tpu.matmul %103, %104, %cst_61 {dimension_numbers = #tpu.dot_dimension_numbers<[1], [0], [0], [1], [0, 0, 1, 1], [], []>} : vector<8x128xf32>, vector<128x512xf32>, vector<8x512xf32> -> vector<8x512xf32>
    %c8_i32_62 = arith.constant 8 : i32
    %106 = arith.muli %c2_i32, %c8_i32_62 : i32
    %107 = tpu.assume_multiple %106, 8 : i32
    %108 = arith.index_cast %107 : i32 to index
    %c0_63 = arith.constant 0 : index
    %109 = vector.load %arg9[%108, %c0_63] : memref<64x512xf32, #tpu.memory_space<vmem>>, vector<8x512xf32>
    %110 = arith.addf %105, %109 : vector<8x512xf32>
    %111 = vector.extract_strided_slice %110 {offsets = [0, 0], sizes = [8, 128], strides = [1, 1]} : vector<8x512xf32> to vector<8x128xf32>
    %cst_64 = arith.constant 5.000000e-01 : f32
    %112 = vector.broadcast %cst_64 : f32 to vector<8x128xf32>
    %113 = arith.mulf %112, %111 : vector<8x128xf32>
    %114 = math.tanh %113 : vector<8x128xf32>
    %cst_65 = arith.constant 5.000000e-01 : f32
    %115 = vector.broadcast %cst_65 : f32 to vector<8x128xf32>
    %116 = arith.mulf %115, %114 : vector<8x128xf32>
    %cst_66 = arith.constant 5.000000e-01 : f32
    %117 = vector.broadcast %cst_66 : f32 to vector<8x128xf32>
    %118 = arith.addf %116, %117 : vector<8x128xf32>
    %119 = vector.extract_strided_slice %110 {offsets = [0, 128], sizes = [8, 128], strides = [1, 1]} : vector<8x512xf32> to vector<8x128xf32>
    %cst_67 = arith.constant 5.000000e-01 : f32
    %120 = vector.broadcast %cst_67 : f32 to vector<8x128xf32>
    %121 = arith.mulf %120, %119 : vector<8x128xf32>
    %122 = math.tanh %121 : vector<8x128xf32>
    %cst_68 = arith.constant 5.000000e-01 : f32
    %123 = vector.broadcast %cst_68 : f32 to vector<8x128xf32>
    %124 = arith.mulf %123, %122 : vector<8x128xf32>
    %cst_69 = arith.constant 5.000000e-01 : f32
    %125 = vector.broadcast %cst_69 : f32 to vector<8x128xf32>
    %126 = arith.addf %124, %125 : vector<8x128xf32>
    %127 = vector.extract_strided_slice %110 {offsets = [0, 256], sizes = [8, 128], strides = [1, 1]} : vector<8x512xf32> to vector<8x128xf32>
    %128 = math.tanh %127 : vector<8x128xf32>
    %129 = vector.extract_strided_slice %110 {offsets = [0, 384], sizes = [8, 128], strides = [1, 1]} : vector<8x512xf32> to vector<8x128xf32>
    %cst_70 = arith.constant 5.000000e-01 : f32
    %130 = vector.broadcast %cst_70 : f32 to vector<8x128xf32>
    %131 = arith.mulf %130, %129 : vector<8x128xf32>
    %132 = math.tanh %131 : vector<8x128xf32>
    %cst_71 = arith.constant 5.000000e-01 : f32
    %133 = vector.broadcast %cst_71 : f32 to vector<8x128xf32>
    %134 = arith.mulf %133, %132 : vector<8x128xf32>
    %cst_72 = arith.constant 5.000000e-01 : f32
    %135 = vector.broadcast %cst_72 : f32 to vector<8x128xf32>
    %136 = arith.addf %134, %135 : vector<8x128xf32>
    %c0_73 = arith.constant 0 : index
    %c0_74 = arith.constant 0 : index
    %137 = vector.load %arg8[%c0_73, %c0_74] : memref<8x128xf32, #tpu.memory_space<vmem>>, vector<8x128xf32>
    %138 = arith.mulf %126, %137 : vector<8x128xf32>
    %139 = arith.mulf %118, %128 : vector<8x128xf32>
    %140 = arith.addf %138, %139 : vector<8x128xf32>
    %141 = math.tanh %140 : vector<8x128xf32>
    %142 = arith.mulf %136, %141 : vector<8x128xf32>
    %c0_75 = arith.constant 0 : index
    %c0_76 = arith.constant 0 : index
    %143 = vector.load %arg8[%c0_75, %c0_76] : memref<8x128xf32, #tpu.memory_space<vmem>>, vector<8x128xf32>
    tpu.vector_store %arg8[%c0_75, %c0_76], %140 {strides = array<i32>} : memref<8x128xf32, #tpu.memory_space<vmem>>, vector<8x128xf32>,
    %c0_77 = arith.constant 0 : index
    %c0_78 = arith.constant 0 : index
    %144 = vector.load %arg7[%c0_77, %c0_78] : memref<8x128xf32, #tpu.memory_space<vmem>>, vector<8x128xf32>
    tpu.vector_store %arg7[%c0_77, %c0_78], %142 {strides = array<i32>} : memref<8x128xf32, #tpu.memory_space<vmem>>, vector<8x128xf32>,
    %145 = arith.index_cast %c2_i32 : i32 to index
    %c0_79 = arith.constant 0 : index
    %c0_80 = arith.constant 0 : index
    %146 = vector.load %arg6[%145, %c0_79, %c0_80] : memref<8x8x128xf32, #tpu.memory_space<vmem>>, vector<1x8x128xf32>
    %147 = vector.shape_cast %146 : vector<1x8x128xf32> to vector<8x128xf32>
    %148 = vector.shape_cast %142 : vector<8x128xf32> to vector<1x8x128xf32>
    tpu.vector_store %arg6[%145, %c0_79, %c0_80], %148 {strides = array<i32>} : memref<8x8x128xf32, #tpu.memory_space<vmem>>, vector<1x8x128xf32>,
    %c3_i32 = arith.constant 3 : i32
    %c0_81 = arith.constant 0 : index
    %c0_82 = arith.constant 0 : index
    %149 = vector.load %arg7[%c0_81, %c0_82] : memref<8x128xf32, #tpu.memory_space<vmem>>, vector<8x128xf32>
    %c0_83 = arith.constant 0 : index
    %c0_84 = arith.constant 0 : index
    %150 = vector.load %arg4[%c0_83, %c0_84] : memref<128x512xf32, #tpu.memory_space<vmem>>, vector<128x512xf32>
    %cst_85 = arith.constant dense<0.000000e+00> : vector<8x512xf32>
    %151 = tpu.matmul %149, %150, %cst_85 {dimension_numbers = #tpu.dot_dimension_numbers<[1], [0], [0], [1], [0, 0, 1, 1], [], []>} : vector<8x128xf32>, vector<128x512xf32>, vector<8x512xf32> -> vector<8x512xf32>
    %c8_i32_86 = arith.constant 8 : i32
    %152 = arith.muli %c3_i32, %c8_i32_86 : i32
    %153 = tpu.assume_multiple %152, 8 : i32
    %154 = arith.index_cast %153 : i32 to index
    %c0_87 = arith.constant 0 : index
    %155 = vector.load %arg9[%154, %c0_87] : memref<64x512xf32, #tpu.memory_space<vmem>>, vector<8x512xf32>
    %156 = arith.addf %151, %155 : vector<8x512xf32>
    %157 = vector.extract_strided_slice %156 {offsets = [0, 0], sizes = [8, 128], strides = [1, 1]} : vector<8x512xf32> to vector<8x128xf32>
    %cst_88 = arith.constant 5.000000e-01 : f32
    %158 = vector.broadcast %cst_88 : f32 to vector<8x128xf32>
    %159 = arith.mulf %158, %157 : vector<8x128xf32>
    %160 = math.tanh %159 : vector<8x128xf32>
    %cst_89 = arith.constant 5.000000e-01 : f32
    %161 = vector.broadcast %cst_89 : f32 to vector<8x128xf32>
    %162 = arith.mulf %161, %160 : vector<8x128xf32>
    %cst_90 = arith.constant 5.000000e-01 : f32
    %163 = vector.broadcast %cst_90 : f32 to vector<8x128xf32>
    %164 = arith.addf %162, %163 : vector<8x128xf32>
    %165 = vector.extract_strided_slice %156 {offsets = [0, 128], sizes = [8, 128], strides = [1, 1]} : vector<8x512xf32> to vector<8x128xf32>
    %cst_91 = arith.constant 5.000000e-01 : f32
    %166 = vector.broadcast %cst_91 : f32 to vector<8x128xf32>
    %167 = arith.mulf %166, %165 : vector<8x128xf32>
    %168 = math.tanh %167 : vector<8x128xf32>
    %cst_92 = arith.constant 5.000000e-01 : f32
    %169 = vector.broadcast %cst_92 : f32 to vector<8x128xf32>
    %170 = arith.mulf %169, %168 : vector<8x128xf32>
    %cst_93 = arith.constant 5.000000e-01 : f32
    %171 = vector.broadcast %cst_93 : f32 to vector<8x128xf32>
    %172 = arith.addf %170, %171 : vector<8x128xf32>
    %173 = vector.extract_strided_slice %156 {offsets = [0, 256], sizes = [8, 128], strides = [1, 1]} : vector<8x512xf32> to vector<8x128xf32>
    %174 = math.tanh %173 : vector<8x128xf32>
    %175 = vector.extract_strided_slice %156 {offsets = [0, 384], sizes = [8, 128], strides = [1, 1]} : vector<8x512xf32> to vector<8x128xf32>
    %cst_94 = arith.constant 5.000000e-01 : f32
    %176 = vector.broadcast %cst_94 : f32 to vector<8x128xf32>
    %177 = arith.mulf %176, %175 : vector<8x128xf32>
    %178 = math.tanh %177 : vector<8x128xf32>
    %cst_95 = arith.constant 5.000000e-01 : f32
    %179 = vector.broadcast %cst_95 : f32 to vector<8x128xf32>
    %180 = arith.mulf %179, %178 : vector<8x128xf32>
    %cst_96 = arith.constant 5.000000e-01 : f32
    %181 = vector.broadcast %cst_96 : f32 to vector<8x128xf32>
    %182 = arith.addf %180, %181 : vector<8x128xf32>
    %c0_97 = arith.constant 0 : index
    %c0_98 = arith.constant 0 : index
    %183 = vector.load %arg8[%c0_97, %c0_98] : memref<8x128xf32, #tpu.memory_space<vmem>>, vector<8x128xf32>
    %184 = arith.mulf %172, %183 : vector<8x128xf32>
    %185 = arith.mulf %164, %174 : vector<8x128xf32>
    %186 = arith.addf %184, %185 : vector<8x128xf32>
    %187 = math.tanh %186 : vector<8x128xf32>
    %188 = arith.mulf %182, %187 : vector<8x128xf32>
    %c0_99 = arith.constant 0 : index
    %c0_100 = arith.constant 0 : index
    %189 = vector.load %arg8[%c0_99, %c0_100] : memref<8x128xf32, #tpu.memory_space<vmem>>, vector<8x128xf32>
    tpu.vector_store %arg8[%c0_99, %c0_100], %186 {strides = array<i32>} : memref<8x128xf32, #tpu.memory_space<vmem>>, vector<8x128xf32>,
    %c0_101 = arith.constant 0 : index
    %c0_102 = arith.constant 0 : index
    %190 = vector.load %arg7[%c0_101, %c0_102] : memref<8x128xf32, #tpu.memory_space<vmem>>, vector<8x128xf32>
    tpu.vector_store %arg7[%c0_101, %c0_102], %188 {strides = array<i32>} : memref<8x128xf32, #tpu.memory_space<vmem>>, vector<8x128xf32>,
    %191 = arith.index_cast %c3_i32 : i32 to index
    %c0_103 = arith.constant 0 : index
    %c0_104 = arith.constant 0 : index
    %192 = vector.load %arg6[%191, %c0_103, %c0_104] : memref<8x8x128xf32, #tpu.memory_space<vmem>>, vector<1x8x128xf32>
    %193 = vector.shape_cast %192 : vector<1x8x128xf32> to vector<8x128xf32>
    %194 = vector.shape_cast %188 : vector<8x128xf32> to vector<1x8x128xf32>
    tpu.vector_store %arg6[%191, %c0_103, %c0_104], %194 {strides = array<i32>} : memref<8x8x128xf32, #tpu.memory_space<vmem>>, vector<1x8x128xf32>,
    %c4_i32 = arith.constant 4 : i32
    %c0_105 = arith.constant 0 : index
    %c0_106 = arith.constant 0 : index
    %195 = vector.load %arg7[%c0_105, %c0_106] : memref<8x128xf32, #tpu.memory_space<vmem>>, vector<8x128xf32>
    %c0_107 = arith.constant 0 : index
    %c0_108 = arith.constant 0 : index
    %196 = vector.load %arg4[%c0_107, %c0_108] : memref<128x512xf32, #tpu.memory_space<vmem>>, vector<128x512xf32>
    %cst_109 = arith.constant dense<0.000000e+00> : vector<8x512xf32>
    %197 = tpu.matmul %195, %196, %cst_109 {dimension_numbers = #tpu.dot_dimension_numbers<[1], [0], [0], [1], [0, 0, 1, 1], [], []>} : vector<8x128xf32>, vector<128x512xf32>, vector<8x512xf32> -> vector<8x512xf32>
    %c8_i32_110 = arith.constant 8 : i32
    %198 = arith.muli %c4_i32, %c8_i32_110 : i32
    %199 = tpu.assume_multiple %198, 8 : i32
    %200 = arith.index_cast %199 : i32 to index
    %c0_111 = arith.constant 0 : index
    %201 = vector.load %arg9[%200, %c0_111] : memref<64x512xf32, #tpu.memory_space<vmem>>, vector<8x512xf32>
    %202 = arith.addf %197, %201 : vector<8x512xf32>
    %203 = vector.extract_strided_slice %202 {offsets = [0, 0], sizes = [8, 128], strides = [1, 1]} : vector<8x512xf32> to vector<8x128xf32>
    %cst_112 = arith.constant 5.000000e-01 : f32
    %204 = vector.broadcast %cst_112 : f32 to vector<8x128xf32>
    %205 = arith.mulf %204, %203 : vector<8x128xf32>
    %206 = math.tanh %205 : vector<8x128xf32>
    %cst_113 = arith.constant 5.000000e-01 : f32
    %207 = vector.broadcast %cst_113 : f32 to vector<8x128xf32>
    %208 = arith.mulf %207, %206 : vector<8x128xf32>
    %cst_114 = arith.constant 5.000000e-01 : f32
    %209 = vector.broadcast %cst_114 : f32 to vector<8x128xf32>
    %210 = arith.addf %208, %209 : vector<8x128xf32>
    %211 = vector.extract_strided_slice %202 {offsets = [0, 128], sizes = [8, 128], strides = [1, 1]} : vector<8x512xf32> to vector<8x128xf32>
    %cst_115 = arith.constant 5.000000e-01 : f32
    %212 = vector.broadcast %cst_115 : f32 to vector<8x128xf32>
    %213 = arith.mulf %212, %211 : vector<8x128xf32>
    %214 = math.tanh %213 : vector<8x128xf32>
    %cst_116 = arith.constant 5.000000e-01 : f32
    %215 = vector.broadcast %cst_116 : f32 to vector<8x128xf32>
    %216 = arith.mulf %215, %214 : vector<8x128xf32>
    %cst_117 = arith.constant 5.000000e-01 : f32
    %217 = vector.broadcast %cst_117 : f32 to vector<8x128xf32>
    %218 = arith.addf %216, %217 : vector<8x128xf32>
    %219 = vector.extract_strided_slice %202 {offsets = [0, 256], sizes = [8, 128], strides = [1, 1]} : vector<8x512xf32> to vector<8x128xf32>
    %220 = math.tanh %219 : vector<8x128xf32>
    %221 = vector.extract_strided_slice %202 {offsets = [0, 384], sizes = [8, 128], strides = [1, 1]} : vector<8x512xf32> to vector<8x128xf32>
    %cst_118 = arith.constant 5.000000e-01 : f32
    %222 = vector.broadcast %cst_118 : f32 to vector<8x128xf32>
    %223 = arith.mulf %222, %221 : vector<8x128xf32>
    %224 = math.tanh %223 : vector<8x128xf32>
    %cst_119 = arith.constant 5.000000e-01 : f32
    %225 = vector.broadcast %cst_119 : f32 to vector<8x128xf32>
    %226 = arith.mulf %225, %224 : vector<8x128xf32>
    %cst_120 = arith.constant 5.000000e-01 : f32
    %227 = vector.broadcast %cst_120 : f32 to vector<8x128xf32>
    %228 = arith.addf %226, %227 : vector<8x128xf32>
    %c0_121 = arith.constant 0 : index
    %c0_122 = arith.constant 0 : index
    %229 = vector.load %arg8[%c0_121, %c0_122] : memref<8x128xf32, #tpu.memory_space<vmem>>, vector<8x128xf32>
    %230 = arith.mulf %218, %229 : vector<8x128xf32>
    %231 = arith.mulf %210, %220 : vector<8x128xf32>
    %232 = arith.addf %230, %231 : vector<8x128xf32>
    %233 = math.tanh %232 : vector<8x128xf32>
    %234 = arith.mulf %228, %233 : vector<8x128xf32>
    %c0_123 = arith.constant 0 : index
    %c0_124 = arith.constant 0 : index
    %235 = vector.load %arg8[%c0_123, %c0_124] : memref<8x128xf32, #tpu.memory_space<vmem>>, vector<8x128xf32>
    tpu.vector_store %arg8[%c0_123, %c0_124], %232 {strides = array<i32>} : memref<8x128xf32, #tpu.memory_space<vmem>>, vector<8x128xf32>,
    %c0_125 = arith.constant 0 : index
    %c0_126 = arith.constant 0 : index
    %236 = vector.load %arg7[%c0_125, %c0_126] : memref<8x128xf32, #tpu.memory_space<vmem>>, vector<8x128xf32>
    tpu.vector_store %arg7[%c0_125, %c0_126], %234 {strides = array<i32>} : memref<8x128xf32, #tpu.memory_space<vmem>>, vector<8x128xf32>,
    %237 = arith.index_cast %c4_i32 : i32 to index
    %c0_127 = arith.constant 0 : index
    %c0_128 = arith.constant 0 : index
    %238 = vector.load %arg6[%237, %c0_127, %c0_128] : memref<8x8x128xf32, #tpu.memory_space<vmem>>, vector<1x8x128xf32>
    %239 = vector.shape_cast %238 : vector<1x8x128xf32> to vector<8x128xf32>
    %240 = vector.shape_cast %234 : vector<8x128xf32> to vector<1x8x128xf32>
    tpu.vector_store %arg6[%237, %c0_127, %c0_128], %240 {strides = array<i32>} : memref<8x8x128xf32, #tpu.memory_space<vmem>>, vector<1x8x128xf32>,
    %c5_i32 = arith.constant 5 : i32
    %c0_129 = arith.constant 0 : index
    %c0_130 = arith.constant 0 : index
    %241 = vector.load %arg7[%c0_129, %c0_130] : memref<8x128xf32, #tpu.memory_space<vmem>>, vector<8x128xf32>
    %c0_131 = arith.constant 0 : index
    %c0_132 = arith.constant 0 : index
    %242 = vector.load %arg4[%c0_131, %c0_132] : memref<128x512xf32, #tpu.memory_space<vmem>>, vector<128x512xf32>
    %cst_133 = arith.constant dense<0.000000e+00> : vector<8x512xf32>
    %243 = tpu.matmul %241, %242, %cst_133 {dimension_numbers = #tpu.dot_dimension_numbers<[1], [0], [0], [1], [0, 0, 1, 1], [], []>} : vector<8x128xf32>, vector<128x512xf32>, vector<8x512xf32> -> vector<8x512xf32>
    %c8_i32_134 = arith.constant 8 : i32
    %244 = arith.muli %c5_i32, %c8_i32_134 : i32
    %245 = tpu.assume_multiple %244, 8 : i32
    %246 = arith.index_cast %245 : i32 to index
    %c0_135 = arith.constant 0 : index
    %247 = vector.load %arg9[%246, %c0_135] : memref<64x512xf32, #tpu.memory_space<vmem>>, vector<8x512xf32>
    %248 = arith.addf %243, %247 : vector<8x512xf32>
    %249 = vector.extract_strided_slice %248 {offsets = [0, 0], sizes = [8, 128], strides = [1, 1]} : vector<8x512xf32> to vector<8x128xf32>
    %cst_136 = arith.constant 5.000000e-01 : f32
    %250 = vector.broadcast %cst_136 : f32 to vector<8x128xf32>
    %251 = arith.mulf %250, %249 : vector<8x128xf32>
    %252 = math.tanh %251 : vector<8x128xf32>
    %cst_137 = arith.constant 5.000000e-01 : f32
    %253 = vector.broadcast %cst_137 : f32 to vector<8x128xf32>
    %254 = arith.mulf %253, %252 : vector<8x128xf32>
    %cst_138 = arith.constant 5.000000e-01 : f32
    %255 = vector.broadcast %cst_138 : f32 to vector<8x128xf32>
    %256 = arith.addf %254, %255 : vector<8x128xf32>
    %257 = vector.extract_strided_slice %248 {offsets = [0, 128], sizes = [8, 128], strides = [1, 1]} : vector<8x512xf32> to vector<8x128xf32>
    %cst_139 = arith.constant 5.000000e-01 : f32
    %258 = vector.broadcast %cst_139 : f32 to vector<8x128xf32>
    %259 = arith.mulf %258, %257 : vector<8x128xf32>
    %260 = math.tanh %259 : vector<8x128xf32>
    %cst_140 = arith.constant 5.000000e-01 : f32
    %261 = vector.broadcast %cst_140 : f32 to vector<8x128xf32>
    %262 = arith.mulf %261, %260 : vector<8x128xf32>
    %cst_141 = arith.constant 5.000000e-01 : f32
    %263 = vector.broadcast %cst_141 : f32 to vector<8x128xf32>
    %264 = arith.addf %262, %263 : vector<8x128xf32>
    %265 = vector.extract_strided_slice %248 {offsets = [0, 256], sizes = [8, 128], strides = [1, 1]} : vector<8x512xf32> to vector<8x128xf32>
    %266 = math.tanh %265 : vector<8x128xf32>
    %267 = vector.extract_strided_slice %248 {offsets = [0, 384], sizes = [8, 128], strides = [1, 1]} : vector<8x512xf32> to vector<8x128xf32>
    %cst_142 = arith.constant 5.000000e-01 : f32
    %268 = vector.broadcast %cst_142 : f32 to vector<8x128xf32>
    %269 = arith.mulf %268, %267 : vector<8x128xf32>
    %270 = math.tanh %269 : vector<8x128xf32>
    %cst_143 = arith.constant 5.000000e-01 : f32
    %271 = vector.broadcast %cst_143 : f32 to vector<8x128xf32>
    %272 = arith.mulf %271, %270 : vector<8x128xf32>
    %cst_144 = arith.constant 5.000000e-01 : f32
    %273 = vector.broadcast %cst_144 : f32 to vector<8x128xf32>
    %274 = arith.addf %272, %273 : vector<8x128xf32>
    %c0_145 = arith.constant 0 : index
    %c0_146 = arith.constant 0 : index
    %275 = vector.load %arg8[%c0_145, %c0_146] : memref<8x128xf32, #tpu.memory_space<vmem>>, vector<8x128xf32>
    %276 = arith.mulf %264, %275 : vector<8x128xf32>
    %277 = arith.mulf %256, %266 : vector<8x128xf32>
    %278 = arith.addf %276, %277 : vector<8x128xf32>
    %279 = math.tanh %278 : vector<8x128xf32>
    %280 = arith.mulf %274, %279 : vector<8x128xf32>
    %c0_147 = arith.constant 0 : index
    %c0_148 = arith.constant 0 : index
    %281 = vector.load %arg8[%c0_147, %c0_148] : memref<8x128xf32, #tpu.memory_space<vmem>>, vector<8x128xf32>
    tpu.vector_store %arg8[%c0_147, %c0_148], %278 {strides = array<i32>} : memref<8x128xf32, #tpu.memory_space<vmem>>, vector<8x128xf32>,
    %c0_149 = arith.constant 0 : index
    %c0_150 = arith.constant 0 : index
    %282 = vector.load %arg7[%c0_149, %c0_150] : memref<8x128xf32, #tpu.memory_space<vmem>>, vector<8x128xf32>
    tpu.vector_store %arg7[%c0_149, %c0_150], %280 {strides = array<i32>} : memref<8x128xf32, #tpu.memory_space<vmem>>, vector<8x128xf32>,
    %283 = arith.index_cast %c5_i32 : i32 to index
    %c0_151 = arith.constant 0 : index
    %c0_152 = arith.constant 0 : index
    %284 = vector.load %arg6[%283, %c0_151, %c0_152] : memref<8x8x128xf32, #tpu.memory_space<vmem>>, vector<1x8x128xf32>
    %285 = vector.shape_cast %284 : vector<1x8x128xf32> to vector<8x128xf32>
    %286 = vector.shape_cast %280 : vector<8x128xf32> to vector<1x8x128xf32>
    tpu.vector_store %arg6[%283, %c0_151, %c0_152], %286 {strides = array<i32>} : memref<8x8x128xf32, #tpu.memory_space<vmem>>, vector<1x8x128xf32>,
    %c6_i32 = arith.constant 6 : i32
    %c0_153 = arith.constant 0 : index
    %c0_154 = arith.constant 0 : index
    %287 = vector.load %arg7[%c0_153, %c0_154] : memref<8x128xf32, #tpu.memory_space<vmem>>, vector<8x128xf32>
    %c0_155 = arith.constant 0 : index
    %c0_156 = arith.constant 0 : index
    %288 = vector.load %arg4[%c0_155, %c0_156] : memref<128x512xf32, #tpu.memory_space<vmem>>, vector<128x512xf32>
    %cst_157 = arith.constant dense<0.000000e+00> : vector<8x512xf32>
    %289 = tpu.matmul %287, %288, %cst_157 {dimension_numbers = #tpu.dot_dimension_numbers<[1], [0], [0], [1], [0, 0, 1, 1], [], []>} : vector<8x128xf32>, vector<128x512xf32>, vector<8x512xf32> -> vector<8x512xf32>
    %c8_i32_158 = arith.constant 8 : i32
    %290 = arith.muli %c6_i32, %c8_i32_158 : i32
    %291 = tpu.assume_multiple %290, 8 : i32
    %292 = arith.index_cast %291 : i32 to index
    %c0_159 = arith.constant 0 : index
    %293 = vector.load %arg9[%292, %c0_159] : memref<64x512xf32, #tpu.memory_space<vmem>>, vector<8x512xf32>
    %294 = arith.addf %289, %293 : vector<8x512xf32>
    %295 = vector.extract_strided_slice %294 {offsets = [0, 0], sizes = [8, 128], strides = [1, 1]} : vector<8x512xf32> to vector<8x128xf32>
    %cst_160 = arith.constant 5.000000e-01 : f32
    %296 = vector.broadcast %cst_160 : f32 to vector<8x128xf32>
    %297 = arith.mulf %296, %295 : vector<8x128xf32>
    %298 = math.tanh %297 : vector<8x128xf32>
    %cst_161 = arith.constant 5.000000e-01 : f32
    %299 = vector.broadcast %cst_161 : f32 to vector<8x128xf32>
    %300 = arith.mulf %299, %298 : vector<8x128xf32>
    %cst_162 = arith.constant 5.000000e-01 : f32
    %301 = vector.broadcast %cst_162 : f32 to vector<8x128xf32>
    %302 = arith.addf %300, %301 : vector<8x128xf32>
    %303 = vector.extract_strided_slice %294 {offsets = [0, 128], sizes = [8, 128], strides = [1, 1]} : vector<8x512xf32> to vector<8x128xf32>
    %cst_163 = arith.constant 5.000000e-01 : f32
    %304 = vector.broadcast %cst_163 : f32 to vector<8x128xf32>
    %305 = arith.mulf %304, %303 : vector<8x128xf32>
    %306 = math.tanh %305 : vector<8x128xf32>
    %cst_164 = arith.constant 5.000000e-01 : f32
    %307 = vector.broadcast %cst_164 : f32 to vector<8x128xf32>
    %308 = arith.mulf %307, %306 : vector<8x128xf32>
    %cst_165 = arith.constant 5.000000e-01 : f32
    %309 = vector.broadcast %cst_165 : f32 to vector<8x128xf32>
    %310 = arith.addf %308, %309 : vector<8x128xf32>
    %311 = vector.extract_strided_slice %294 {offsets = [0, 256], sizes = [8, 128], strides = [1, 1]} : vector<8x512xf32> to vector<8x128xf32>
    %312 = math.tanh %311 : vector<8x128xf32>
    %313 = vector.extract_strided_slice %294 {offsets = [0, 384], sizes = [8, 128], strides = [1, 1]} : vector<8x512xf32> to vector<8x128xf32>
    %cst_166 = arith.constant 5.000000e-01 : f32
    %314 = vector.broadcast %cst_166 : f32 to vector<8x128xf32>
    %315 = arith.mulf %314, %313 : vector<8x128xf32>
    %316 = math.tanh %315 : vector<8x128xf32>
    %cst_167 = arith.constant 5.000000e-01 : f32
    %317 = vector.broadcast %cst_167 : f32 to vector<8x128xf32>
    %318 = arith.mulf %317, %316 : vector<8x128xf32>
    %cst_168 = arith.constant 5.000000e-01 : f32
    %319 = vector.broadcast %cst_168 : f32 to vector<8x128xf32>
    %320 = arith.addf %318, %319 : vector<8x128xf32>
    %c0_169 = arith.constant 0 : index
    %c0_170 = arith.constant 0 : index
    %321 = vector.load %arg8[%c0_169, %c0_170] : memref<8x128xf32, #tpu.memory_space<vmem>>, vector<8x128xf32>
    %322 = arith.mulf %310, %321 : vector<8x128xf32>
    %323 = arith.mulf %302, %312 : vector<8x128xf32>
    %324 = arith.addf %322, %323 : vector<8x128xf32>
    %325 = math.tanh %324 : vector<8x128xf32>
    %326 = arith.mulf %320, %325 : vector<8x128xf32>
    %c0_171 = arith.constant 0 : index
    %c0_172 = arith.constant 0 : index
    %327 = vector.load %arg8[%c0_171, %c0_172] : memref<8x128xf32, #tpu.memory_space<vmem>>, vector<8x128xf32>
    tpu.vector_store %arg8[%c0_171, %c0_172], %324 {strides = array<i32>} : memref<8x128xf32, #tpu.memory_space<vmem>>, vector<8x128xf32>,
    %c0_173 = arith.constant 0 : index
    %c0_174 = arith.constant 0 : index
    %328 = vector.load %arg7[%c0_173, %c0_174] : memref<8x128xf32, #tpu.memory_space<vmem>>, vector<8x128xf32>
    tpu.vector_store %arg7[%c0_173, %c0_174], %326 {strides = array<i32>} : memref<8x128xf32, #tpu.memory_space<vmem>>, vector<8x128xf32>,
    %329 = arith.index_cast %c6_i32 : i32 to index
    %c0_175 = arith.constant 0 : index
    %c0_176 = arith.constant 0 : index
    %330 = vector.load %arg6[%329, %c0_175, %c0_176] : memref<8x8x128xf32, #tpu.memory_space<vmem>>, vector<1x8x128xf32>
    %331 = vector.shape_cast %330 : vector<1x8x128xf32> to vector<8x128xf32>
    %332 = vector.shape_cast %326 : vector<8x128xf32> to vector<1x8x128xf32>
    tpu.vector_store %arg6[%329, %c0_175, %c0_176], %332 {strides = array<i32>} : memref<8x8x128xf32, #tpu.memory_space<vmem>>, vector<1x8x128xf32>,
    %c7_i32 = arith.constant 7 : i32
    %c0_177 = arith.constant 0 : index
    %c0_178 = arith.constant 0 : index
    %333 = vector.load %arg7[%c0_177, %c0_178] : memref<8x128xf32, #tpu.memory_space<vmem>>, vector<8x128xf32>
    %c0_179 = arith.constant 0 : index
    %c0_180 = arith.constant 0 : index
    %334 = vector.load %arg4[%c0_179, %c0_180] : memref<128x512xf32, #tpu.memory_space<vmem>>, vector<128x512xf32>
    %cst_181 = arith.constant dense<0.000000e+00> : vector<8x512xf32>
    %335 = tpu.matmul %333, %334, %cst_181 {dimension_numbers = #tpu.dot_dimension_numbers<[1], [0], [0], [1], [0, 0, 1, 1], [], []>} : vector<8x128xf32>, vector<128x512xf32>, vector<8x512xf32> -> vector<8x512xf32>
    %c8_i32_182 = arith.constant 8 : i32
    %336 = arith.muli %c7_i32, %c8_i32_182 : i32
    %337 = tpu.assume_multiple %336, 8 : i32
    %338 = arith.index_cast %337 : i32 to index
    %c0_183 = arith.constant 0 : index
    %339 = vector.load %arg9[%338, %c0_183] : memref<64x512xf32, #tpu.memory_space<vmem>>, vector<8x512xf32>
    %340 = arith.addf %335, %339 : vector<8x512xf32>
    %341 = vector.extract_strided_slice %340 {offsets = [0, 0], sizes = [8, 128], strides = [1, 1]} : vector<8x512xf32> to vector<8x128xf32>
    %cst_184 = arith.constant 5.000000e-01 : f32
    %342 = vector.broadcast %cst_184 : f32 to vector<8x128xf32>
    %343 = arith.mulf %342, %341 : vector<8x128xf32>
    %344 = math.tanh %343 : vector<8x128xf32>
    %cst_185 = arith.constant 5.000000e-01 : f32
    %345 = vector.broadcast %cst_185 : f32 to vector<8x128xf32>
    %346 = arith.mulf %345, %344 : vector<8x128xf32>
    %cst_186 = arith.constant 5.000000e-01 : f32
    %347 = vector.broadcast %cst_186 : f32 to vector<8x128xf32>
    %348 = arith.addf %346, %347 : vector<8x128xf32>
    %349 = vector.extract_strided_slice %340 {offsets = [0, 128], sizes = [8, 128], strides = [1, 1]} : vector<8x512xf32> to vector<8x128xf32>
    %cst_187 = arith.constant 5.000000e-01 : f32
    %350 = vector.broadcast %cst_187 : f32 to vector<8x128xf32>
    %351 = arith.mulf %350, %349 : vector<8x128xf32>
    %352 = math.tanh %351 : vector<8x128xf32>
    %cst_188 = arith.constant 5.000000e-01 : f32
    %353 = vector.broadcast %cst_188 : f32 to vector<8x128xf32>
    %354 = arith.mulf %353, %352 : vector<8x128xf32>
    %cst_189 = arith.constant 5.000000e-01 : f32
    %355 = vector.broadcast %cst_189 : f32 to vector<8x128xf32>
    %356 = arith.addf %354, %355 : vector<8x128xf32>
    %357 = vector.extract_strided_slice %340 {offsets = [0, 256], sizes = [8, 128], strides = [1, 1]} : vector<8x512xf32> to vector<8x128xf32>
    %358 = math.tanh %357 : vector<8x128xf32>
    %359 = vector.extract_strided_slice %340 {offsets = [0, 384], sizes = [8, 128], strides = [1, 1]} : vector<8x512xf32> to vector<8x128xf32>
    %cst_190 = arith.constant 5.000000e-01 : f32
    %360 = vector.broadcast %cst_190 : f32 to vector<8x128xf32>
    %361 = arith.mulf %360, %359 : vector<8x128xf32>
    %362 = math.tanh %361 : vector<8x128xf32>
    %cst_191 = arith.constant 5.000000e-01 : f32
    %363 = vector.broadcast %cst_191 : f32 to vector<8x128xf32>
    %364 = arith.mulf %363, %362 : vector<8x128xf32>
    %cst_192 = arith.constant 5.000000e-01 : f32
    %365 = vector.broadcast %cst_192 : f32 to vector<8x128xf32>
    %366 = arith.addf %364, %365 : vector<8x128xf32>
    %c0_193 = arith.constant 0 : index
    %c0_194 = arith.constant 0 : index
    %367 = vector.load %arg8[%c0_193, %c0_194] : memref<8x128xf32, #tpu.memory_space<vmem>>, vector<8x128xf32>
    %368 = arith.mulf %356, %367 : vector<8x128xf32>
    %369 = arith.mulf %348, %358 : vector<8x128xf32>
    %370 = arith.addf %368, %369 : vector<8x128xf32>
    %371 = math.tanh %370 : vector<8x128xf32>
    %372 = arith.mulf %366, %371 : vector<8x128xf32>
    %c0_195 = arith.constant 0 : index
    %c0_196 = arith.constant 0 : index
    %373 = vector.load %arg8[%c0_195, %c0_196] : memref<8x128xf32, #tpu.memory_space<vmem>>, vector<8x128xf32>
    tpu.vector_store %arg8[%c0_195, %c0_196], %370 {strides = array<i32>} : memref<8x128xf32, #tpu.memory_space<vmem>>, vector<8x128xf32>,
    %c0_197 = arith.constant 0 : index
    %c0_198 = arith.constant 0 : index
    %374 = vector.load %arg7[%c0_197, %c0_198] : memref<8x128xf32, #tpu.memory_space<vmem>>, vector<8x128xf32>
    tpu.vector_store %arg7[%c0_197, %c0_198], %372 {strides = array<i32>} : memref<8x128xf32, #tpu.memory_space<vmem>>, vector<8x128xf32>,
    %375 = arith.index_cast %c7_i32 : i32 to index
    %c0_199 = arith.constant 0 : index
    %c0_200 = arith.constant 0 : index
    %376 = vector.load %arg6[%375, %c0_199, %c0_200] : memref<8x8x128xf32, #tpu.memory_space<vmem>>, vector<1x8x128xf32>
    %377 = vector.shape_cast %376 : vector<1x8x128xf32> to vector<8x128xf32>
    %378 = vector.shape_cast %372 : vector<8x128xf32> to vector<1x8x128xf32>
    tpu.vector_store %arg6[%375, %c0_199, %c0_200], %378 {strides = array<i32>} : memref<8x8x128xf32, #tpu.memory_space<vmem>>, vector<1x8x128xf32>,
    %c8_i32_201 = arith.constant 8 : i32
    return
  }
  func.func @transform_0(%arg0: i32, %arg1: i32) -> (i32, i32, i32) {
    %c0_i32 = arith.constant 0 : i32
    %c0_i32_0 = arith.constant 0 : i32
    return %arg1, %arg0, %c0_i32 : i32, i32, i32
  }
  func.func @transform_1(%arg0: i32, %arg1: i32) -> (i32, i32) {
    %c0_i32 = arith.constant 0 : i32
    %c0_i32_0 = arith.constant 0 : i32
    %c0_i32_1 = arith.constant 0 : i32
    return %c0_i32, %c0_i32_0 : i32, i32
  }
  func.func @transform_2(%arg0: i32, %arg1: i32) -> (i32, i32) {
    %c0_i32 = arith.constant 0 : i32
    %c0_i32_0 = arith.constant 0 : i32
    %c0_i32_1 = arith.constant 0 : i32
    return %c0_i32, %c0_i32_0 : i32, i32
  }
  func.func @transform_3(%arg0: i32, %arg1: i32) -> (i32, i32) {
    %c0_i32 = arith.constant 0 : i32
    %c0_i32_0 = arith.constant 0 : i32
    %c0_i32_1 = arith.constant 0 : i32
    return %c0_i32, %c0_i32_0 : i32, i32
  }
  func.func @transform_4(%arg0: i32, %arg1: i32) -> (i32, i32, i32) {
    %c0_i32 = arith.constant 0 : i32
    %c0_i32_0 = arith.constant 0 : i32
    return %arg1, %arg0, %c0_i32 : i32, i32, i32
  }
}

module attributes {stable_mosaic.version = 11 : i64} {
  func.func @_lstm_chunk_kernel_gx(%arg0: i32, %arg1: i32, %arg2: memref<8x8x512xf32, #tpu.memory_space<vmem>>, %arg3: memref<128x512xf32, #tpu.memory_space<vmem>>, %arg4: memref<8x8x128xf32, #tpu.memory_space<vmem>>, %arg5: memref<8x128xf32, #tpu.memory_space<vmem>>, %arg6: memref<8x128xf32, #tpu.memory_space<vmem>>) attributes {dimension_semantics = [#tpu.dimension_semantics<parallel>, #tpu.dimension_semantics<arbitrary>], iteration_bounds = array<i64: 1, 1>, scalar_prefetch = 0 : i64, scratch_operands = 2 : i64, tpu.core_type = #tpu.core_type<tc>, window_params = [{transform_indices = @transform_0, window_bounds = array<i64: 8, 8, 512>}, {pipeline_mode = #tpu.pipeline_mode<synchronous>, transform_indices = @transform_1, window_bounds = array<i64: 128, 512>}, {transform_indices = @transform_2, window_bounds = array<i64: 8, 8, 128>}]} {
    %c0_i32 = arith.constant 0 : i32
    %0 = arith.cmpi eq, %arg1, %c0_i32 : i32
    %1 = arith.extui %0 : i1 to i32
    %c0_i32_0 = arith.constant 0 : i32
    %2 = arith.cmpi ne, %1, %c0_i32_0 : i32
    scf.if %2 {
      %cst_192 = arith.constant 0.000000e+00 : f32
      %363 = vector.broadcast %cst_192 : f32 to vector<8x128xf32>
      %c0_193 = arith.constant 0 : index
      %c0_194 = arith.constant 0 : index
      %364 = vector.load %arg5[%c0_193, %c0_194] : memref<8x128xf32, #tpu.memory_space<vmem>>, vector<8x128xf32>
      tpu.vector_store %arg5[%c0_193, %c0_194], %363 {strides = array<i32>} : memref<8x128xf32, #tpu.memory_space<vmem>>, vector<8x128xf32>,
      %cst_195 = arith.constant 0.000000e+00 : f32
      %365 = vector.broadcast %cst_195 : f32 to vector<8x128xf32>
      %c0_196 = arith.constant 0 : index
      %c0_197 = arith.constant 0 : index
      %366 = vector.load %arg6[%c0_196, %c0_197] : memref<8x128xf32, #tpu.memory_space<vmem>>, vector<8x128xf32>
      tpu.vector_store %arg6[%c0_196, %c0_197], %365 {strides = array<i32>} : memref<8x128xf32, #tpu.memory_space<vmem>>, vector<8x128xf32>,
    } else {
    }
    %c0_i32_1 = arith.constant 0 : i32
    %c0 = arith.constant 0 : index
    %c0_2 = arith.constant 0 : index
    %3 = vector.load %arg5[%c0, %c0_2] : memref<8x128xf32, #tpu.memory_space<vmem>>, vector<8x128xf32>
    %c0_3 = arith.constant 0 : index
    %c0_4 = arith.constant 0 : index
    %4 = vector.load %arg3[%c0_3, %c0_4] : memref<128x512xf32, #tpu.memory_space<vmem>>, vector<128x512xf32>
    %cst = arith.constant dense<0.000000e+00> : vector<8x512xf32>
    %5 = tpu.matmul %3, %4, %cst {dimension_numbers = #tpu.dot_dimension_numbers<[1], [0], [0], [1], [0, 0, 1, 1], [], []>} : vector<8x128xf32>, vector<128x512xf32>, vector<8x512xf32> -> vector<8x512xf32>
    %6 = arith.index_cast %c0_i32_1 : i32 to index
    %c0_5 = arith.constant 0 : index
    %c0_6 = arith.constant 0 : index
    %7 = vector.load %arg2[%6, %c0_5, %c0_6] : memref<8x8x512xf32, #tpu.memory_space<vmem>>, vector<1x8x512xf32>
    %8 = vector.shape_cast %7 : vector<1x8x512xf32> to vector<8x512xf32>
    %9 = arith.addf %5, %8 : vector<8x512xf32>
    %10 = vector.extract_strided_slice %9 {offsets = [0, 0], sizes = [8, 128], strides = [1, 1]} : vector<8x512xf32> to vector<8x128xf32>
    %cst_7 = arith.constant 5.000000e-01 : f32
    %11 = vector.broadcast %cst_7 : f32 to vector<8x128xf32>
    %12 = arith.mulf %11, %10 : vector<8x128xf32>
    %13 = math.tanh %12 : vector<8x128xf32>
    %cst_8 = arith.constant 5.000000e-01 : f32
    %14 = vector.broadcast %cst_8 : f32 to vector<8x128xf32>
    %15 = arith.mulf %14, %13 : vector<8x128xf32>
    %cst_9 = arith.constant 5.000000e-01 : f32
    %16 = vector.broadcast %cst_9 : f32 to vector<8x128xf32>
    %17 = arith.addf %15, %16 : vector<8x128xf32>
    %18 = vector.extract_strided_slice %9 {offsets = [0, 128], sizes = [8, 128], strides = [1, 1]} : vector<8x512xf32> to vector<8x128xf32>
    %cst_10 = arith.constant 5.000000e-01 : f32
    %19 = vector.broadcast %cst_10 : f32 to vector<8x128xf32>
    %20 = arith.mulf %19, %18 : vector<8x128xf32>
    %21 = math.tanh %20 : vector<8x128xf32>
    %cst_11 = arith.constant 5.000000e-01 : f32
    %22 = vector.broadcast %cst_11 : f32 to vector<8x128xf32>
    %23 = arith.mulf %22, %21 : vector<8x128xf32>
    %cst_12 = arith.constant 5.000000e-01 : f32
    %24 = vector.broadcast %cst_12 : f32 to vector<8x128xf32>
    %25 = arith.addf %23, %24 : vector<8x128xf32>
    %26 = vector.extract_strided_slice %9 {offsets = [0, 256], sizes = [8, 128], strides = [1, 1]} : vector<8x512xf32> to vector<8x128xf32>
    %27 = math.tanh %26 : vector<8x128xf32>
    %28 = vector.extract_strided_slice %9 {offsets = [0, 384], sizes = [8, 128], strides = [1, 1]} : vector<8x512xf32> to vector<8x128xf32>
    %cst_13 = arith.constant 5.000000e-01 : f32
    %29 = vector.broadcast %cst_13 : f32 to vector<8x128xf32>
    %30 = arith.mulf %29, %28 : vector<8x128xf32>
    %31 = math.tanh %30 : vector<8x128xf32>
    %cst_14 = arith.constant 5.000000e-01 : f32
    %32 = vector.broadcast %cst_14 : f32 to vector<8x128xf32>
    %33 = arith.mulf %32, %31 : vector<8x128xf32>
    %cst_15 = arith.constant 5.000000e-01 : f32
    %34 = vector.broadcast %cst_15 : f32 to vector<8x128xf32>
    %35 = arith.addf %33, %34 : vector<8x128xf32>
    %c0_16 = arith.constant 0 : index
    %c0_17 = arith.constant 0 : index
    %36 = vector.load %arg6[%c0_16, %c0_17] : memref<8x128xf32, #tpu.memory_space<vmem>>, vector<8x128xf32>
    %37 = arith.mulf %25, %36 : vector<8x128xf32>
    %38 = arith.mulf %17, %27 : vector<8x128xf32>
    %39 = arith.addf %37, %38 : vector<8x128xf32>
    %40 = math.tanh %39 : vector<8x128xf32>
    %41 = arith.mulf %35, %40 : vector<8x128xf32>
    %c0_18 = arith.constant 0 : index
    %c0_19 = arith.constant 0 : index
    %42 = vector.load %arg6[%c0_18, %c0_19] : memref<8x128xf32, #tpu.memory_space<vmem>>, vector<8x128xf32>
    tpu.vector_store %arg6[%c0_18, %c0_19], %39 {strides = array<i32>} : memref<8x128xf32, #tpu.memory_space<vmem>>, vector<8x128xf32>,
    %c0_20 = arith.constant 0 : index
    %c0_21 = arith.constant 0 : index
    %43 = vector.load %arg5[%c0_20, %c0_21] : memref<8x128xf32, #tpu.memory_space<vmem>>, vector<8x128xf32>
    tpu.vector_store %arg5[%c0_20, %c0_21], %41 {strides = array<i32>} : memref<8x128xf32, #tpu.memory_space<vmem>>, vector<8x128xf32>,
    %44 = arith.index_cast %c0_i32_1 : i32 to index
    %c0_22 = arith.constant 0 : index
    %c0_23 = arith.constant 0 : index
    %45 = vector.load %arg4[%44, %c0_22, %c0_23] : memref<8x8x128xf32, #tpu.memory_space<vmem>>, vector<1x8x128xf32>
    %46 = vector.shape_cast %45 : vector<1x8x128xf32> to vector<8x128xf32>
    %47 = vector.shape_cast %41 : vector<8x128xf32> to vector<1x8x128xf32>
    tpu.vector_store %arg4[%44, %c0_22, %c0_23], %47 {strides = array<i32>} : memref<8x8x128xf32, #tpu.memory_space<vmem>>, vector<1x8x128xf32>,
    %c1_i32 = arith.constant 1 : i32
    %c0_24 = arith.constant 0 : index
    %c0_25 = arith.constant 0 : index
    %48 = vector.load %arg5[%c0_24, %c0_25] : memref<8x128xf32, #tpu.memory_space<vmem>>, vector<8x128xf32>
    %c0_26 = arith.constant 0 : index
    %c0_27 = arith.constant 0 : index
    %49 = vector.load %arg3[%c0_26, %c0_27] : memref<128x512xf32, #tpu.memory_space<vmem>>, vector<128x512xf32>
    %cst_28 = arith.constant dense<0.000000e+00> : vector<8x512xf32>
    %50 = tpu.matmul %48, %49, %cst_28 {dimension_numbers = #tpu.dot_dimension_numbers<[1], [0], [0], [1], [0, 0, 1, 1], [], []>} : vector<8x128xf32>, vector<128x512xf32>, vector<8x512xf32> -> vector<8x512xf32>
    %51 = arith.index_cast %c1_i32 : i32 to index
    %c0_29 = arith.constant 0 : index
    %c0_30 = arith.constant 0 : index
    %52 = vector.load %arg2[%51, %c0_29, %c0_30] : memref<8x8x512xf32, #tpu.memory_space<vmem>>, vector<1x8x512xf32>
    %53 = vector.shape_cast %52 : vector<1x8x512xf32> to vector<8x512xf32>
    %54 = arith.addf %50, %53 : vector<8x512xf32>
    %55 = vector.extract_strided_slice %54 {offsets = [0, 0], sizes = [8, 128], strides = [1, 1]} : vector<8x512xf32> to vector<8x128xf32>
    %cst_31 = arith.constant 5.000000e-01 : f32
    %56 = vector.broadcast %cst_31 : f32 to vector<8x128xf32>
    %57 = arith.mulf %56, %55 : vector<8x128xf32>
    %58 = math.tanh %57 : vector<8x128xf32>
    %cst_32 = arith.constant 5.000000e-01 : f32
    %59 = vector.broadcast %cst_32 : f32 to vector<8x128xf32>
    %60 = arith.mulf %59, %58 : vector<8x128xf32>
    %cst_33 = arith.constant 5.000000e-01 : f32
    %61 = vector.broadcast %cst_33 : f32 to vector<8x128xf32>
    %62 = arith.addf %60, %61 : vector<8x128xf32>
    %63 = vector.extract_strided_slice %54 {offsets = [0, 128], sizes = [8, 128], strides = [1, 1]} : vector<8x512xf32> to vector<8x128xf32>
    %cst_34 = arith.constant 5.000000e-01 : f32
    %64 = vector.broadcast %cst_34 : f32 to vector<8x128xf32>
    %65 = arith.mulf %64, %63 : vector<8x128xf32>
    %66 = math.tanh %65 : vector<8x128xf32>
    %cst_35 = arith.constant 5.000000e-01 : f32
    %67 = vector.broadcast %cst_35 : f32 to vector<8x128xf32>
    %68 = arith.mulf %67, %66 : vector<8x128xf32>
    %cst_36 = arith.constant 5.000000e-01 : f32
    %69 = vector.broadcast %cst_36 : f32 to vector<8x128xf32>
    %70 = arith.addf %68, %69 : vector<8x128xf32>
    %71 = vector.extract_strided_slice %54 {offsets = [0, 256], sizes = [8, 128], strides = [1, 1]} : vector<8x512xf32> to vector<8x128xf32>
    %72 = math.tanh %71 : vector<8x128xf32>
    %73 = vector.extract_strided_slice %54 {offsets = [0, 384], sizes = [8, 128], strides = [1, 1]} : vector<8x512xf32> to vector<8x128xf32>
    %cst_37 = arith.constant 5.000000e-01 : f32
    %74 = vector.broadcast %cst_37 : f32 to vector<8x128xf32>
    %75 = arith.mulf %74, %73 : vector<8x128xf32>
    %76 = math.tanh %75 : vector<8x128xf32>
    %cst_38 = arith.constant 5.000000e-01 : f32
    %77 = vector.broadcast %cst_38 : f32 to vector<8x128xf32>
    %78 = arith.mulf %77, %76 : vector<8x128xf32>
    %cst_39 = arith.constant 5.000000e-01 : f32
    %79 = vector.broadcast %cst_39 : f32 to vector<8x128xf32>
    %80 = arith.addf %78, %79 : vector<8x128xf32>
    %c0_40 = arith.constant 0 : index
    %c0_41 = arith.constant 0 : index
    %81 = vector.load %arg6[%c0_40, %c0_41] : memref<8x128xf32, #tpu.memory_space<vmem>>, vector<8x128xf32>
    %82 = arith.mulf %70, %81 : vector<8x128xf32>
    %83 = arith.mulf %62, %72 : vector<8x128xf32>
    %84 = arith.addf %82, %83 : vector<8x128xf32>
    %85 = math.tanh %84 : vector<8x128xf32>
    %86 = arith.mulf %80, %85 : vector<8x128xf32>
    %c0_42 = arith.constant 0 : index
    %c0_43 = arith.constant 0 : index
    %87 = vector.load %arg6[%c0_42, %c0_43] : memref<8x128xf32, #tpu.memory_space<vmem>>, vector<8x128xf32>
    tpu.vector_store %arg6[%c0_42, %c0_43], %84 {strides = array<i32>} : memref<8x128xf32, #tpu.memory_space<vmem>>, vector<8x128xf32>,
    %c0_44 = arith.constant 0 : index
    %c0_45 = arith.constant 0 : index
    %88 = vector.load %arg5[%c0_44, %c0_45] : memref<8x128xf32, #tpu.memory_space<vmem>>, vector<8x128xf32>
    tpu.vector_store %arg5[%c0_44, %c0_45], %86 {strides = array<i32>} : memref<8x128xf32, #tpu.memory_space<vmem>>, vector<8x128xf32>,
    %89 = arith.index_cast %c1_i32 : i32 to index
    %c0_46 = arith.constant 0 : index
    %c0_47 = arith.constant 0 : index
    %90 = vector.load %arg4[%89, %c0_46, %c0_47] : memref<8x8x128xf32, #tpu.memory_space<vmem>>, vector<1x8x128xf32>
    %91 = vector.shape_cast %90 : vector<1x8x128xf32> to vector<8x128xf32>
    %92 = vector.shape_cast %86 : vector<8x128xf32> to vector<1x8x128xf32>
    tpu.vector_store %arg4[%89, %c0_46, %c0_47], %92 {strides = array<i32>} : memref<8x8x128xf32, #tpu.memory_space<vmem>>, vector<1x8x128xf32>,
    %c2_i32 = arith.constant 2 : i32
    %c0_48 = arith.constant 0 : index
    %c0_49 = arith.constant 0 : index
    %93 = vector.load %arg5[%c0_48, %c0_49] : memref<8x128xf32, #tpu.memory_space<vmem>>, vector<8x128xf32>
    %c0_50 = arith.constant 0 : index
    %c0_51 = arith.constant 0 : index
    %94 = vector.load %arg3[%c0_50, %c0_51] : memref<128x512xf32, #tpu.memory_space<vmem>>, vector<128x512xf32>
    %cst_52 = arith.constant dense<0.000000e+00> : vector<8x512xf32>
    %95 = tpu.matmul %93, %94, %cst_52 {dimension_numbers = #tpu.dot_dimension_numbers<[1], [0], [0], [1], [0, 0, 1, 1], [], []>} : vector<8x128xf32>, vector<128x512xf32>, vector<8x512xf32> -> vector<8x512xf32>
    %96 = arith.index_cast %c2_i32 : i32 to index
    %c0_53 = arith.constant 0 : index
    %c0_54 = arith.constant 0 : index
    %97 = vector.load %arg2[%96, %c0_53, %c0_54] : memref<8x8x512xf32, #tpu.memory_space<vmem>>, vector<1x8x512xf32>
    %98 = vector.shape_cast %97 : vector<1x8x512xf32> to vector<8x512xf32>
    %99 = arith.addf %95, %98 : vector<8x512xf32>
    %100 = vector.extract_strided_slice %99 {offsets = [0, 0], sizes = [8, 128], strides = [1, 1]} : vector<8x512xf32> to vector<8x128xf32>
    %cst_55 = arith.constant 5.000000e-01 : f32
    %101 = vector.broadcast %cst_55 : f32 to vector<8x128xf32>
    %102 = arith.mulf %101, %100 : vector<8x128xf32>
    %103 = math.tanh %102 : vector<8x128xf32>
    %cst_56 = arith.constant 5.000000e-01 : f32
    %104 = vector.broadcast %cst_56 : f32 to vector<8x128xf32>
    %105 = arith.mulf %104, %103 : vector<8x128xf32>
    %cst_57 = arith.constant 5.000000e-01 : f32
    %106 = vector.broadcast %cst_57 : f32 to vector<8x128xf32>
    %107 = arith.addf %105, %106 : vector<8x128xf32>
    %108 = vector.extract_strided_slice %99 {offsets = [0, 128], sizes = [8, 128], strides = [1, 1]} : vector<8x512xf32> to vector<8x128xf32>
    %cst_58 = arith.constant 5.000000e-01 : f32
    %109 = vector.broadcast %cst_58 : f32 to vector<8x128xf32>
    %110 = arith.mulf %109, %108 : vector<8x128xf32>
    %111 = math.tanh %110 : vector<8x128xf32>
    %cst_59 = arith.constant 5.000000e-01 : f32
    %112 = vector.broadcast %cst_59 : f32 to vector<8x128xf32>
    %113 = arith.mulf %112, %111 : vector<8x128xf32>
    %cst_60 = arith.constant 5.000000e-01 : f32
    %114 = vector.broadcast %cst_60 : f32 to vector<8x128xf32>
    %115 = arith.addf %113, %114 : vector<8x128xf32>
    %116 = vector.extract_strided_slice %99 {offsets = [0, 256], sizes = [8, 128], strides = [1, 1]} : vector<8x512xf32> to vector<8x128xf32>
    %117 = math.tanh %116 : vector<8x128xf32>
    %118 = vector.extract_strided_slice %99 {offsets = [0, 384], sizes = [8, 128], strides = [1, 1]} : vector<8x512xf32> to vector<8x128xf32>
    %cst_61 = arith.constant 5.000000e-01 : f32
    %119 = vector.broadcast %cst_61 : f32 to vector<8x128xf32>
    %120 = arith.mulf %119, %118 : vector<8x128xf32>
    %121 = math.tanh %120 : vector<8x128xf32>
    %cst_62 = arith.constant 5.000000e-01 : f32
    %122 = vector.broadcast %cst_62 : f32 to vector<8x128xf32>
    %123 = arith.mulf %122, %121 : vector<8x128xf32>
    %cst_63 = arith.constant 5.000000e-01 : f32
    %124 = vector.broadcast %cst_63 : f32 to vector<8x128xf32>
    %125 = arith.addf %123, %124 : vector<8x128xf32>
    %c0_64 = arith.constant 0 : index
    %c0_65 = arith.constant 0 : index
    %126 = vector.load %arg6[%c0_64, %c0_65] : memref<8x128xf32, #tpu.memory_space<vmem>>, vector<8x128xf32>
    %127 = arith.mulf %115, %126 : vector<8x128xf32>
    %128 = arith.mulf %107, %117 : vector<8x128xf32>
    %129 = arith.addf %127, %128 : vector<8x128xf32>
    %130 = math.tanh %129 : vector<8x128xf32>
    %131 = arith.mulf %125, %130 : vector<8x128xf32>
    %c0_66 = arith.constant 0 : index
    %c0_67 = arith.constant 0 : index
    %132 = vector.load %arg6[%c0_66, %c0_67] : memref<8x128xf32, #tpu.memory_space<vmem>>, vector<8x128xf32>
    tpu.vector_store %arg6[%c0_66, %c0_67], %129 {strides = array<i32>} : memref<8x128xf32, #tpu.memory_space<vmem>>, vector<8x128xf32>,
    %c0_68 = arith.constant 0 : index
    %c0_69 = arith.constant 0 : index
    %133 = vector.load %arg5[%c0_68, %c0_69] : memref<8x128xf32, #tpu.memory_space<vmem>>, vector<8x128xf32>
    tpu.vector_store %arg5[%c0_68, %c0_69], %131 {strides = array<i32>} : memref<8x128xf32, #tpu.memory_space<vmem>>, vector<8x128xf32>,
    %134 = arith.index_cast %c2_i32 : i32 to index
    %c0_70 = arith.constant 0 : index
    %c0_71 = arith.constant 0 : index
    %135 = vector.load %arg4[%134, %c0_70, %c0_71] : memref<8x8x128xf32, #tpu.memory_space<vmem>>, vector<1x8x128xf32>
    %136 = vector.shape_cast %135 : vector<1x8x128xf32> to vector<8x128xf32>
    %137 = vector.shape_cast %131 : vector<8x128xf32> to vector<1x8x128xf32>
    tpu.vector_store %arg4[%134, %c0_70, %c0_71], %137 {strides = array<i32>} : memref<8x8x128xf32, #tpu.memory_space<vmem>>, vector<1x8x128xf32>,
    %c3_i32 = arith.constant 3 : i32
    %c0_72 = arith.constant 0 : index
    %c0_73 = arith.constant 0 : index
    %138 = vector.load %arg5[%c0_72, %c0_73] : memref<8x128xf32, #tpu.memory_space<vmem>>, vector<8x128xf32>
    %c0_74 = arith.constant 0 : index
    %c0_75 = arith.constant 0 : index
    %139 = vector.load %arg3[%c0_74, %c0_75] : memref<128x512xf32, #tpu.memory_space<vmem>>, vector<128x512xf32>
    %cst_76 = arith.constant dense<0.000000e+00> : vector<8x512xf32>
    %140 = tpu.matmul %138, %139, %cst_76 {dimension_numbers = #tpu.dot_dimension_numbers<[1], [0], [0], [1], [0, 0, 1, 1], [], []>} : vector<8x128xf32>, vector<128x512xf32>, vector<8x512xf32> -> vector<8x512xf32>
    %141 = arith.index_cast %c3_i32 : i32 to index
    %c0_77 = arith.constant 0 : index
    %c0_78 = arith.constant 0 : index
    %142 = vector.load %arg2[%141, %c0_77, %c0_78] : memref<8x8x512xf32, #tpu.memory_space<vmem>>, vector<1x8x512xf32>
    %143 = vector.shape_cast %142 : vector<1x8x512xf32> to vector<8x512xf32>
    %144 = arith.addf %140, %143 : vector<8x512xf32>
    %145 = vector.extract_strided_slice %144 {offsets = [0, 0], sizes = [8, 128], strides = [1, 1]} : vector<8x512xf32> to vector<8x128xf32>
    %cst_79 = arith.constant 5.000000e-01 : f32
    %146 = vector.broadcast %cst_79 : f32 to vector<8x128xf32>
    %147 = arith.mulf %146, %145 : vector<8x128xf32>
    %148 = math.tanh %147 : vector<8x128xf32>
    %cst_80 = arith.constant 5.000000e-01 : f32
    %149 = vector.broadcast %cst_80 : f32 to vector<8x128xf32>
    %150 = arith.mulf %149, %148 : vector<8x128xf32>
    %cst_81 = arith.constant 5.000000e-01 : f32
    %151 = vector.broadcast %cst_81 : f32 to vector<8x128xf32>
    %152 = arith.addf %150, %151 : vector<8x128xf32>
    %153 = vector.extract_strided_slice %144 {offsets = [0, 128], sizes = [8, 128], strides = [1, 1]} : vector<8x512xf32> to vector<8x128xf32>
    %cst_82 = arith.constant 5.000000e-01 : f32
    %154 = vector.broadcast %cst_82 : f32 to vector<8x128xf32>
    %155 = arith.mulf %154, %153 : vector<8x128xf32>
    %156 = math.tanh %155 : vector<8x128xf32>
    %cst_83 = arith.constant 5.000000e-01 : f32
    %157 = vector.broadcast %cst_83 : f32 to vector<8x128xf32>
    %158 = arith.mulf %157, %156 : vector<8x128xf32>
    %cst_84 = arith.constant 5.000000e-01 : f32
    %159 = vector.broadcast %cst_84 : f32 to vector<8x128xf32>
    %160 = arith.addf %158, %159 : vector<8x128xf32>
    %161 = vector.extract_strided_slice %144 {offsets = [0, 256], sizes = [8, 128], strides = [1, 1]} : vector<8x512xf32> to vector<8x128xf32>
    %162 = math.tanh %161 : vector<8x128xf32>
    %163 = vector.extract_strided_slice %144 {offsets = [0, 384], sizes = [8, 128], strides = [1, 1]} : vector<8x512xf32> to vector<8x128xf32>
    %cst_85 = arith.constant 5.000000e-01 : f32
    %164 = vector.broadcast %cst_85 : f32 to vector<8x128xf32>
    %165 = arith.mulf %164, %163 : vector<8x128xf32>
    %166 = math.tanh %165 : vector<8x128xf32>
    %cst_86 = arith.constant 5.000000e-01 : f32
    %167 = vector.broadcast %cst_86 : f32 to vector<8x128xf32>
    %168 = arith.mulf %167, %166 : vector<8x128xf32>
    %cst_87 = arith.constant 5.000000e-01 : f32
    %169 = vector.broadcast %cst_87 : f32 to vector<8x128xf32>
    %170 = arith.addf %168, %169 : vector<8x128xf32>
    %c0_88 = arith.constant 0 : index
    %c0_89 = arith.constant 0 : index
    %171 = vector.load %arg6[%c0_88, %c0_89] : memref<8x128xf32, #tpu.memory_space<vmem>>, vector<8x128xf32>
    %172 = arith.mulf %160, %171 : vector<8x128xf32>
    %173 = arith.mulf %152, %162 : vector<8x128xf32>
    %174 = arith.addf %172, %173 : vector<8x128xf32>
    %175 = math.tanh %174 : vector<8x128xf32>
    %176 = arith.mulf %170, %175 : vector<8x128xf32>
    %c0_90 = arith.constant 0 : index
    %c0_91 = arith.constant 0 : index
    %177 = vector.load %arg6[%c0_90, %c0_91] : memref<8x128xf32, #tpu.memory_space<vmem>>, vector<8x128xf32>
    tpu.vector_store %arg6[%c0_90, %c0_91], %174 {strides = array<i32>} : memref<8x128xf32, #tpu.memory_space<vmem>>, vector<8x128xf32>,
    %c0_92 = arith.constant 0 : index
    %c0_93 = arith.constant 0 : index
    %178 = vector.load %arg5[%c0_92, %c0_93] : memref<8x128xf32, #tpu.memory_space<vmem>>, vector<8x128xf32>
    tpu.vector_store %arg5[%c0_92, %c0_93], %176 {strides = array<i32>} : memref<8x128xf32, #tpu.memory_space<vmem>>, vector<8x128xf32>,
    %179 = arith.index_cast %c3_i32 : i32 to index
    %c0_94 = arith.constant 0 : index
    %c0_95 = arith.constant 0 : index
    %180 = vector.load %arg4[%179, %c0_94, %c0_95] : memref<8x8x128xf32, #tpu.memory_space<vmem>>, vector<1x8x128xf32>
    %181 = vector.shape_cast %180 : vector<1x8x128xf32> to vector<8x128xf32>
    %182 = vector.shape_cast %176 : vector<8x128xf32> to vector<1x8x128xf32>
    tpu.vector_store %arg4[%179, %c0_94, %c0_95], %182 {strides = array<i32>} : memref<8x8x128xf32, #tpu.memory_space<vmem>>, vector<1x8x128xf32>,
    %c4_i32 = arith.constant 4 : i32
    %c0_96 = arith.constant 0 : index
    %c0_97 = arith.constant 0 : index
    %183 = vector.load %arg5[%c0_96, %c0_97] : memref<8x128xf32, #tpu.memory_space<vmem>>, vector<8x128xf32>
    %c0_98 = arith.constant 0 : index
    %c0_99 = arith.constant 0 : index
    %184 = vector.load %arg3[%c0_98, %c0_99] : memref<128x512xf32, #tpu.memory_space<vmem>>, vector<128x512xf32>
    %cst_100 = arith.constant dense<0.000000e+00> : vector<8x512xf32>
    %185 = tpu.matmul %183, %184, %cst_100 {dimension_numbers = #tpu.dot_dimension_numbers<[1], [0], [0], [1], [0, 0, 1, 1], [], []>} : vector<8x128xf32>, vector<128x512xf32>, vector<8x512xf32> -> vector<8x512xf32>
    %186 = arith.index_cast %c4_i32 : i32 to index
    %c0_101 = arith.constant 0 : index
    %c0_102 = arith.constant 0 : index
    %187 = vector.load %arg2[%186, %c0_101, %c0_102] : memref<8x8x512xf32, #tpu.memory_space<vmem>>, vector<1x8x512xf32>
    %188 = vector.shape_cast %187 : vector<1x8x512xf32> to vector<8x512xf32>
    %189 = arith.addf %185, %188 : vector<8x512xf32>
    %190 = vector.extract_strided_slice %189 {offsets = [0, 0], sizes = [8, 128], strides = [1, 1]} : vector<8x512xf32> to vector<8x128xf32>
    %cst_103 = arith.constant 5.000000e-01 : f32
    %191 = vector.broadcast %cst_103 : f32 to vector<8x128xf32>
    %192 = arith.mulf %191, %190 : vector<8x128xf32>
    %193 = math.tanh %192 : vector<8x128xf32>
    %cst_104 = arith.constant 5.000000e-01 : f32
    %194 = vector.broadcast %cst_104 : f32 to vector<8x128xf32>
    %195 = arith.mulf %194, %193 : vector<8x128xf32>
    %cst_105 = arith.constant 5.000000e-01 : f32
    %196 = vector.broadcast %cst_105 : f32 to vector<8x128xf32>
    %197 = arith.addf %195, %196 : vector<8x128xf32>
    %198 = vector.extract_strided_slice %189 {offsets = [0, 128], sizes = [8, 128], strides = [1, 1]} : vector<8x512xf32> to vector<8x128xf32>
    %cst_106 = arith.constant 5.000000e-01 : f32
    %199 = vector.broadcast %cst_106 : f32 to vector<8x128xf32>
    %200 = arith.mulf %199, %198 : vector<8x128xf32>
    %201 = math.tanh %200 : vector<8x128xf32>
    %cst_107 = arith.constant 5.000000e-01 : f32
    %202 = vector.broadcast %cst_107 : f32 to vector<8x128xf32>
    %203 = arith.mulf %202, %201 : vector<8x128xf32>
    %cst_108 = arith.constant 5.000000e-01 : f32
    %204 = vector.broadcast %cst_108 : f32 to vector<8x128xf32>
    %205 = arith.addf %203, %204 : vector<8x128xf32>
    %206 = vector.extract_strided_slice %189 {offsets = [0, 256], sizes = [8, 128], strides = [1, 1]} : vector<8x512xf32> to vector<8x128xf32>
    %207 = math.tanh %206 : vector<8x128xf32>
    %208 = vector.extract_strided_slice %189 {offsets = [0, 384], sizes = [8, 128], strides = [1, 1]} : vector<8x512xf32> to vector<8x128xf32>
    %cst_109 = arith.constant 5.000000e-01 : f32
    %209 = vector.broadcast %cst_109 : f32 to vector<8x128xf32>
    %210 = arith.mulf %209, %208 : vector<8x128xf32>
    %211 = math.tanh %210 : vector<8x128xf32>
    %cst_110 = arith.constant 5.000000e-01 : f32
    %212 = vector.broadcast %cst_110 : f32 to vector<8x128xf32>
    %213 = arith.mulf %212, %211 : vector<8x128xf32>
    %cst_111 = arith.constant 5.000000e-01 : f32
    %214 = vector.broadcast %cst_111 : f32 to vector<8x128xf32>
    %215 = arith.addf %213, %214 : vector<8x128xf32>
    %c0_112 = arith.constant 0 : index
    %c0_113 = arith.constant 0 : index
    %216 = vector.load %arg6[%c0_112, %c0_113] : memref<8x128xf32, #tpu.memory_space<vmem>>, vector<8x128xf32>
    %217 = arith.mulf %205, %216 : vector<8x128xf32>
    %218 = arith.mulf %197, %207 : vector<8x128xf32>
    %219 = arith.addf %217, %218 : vector<8x128xf32>
    %220 = math.tanh %219 : vector<8x128xf32>
    %221 = arith.mulf %215, %220 : vector<8x128xf32>
    %c0_114 = arith.constant 0 : index
    %c0_115 = arith.constant 0 : index
    %222 = vector.load %arg6[%c0_114, %c0_115] : memref<8x128xf32, #tpu.memory_space<vmem>>, vector<8x128xf32>
    tpu.vector_store %arg6[%c0_114, %c0_115], %219 {strides = array<i32>} : memref<8x128xf32, #tpu.memory_space<vmem>>, vector<8x128xf32>,
    %c0_116 = arith.constant 0 : index
    %c0_117 = arith.constant 0 : index
    %223 = vector.load %arg5[%c0_116, %c0_117] : memref<8x128xf32, #tpu.memory_space<vmem>>, vector<8x128xf32>
    tpu.vector_store %arg5[%c0_116, %c0_117], %221 {strides = array<i32>} : memref<8x128xf32, #tpu.memory_space<vmem>>, vector<8x128xf32>,
    %224 = arith.index_cast %c4_i32 : i32 to index
    %c0_118 = arith.constant 0 : index
    %c0_119 = arith.constant 0 : index
    %225 = vector.load %arg4[%224, %c0_118, %c0_119] : memref<8x8x128xf32, #tpu.memory_space<vmem>>, vector<1x8x128xf32>
    %226 = vector.shape_cast %225 : vector<1x8x128xf32> to vector<8x128xf32>
    %227 = vector.shape_cast %221 : vector<8x128xf32> to vector<1x8x128xf32>
    tpu.vector_store %arg4[%224, %c0_118, %c0_119], %227 {strides = array<i32>} : memref<8x8x128xf32, #tpu.memory_space<vmem>>, vector<1x8x128xf32>,
    %c5_i32 = arith.constant 5 : i32
    %c0_120 = arith.constant 0 : index
    %c0_121 = arith.constant 0 : index
    %228 = vector.load %arg5[%c0_120, %c0_121] : memref<8x128xf32, #tpu.memory_space<vmem>>, vector<8x128xf32>
    %c0_122 = arith.constant 0 : index
    %c0_123 = arith.constant 0 : index
    %229 = vector.load %arg3[%c0_122, %c0_123] : memref<128x512xf32, #tpu.memory_space<vmem>>, vector<128x512xf32>
    %cst_124 = arith.constant dense<0.000000e+00> : vector<8x512xf32>
    %230 = tpu.matmul %228, %229, %cst_124 {dimension_numbers = #tpu.dot_dimension_numbers<[1], [0], [0], [1], [0, 0, 1, 1], [], []>} : vector<8x128xf32>, vector<128x512xf32>, vector<8x512xf32> -> vector<8x512xf32>
    %231 = arith.index_cast %c5_i32 : i32 to index
    %c0_125 = arith.constant 0 : index
    %c0_126 = arith.constant 0 : index
    %232 = vector.load %arg2[%231, %c0_125, %c0_126] : memref<8x8x512xf32, #tpu.memory_space<vmem>>, vector<1x8x512xf32>
    %233 = vector.shape_cast %232 : vector<1x8x512xf32> to vector<8x512xf32>
    %234 = arith.addf %230, %233 : vector<8x512xf32>
    %235 = vector.extract_strided_slice %234 {offsets = [0, 0], sizes = [8, 128], strides = [1, 1]} : vector<8x512xf32> to vector<8x128xf32>
    %cst_127 = arith.constant 5.000000e-01 : f32
    %236 = vector.broadcast %cst_127 : f32 to vector<8x128xf32>
    %237 = arith.mulf %236, %235 : vector<8x128xf32>
    %238 = math.tanh %237 : vector<8x128xf32>
    %cst_128 = arith.constant 5.000000e-01 : f32
    %239 = vector.broadcast %cst_128 : f32 to vector<8x128xf32>
    %240 = arith.mulf %239, %238 : vector<8x128xf32>
    %cst_129 = arith.constant 5.000000e-01 : f32
    %241 = vector.broadcast %cst_129 : f32 to vector<8x128xf32>
    %242 = arith.addf %240, %241 : vector<8x128xf32>
    %243 = vector.extract_strided_slice %234 {offsets = [0, 128], sizes = [8, 128], strides = [1, 1]} : vector<8x512xf32> to vector<8x128xf32>
    %cst_130 = arith.constant 5.000000e-01 : f32
    %244 = vector.broadcast %cst_130 : f32 to vector<8x128xf32>
    %245 = arith.mulf %244, %243 : vector<8x128xf32>
    %246 = math.tanh %245 : vector<8x128xf32>
    %cst_131 = arith.constant 5.000000e-01 : f32
    %247 = vector.broadcast %cst_131 : f32 to vector<8x128xf32>
    %248 = arith.mulf %247, %246 : vector<8x128xf32>
    %cst_132 = arith.constant 5.000000e-01 : f32
    %249 = vector.broadcast %cst_132 : f32 to vector<8x128xf32>
    %250 = arith.addf %248, %249 : vector<8x128xf32>
    %251 = vector.extract_strided_slice %234 {offsets = [0, 256], sizes = [8, 128], strides = [1, 1]} : vector<8x512xf32> to vector<8x128xf32>
    %252 = math.tanh %251 : vector<8x128xf32>
    %253 = vector.extract_strided_slice %234 {offsets = [0, 384], sizes = [8, 128], strides = [1, 1]} : vector<8x512xf32> to vector<8x128xf32>
    %cst_133 = arith.constant 5.000000e-01 : f32
    %254 = vector.broadcast %cst_133 : f32 to vector<8x128xf32>
    %255 = arith.mulf %254, %253 : vector<8x128xf32>
    %256 = math.tanh %255 : vector<8x128xf32>
    %cst_134 = arith.constant 5.000000e-01 : f32
    %257 = vector.broadcast %cst_134 : f32 to vector<8x128xf32>
    %258 = arith.mulf %257, %256 : vector<8x128xf32>
    %cst_135 = arith.constant 5.000000e-01 : f32
    %259 = vector.broadcast %cst_135 : f32 to vector<8x128xf32>
    %260 = arith.addf %258, %259 : vector<8x128xf32>
    %c0_136 = arith.constant 0 : index
    %c0_137 = arith.constant 0 : index
    %261 = vector.load %arg6[%c0_136, %c0_137] : memref<8x128xf32, #tpu.memory_space<vmem>>, vector<8x128xf32>
    %262 = arith.mulf %250, %261 : vector<8x128xf32>
    %263 = arith.mulf %242, %252 : vector<8x128xf32>
    %264 = arith.addf %262, %263 : vector<8x128xf32>
    %265 = math.tanh %264 : vector<8x128xf32>
    %266 = arith.mulf %260, %265 : vector<8x128xf32>
    %c0_138 = arith.constant 0 : index
    %c0_139 = arith.constant 0 : index
    %267 = vector.load %arg6[%c0_138, %c0_139] : memref<8x128xf32, #tpu.memory_space<vmem>>, vector<8x128xf32>
    tpu.vector_store %arg6[%c0_138, %c0_139], %264 {strides = array<i32>} : memref<8x128xf32, #tpu.memory_space<vmem>>, vector<8x128xf32>,
    %c0_140 = arith.constant 0 : index
    %c0_141 = arith.constant 0 : index
    %268 = vector.load %arg5[%c0_140, %c0_141] : memref<8x128xf32, #tpu.memory_space<vmem>>, vector<8x128xf32>
    tpu.vector_store %arg5[%c0_140, %c0_141], %266 {strides = array<i32>} : memref<8x128xf32, #tpu.memory_space<vmem>>, vector<8x128xf32>,
    %269 = arith.index_cast %c5_i32 : i32 to index
    %c0_142 = arith.constant 0 : index
    %c0_143 = arith.constant 0 : index
    %270 = vector.load %arg4[%269, %c0_142, %c0_143] : memref<8x8x128xf32, #tpu.memory_space<vmem>>, vector<1x8x128xf32>
    %271 = vector.shape_cast %270 : vector<1x8x128xf32> to vector<8x128xf32>
    %272 = vector.shape_cast %266 : vector<8x128xf32> to vector<1x8x128xf32>
    tpu.vector_store %arg4[%269, %c0_142, %c0_143], %272 {strides = array<i32>} : memref<8x8x128xf32, #tpu.memory_space<vmem>>, vector<1x8x128xf32>,
    %c6_i32 = arith.constant 6 : i32
    %c0_144 = arith.constant 0 : index
    %c0_145 = arith.constant 0 : index
    %273 = vector.load %arg5[%c0_144, %c0_145] : memref<8x128xf32, #tpu.memory_space<vmem>>, vector<8x128xf32>
    %c0_146 = arith.constant 0 : index
    %c0_147 = arith.constant 0 : index
    %274 = vector.load %arg3[%c0_146, %c0_147] : memref<128x512xf32, #tpu.memory_space<vmem>>, vector<128x512xf32>
    %cst_148 = arith.constant dense<0.000000e+00> : vector<8x512xf32>
    %275 = tpu.matmul %273, %274, %cst_148 {dimension_numbers = #tpu.dot_dimension_numbers<[1], [0], [0], [1], [0, 0, 1, 1], [], []>} : vector<8x128xf32>, vector<128x512xf32>, vector<8x512xf32> -> vector<8x512xf32>
    %276 = arith.index_cast %c6_i32 : i32 to index
    %c0_149 = arith.constant 0 : index
    %c0_150 = arith.constant 0 : index
    %277 = vector.load %arg2[%276, %c0_149, %c0_150] : memref<8x8x512xf32, #tpu.memory_space<vmem>>, vector<1x8x512xf32>
    %278 = vector.shape_cast %277 : vector<1x8x512xf32> to vector<8x512xf32>
    %279 = arith.addf %275, %278 : vector<8x512xf32>
    %280 = vector.extract_strided_slice %279 {offsets = [0, 0], sizes = [8, 128], strides = [1, 1]} : vector<8x512xf32> to vector<8x128xf32>
    %cst_151 = arith.constant 5.000000e-01 : f32
    %281 = vector.broadcast %cst_151 : f32 to vector<8x128xf32>
    %282 = arith.mulf %281, %280 : vector<8x128xf32>
    %283 = math.tanh %282 : vector<8x128xf32>
    %cst_152 = arith.constant 5.000000e-01 : f32
    %284 = vector.broadcast %cst_152 : f32 to vector<8x128xf32>
    %285 = arith.mulf %284, %283 : vector<8x128xf32>
    %cst_153 = arith.constant 5.000000e-01 : f32
    %286 = vector.broadcast %cst_153 : f32 to vector<8x128xf32>
    %287 = arith.addf %285, %286 : vector<8x128xf32>
    %288 = vector.extract_strided_slice %279 {offsets = [0, 128], sizes = [8, 128], strides = [1, 1]} : vector<8x512xf32> to vector<8x128xf32>
    %cst_154 = arith.constant 5.000000e-01 : f32
    %289 = vector.broadcast %cst_154 : f32 to vector<8x128xf32>
    %290 = arith.mulf %289, %288 : vector<8x128xf32>
    %291 = math.tanh %290 : vector<8x128xf32>
    %cst_155 = arith.constant 5.000000e-01 : f32
    %292 = vector.broadcast %cst_155 : f32 to vector<8x128xf32>
    %293 = arith.mulf %292, %291 : vector<8x128xf32>
    %cst_156 = arith.constant 5.000000e-01 : f32
    %294 = vector.broadcast %cst_156 : f32 to vector<8x128xf32>
    %295 = arith.addf %293, %294 : vector<8x128xf32>
    %296 = vector.extract_strided_slice %279 {offsets = [0, 256], sizes = [8, 128], strides = [1, 1]} : vector<8x512xf32> to vector<8x128xf32>
    %297 = math.tanh %296 : vector<8x128xf32>
    %298 = vector.extract_strided_slice %279 {offsets = [0, 384], sizes = [8, 128], strides = [1, 1]} : vector<8x512xf32> to vector<8x128xf32>
    %cst_157 = arith.constant 5.000000e-01 : f32
    %299 = vector.broadcast %cst_157 : f32 to vector<8x128xf32>
    %300 = arith.mulf %299, %298 : vector<8x128xf32>
    %301 = math.tanh %300 : vector<8x128xf32>
    %cst_158 = arith.constant 5.000000e-01 : f32
    %302 = vector.broadcast %cst_158 : f32 to vector<8x128xf32>
    %303 = arith.mulf %302, %301 : vector<8x128xf32>
    %cst_159 = arith.constant 5.000000e-01 : f32
    %304 = vector.broadcast %cst_159 : f32 to vector<8x128xf32>
    %305 = arith.addf %303, %304 : vector<8x128xf32>
    %c0_160 = arith.constant 0 : index
    %c0_161 = arith.constant 0 : index
    %306 = vector.load %arg6[%c0_160, %c0_161] : memref<8x128xf32, #tpu.memory_space<vmem>>, vector<8x128xf32>
    %307 = arith.mulf %295, %306 : vector<8x128xf32>
    %308 = arith.mulf %287, %297 : vector<8x128xf32>
    %309 = arith.addf %307, %308 : vector<8x128xf32>
    %310 = math.tanh %309 : vector<8x128xf32>
    %311 = arith.mulf %305, %310 : vector<8x128xf32>
    %c0_162 = arith.constant 0 : index
    %c0_163 = arith.constant 0 : index
    %312 = vector.load %arg6[%c0_162, %c0_163] : memref<8x128xf32, #tpu.memory_space<vmem>>, vector<8x128xf32>
    tpu.vector_store %arg6[%c0_162, %c0_163], %309 {strides = array<i32>} : memref<8x128xf32, #tpu.memory_space<vmem>>, vector<8x128xf32>,
    %c0_164 = arith.constant 0 : index
    %c0_165 = arith.constant 0 : index
    %313 = vector.load %arg5[%c0_164, %c0_165] : memref<8x128xf32, #tpu.memory_space<vmem>>, vector<8x128xf32>
    tpu.vector_store %arg5[%c0_164, %c0_165], %311 {strides = array<i32>} : memref<8x128xf32, #tpu.memory_space<vmem>>, vector<8x128xf32>,
    %314 = arith.index_cast %c6_i32 : i32 to index
    %c0_166 = arith.constant 0 : index
    %c0_167 = arith.constant 0 : index
    %315 = vector.load %arg4[%314, %c0_166, %c0_167] : memref<8x8x128xf32, #tpu.memory_space<vmem>>, vector<1x8x128xf32>
    %316 = vector.shape_cast %315 : vector<1x8x128xf32> to vector<8x128xf32>
    %317 = vector.shape_cast %311 : vector<8x128xf32> to vector<1x8x128xf32>
    tpu.vector_store %arg4[%314, %c0_166, %c0_167], %317 {strides = array<i32>} : memref<8x8x128xf32, #tpu.memory_space<vmem>>, vector<1x8x128xf32>,
    %c7_i32 = arith.constant 7 : i32
    %c0_168 = arith.constant 0 : index
    %c0_169 = arith.constant 0 : index
    %318 = vector.load %arg5[%c0_168, %c0_169] : memref<8x128xf32, #tpu.memory_space<vmem>>, vector<8x128xf32>
    %c0_170 = arith.constant 0 : index
    %c0_171 = arith.constant 0 : index
    %319 = vector.load %arg3[%c0_170, %c0_171] : memref<128x512xf32, #tpu.memory_space<vmem>>, vector<128x512xf32>
    %cst_172 = arith.constant dense<0.000000e+00> : vector<8x512xf32>
    %320 = tpu.matmul %318, %319, %cst_172 {dimension_numbers = #tpu.dot_dimension_numbers<[1], [0], [0], [1], [0, 0, 1, 1], [], []>} : vector<8x128xf32>, vector<128x512xf32>, vector<8x512xf32> -> vector<8x512xf32>
    %321 = arith.index_cast %c7_i32 : i32 to index
    %c0_173 = arith.constant 0 : index
    %c0_174 = arith.constant 0 : index
    %322 = vector.load %arg2[%321, %c0_173, %c0_174] : memref<8x8x512xf32, #tpu.memory_space<vmem>>, vector<1x8x512xf32>
    %323 = vector.shape_cast %322 : vector<1x8x512xf32> to vector<8x512xf32>
    %324 = arith.addf %320, %323 : vector<8x512xf32>
    %325 = vector.extract_strided_slice %324 {offsets = [0, 0], sizes = [8, 128], strides = [1, 1]} : vector<8x512xf32> to vector<8x128xf32>
    %cst_175 = arith.constant 5.000000e-01 : f32
    %326 = vector.broadcast %cst_175 : f32 to vector<8x128xf32>
    %327 = arith.mulf %326, %325 : vector<8x128xf32>
    %328 = math.tanh %327 : vector<8x128xf32>
    %cst_176 = arith.constant 5.000000e-01 : f32
    %329 = vector.broadcast %cst_176 : f32 to vector<8x128xf32>
    %330 = arith.mulf %329, %328 : vector<8x128xf32>
    %cst_177 = arith.constant 5.000000e-01 : f32
    %331 = vector.broadcast %cst_177 : f32 to vector<8x128xf32>
    %332 = arith.addf %330, %331 : vector<8x128xf32>
    %333 = vector.extract_strided_slice %324 {offsets = [0, 128], sizes = [8, 128], strides = [1, 1]} : vector<8x512xf32> to vector<8x128xf32>
    %cst_178 = arith.constant 5.000000e-01 : f32
    %334 = vector.broadcast %cst_178 : f32 to vector<8x128xf32>
    %335 = arith.mulf %334, %333 : vector<8x128xf32>
    %336 = math.tanh %335 : vector<8x128xf32>
    %cst_179 = arith.constant 5.000000e-01 : f32
    %337 = vector.broadcast %cst_179 : f32 to vector<8x128xf32>
    %338 = arith.mulf %337, %336 : vector<8x128xf32>
    %cst_180 = arith.constant 5.000000e-01 : f32
    %339 = vector.broadcast %cst_180 : f32 to vector<8x128xf32>
    %340 = arith.addf %338, %339 : vector<8x128xf32>
    %341 = vector.extract_strided_slice %324 {offsets = [0, 256], sizes = [8, 128], strides = [1, 1]} : vector<8x512xf32> to vector<8x128xf32>
    %342 = math.tanh %341 : vector<8x128xf32>
    %343 = vector.extract_strided_slice %324 {offsets = [0, 384], sizes = [8, 128], strides = [1, 1]} : vector<8x512xf32> to vector<8x128xf32>
    %cst_181 = arith.constant 5.000000e-01 : f32
    %344 = vector.broadcast %cst_181 : f32 to vector<8x128xf32>
    %345 = arith.mulf %344, %343 : vector<8x128xf32>
    %346 = math.tanh %345 : vector<8x128xf32>
    %cst_182 = arith.constant 5.000000e-01 : f32
    %347 = vector.broadcast %cst_182 : f32 to vector<8x128xf32>
    %348 = arith.mulf %347, %346 : vector<8x128xf32>
    %cst_183 = arith.constant 5.000000e-01 : f32
    %349 = vector.broadcast %cst_183 : f32 to vector<8x128xf32>
    %350 = arith.addf %348, %349 : vector<8x128xf32>
    %c0_184 = arith.constant 0 : index
    %c0_185 = arith.constant 0 : index
    %351 = vector.load %arg6[%c0_184, %c0_185] : memref<8x128xf32, #tpu.memory_space<vmem>>, vector<8x128xf32>
    %352 = arith.mulf %340, %351 : vector<8x128xf32>
    %353 = arith.mulf %332, %342 : vector<8x128xf32>
    %354 = arith.addf %352, %353 : vector<8x128xf32>
    %355 = math.tanh %354 : vector<8x128xf32>
    %356 = arith.mulf %350, %355 : vector<8x128xf32>
    %c0_186 = arith.constant 0 : index
    %c0_187 = arith.constant 0 : index
    %357 = vector.load %arg6[%c0_186, %c0_187] : memref<8x128xf32, #tpu.memory_space<vmem>>, vector<8x128xf32>
    tpu.vector_store %arg6[%c0_186, %c0_187], %354 {strides = array<i32>} : memref<8x128xf32, #tpu.memory_space<vmem>>, vector<8x128xf32>,
    %c0_188 = arith.constant 0 : index
    %c0_189 = arith.constant 0 : index
    %358 = vector.load %arg5[%c0_188, %c0_189] : memref<8x128xf32, #tpu.memory_space<vmem>>, vector<8x128xf32>
    tpu.vector_store %arg5[%c0_188, %c0_189], %356 {strides = array<i32>} : memref<8x128xf32, #tpu.memory_space<vmem>>, vector<8x128xf32>,
    %359 = arith.index_cast %c7_i32 : i32 to index
    %c0_190 = arith.constant 0 : index
    %c0_191 = arith.constant 0 : index
    %360 = vector.load %arg4[%359, %c0_190, %c0_191] : memref<8x8x128xf32, #tpu.memory_space<vmem>>, vector<1x8x128xf32>
    %361 = vector.shape_cast %360 : vector<1x8x128xf32> to vector<8x128xf32>
    %362 = vector.shape_cast %356 : vector<8x128xf32> to vector<1x8x128xf32>
    tpu.vector_store %arg4[%359, %c0_190, %c0_191], %362 {strides = array<i32>} : memref<8x8x128xf32, #tpu.memory_space<vmem>>, vector<1x8x128xf32>,
    %c8_i32 = arith.constant 8 : i32
    return
  }
  func.func @transform_0(%arg0: i32, %arg1: i32) -> (i32, i32, i32) {
    %c0_i32 = arith.constant 0 : i32
    %c0_i32_0 = arith.constant 0 : i32
    return %arg1, %arg0, %c0_i32 : i32, i32, i32
  }
  func.func @transform_1(%arg0: i32, %arg1: i32) -> (i32, i32) {
    %c0_i32 = arith.constant 0 : i32
    %c0_i32_0 = arith.constant 0 : i32
    %c0_i32_1 = arith.constant 0 : i32
    return %c0_i32, %c0_i32_0 : i32, i32
  }
  func.func @transform_2(%arg0: i32, %arg1: i32) -> (i32, i32, i32) {
    %c0_i32 = arith.constant 0 : i32
    %c0_i32_0 = arith.constant 0 : i32
    return %arg1, %arg0, %c0_i32 : i32, i32, i32
  }
}

module attributes {stable_mosaic.version = 11 : i64} {
  func.func @_head_sub_kernel(%arg0: i32, %arg1: i32, %arg2: memref<64x128xf32, #tpu.memory_space<vmem>>, %arg3: memref<64x1xf32, #tpu.memory_space<vmem>>, %arg4: memref<64x128xf32, #tpu.memory_space<vmem>>) attributes {dimension_semantics = [#tpu.dimension_semantics<parallel>, #tpu.dimension_semantics<parallel>], iteration_bounds = array<i64: 1, 1>, scalar_prefetch = 0 : i64, scratch_operands = 0 : i64, tpu.core_type = #tpu.core_type<tc>, window_params = [{transform_indices = @transform_0, window_bounds = array<i64: 64, 128>}, {transform_indices = @transform_1, window_bounds = array<i64: 64, 1>}, {transform_indices = @transform_2, window_bounds = array<i64: 64, 128>}]} {
    %c0 = arith.constant 0 : index
    %c0_0 = arith.constant 0 : index
    %0 = vector.load %arg2[%c0, %c0_0] : memref<64x128xf32, #tpu.memory_space<vmem>>, vector<64x128xf32>
    %c0_1 = arith.constant 0 : index
    %c0_2 = arith.constant 0 : index
    %1 = vector.load %arg3[%c0_1, %c0_2] : memref<64x1xf32, #tpu.memory_space<vmem>>, vector<64x1xf32>
    %2 = vector.broadcast %1 : vector<64x1xf32> to vector<64x128xf32>
    %3 = arith.subf %0, %2 : vector<64x128xf32>
    %c0_3 = arith.constant 0 : index
    %c0_4 = arith.constant 0 : index
    %4 = vector.load %arg4[%c0_3, %c0_4] : memref<64x128xf32, #tpu.memory_space<vmem>>, vector<64x128xf32>
    tpu.vector_store %arg4[%c0_3, %c0_4], %3 {strides = array<i32>} : memref<64x128xf32, #tpu.memory_space<vmem>>, vector<64x128xf32>,
    return
  }
  func.func @transform_0(%arg0: i32, %arg1: i32) -> (i32, i32) {
    %c0_i32 = arith.constant 0 : i32
    return %arg0, %arg1 : i32, i32
  }
  func.func @transform_1(%arg0: i32, %arg1: i32) -> (i32, i32) {
    %c0_i32 = arith.constant 0 : i32
    %c0_i32_0 = arith.constant 0 : i32
    return %arg0, %c0_i32 : i32, i32
  }
  func.func @transform_2(%arg0: i32, %arg1: i32) -> (i32, i32) {
    %c0_i32 = arith.constant 0 : i32
    return %arg0, %arg1 : i32, i32
  }
}

</mosaic_0001>

<llo_original>
// kernel: lstm_model_forward.7
$region0: #{lstm_model_forward.7}
  #allocation0 [shape = 'u32[]', space=smem, size = 0x4, offset = 0x4, fixed_abs, tag = 'smem constant byte address 0x4 - core index']
  #allocation1 [shape = 'u32[144,128]{1,0:T(1,128)}', space=vmem, size = 0x12000, scoped, tag = 'internal scratch']
  %s0 = inlined_call_operand.vmem [shape: f32[64,128], index: 0, kind: input, shape index: {}]
  %s1 = inlined_call_operand.vmem [shape: f32[64,1], index: 1, kind: input, shape index: {}]
  %s2 = inlined_call_operand.vmem [shape: f32[64,128], index: 2, kind: output, shape index: {}]
  %s3 = sld [smem:[#allocation0]]
  $region18: #{lstm_model_forward.7} parent=0
    _
  %s5 = ssub.s32 1, %s3
  %s6 = scalar_select 0, %s5, %s3
  // Predicated region
  $region2: #{lstm_model_forward.7} parent=0 // pred_check
    _
  $region3: #{lstm_model_forward.7} parent=0 // pred_check_branch
    %8 = sbr.rel (0) target = $region5
  $region4: #{lstm_model_forward.7} parent=0 // pred_region
    _
  $region5: #{lstm_model_forward.7} parent=0 // pred_fallthru
    _
  // Predicated region
  $region6: #{lstm_model_forward.7} parent=0 // pred_check
    _
  $region7: #{lstm_model_forward.7} parent=0 // pred_check_branch
    %10 = sbr.rel (0) target = $region9
  $region8: #{lstm_model_forward.7} parent=0 // pred_region
    _
  $region9: #{lstm_model_forward.7} parent=0 // pred_fallthru
    _
  %v11 = vld [vmem:[%s0] sm:$0xff]
  %v12 = vld [vmem:[%s0 + $0x8] sm:$0xff]
  %v13 = vld [vmem:[%s0 + $0x10] sm:$0xff]
  %v14 = vld [vmem:[%s0 + $0x18] sm:$0xff]
  %v15 = vld [vmem:[%s0 + $0x20] sm:$0xff]
  %v16 = vld [vmem:[%s0 + $0x28] sm:$0xff]
  %v17 = vld [vmem:[%s0 + $0x30] sm:$0xff]
  %v18 = vld [vmem:[%s0 + $0x38] sm:$0xff]
  %v19 = vld [vmem:[%s1] sm:$0xff]
  %v20 = vld [vmem:[%s1 + $0x8] sm:$0xff]
  %v21 = vld [vmem:[%s1 + $0x10] sm:$0xff]
  %v22 = vld [vmem:[%s1 + $0x18] sm:$0xff]
  %v23 = vld [vmem:[%s1 + $0x20] sm:$0xff]
  %v24 = vld [vmem:[%s1 + $0x28] sm:$0xff]
  %v25 = vld [vmem:[%s1 + $0x30] sm:$0xff]
  %v26 = vld [vmem:[%s1 + $0x38] sm:$0xff]
  %28 = vset.pattern.permute.xlu0 0
  %29 = vperm.xlu0 %28, %v19
  %v30 = vpop.permute.xlu0 %29
  %33 = vset.pattern.permute.xlu0 0
  %34 = vperm.xlu0 %33, %v20
  %v35 = vpop.permute.xlu0 %34
  %38 = vset.pattern.permute.xlu0 0
  %39 = vperm.xlu0 %38, %v21
  %v40 = vpop.permute.xlu0 %39
  %43 = vset.pattern.permute.xlu0 0
  %44 = vperm.xlu0 %43, %v22
  %v45 = vpop.permute.xlu0 %44
  %48 = vset.pattern.permute.xlu0 0
  %49 = vperm.xlu0 %48, %v23
  %v50 = vpop.permute.xlu0 %49
  %53 = vset.pattern.permute.xlu0 0
  %54 = vperm.xlu0 %53, %v24
  %v55 = vpop.permute.xlu0 %54
  %58 = vset.pattern.permute.xlu0 0
  %59 = vperm.xlu0 %58, %v25
  %v60 = vpop.permute.xlu0 %59
  %63 = vset.pattern.permute.xlu0 0
  %64 = vperm.xlu0 %63, %v26
  %v65 = vpop.permute.xlu0 %64
  %v67 = vsub.f32 %v11, %v30
  %v68 = vsub.f32 %v12, %v35
  %v69 = vsub.f32 %v13, %v40
  %v70 = vsub.f32 %v14, %v45
  %v71 = vsub.f32 %v15, %v50
  %v72 = vsub.f32 %v16, %v55
  %v73 = vsub.f32 %v17, %v60
  %v74 = vsub.f32 %v18, %v65
  %75 = vst [vmem:[%s2] sm:$0xff] %v67
  %76 = vst [vmem:[%s2 + $0x8] sm:$0xff] %v68
  %77 = vst [vmem:[%s2 + $0x10] sm:$0xff] %v69
  %78 = vst [vmem:[%s2 + $0x18] sm:$0xff] %v70
  %79 = vst [vmem:[%s2 + $0x20] sm:$0xff] %v71
  %80 = vst [vmem:[%s2 + $0x28] sm:$0xff] %v72
  %81 = vst [vmem:[%s2 + $0x30] sm:$0xff] %v73
  %82 = vst [vmem:[%s2 + $0x38] sm:$0xff] %v74
  // Predicated region
  $region10: #{lstm_model_forward.7} parent=0 // pred_check
    _
  $region11: #{lstm_model_forward.7} parent=0 // pred_check_branch
    %84 = sbr.rel (0) target = $region13
  $region12: #{lstm_model_forward.7} parent=0 // pred_region
    _
  $region13: #{lstm_model_forward.7} parent=0 // pred_fallthru
    _
  // Predicated region
  $region14: #{lstm_model_forward.7} parent=0 // pred_check
    _
  $region15: #{lstm_model_forward.7} parent=0 // pred_check_branch
    %86 = sbr.rel (0) target = $region17
  $region16: #{lstm_model_forward.7} parent=0 // pred_region
    _
  $region17: #{lstm_model_forward.7} parent=0 // pred_fallthru
    _

// kernel: lstm_model_forward.6
$region0: #{lstm_model_forward.6}
  #allocation0 [shape = 'u32[]', space=smem, size = 0x4, offset = 0x4, fixed_abs, tag = 'smem constant byte address 0x4 - core index']
  #allocation1 [shape = 'u32[144,128]{1,0:T(1,128)}', space=vmem, size = 0x12000, scoped, tag = 'internal scratch']
  #allocation2 [shape = 'f32[64,1]{1,0:T(8,128)}', space=vmem, size = 0x8000, scoped, tag = 'scratch operand']
  #allocation3 [shape = 'f32[64,1]{1,0:T(8,128)}', space=vmem, size = 0x8000, scoped, tag = 'scratch operand']
  %s0 = inlined_call_operand.vmem [shape: f32[64,128], index: 0, kind: input, shape index: {}]
  %s1 = inlined_call_operand.vmem [shape: f32[128,128], index: 1, kind: input, shape index: {}]
  %s2 = inlined_call_operand.vmem [shape: f32[1,128], index: 2, kind: input, shape index: {}]
  %s3 = inlined_call_operand.vmem [shape: f32[64,128], index: 3, kind: output, shape index: {0}]
  %s4 = inlined_call_operand.vmem [shape: f32[64,1], index: 4, kind: output, shape index: {1}]
  %5 = xla_tuple %s3, %s4
  %s6 = sld [smem:[#allocation0]]
  $region38: #{lstm_model_forward.6} parent=0
    _
  %s8 = ssub.s32 1, %s6
  %s9 = scalar_select 0, %s8, %s6
  // Predicated region
  $region2: #{lstm_model_forward.6} parent=0 // pred_check
    _
  $region3: #{lstm_model_forward.6} parent=0 // pred_check_branch
    %11 = sbr.rel (0) target = $region5
  $region4: #{lstm_model_forward.6} parent=0 // pred_region
    _
  $region5: #{lstm_model_forward.6} parent=0 // pred_fallthru
    _
  // Predicated region
  $region6: #{lstm_model_forward.6} parent=0 // pred_check
    _
  $region7: #{lstm_model_forward.6} parent=0 // pred_check_branch
    %13 = sbr.rel (0) target = $region9
  $region8: #{lstm_model_forward.6} parent=0 // pred_region
    _
  $region9: #{lstm_model_forward.6} parent=0 // pred_fallthru
    _
  // Predicated region
  $region10: #{lstm_model_forward.6} parent=0 // pred_check
    _
  $region11: #{lstm_model_forward.6} parent=0 // pred_check_branch
    %15 = sbr.rel (0) target = $region13
  $region12: #{lstm_model_forward.6} parent=0 // pred_region
    _
  $region13: #{lstm_model_forward.6} parent=0 // pred_fallthru
    _
  %p16 = scmp.eq.s32.totalorder 0, 0
  // Predicated region
  $region14: #{lstm_model_forward.6} parent=0 // pred_check
    %p17 = pneg %p16
  $region15: #{lstm_model_forward.6} parent=0 // pred_check_branch
    %19 = sbr.rel (%p17) target = $region17
  $region16: #{lstm_model_forward.6} parent=0 // pred_region
    %vm20 = vcmask 7168
    %21 = vst.msk [vmem:[#allocation2] sm:$0xff] %vm20, -inf
    %22 = vst.msk [vmem:[#allocation2 + $0x8] sm:$0xff] %vm20, -inf
    %23 = vst.msk [vmem:[#allocation2 + $0x10] sm:$0xff] %vm20, -inf
    %24 = vst.msk [vmem:[#allocation2 + $0x18] sm:$0xff] %vm20, -inf
    %25 = vst.msk [vmem:[#allocation2 + $0x20] sm:$0xff] %vm20, -inf
    %26 = vst.msk [vmem:[#allocation2 + $0x28] sm:$0xff] %vm20, -inf
    %27 = vst.msk [vmem:[#allocation2 + $0x30] sm:$0xff] %vm20, -inf
    %28 = vst.msk [vmem:[#allocation2 + $0x38] sm:$0xff] %vm20, -inf
    %29 = vst.msk [vmem:[#allocation3] sm:$0xff] %vm20, 0.0
    %30 = vst.msk [vmem:[#allocation3 + $0x8] sm:$0xff] %vm20, 0.0
    %31 = vst.msk [vmem:[#allocation3 + $0x10] sm:$0xff] %vm20, 0.0
    %32 = vst.msk [vmem:[#allocation3 + $0x18] sm:$0xff] %vm20, 0.0
    %33 = vst.msk [vmem:[#allocation3 + $0x20] sm:$0xff] %vm20, 0.0
    %34 = vst.msk [vmem:[#allocation3 + $0x28] sm:$0xff] %vm20, 0.0
    %35 = vst.msk [vmem:[#allocation3 + $0x30] sm:$0xff] %vm20, 0.0
    %36 = vst.msk [vmem:[#allocation3 + $0x38] sm:$0xff] %vm20, 0.0
  $region17: #{lstm_model_forward.6} parent=0 // pred_fallthru
    _
  %v37 = vld [vmem:[%s0] sm:$0xff]
  %v38 = vld [vmem:[%s0 + $0x8] sm:$0xff]
  %v39 = vld [vmem:[%s0 + $0x10] sm:$0xff]
  %v40 = vld [vmem:[%s0 + $0x18] sm:$0xff]
  %v41 = vld [vmem:[%s0 + $0x20] sm:$0xff]
  %v42 = vld [vmem:[%s0 + $0x28] sm:$0xff]
  %v43 = vld [vmem:[%s0 + $0x30] sm:$0xff]
  %v44 = vld [vmem:[%s0 + $0x38] sm:$0xff]
  %v45 = vld [vmem:[%s1] sm:$0xff]
  %v46 = vld [vmem:[%s1 + $0x8] sm:$0xff]
  %v47 = vld [vmem:[%s1 + $0x10] sm:$0xff]
  %v48 = vld [vmem:[%s1 + $0x18] sm:$0xff]
  %v49 = vld [vmem:[%s1 + $0x20] sm:$0xff]
  %v50 = vld [vmem:[%s1 + $0x28] sm:$0xff]
  %v51 = vld [vmem:[%s1 + $0x30] sm:$0xff]
  %v52 = vld [vmem:[%s1 + $0x38] sm:$0xff]
  %v53 = vld [vmem:[%s1 + $0x40] sm:$0xff]
  %v54 = vld [vmem:[%s1 + $0x48] sm:$0xff]
  %v55 = vld [vmem:[%s1 + $0x50] sm:$0xff]
  %v56 = vld [vmem:[%s1 + $0x58] sm:$0xff]
  %v57 = vld [vmem:[%s1 + $0x60] sm:$0xff]
  %v58 = vld [vmem:[%s1 + $0x68] sm:$0xff]
  %v59 = vld [vmem:[%s1 + $0x70] sm:$0xff]
  %v60 = vld [vmem:[%s1 + $0x78] sm:$0xff]
  %v61 = vld [vmem:[%s2] sm:$0x1]
  %v63 = vlaneseq
  %v64 = vshrl.u32 %v63, 7
  %v65 = vsub.s32 0, %v64
  %v66 = vrot.slane %v61, %v65
  %68 = vmatprep.subr.mxu0 0.0
  %69 = vmatpush1.msra.mxu0 %v60
  %70 = vmatprep.subr.mxu0 0.0
  %71 = vmatpush1.msra.mxu0 %v59
  %72 = vmatprep.subr.mxu0 0.0
  %73 = vmatpush1.msra.mxu0 %v58
  %74 = vmatprep.subr.mxu0 0.0
  %75 = vmatpush1.msra.mxu0 %v57
  %76 = vmatprep.subr.mxu0 0.0
  %77 = vmatpush1.msra.mxu0 %v56
  %78 = vmatprep.subr.mxu0 0.0
  %79 = vmatpush1.msra.mxu0 %v55
  %80 = vmatprep.subr.mxu0 0.0
  %81 = vmatpush1.msra.mxu0 %v54
  %82 = vmatprep.subr.mxu0 0.0
  %83 = vmatpush1.msra.mxu0 %v53
  %84 = vmatprep.subr.mxu0 0.0
  %85 = vmatpush1.msra.mxu0 %v52
  %86 = vmatprep.subr.mxu0 0.0
  %87 = vmatpush1.msra.mxu0 %v51
  %88 = vmatprep.subr.mxu0 0.0
  %89 = vmatpush1.msra.mxu0 %v50
  %90 = vmatprep.subr.mxu0 0.0
  %91 = vmatpush1.msra.mxu0 %v49
  %92 = vmatprep.subr.mxu0 0.0
  %93 = vmatpush1.msra.mxu0 %v48
  %94 = vmatprep.subr.mxu0 0.0
  %95 = vmatpush1.msra.mxu0 %v47
  %96 = vmatprep.subr.mxu0 0.0
  %97 = vmatpush1.msra.mxu0 %v46
  %98 = vmatprep.subr.mxu0 0.0
  %99 = vmatpush1.msra.mxu0 %v45
  %100 = vmatprep.subr.mxu0 0.0
  %101 = vmatpush2.msra.mxu0 0.0
  %102 = vmatprep.subr.mxu0 0.0
  %103 = vmatpush2.msra.mxu0 0.0
  %104 = vmatprep.subr.mxu0 0.0
  %105 = vmatpush2.msra.mxu0 0.0
  %106 = vmatprep.subr.mxu0 0.0
  %107 = vmatpush2.msra.mxu0 0.0
  %108 = vmatprep.subr.mxu0 0.0
  %109 = vmatpush2.msra.mxu0 0.0
  %110 = vmatprep.subr.mxu0 0.0
  %111 = vmatpush2.msra.mxu0 0.0
  %112 = vmatprep.subr.mxu0 0.0
  %113 = vmatpush2.msra.mxu0 0.0
  %114 = vmatprep.subr.mxu0 0.0
  %115 = vmatpush2.msra.mxu0 0.0
  %116 = vmatprep.subr.mxu0 0.0
  %117 = vmatpush2.msra.mxu0 0.0
  %118 = vmatprep.subr.mxu0 0.0
  %119 = vmatpush2.msra.mxu0 0.0
  %120 = vmatprep.subr.mxu0 0.0
  %121 = vmatpush2.msra.mxu0 0.0
  %122 = vmatprep.subr.mxu0 0.0
  %123 = vmatpush2.msra.mxu0 0.0
  %124 = vmatprep.subr.mxu0 0.0
  %125 = vmatpush2.msra.mxu0 0.0
  %126 = vmatprep.subr.mxu0 0.0
  %127 = vmatpush2.msra.mxu0 0.0
  %128 = vmatprep.subr.mxu0 0.0
  %129 = vmatpush2.msra.mxu0 0.0
  %130 = vmatprep.subr.mxu0 0.0
  %131 = vmatpush2.msra.mxu0 0.0
  %132 = vmatprep.mubr.f32.mxu0 0.0
  %133 = vmatmul.mubr.f32.gmra.mxu0 %v37
  %v134 = vpop.f32.mrf.mxu0
  %v135 = vadd.f32 %v66, %v134
  %v136 = vpop.f32.mrf.mxu0
  %137 = vmatprep.mubr.f32.mxu0 0.0
  %138 = vmatmul.mubr.f32.gmra.mxu0 %v38
  %v139 = vpop.f32.mrf.mxu0
  %v140 = vadd.f32 %v66, %v139
  %v141 = vpop.f32.mrf.mxu0
  %142 = vmatprep.mubr.f32.mxu0 0.0
  %143 = vmatmul.mubr.f32.gmra.mxu0 %v39
  %v144 = vpop.f32.mrf.mxu0
  %v145 = vadd.f32 %v66, %v144
  %v146 = vpop.f32.mrf.mxu0
  %147 = vmatprep.mubr.f32.mxu0 0.0
  %148 = vmatmul.mubr.f32.gmra.mxu0 %v40
  %v149 = vpop.f32.mrf.mxu0
  %v150 = vadd.f32 %v66, %v149
  %v151 = vpop.f32.mrf.mxu0
  %152 = vmatprep.mubr.f32.mxu0 0.0
  %153 = vmatmul.mubr.f32.gmra.mxu0 %v41
  %v154 = vpop.f32.mrf.mxu0
  %v155 = vadd.f32 %v66, %v154
  %v156 = vpop.f32.mrf.mxu0
  %157 = vmatprep.mubr.f32.mxu0 0.0
  %158 = vmatmul.mubr.f32.gmra.mxu0 %v42
  %v159 = vpop.f32.mrf.mxu0
  %v160 = vadd.f32 %v66, %v159
  %v161 = vpop.f32.mrf.mxu0
  %162 = vmatprep.mubr.f32.mxu0 0.0
  %163 = vmatmul.mubr.f32.gmra.mxu0 %v43
  %v164 = vpop.f32.mrf.mxu0
  %v165 = vadd.f32 %v66, %v164
  %v166 = vpop.f32.mrf.mxu0
  %167 = vmatprep.mubr.f32.mxu0 0.0
  %168 = vmatmul.mubr.f32.gmra.mxu0 %v44
  %v169 = vpop.f32.mrf.mxu0
  %v170 = vadd.f32 %v66, %v169
  %v171 = vpop.f32.mrf.mxu0
  %172 = vdwg.mxu0
  %173 = vst [vmem:[%s3] sm:$0xff] %v135
  %174 = vst [vmem:[%s3 + $0x8] sm:$0xff] %v140
  %175 = vst [vmem:[%s3 + $0x10] sm:$0xff] %v145
  %176 = vst [vmem:[%s3 + $0x18] sm:$0xff] %v150
  %177 = vst [vmem:[%s3 + $0x20] sm:$0xff] %v155
  %178 = vst [vmem:[%s3 + $0x28] sm:$0xff] %v160
  %179 = vst [vmem:[%s3 + $0x30] sm:$0xff] %v165
  %180 = vst [vmem:[%s3 + $0x38] sm:$0xff] %v170
  %v181 = vld [vmem:[#allocation2] sm:$0xff]
  %v182 = vld [vmem:[#allocation2 + $0x8] sm:$0xff]
  %v183 = vld [vmem:[#allocation2 + $0x10] sm:$0xff]
  %v184 = vld [vmem:[#allocation2 + $0x18] sm:$0xff]
  %v185 = vld [vmem:[#allocation2 + $0x20] sm:$0xff]
  %v186 = vld [vmem:[#allocation2 + $0x28] sm:$0xff]
  %v187 = vld [vmem:[#allocation2 + $0x30] sm:$0xff]
  %v188 = vld [vmem:[#allocation2 + $0x38] sm:$0xff]
  %189 = vmax.xlane.f32.xlu0 %v135
  %v190 = vpop.xlane.xlu0 %189
  %191 = vmax.xlane.f32.xlu0 %v140
  %v192 = vpop.xlane.xlu0 %191
  %193 = vmax.xlane.f32.xlu0 %v145
  %v194 = vpop.xlane.xlu0 %193
  %195 = vmax.xlane.f32.xlu0 %v150
  %v196 = vpop.xlane.xlu0 %195
  %197 = vmax.xlane.f32.xlu0 %v155
  %v198 = vpop.xlane.xlu0 %197
  %199 = vmax.xlane.f32.xlu0 %v160
  %v200 = vpop.xlane.xlu0 %199
  %201 = vmax.xlane.f32.xlu0 %v165
  %v202 = vpop.xlane.xlu0 %201
  %203 = vmax.xlane.f32.xlu0 %v170
  %v204 = vpop.xlane.xlu0 %203
  %v205 = vmax.f32 %v181, %v190
  %v206 = vmax.f32 %v182, %v192
  %v207 = vmax.f32 %v183, %v194
  %v208 = vmax.f32 %v184, %v196
  %v209 = vmax.f32 %v185, %v198
  %v210 = vmax.f32 %v186, %v200
  %v211 = vmax.f32 %v187, %v202
  %v212 = vmax.f32 %v188, %v204
  %v213 = vsub.f32 %v181, %v205
  %v214 = vsub.f32 %v182, %v206
  %v215 = vsub.f32 %v183, %v207
  %v216 = vsub.f32 %v184, %v208
  %v217 = vsub.f32 %v185, %v209
  %v218 = vsub.f32 %v186, %v210
  %v219 = vsub.f32 %v187, %v211
  %v220 = vsub.f32 %v188, %v212
  %v221 = vmul.f32 %v213, 1.442695
  %v222 = vpow.pop %v221
  %v223 = vmul.f32 %v214, 1.442695
  %v224 = vpow.pop %v223
  %v225 = vmul.f32 %v215, 1.442695
  %v226 = vpow.pop %v225
  %v227 = vmul.f32 %v216, 1.442695
  %v228 = vpow.pop %v227
  %v229 = vmul.f32 %v217, 1.442695
  %v230 = vpow.pop %v229
  %v231 = vmul.f32 %v218, 1.442695
  %v232 = vpow.pop %v231
  %v233 = vmul.f32 %v219, 1.442695
  %v234 = vpow.pop %v233
  %v235 = vmul.f32 %v220, 1.442695
  %v236 = vpow.pop %v235
  %v237 = vld [vmem:[#allocation3] sm:$0xff]
  %v238 = vld [vmem:[#allocation3 + $0x8] sm:$0xff]
  %v239 = vld [vmem:[#allocation3 + $0x10] sm:$0xff]
  %v240 = vld [vmem:[#allocation3 + $0x18] sm:$0xff]
  %v241 = vld [vmem:[#allocation3 + $0x20] sm:$0xff]
  %v242 = vld [vmem:[#allocation3 + $0x28] sm:$0xff]
  %v243 = vld [vmem:[#allocation3 + $0x30] sm:$0xff]
  %v244 = vld [vmem:[#allocation3 + $0x38] sm:$0xff]
  %v245 = vmul.f32 %v222, %v237
  %v246 = vmul.f32 %v224, %v238
  %v247 = vmul.f32 %v226, %v239
  %v248 = vmul.f32 %v228, %v240
  %v249 = vmul.f32 %v230, %v241
  %v250 = vmul.f32 %v232, %v242
  %v251 = vmul.f32 %v234, %v243
  %v252 = vmul.f32 %v236, %v244
  %254 = vset.pattern.permute.xlu0 0
  %255 = vperm.xlu0 %254, %v205
  %v256 = vpop.permute.xlu0 %255
  %259 = vset.pattern.permute.xlu0 0
  %260 = vperm.xlu0 %259, %v206
  %v261 = vpop.permute.xlu0 %260
  %264 = vset.pattern.permute.xlu0 0
  %265 = vperm.xlu0 %264, %v207
  %v266 = vpop.permute.xlu0 %265
  %269 = vset.pattern.permute.xlu0 0
  %270 = vperm.xlu0 %269, %v208
  %v271 = vpop.permute.xlu0 %270
  %274 = vset.pattern.permute.xlu0 0
  %275 = vperm.xlu0 %274, %v209
  %v276 = vpop.permute.xlu0 %275
  %279 = vset.pattern.permute.xlu0 0
  %280 = vperm.xlu0 %279, %v210
  %v281 = vpop.permute.xlu0 %280
  %284 = vset.pattern.permute.xlu0 0
  %285 = vperm.xlu0 %284, %v211
  %v286 = vpop.permute.xlu0 %285
  %289 = vset.pattern.permute.xlu0 0
  %290 = vperm.xlu0 %289, %v212
  %v291 = vpop.permute.xlu0 %290
  %v293 = vsub.f32 %v135, %v256
  %v294 = vsub.f32 %v140, %v261
  %v295 = vsub.f32 %v145, %v266
  %v296 = vsub.f32 %v150, %v271
  %v297 = vsub.f32 %v155, %v276
  %v298 = vsub.f32 %v160, %v281
  %v299 = vsub.f32 %v165, %v286
  %v300 = vsub.f32 %v170, %v291
  %v301 = vmul.f32 %v293, 1.442695
  %v302 = vpow.pop %v301
  %v303 = vmul.f32 %v294, 1.442695
  %v304 = vpow.pop %v303
  %v305 = vmul.f32 %v295, 1.442695
  %v306 = vpow.pop %v305
  %v307 = vmul.f32 %v296, 1.442695
  %v308 = vpow.pop %v307
  %v309 = vmul.f32 %v297, 1.442695
  %v310 = vpow.pop %v309
  %v311 = vmul.f32 %v298, 1.442695
  %v312 = vpow.pop %v311
  %v313 = vmul.f32 %v299, 1.442695
  %v314 = vpow.pop %v313
  %v315 = vmul.f32 %v300, 1.442695
  %v316 = vpow.pop %v315
  %317 = vadd.xlane.f32.xlu0 %v302
  %v318 = vpop.xlane.xlu0 %317
  %319 = vadd.xlane.f32.xlu0 %v304
  %v320 = vpop.xlane.xlu0 %319
  %321 = vadd.xlane.f32.xlu0 %v306
  %v322 = vpop.xlane.xlu0 %321
  %323 = vadd.xlane.f32.xlu0 %v308
  %v324 = vpop.xlane.xlu0 %323
  %325 = vadd.xlane.f32.xlu0 %v310
  %v326 = vpop.xlane.xlu0 %325
  %327 = vadd.xlane.f32.xlu0 %v312
  %v328 = vpop.xlane.xlu0 %327
  %329 = vadd.xlane.f32.xlu0 %v314
  %v330 = vpop.xlane.xlu0 %329
  %331 = vadd.xlane.f32.xlu0 %v316
  %v332 = vpop.xlane.xlu0 %331
  %v333 = vadd.f32 %v245, %v318
  %v334 = vadd.f32 %v246, %v320
  %v335 = vadd.f32 %v247, %v322
  %v336 = vadd.f32 %v248, %v324
  %v337 = vadd.f32 %v249, %v326
  %v338 = vadd.f32 %v250, %v328
  %v339 = vadd.f32 %v251, %v330
  %v340 = vadd.f32 %v252, %v332
  %vm341 = vcmask 7168
  %342 = vst.msk [vmem:[#allocation3] sm:$0xff] %vm341, %v333
  %343 = vst.msk [vmem:[#allocation3 + $0x8] sm:$0xff] %vm341, %v334
  %344 = vst.msk [vmem:[#allocation3 + $0x10] sm:$0xff] %vm341, %v335
  %345 = vst.msk [vmem:[#allocation3 + $0x18] sm:$0xff] %vm341, %v336
  %346 = vst.msk [vmem:[#allocation3 + $0x20] sm:$0xff] %vm341, %v337
  %347 = vst.msk [vmem:[#allocation3 + $0x28] sm:$0xff] %vm341, %v338
  %348 = vst.msk [vmem:[#allocation3 + $0x30] sm:$0xff] %vm341, %v339
  %349 = vst.msk [vmem:[#allocation3 + $0x38] sm:$0xff] %vm341, %v340
  %350 = vst.msk [vmem:[#allocation2] sm:$0xff] %vm341, %v205
  %351 = vst.msk [vmem:[#allocation2 + $0x8] sm:$0xff] %vm341, %v206
  %352 = vst.msk [vmem:[#allocation2 + $0x10] sm:$0xff] %vm341, %v207
  %353 = vst.msk [vmem:[#allocation2 + $0x18] sm:$0xff] %vm341, %v208
  %354 = vst.msk [vmem:[#allocation2 + $0x20] sm:$0xff] %vm341, %v209
  %355 = vst.msk [vmem:[#allocation2 + $0x28] sm:$0xff] %vm341, %v210
  %356 = vst.msk [vmem:[#allocation2 + $0x30] sm:$0xff] %vm341, %v211
  %357 = vst.msk [vmem:[#allocation2 + $0x38] sm:$0xff] %vm341, %v212
  // Predicated region
  $region18: #{lstm_model_forward.6} parent=0 // pred_check
    %p358 = pneg %p16
  $region19: #{lstm_model_forward.6} parent=0 // pred_check_branch
    %360 = sbr.rel (%p358) target = $region21
  $region20: #{lstm_model_forward.6} parent=0 // pred_region
    %v361 = vld [vmem:[#allocation2] sm:$0xff]
    %v362 = vld [vmem:[#allocation2 + $0x8] sm:$0xff]
    %v363 = vld [vmem:[#allocation2 + $0x10] sm:$0xff]
    %v364 = vld [vmem:[#allocation2 + $0x18] sm:$0xff]
    %v365 = vld [vmem:[#allocation2 + $0x20] sm:$0xff]
    %v366 = vld [vmem:[#allocation2 + $0x28] sm:$0xff]
    %v367 = vld [vmem:[#allocation2 + $0x30] sm:$0xff]
    %v368 = vld [vmem:[#allocation2 + $0x38] sm:$0xff]
    %v369 = vld [vmem:[#allocation3] sm:$0xff]
    %v370 = vld [vmem:[#allocation3 + $0x8] sm:$0xff]
    %v371 = vld [vmem:[#allocation3 + $0x10] sm:$0xff]
    %v372 = vld [vmem:[#allocation3 + $0x18] sm:$0xff]
    %v373 = vld [vmem:[#allocation3 + $0x20] sm:$0xff]
    %v374 = vld [vmem:[#allocation3 + $0x28] sm:$0xff]
    %v375 = vld [vmem:[#allocation3 + $0x30] sm:$0xff]
    %v376 = vld [vmem:[#allocation3 + $0x38] sm:$0xff]
    %v377 = vlog2.pop %v369
    %v378 = vmul.f32 %v377, 0.6931472
    %v379 = vlog2.pop %v370
    %v380 = vmul.f32 %v379, 0.6931472
    %v381 = vlog2.pop %v371
    %v382 = vmul.f32 %v381, 0.6931472
    %v383 = vlog2.pop %v372
    %v384 = vmul.f32 %v383, 0.6931472
    %v385 = vlog2.pop %v373
    %v386 = vmul.f32 %v385, 0.6931472
    %v387 = vlog2.pop %v374
    %v388 = vmul.f32 %v387, 0.6931472
    %v389 = vlog2.pop %v375
    %v390 = vmul.f32 %v389, 0.6931472
    %v391 = vlog2.pop %v376
    %v392 = vmul.f32 %v391, 0.6931472
    %v393 = vadd.f32 %v361, %v378
    %v394 = vadd.f32 %v362, %v380
    %v395 = vadd.f32 %v363, %v382
    %v396 = vadd.f32 %v364, %v384
    %v397 = vadd.f32 %v365, %v386
    %v398 = vadd.f32 %v366, %v388
    %v399 = vadd.f32 %v367, %v390
    %v400 = vadd.f32 %v368, %v392
    %401 = vst.msk [vmem:[%s4] sm:$0xff] %vm341, %v393
    %402 = vst.msk [vmem:[%s4 + $0x8] sm:$0xff] %vm341, %v394
    %403 = vst.msk [vmem:[%s4 + $0x10] sm:$0xff] %vm341, %v395
    %404 = vst.msk [vmem:[%s4 + $0x18] sm:$0xff] %vm341, %v396
    %405 = vst.msk [vmem:[%s4 + $0x20] sm:$0xff] %vm341, %v397
    %406 = vst.msk [vmem:[%s4 + $0x28] sm:$0xff] %vm341, %v398
    %407 = vst.msk [vmem:[%s4 + $0x30] sm:$0xff] %vm341, %v399
    %408 = vst.msk [vmem:[%s4 + $0x38] sm:$0xff] %vm341, %v400
  $region21: #{lstm_model_forward.6} parent=0 // pred_fallthru
    _
  // Predicated region
  $region22: #{lstm_model_forward.6} parent=0 // pred_check
    _
  $region23: #{lstm_model_forward.6} parent=0 // pred_check_branch
    %410 = sbr.rel (0) target = $region25
  $region24: #{lstm_model_forward.6} parent=0 // pred_region
    _
  $region25: #{lstm_model_forward.6} parent=0 // pred_fallthru
    _
  // Predicated region
  $region26: #{lstm_model_forward.6} parent=0 // pred_check
    _
  $region27: #{lstm_model_forward.6} parent=0 // pred_check_branch
    %412 = sbr.rel (0) target = $region29
  $region28: #{lstm_model_forward.6} parent=0 // pred_region
    _
  $region29: #{lstm_model_forward.6} parent=0 // pred_fallthru
    _
  // Predicated region
  $region30: #{lstm_model_forward.6} parent=0 // pred_check
    _
  $region31: #{lstm_model_forward.6} parent=0 // pred_check_branch
    %414 = sbr.rel (0) target = $region33
  $region32: #{lstm_model_forward.6} parent=0 // pred_region
    _
  $region33: #{lstm_model_forward.6} parent=0 // pred_fallthru
    _
  // Predicated region
  $region34: #{lstm_model_forward.6} parent=0 // pred_check
    _
  $region35: #{lstm_model_forward.6} parent=0 // pred_check_branch
    %416 = sbr.rel (0) target = $region37
  $region36: #{lstm_model_forward.6} parent=0 // pred_region
    _
  $region37: #{lstm_model_forward.6} parent=0 // pred_fallthru
    _

// kernel: lstm_model_forward.4
$region0: #{lstm_model_forward.4}
  #allocation0 [shape = 'u32[]', space=smem, size = 0x4, offset = 0x4, fixed_abs, tag = 'smem constant byte address 0x4 - core index']
  #allocation1 [shape = 'u32[144,128]{1,0:T(1,128)}', space=vmem, size = 0x12000, scoped, tag = 'internal scratch']
  #allocation2 [shape = 'f32[8,128]{1,0:T(8,128)}', space=vmem, size = 0x1000, scoped, tag = 'scratch operand']
  #allocation3 [shape = 'f32[8,128]{1,0:T(8,128)}', space=vmem, size = 0x1000, scoped, tag = 'scratch operand']
  %s0 = inlined_call_operand.vmem [shape: f32[8,8,512], index: 0, kind: input, shape index: {}]
  %s1 = inlined_call_operand.vmem [shape: f32[128,512], index: 1, kind: input, shape index: {}]
  %s2 = inlined_call_operand.vmem [shape: f32[8,8,128], index: 2, kind: output, shape index: {}]
  %s3 = sld [smem:[#allocation0]]
  $region22: #{lstm_model_forward.4} parent=0
    _
  %s5 = ssub.s32 1, %s3
  %s6 = scalar_select 0, %s5, %s3
  // Predicated region
  $region2: #{lstm_model_forward.4} parent=0 // pred_check
    _
  $region3: #{lstm_model_forward.4} parent=0 // pred_check_branch
    %8 = sbr.rel (0) target = $region5
  $region4: #{lstm_model_forward.4} parent=0 // pred_region
    _
  $region5: #{lstm_model_forward.4} parent=0 // pred_fallthru
    _
  // Predicated region
  $region6: #{lstm_model_forward.4} parent=0 // pred_check
    _
  $region7: #{lstm_model_forward.4} parent=0 // pred_check_branch
    %10 = sbr.rel (0) target = $region9
  $region8: #{lstm_model_forward.4} parent=0 // pred_region
    _
  $region9: #{lstm_model_forward.4} parent=0 // pred_fallthru
    _
  %p11 = scmp.eq.s32.totalorder 0, 0
  // Predicated region
  $region10: #{lstm_model_forward.4} parent=0 // pred_check
    %p12 = pneg %p11
  $region11: #{lstm_model_forward.4} parent=0 // pred_check_branch
    %14 = sbr.rel (%p12) target = $region13
  $region12: #{lstm_model_forward.4} parent=0 // pred_region
    %15 = vst [vmem:[#allocation2] sm:$0xff] 0.0
    %16 = vst [vmem:[#allocation3] sm:$0xff] 0.0
  $region13: #{lstm_model_forward.4} parent=0 // pred_fallthru
    _
  %v17 = vld [vmem:[#allocation2] sm:$0xff]
  %v18 = vld [vmem:[%s1] sm:$0xff]
  %v19 = vld [vmem:[%s1 + $0x8] sm:$0xff]
  %v20 = vld [vmem:[%s1 + $0x10] sm:$0xff]
  %v21 = vld [vmem:[%s1 + $0x18] sm:$0xff]
  %v22 = vld [vmem:[%s1 + $0x20] sm:$0xff]
  %v23 = vld [vmem:[%s1 + $0x28] sm:$0xff]
  %v24 = vld [vmem:[%s1 + $0x30] sm:$0xff]
  %v25 = vld [vmem:[%s1 + $0x38] sm:$0xff]
  %v26 = vld [vmem:[%s1 + $0x40] sm:$0xff]
  %v27 = vld [vmem:[%s1 + $0x48] sm:$0xff]
  %v28 = vld [vmem:[%s1 + $0x50] sm:$0xff]
  %v29 = vld [vmem:[%s1 + $0x58] sm:$0xff]
  %v30 = vld [vmem:[%s1 + $0x60] sm:$0xff]
  %v31 = vld [vmem:[%s1 + $0x68] sm:$0xff]
  %v32 = vld [vmem:[%s1 + $0x70] sm:$0xff]
  %v33 = vld [vmem:[%s1 + $0x78] sm:$0xff]
  %v34 = vld [vmem:[%s1 + $0x80] sm:$0xff]
  %v35 = vld [vmem:[%s1 + $0x88] sm:$0xff]
  %v36 = vld [vmem:[%s1 + $0x90] sm:$0xff]
  %v37 = vld [vmem:[%s1 + $0x98] sm:$0xff]
  %v38 = vld [vmem:[%s1 + $0xa0] sm:$0xff]
  %v39 = vld [vmem:[%s1 + $0xa8] sm:$0xff]
  %v40 = vld [vmem:[%s1 + $0xb0] sm:$0xff]
  %v41 = vld [vmem:[%s1 + $0xb8] sm:$0xff]
  %v42 = vld [vmem:[%s1 + $0xc0] sm:$0xff]
  %v43 = vld [vmem:[%s1 + $0xc8] sm:$0xff]
  %v44 = vld [vmem:[%s1 + $0xd0] sm:$0xff]
  %v45 = vld [vmem:[%s1 + $0xd8] sm:$0xff]
  %v46 = vld [vmem:[%s1 + $0xe0] sm:$0xff]
  %v47 = vld [vmem:[%s1 + $0xe8] sm:$0xff]
  %v48 = vld [vmem:[%s1 + $0xf0] sm:$0xff]
  %v49 = vld [vmem:[%s1 + $0xf8] sm:$0xff]
  %v50 = vld [vmem:[%s1 + $0x100] sm:$0xff]
  %v51 = vld [vmem:[%s1 + $0x108] sm:$0xff]
  %v52 = vld [vmem:[%s1 + $0x110] sm:$0xff]
  %v53 = vld [vmem:[%s1 + $0x118] sm:$0xff]
  %v54 = vld [vmem:[%s1 + $0x120] sm:$0xff]
  %v55 = vld [vmem:[%s1 + $0x128] sm:$0xff]
  %v56 = vld [vmem:[%s1 + $0x130] sm:$0xff]
  %v57 = vld [vmem:[%s1 + $0x138] sm:$0xff]
  %v58 = vld [vmem:[%s1 + $0x140] sm:$0xff]
  %v59 = vld [vmem:[%s1 + $0x148] sm:$0xff]
  %v60 = vld [vmem:[%s1 + $0x150] sm:$0xff]
  %v61 = vld [vmem:[%s1 + $0x158] sm:$0xff]
  %v62 = vld [vmem:[%s1 + $0x160] sm:$0xff]
  %v63 = vld [vmem:[%s1 + $0x168] sm:$0xff]
  %v64 = vld [vmem:[%s1 + $0x170] sm:$0xff]
  %v65 = vld [vmem:[%s1 + $0x178] sm:$0xff]
  %v66 = vld [vmem:[%s1 + $0x180] sm:$0xff]
  %v67 = vld [vmem:[%s1 + $0x188] sm:$0xff]
  %v68 = vld [vmem:[%s1 + $0x190] sm:$0xff]
  %v69 = vld [vmem:[%s1 + $0x198] sm:$0xff]
  %v70 = vld [vmem:[%s1 + $0x1a0] sm:$0xff]
  %v71 = vld [vmem:[%s1 + $0x1a8] sm:$0xff]
  %v72 = vld [vmem:[%s1 + $0x1b0] sm:$0xff]
  %v73 = vld [vmem:[%s1 + $0x1b8] sm:$0xff]
  %v74 = vld [vmem:[%s1 + $0x1c0] sm:$0xff]
  %v75 = vld [vmem:[%s1 + $0x1c8] sm:$0xff]
  %v76 = vld [vmem:[%s1 + $0x1d0] sm:$0xff]
  %v77 = vld [vmem:[%s1 + $0x1d8] sm:$0xff]
  %v78 = vld [vmem:[%s1 + $0x1e0] sm:$0xff]
  %v79 = vld [vmem:[%s1 + $0x1e8] sm:$0xff]
  %v80 = vld [vmem:[%s1 + $0x1f0] sm:$0xff]
  %v81 = vld [vmem:[%s1 + $0x1f8] sm:$0xff]
  %v82 = vld [vmem:[%s0] sm:$0xff]
  %v83 = vld [vmem:[%s0 + $0x8] sm:$0xff]
  %v84 = vld [vmem:[%s0 + $0x10] sm:$0xff]
  %v85 = vld [vmem:[%s0 + $0x18] sm:$0xff]
  %86 = vmatprep.subr.mxu0 %v79
  %87 = vmatpush1.msra.mxu0 %v78
  %88 = vmatprep.subr.mxu0 %v75
  %89 = vmatpush1.msra.mxu0 %v74
  %90 = vmatprep.subr.mxu0 %v71
  %91 = vmatpush1.msra.mxu0 %v70
  %92 = vmatprep.subr.mxu0 %v67
  %93 = vmatpush1.msra.mxu0 %v66
  %94 = vmatprep.subr.mxu0 %v63
  %95 = vmatpush1.msra.mxu0 %v62
  %96 = vmatprep.subr.mxu0 %v59
  %97 = vmatpush1.msra.mxu0 %v58
  %98 = vmatprep.subr.mxu0 %v55
  %99 = vmatpush1.msra.mxu0 %v54
  %100 = vmatprep.subr.mxu0 %v51
  %101 = vmatpush1.msra.mxu0 %v50
  %102 = vmatprep.subr.mxu0 %v47
  %103 = vmatpush1.msra.mxu0 %v46
  %104 = vmatprep.subr.mxu0 %v43
  %105 = vmatpush1.msra.mxu0 %v42
  %106 = vmatprep.subr.mxu0 %v39
  %107 = vmatpush1.msra.mxu0 %v38
  %108 = vmatprep.subr.mxu0 %v35
  %109 = vmatpush1.msra.mxu0 %v34
  %110 = vmatprep.subr.mxu0 %v31
  %111 = vmatpush1.msra.mxu0 %v30
  %112 = vmatprep.subr.mxu0 %v27
  %113 = vmatpush1.msra.mxu0 %v26
  %114 = vmatprep.subr.mxu0 %v23
  %115 = vmatpush1.msra.mxu0 %v22
  %116 = vmatprep.subr.mxu0 %v19
  %117 = vmatpush1.msra.mxu0 %v18
  %118 = vmatprep.subr.mxu0 0.0
  %119 = vmatpush2.msra.mxu0 0.0
  %120 = vmatprep.subr.mxu0 0.0
  %121 = vmatpush2.msra.mxu0 0.0
  %122 = vmatprep.subr.mxu0 0.0
  %123 = vmatpush2.msra.mxu0 0.0
  %124 = vmatprep.subr.mxu0 0.0
  %125 = vmatpush2.msra.mxu0 0.0
  %126 = vmatprep.subr.mxu0 0.0
  %127 = vmatpush2.msra.mxu0 0.0
  %128 = vmatprep.subr.mxu0 0.0
  %129 = vmatpush2.msra.mxu0 0.0
  %130 = vmatprep.subr.mxu0 0.0
  %131 = vmatpush2.msra.mxu0 0.0
  %132 = vmatprep.subr.mxu0 0.0
  %133 = vmatpush2.msra.mxu0 0.0
  %134 = vmatprep.subr.mxu0 0.0
  %135 = vmatpush2.msra.mxu0 0.0
  %136 = vmatprep.subr.mxu0 0.0
  %137 = vmatpush2.msra.mxu0 0.0
  %138 = vmatprep.subr.mxu0 0.0
  %139 = vmatpush2.msra.mxu0 0.0
  %140 = vmatprep.subr.mxu0 0.0
  %141 = vmatpush2.msra.mxu0 0.0
  %142 = vmatprep.subr.mxu0 0.0
  %143 = vmatpush2.msra.mxu0 0.0
  %144 = vmatprep.subr.mxu0 0.0
  %145 = vmatpush2.msra.mxu0 0.0
  %146 = vmatprep.subr.mxu0 0.0
  %147 = vmatpush2.msra.mxu0 0.0
  %148 = vmatprep.subr.mxu0 0.0
  %149 = vmatpush2.msra.mxu0 0.0
  %150 = vmatprep.mubr.f32.mxu0 0.0
  %151 = vmatmul.mubr.f32.gmra.mxu0 %v17
  %v152 = vpop.f32.mrf.mxu0
  %v153 = vadd.f32 %v82, %v152
  %v154 = vpop.f32.mrf.mxu0
  %v155 = vadd.f32 %v83, %v154
  %156 = vdwg.mxu0
  %157 = vmatprep.subr.mxu0 %v81
  %158 = vmatpush1.msra.mxu0 %v80
  %159 = vmatprep.subr.mxu0 %v77
  %160 = vmatpush1.msra.mxu0 %v76
  %161 = vmatprep.subr.mxu0 %v73
  %162 = vmatpush1.msra.mxu0 %v72
  %163 = vmatprep.subr.mxu0 %v69
  %164 = vmatpush1.msra.mxu0 %v68
  %165 = vmatprep.subr.mxu0 %v65
  %166 = vmatpush1.msra.mxu0 %v64
  %167 = vmatprep.subr.mxu0 %v61
  %168 = vmatpush1.msra.mxu0 %v60
  %169 = vmatprep.subr.mxu0 %v57
  %170 = vmatpush1.msra.mxu0 %v56
  %171 = vmatprep.subr.mxu0 %v53
  %172 = vmatpush1.msra.mxu0 %v52
  %173 = vmatprep.subr.mxu0 %v49
  %174 = vmatpush1.msra.mxu0 %v48
  %175 = vmatprep.subr.mxu0 %v45
  %176 = vmatpush1.msra.mxu0 %v44
  %177 = vmatprep.subr.mxu0 %v41
  %178 = vmatpush1.msra.mxu0 %v40
  %179 = vmatprep.subr.mxu0 %v37
  %180 = vmatpush1.msra.mxu0 %v36
  %181 = vmatprep.subr.mxu0 %v33
  %182 = vmatpush1.msra.mxu0 %v32
  %183 = vmatprep.subr.mxu0 %v29
  %184 = vmatpush1.msra.mxu0 %v28
  %185 = vmatprep.subr.mxu0 %v25
  %186 = vmatpush1.msra.mxu0 %v24
  %187 = vmatprep.subr.mxu0 %v21
  %188 = vmatpush1.msra.mxu0 %v20
  %189 = vmatprep.subr.mxu0 0.0
  %190 = vmatpush2.msra.mxu0 0.0
  %191 = vmatprep.subr.mxu0 0.0
  %192 = vmatpush2.msra.mxu0 0.0
  %193 = vmatprep.subr.mxu0 0.0
  %194 = vmatpush2.msra.mxu0 0.0
  %195 = vmatprep.subr.mxu0 0.0
  %196 = vmatpush2.msra.mxu0 0.0
  %197 = vmatprep.subr.mxu0 0.0
  %198 = vmatpush2.msra.mxu0 0.0
  %199 = vmatprep.subr.mxu0 0.0
  %200 = vmatpush2.msra.mxu0 0.0
  %201 = vmatprep.subr.mxu0 0.0
  %202 = vmatpush2.msra.mxu0 0.0
  %203 = vmatprep.subr.mxu0 0.0
  %204 = vmatpush2.msra.mxu0 0.0
  %205 = vmatprep.subr.mxu0 0.0
  %206 = vmatpush2.msra.mxu0 0.0
  %207 = vmatprep.subr.mxu0 0.0
  %208 = vmatpush2.msra.mxu0 0.0
  %209 = vmatprep.subr.mxu0 0.0
  %210 = vmatpush2.msra.mxu0 0.0
  %211 = vmatprep.subr.mxu0 0.0
  %212 = vmatpush2.msra.mxu0 0.0
  %213 = vmatprep.subr.mxu0 0.0
  %214 = vmatpush2.msra.mxu0 0.0
  %215 = vmatprep.subr.mxu0 0.0
  %216 = vmatpush2.msra.mxu0 0.0
  %217 = vmatprep.subr.mxu0 0.0
  %218 = vmatpush2.msra.mxu0 0.0
  %219 = vmatprep.subr.mxu0 0.0
  %220 = vmatpush2.msra.mxu0 0.0
  %221 = vmatprep.mubr.f32.mxu0 0.0
  %222 = vmatmul.mubr.f32.gmra.mxu0 %v17
  %v223 = vpop.f32.mrf.mxu0
  %v224 = vadd.f32 %v84, %v223
  %v225 = vpop.f32.mrf.mxu0
  %v226 = vadd.f32 %v85, %v225
  %227 = vdwg.mxu0
  %v228 = vmul.f32 %v153, 0.5
  %v229 = vtanh.pop %v228
  %v230 = vmul.f32 %v229, 0.5
  %v231 = vadd.f32 %v230, 0.5
  %v232 = vmul.f32 %v155, 0.5
  %v233 = vtanh.pop %v232
  %v234 = vmul.f32 %v233, 0.5
  %v235 = vadd.f32 %v234, 0.5
  %v236 = vtanh.pop %v224
  %v237 = vmul.f32 %v226, 0.5
  %v238 = vtanh.pop %v237
  %v239 = vmul.f32 %v238, 0.5
  %v240 = vadd.f32 %v239, 0.5
  %v241 = vld [vmem:[#allocation3] sm:$0xff]
  %v242 = vmul.f32 %v235, %v241
  %v243 = vmul.f32 %v231, %v236
  %v244 = vadd.f32 %v242, %v243
  %v245 = vtanh.pop %v244
  %v246 = vmul.f32 %v240, %v245
  %247 = vst [vmem:[#allocation3] sm:$0xff] %v244
  %248 = vst [vmem:[#allocation2] sm:$0xff] %v246
  %249 = vst [vmem:[%s2] sm:$0xff] %v246
  %v250 = vld [vmem:[#allocation2] sm:$0xff]
  %v251 = vld [vmem:[%s1] sm:$0xff]
  %v252 = vld [vmem:[%s1 + $0x8] sm:$0xff]
  %v253 = vld [vmem:[%s1 + $0x10] sm:$0xff]
  %v254 = vld [vmem:[%s1 + $0x18] sm:$0xff]
  %v255 = vld [vmem:[%s1 + $0x20] sm:$0xff]
  %v256 = vld [vmem:[%s1 + $0x28] sm:$0xff]
  %v257 = vld [vmem:[%s1 + $0x30] sm:$0xff]
  %v258 = vld [vmem:[%s1 + $0x38] sm:$0xff]
  %v259 = vld [vmem:[%s1 + $0x40] sm:$0xff]
  %v260 = vld [vmem:[%s1 + $0x48] sm:$0xff]
  %v261 = vld [vmem:[%s1 + $0x50] sm:$0xff]
  %v262 = vld [vmem:[%s1 + $0x58] sm:$0xff]
  %v263 = vld [vmem:[%s1 + $0x60] sm:$0xff]
  %v264 = vld [vmem:[%s1 + $0x68] sm:$0xff]
  %v265 = vld [vmem:[%s1 + $0x70] sm:$0xff]
  %v266 = vld [vmem:[%s1 + $0x78] sm:$0xff]
  %v267 = vld [vmem:[%s1 + $0x80] sm:$0xff]
  %v268 = vld [vmem:[%s1 + $0x88] sm:$0xff]
  %v269 = vld [vmem:[%s1 + $0x90] sm:$0xff]
  %v270 = vld [vmem:[%s1 + $0x98] sm:$0xff]
  %v271 = vld [vmem:[%s1 + $0xa0] sm:$0xff]
  %v272 = vld [vmem:[%s1 + $0xa8] sm:$0xff]
  %v273 = vld [vmem:[%s1 + $0xb0] sm:$0xff]
  %v274 = vld [vmem:[%s1 + $0xb8] sm:$0xff]
  %v275 = vld [vmem:[%s1 + $0xc0] sm:$0xff]
  %v276 = vld [vmem:[%s1 + $0xc8] sm:$0xff]
  %v277 = vld [vmem:[%s1 + $0xd0] sm:$0xff]
  %v278 = vld [vmem:[%s1 + $0xd8] sm:$0xff]
  %v279 = vld [vmem:[%s1 + $0xe0] sm:$0xff]
  %v280 = vld [vmem:[%s1 + $0xe8] sm:$0xff]
  %v281 = vld [vmem:[%s1 + $0xf0] sm:$0xff]
  %v282 = vld [vmem:[%s1 + $0xf8] sm:$0xff]
  %v283 = vld [vmem:[%s1 + $0x100] sm:$0xff]
  %v284 = vld [vmem:[%s1 + $0x108] sm:$0xff]
  %v285 = vld [vmem:[%s1 + $0x110] sm:$0xff]
  %v286 = vld [vmem:[%s1 + $0x118] sm:$0xff]
  %v287 = vld [vmem:[%s1 + $0x120] sm:$0xff]
  %v288 = vld [vmem:[%s1 + $0x128] sm:$0xff]
  %v289 = vld [vmem:[%s1 + $0x130] sm:$0xff]
  %v290 = vld [vmem:[%s1 + $0x138] sm:$0xff]
  %v291 = vld [vmem:[%s1 + $0x140] sm:$0xff]
  %v292 = vld [vmem:[%s1 + $0x148] sm:$0xff]
  %v293 = vld [vmem:[%s1 + $0x150] sm:$0xff]
  %v294 = vld [vmem:[%s1 + $0x158] sm:$0xff]
  %v295 = vld [vmem:[%s1 + $0x160] sm:$0xff]
  %v296 = vld [vmem:[%s1 + $0x168] sm:$0xff]
  %v297 = vld [vmem:[%s1 + $0x170] sm:$0xff]
  %v298 = vld [vmem:[%s1 + $0x178] sm:$0xff]
  %v299 = vld [vmem:[%s1 + $0x180] sm:$0xff]
  %v300 = vld [vmem:[%s1 + $0x188] sm:$0xff]
  %v301 = vld [vmem:[%s1 + $0x190] sm:$0xff]
  %v302 = vld [vmem:[%s1 + $0x198] sm:$0xff]
  %v303 = vld [vmem:[%s1 + $0x1a0] sm:$0xff]
  %v304 = vld [vmem:[%s1 + $0x1a8] sm:$0xff]
  %v305 = vld [vmem:[%s1 + $0x1b0] sm:$0xff]
  %v306 = vld [vmem:[%s1 + $0x1b8] sm:$0xff]
  %v307 = vld [vmem:[%s1 + $0x1c0] sm:$0xff]
  %v308 = vld [vmem:[%s1 + $0x1c8] sm:$0xff]
  %v309 = vld [vmem:[%s1 + $0x1d0] sm:$0xff]
  %v310 = vld [vmem:[%s1 + $0x1d8] sm:$0xff]
  %v311 = vld [vmem:[%s1 + $0x1e0] sm:$0xff]
  %v312 = vld [vmem:[%s1 + $0x1e8] sm:$0xff]
  %v313 = vld [vmem:[%s1 + $0x1f0] sm:$0xff]
  %v314 = vld [vmem:[%s1 + $0x1f8] sm:$0xff]
  %s315 = scalar_lea.vmem %s0, 32
  %v316 = vld [vmem:[%s315] sm:$0xff]
  %v317 = vld [vmem:[%s315 + $0x8] sm:$0xff]
  %v318 = vld [vmem:[%s315 + $0x10] sm:$0xff]
  %v319 = vld [vmem:[%s315 + $0x18] sm:$0xff]
  %320 = vmatprep.subr.mxu0 %v312
  %321 = vmatpush1.msra.mxu0 %v311
  %322 = vmatprep.subr.mxu0 %v308
  %323 = vmatpush1.msra.mxu0 %v307
  %324 = vmatprep.subr.mxu0 %v304
  %325 = vmatpush1.msra.mxu0 %v303
  %326 = vmatprep.subr.mxu0 %v300
  %327 = vmatpush1.msra.mxu0 %v299
  %328 = vmatprep.subr.mxu0 %v296
  %329 = vmatpush1.msra.mxu0 %v295
  %330 = vmatprep.subr.mxu0 %v292
  %331 = vmatpush1.msra.mxu0 %v291
  %332 = vmatprep.subr.mxu0 %v288
  %333 = vmatpush1.msra.mxu0 %v287
  %334 = vmatprep.subr.mxu0 %v284
  %335 = vmatpush1.msra.mxu0 %v283
  %336 = vmatprep.subr.mxu0 %v280
  %337 = vmatpush1.msra.mxu0 %v279
  %338 = vmatprep.subr.mxu0 %v276
  %339 = vmatpush1.msra.mxu0 %v275
  %340 = vmatprep.subr.mxu0 %v272
  %341 = vmatpush1.msra.mxu0 %v271
  %342 = vmatprep.subr.mxu0 %v268
  %343 = vmatpush1.msra.mxu0 %v267
  %344 = vmatprep.subr.mxu0 %v264
  %345 = vmatpush1.msra.mxu0 %v263
  %346 = vmatprep.subr.mxu0 %v260
  %347 = vmatpush1.msra.mxu0 %v259
  %348 = vmatprep.subr.mxu0 %v256
  %349 = vmatpush1.msra.mxu0 %v255
  %350 = vmatprep.subr.mxu0 %v252
  %351 = vmatpush1.msra.mxu0 %v251
  %352 = vmatprep.subr.mxu0 0.0
  %353 = vmatpush2.msra.mxu0 0.0
  %354 = vmatprep.subr.mxu0 0.0
  %355 = vmatpush2.msra.mxu0 0.0
  %356 = vmatprep.subr.mxu0 0.0
  %357 = vmatpush2.msra.mxu0 0.0
  %358 = vmatprep.subr.mxu0 0.0
  %359 = vmatpush2.msra.mxu0 0.0
  %360 = vmatprep.subr.mxu0 0.0
  %361 = vmatpush2.msra.mxu0 0.0
  %362 = vmatprep.subr.mxu0 0.0
  %363 = vmatpush2.msra.mxu0 0.0
  %364 = vmatprep.subr.mxu0 0.0
  %365 = vmatpush2.msra.mxu0 0.0
  %366 = vmatprep.subr.mxu0 0.0
  %367 = vmatpush2.msra.mxu0 0.0
  %368 = vmatprep.subr.mxu0 0.0
  %369 = vmatpush2.msra.mxu0 0.0
  %370 = vmatprep.subr.mxu0 0.0
  %371 = vmatpush2.msra.mxu0 0.0
  %372 = vmatprep.subr.mxu0 0.0
  %373 = vmatpush2.msra.mxu0 0.0
  %374 = vmatprep.subr.mxu0 0.0
  %375 = vmatpush2.msra.mxu0 0.0
  %376 = vmatprep.subr.mxu0 0.0
  %377 = vmatpush2.msra.mxu0 0.0
  %378 = vmatprep.subr.mxu0 0.0
  %379 = vmatpush2.msra.mxu0 0.0
  %380 = vmatprep.subr.mxu0 0.0
  %381 = vmatpush2.msra.mxu0 0.0
  %382 = vmatprep.subr.mxu0 0.0
  %383 = vmatpush2.msra.mxu0 0.0
  %384 = vmatprep.mubr.f32.mxu0 0.0
  %385 = vmatmul.mubr.f32.gmra.mxu0 %v250
  %v386 = vpop.f32.mrf.mxu0
  %v387 = vadd.f32 %v316, %v386
  %v388 = vpop.f32.mrf.mxu0
  %v389 = vadd.f32 %v317, %v388
  %390 = vdwg.mxu0
  %391 = vmatprep.subr.mxu0 %v314
  %392 = vmatpush1.msra.mxu0 %v313
  %393 = vmatprep.subr.mxu0 %v310
  %394 = vmatpush1.msra.mxu0 %v309
  %395 = vmatprep.subr.mxu0 %v306
  %396 = vmatpush1.msra.mxu0 %v305
  %397 = vmatprep.subr.mxu0 %v302
  %398 = vmatpush1.msra.mxu0 %v301
  %399 = vmatprep.subr.mxu0 %v298
  %400 = vmatpush1.msra.mxu0 %v297
  %401 = vmatprep.subr.mxu0 %v294
  %402 = vmatpush1.msra.mxu0 %v293
  %403 = vmatprep.subr.mxu0 %v290
  %404 = vmatpush1.msra.mxu0 %v289
  %405 = vmatprep.subr.mxu0 %v286
  %406 = vmatpush1.msra.mxu0 %v285
  %407 = vmatprep.subr.mxu0 %v282
  %408 = vmatpush1.msra.mxu0 %v281
  %409 = vmatprep.subr.mxu0 %v278
  %410 = vmatpush1.msra.mxu0 %v277
  %411 = vmatprep.subr.mxu0 %v274
  %412 = vmatpush1.msra.mxu0 %v273
  %413 = vmatprep.subr.mxu0 %v270
  %414 = vmatpush1.msra.mxu0 %v269
  %415 = vmatprep.subr.mxu0 %v266
  %416 = vmatpush1.msra.mxu0 %v265
  %417 = vmatprep.subr.mxu0 %v262
  %418 = vmatpush1.msra.mxu0 %v261
  %419 = vmatprep.subr.mxu0 %v258
  %420 = vmatpush1.msra.mxu0 %v257
  %421 = vmatprep.subr.mxu0 %v254
  %422 = vmatpush1.msra.mxu0 %v253
  %423 = vmatprep.subr.mxu0 0.0
  %424 = vmatpush2.msra.mxu0 0.0
  %425 = vmatprep.subr.mxu0 0.0
  %426 = vmatpush2.msra.mxu0 0.0
  %427 = vmatprep.subr.mxu0 0.0
  %428 = vmatpush2.msra.mxu0 0.0
  %429 = vmatprep.subr.mxu0 0.0
  %430 = vmatpush2.msra.mxu0 0.0
  %431 = vmatprep.subr.mxu0 0.0
  %432 = vmatpush2.msra.mxu0 0.0
  %433 = vmatprep.subr.mxu0 0.0
  %434 = vmatpush2.msra.mxu0 0.0
  %435 = vmatprep.subr.mxu0 0.0
  %436 = vmatpush2.msra.mxu0 0.0
  %437 = vmatprep.subr.mxu0 0.0
  %438 = vmatpush2.msra.mxu0 0.0
  %439 = vmatprep.subr.mxu0 0.0
  %440 = vmatpush2.msra.mxu0 0.0
  %441 = vmatprep.subr.mxu0 0.0
  %442 = vmatpush2.msra.mxu0 0.0
  %443 = vmatprep.subr.mxu0 0.0
  %444 = vmatpush2.msra.mxu0 0.0
  %445 = vmatprep.subr.mxu0 0.0
  %446 = vmatpush2.msra.mxu0 0.0
  %447 = vmatprep.subr.mxu0 0.0
  %448 = vmatpush2.msra.mxu0 0.0
  %449 = vmatprep.subr.mxu0 0.0
  %450 = vmatpush2.msra.mxu0 0.0
  %451 = vmatprep.subr.mxu0 0.0
  %452 = vmatpush2.msra.mxu0 0.0
  %453 = vmatprep.subr.mxu0 0.0
  %454 = vmatpush2.msra.mxu0 0.0
  %455 = vmatprep.mubr.f32.mxu0 0.0
  %456 = vmatmul.mubr.f32.gmra.mxu0 %v250
  %v457 = vpop.f32.mrf.mxu0
  %v458 = vadd.f32 %v318, %v457
  %v459 = vpop.f32.mrf.mxu0
  %v460 = vadd.f32 %v319, %v459
  %461 = vdwg.mxu0
  %v462 = vmul.f32 %v387, 0.5
  %v463 = vtanh.pop %v462
  %v464 = vmul.f32 %v463, 0.5
  %v465 = vadd.f32 %v464, 0.5
  %v466 = vmul.f32 %v389, 0.5
  %v467 = vtanh.pop %v466
  %v468 = vmul.f32 %v467, 0.5
  %v469 = vadd.f32 %v468, 0.5
  %v470 = vtanh.pop %v458
  %v471 = vmul.f32 %v460, 0.5
  %v472 = vtanh.pop %v471
  %v473 = vmul.f32 %v472, 0.5
  %v474 = vadd.f32 %v473, 0.5
  %v475 = vld [vmem:[#allocation3] sm:$0xff]
  %v476 = vmul.f32 %v469, %v475
  %v477 = vmul.f32 %v465, %v470
  %v478 = vadd.f32 %v476, %v477
  %v479 = vtanh.pop %v478
  %v480 = vmul.f32 %v474, %v479
  %481 = vst [vmem:[#allocation3] sm:$0xff] %v478
  %482 = vst [vmem:[#allocation2] sm:$0xff] %v480
  %s483 = scalar_lea.vmem %s2, 8
  %484 = vst [vmem:[%s483] sm:$0xff] %v480
  %v485 = vld [vmem:[#allocation2] sm:$0xff]
  %v486 = vld [vmem:[%s1] sm:$0xff]
  %v487 = vld [vmem:[%s1 + $0x8] sm:$0xff]
  %v488 = vld [vmem:[%s1 + $0x10] sm:$0xff]
  %v489 = vld [vmem:[%s1 + $0x18] sm:$0xff]
  %v490 = vld [vmem:[%s1 + $0x20] sm:$0xff]
  %v491 = vld [vmem:[%s1 + $0x28] sm:$0xff]
  %v492 = vld [vmem:[%s1 + $0x30] sm:$0xff]
  %v493 = vld [vmem:[%s1 + $0x38] sm:$0xff]
  %v494 = vld [vmem:[%s1 + $0x40] sm:$0xff]
  %v495 = vld [vmem:[%s1 + $0x48] sm:$0xff]
  %v496 = vld [vmem:[%s1 + $0x50] sm:$0xff]
  %v497 = vld [vmem:[%s1 + $0x58] sm:$0xff]
  %v498 = vld [vmem:[%s1 + $0x60] sm:$0xff]
  %v499 = vld [vmem:[%s1 + $0x68] sm:$0xff]
  %v500 = vld [vmem:[%s1 + $0x70] sm:$0xff]
  %v501 = vld [vmem:[%s1 + $0x78] sm:$0xff]
  %v502 = vld [vmem:[%s1 + $0x80] sm:$0xff]
  %v503 = vld [vmem:[%s1 + $0x88] sm:$0xff]
  %v504 = vld [vmem:[%s1 + $0x90] sm:$0xff]
  %v505 = vld [vmem:[%s1 + $0x98] sm:$0xff]
  %v506 = vld [vmem:[%s1 + $0xa0] sm:$0xff]
  %v507 = vld [vmem:[%s1 + $0xa8] sm:$0xff]
  %v508 = vld [vmem:[%s1 + $0xb0] sm:$0xff]
  %v509 = vld [vmem:[%s1 + $0xb8] sm:$0xff]
  %v510 = vld [vmem:[%s1 + $0xc0] sm:$0xff]
  %v511 = vld [vmem:[%s1 + $0xc8] sm:$0xff]
  %v512 = vld [vmem:[%s1 + $0xd0] sm:$0xff]
  %v513 = vld [vmem:[%s1 + $0xd8] sm:$0xff]
  %v514 = vld [vmem:[%s1 + $0xe0] sm:$0xff]
  %v515 = vld [vmem:[%s1 + $0xe8] sm:$0xff]
  %v516 = vld [vmem:[%s1 + $0xf0] sm:$0xff]
  %v517 = vld [vmem:[%s1 + $0xf8] sm:$0xff]
  %v518 = vld [vmem:[%s1 + $0x100] sm:$0xff]
  %v519 = vld [vmem:[%s1 + $0x108] sm:$0xff]
  %v520 = vld [vmem:[%s1 + $0x110] sm:$0xff]
  %v521 = vld [vmem:[%s1 + $0x118] sm:$0xff]
  %v522 = vld [vmem:[%s1 + $0x120] sm:$0xff]
  %v523 = vld [vmem:[%s1 + $0x128] sm:$0xff]
  %v524 = vld [vmem:[%s1 + $0x130] sm:$0xff]
  %v525 = vld [vmem:[%s1 + $0x138] sm:$0xff]
  %v526 = vld [vmem:[%s1 + $0x140] sm:$0xff]
  %v527 = vld [vmem:[%s1 + $0x148] sm:$0xff]
  %v528 = vld [vmem:[%s1 + $0x150] sm:$0xff]
  %v529 = vld [vmem:[%s1 + $0x158] sm:$0xff]
  %v530 = vld [vmem:[%s1 + $0x160] sm:$0xff]
  %v531 = vld [vmem:[%s1 + $0x168] sm:$0xff]
  %v532 = vld [vmem:[%s1 + $0x170] sm:$0xff]
  %v533 = vld [vmem:[%s1 + $0x178] sm:$0xff]
  %v534 = vld [vmem:[%s1 + $0x180] sm:$0xff]
  %v535 = vld [vmem:[%s1 + $0x188] sm:$0xff]
  %v536 = vld [vmem:[%s1 + $0x190] sm:$0xff]
  %v537 = vld [vmem:[%s1 + $0x198] sm:$0xff]
  %v538 = vld [vmem:[%s1 + $0x1a0] sm:$0xff]
  %v539 = vld [vmem:[%s1 + $0x1a8] sm:$0xff]
  %v540 = vld [vmem:[%s1 + $0x1b0] sm:$0xff]
  %v541 = vld [vmem:[%s1 + $0x1b8] sm:$0xff]
  %v542 = vld [vmem:[%s1 + $0x1c0] sm:$0xff]
  %v543 = vld [vmem:[%s1 + $0x1c8] sm:$0xff]
  %v544 = vld [vmem:[%s1 + $0x1d0] sm:$0xff]
  %v545 = vld [vmem:[%s1 + $0x1d8] sm:$0xff]
  %v546 = vld [vmem:[%s1 + $0x1e0] sm:$0xff]
  %v547 = vld [vmem:[%s1 + $0x1e8] sm:$0xff]
  %v548 = vld [vmem:[%s1 + $0x1f0] sm:$0xff]
  %v549 = vld [vmem:[%s1 + $0x1f8] sm:$0xff]
  %s550 = scalar_lea.vmem %s0, 64
  %v551 = vld [vmem:[%s550] sm:$0xff]
  %v552 = vld [vmem:[%s550 + $0x8] sm:$0xff]
  %v553 = vld [vmem:[%s550 + $0x10] sm:$0xff]
  %v554 = vld [vmem:[%s550 + $0x18] sm:$0xff]
  %555 = vmatprep.subr.mxu0 %v547
  %556 = vmatpush1.msra.mxu0 %v546
  %557 = vmatprep.subr.mxu0 %v543
  %558 = vmatpush1.msra.mxu0 %v542
  %559 = vmatprep.subr.mxu0 %v539
  %560 = vmatpush1.msra.mxu0 %v538
  %561 = vmatprep.subr.mxu0 %v535
  %562 = vmatpush1.msra.mxu0 %v534
  %563 = vmatprep.subr.mxu0 %v531
  %564 = vmatpush1.msra.mxu0 %v530
  %565 = vmatprep.subr.mxu0 %v527
  %566 = vmatpush1.msra.mxu0 %v526
  %567 = vmatprep.subr.mxu0 %v523
  %568 = vmatpush1.msra.mxu0 %v522
  %569 = vmatprep.subr.mxu0 %v519
  %570 = vmatpush1.msra.mxu0 %v518
  %571 = vmatprep.subr.mxu0 %v515
  %572 = vmatpush1.msra.mxu0 %v514
  %573 = vmatprep.subr.mxu0 %v511
  %574 = vmatpush1.msra.mxu0 %v510
  %575 = vmatprep.subr.mxu0 %v507
  %576 = vmatpush1.msra.mxu0 %v506
  %577 = vmatprep.subr.mxu0 %v503
  %578 = vmatpush1.msra.mxu0 %v502
  %579 = vmatprep.subr.mxu0 %v499
  %580 = vmatpush1.msra.mxu0 %v498
  %581 = vmatprep.subr.mxu0 %v495
  %582 = vmatpush1.msra.mxu0 %v494
  %583 = vmatprep.subr.mxu0 %v491
  %584 = vmatpush1.msra.mxu0 %v490
  %585 = vmatprep.subr.mxu0 %v487
  %586 = vmatpush1.msra.mxu0 %v486
  %587 = vmatprep.subr.mxu0 0.0
  %588 = vmatpush2.msra.mxu0 0.0
  %589 = vmatprep.subr.mxu0 0.0
  %590 = vmatpush2.msra.mxu0 0.0
  %591 = vmatprep.subr.mxu0 0.0
  %592 = vmatpush2.msra.mxu0 0.0
  %593 = vmatprep.subr.mxu0 0.0
  %594 = vmatpush2.msra.mxu0 0.0
  %595 = vmatprep.subr.mxu0 0.0
  %596 = vmatpush2.msra.mxu0 0.0
  %597 = vmatprep.subr.mxu0 0.0
  %598 = vmatpush2.msra.mxu0 0.0
  %599 = vmatprep.subr.mxu0 0.0
  %600 = vmatpush2.msra.mxu0 0.0
  %601 = vmatprep.subr.mxu0 0.0
  %602 = vmatpush2.msra.mxu0 0.0
  %603 = vmatprep.subr.mxu0 0.0
  %604 = vmatpush2.msra.mxu0 0.0
  %605 = vmatprep.subr.mxu0 0.0
  %606 = vmatpush2.msra.mxu0 0.0
  %607 = vmatprep.subr.mxu0 0.0
  %608 = vmatpush2.msra.mxu0 0.0
  %609 = vmatprep.subr.mxu0 0.0
  %610 = vmatpush2.msra.mxu0 0.0
  %611 = vmatprep.subr.mxu0 0.0
  %612 = vmatpush2.msra.mxu0 0.0
  %613 = vmatprep.subr.mxu0 0.0
  %614 = vmatpush2.msra.mxu0 0.0
  %615 = vmatprep.subr.mxu0 0.0
  %616 = vmatpush2.msra.mxu0 0.0
  %617 = vmatprep.subr.mxu0 0.0
  %618 = vmatpush2.msra.mxu0 0.0
  %619 = vmatprep.mubr.f32.mxu0 0.0
  %620 = vmatmul.mubr.f32.gmra.mxu0 %v485
  %v621 = vpop.f32.mrf.mxu0
  %v622 = vadd.f32 %v551, %v621
  %v623 = vpop.f32.mrf.mxu0
  %v624 = vadd.f32 %v552, %v623
  %625 = vdwg.mxu0
  %626 = vmatprep.subr.mxu0 %v549
  %627 = vmatpush1.msra.mxu0 %v548
  %628 = vmatprep.subr.mxu0 %v545
  %629 = vmatpush1.msra.mxu0 %v544
  %630 = vmatprep.subr.mxu0 %v541
  %631 = vmatpush1.msra.mxu0 %v540
  %632 = vmatprep.subr.mxu0 %v537
  %633 = vmatpush1.msra.mxu0 %v536
  %634 = vmatprep.subr.mxu0 %v533
  %635 = vmatpush1.msra.mxu0 %v532
  %636 = vmatprep.subr.mxu0 %v529
  %637 = vmatpush1.msra.mxu0 %v528
  %638 = vmatprep.subr.mxu0 %v525
  %639 = vmatpush1.msra.mxu0 %v524
  %640 = vmatprep.subr.mxu0 %v521
  %641 = vmatpush1.msra.mxu0 %v520
  %642 = vmatprep.subr.mxu0 %v517
  %643 = vmatpush1.msra.mxu0 %v516
  %644 = vmatprep.subr.mxu0 %v513
  %645 = vmatpush1.msra.mxu0 %v512
  %646 = vmatprep.subr.mxu0 %v509
  %647 = vmatpush1.msra.mxu0 %v508
  %648 = vmatprep.subr.mxu0 %v505
  %649 = vmatpush1.msra.mxu0 %v504
  %650 = vmatprep.subr.mxu0 %v501
  %651 = vmatpush1.msra.mxu0 %v500
  %652 = vmatprep.subr.mxu0 %v497
  %653 = vmatpush1.msra.mxu0 %v496
  %654 = vmatprep.subr.mxu0 %v493
  %655 = vmatpush1.msra.mxu0 %v492
  %656 = vmatprep.subr.mxu0 %v489
  %657 = vmatpush1.msra.mxu0 %v488
  %658 = vmatprep.subr.mxu0 0.0
  %659 = vmatpush2.msra.mxu0 0.0
  %660 = vmatprep.subr.mxu0 0.0
  %661 = vmatpush2.msra.mxu0 0.0
  %662 = vmatprep.subr.mxu0 0.0
  %663 = vmatpush2.msra.mxu0 0.0
  %664 = vmatprep.subr.mxu0 0.0
  %665 = vmatpush2.msra.mxu0 0.0
  %666 = vmatprep.subr.mxu0 0.0
  %667 = vmatpush2.msra.mxu0 0.0
  %668 = vmatprep.subr.mxu0 0.0
  %669 = vmatpush2.msra.mxu0 0.0
  %670 = vmatprep.subr.mxu0 0.0
  %671 = vmatpush2.msra.mxu0 0.0
  %672 = vmatprep.subr.mxu0 0.0
  %673 = vmatpush2.msra.mxu0 0.0
  %674 = vmatprep.subr.mxu0 0.0
  %675 = vmatpush2.msra.mxu0 0.0
  %676 = vmatprep.subr.mxu0 0.0
  %677 = vmatpush2.msra.mxu0 0.0
  %678 = vmatprep.subr.mxu0 0.0
  %679 = vmatpush2.msra.mxu0 0.0
  %680 = vmatprep.subr.mxu0 0.0
  %681 = vmatpush2.msra.mxu0 0.0
  %682 = vmatprep.subr.mxu0 0.0
  %683 = vmatpush2.msra.mxu0 0.0
  %684 = vmatprep.subr.mxu0 0.0
  %685 = vmatpush2.msra.mxu0 0.0
  %686 = vmatprep.subr.mxu0 0.0
  %687 = vmatpush2.msra.mxu0 0.0
  %688 = vmatprep.subr.mxu0 0.0
  %689 = vmatpush2.msra.mxu0 0.0
  %690 = vmatprep.mubr.f32.mxu0 0.0
  %691 = vmatmul.mubr.f32.gmra.mxu0 %v485
  %v692 = vpop.f32.mrf.mxu0
  %v693 = vadd.f32 %v553, %v692
  %v694 = vpop.f32.mrf.mxu0
  %v695 = vadd.f32 %v554, %v694
  %696 = vdwg.mxu0
  %v697 = vmul.f32 %v622, 0.5
  %v698 = vtanh.pop %v697
  %v699 = vmul.f32 %v698, 0.5
  %v700 = vadd.f32 %v699, 0.5
  %v701 = vmul.f32 %v624, 0.5
  %v702 = vtanh.pop %v701
  %v703 = vmul.f32 %v702, 0.5
  %v704 = vadd.f32 %v703, 0.5
  %v705 = vtanh.pop %v693
  %v706 = vmul.f32 %v695, 0.5
  %v707 = vtanh.pop %v706
  %v708 = vmul.f32 %v707, 0.5
  %v709 = vadd.f32 %v708, 0.5
  %v710 = vld [vmem:[#allocation3] sm:$0xff]
  %v711 = vmul.f32 %v704, %v710
  %v712 = vmul.f32 %v700, %v705
  %v713 = vadd.f32 %v711, %v712
  %v714 = vtanh.pop %v713
  %v715 = vmul.f32 %v709, %v714
  %716 = vst [vmem:[#allocation3] sm:$0xff] %v713
  %717 = vst [vmem:[#allocation2] sm:$0xff] %v715
  %s718 = scalar_lea.vmem %s2, 16
  %719 = vst [vmem:[%s718] sm:$0xff] %v715
  %v720 = vld [vmem:[#allocation2] sm:$0xff]
  %v721 = vld [vmem:[%s1] sm:$0xff]
  %v722 = vld [vmem:[%s1 + $0x8] sm:$0xff]
  %v723 = vld [vmem:[%s1 + $0x10] sm:$0xff]
  %v724 = vld [vmem:[%s1 + $0x18] sm:$0xff]
  %v725 = vld [vmem:[%s1 + $0x20] sm:$0xff]
  %v726 = vld [vmem:[%s1 + $0x28] sm:$0xff]
  %v727 = vld [vmem:[%s1 + $0x30] sm:$0xff]
  %v728 = vld [vmem:[%s1 + $0x38] sm:$0xff]
  %v729 = vld [vmem:[%s1 + $0x40] sm:$0xff]
  %v730 = vld [vmem:[%s1 + $0x48] sm:$0xff]
  %v731 = vld [vmem:[%s1 + $0x50] sm:$0xff]
  %v732 = vld [vmem:[%s1 + $0x58] sm:$0xff]
  %v733 = vld [vmem:[%s1 + $0x60] sm:$0xff]
  %v734 = vld [vmem:[%s1 + $0x68] sm:$0xff]
  %v735 = vld [vmem:[%s1 + $0x70] sm:$0xff]
  %v736 = vld [vmem:[%s1 + $0x78] sm:$0xff]
  %v737 = vld [vmem:[%s1 + $0x80] sm:$0xff]
  %v738 = vld [vmem:[%s1 + $0x88] sm:$0xff]
  %v739 = vld [vmem:[%s1 + $0x90] sm:$0xff]
  %v740 = vld [vmem:[%s1 + $0x98] sm:$0xff]
  %v741 = vld [vmem:[%s1 + $0xa0] sm:$0xff]
  %v742 = vld [vmem:[%s1 + $0xa8] sm:$0xff]
  %v743 = vld [vmem:[%s1 + $0xb0] sm:$0xff]
  %v744 = vld [vmem:[%s1 + $0xb8] sm:$0xff]
  %v745 = vld [vmem:[%s1 + $0xc0] sm:$0xff]
  %v746 = vld [vmem:[%s1 + $0xc8] sm:$0xff]
  %v747 = vld [vmem:[%s1 + $0xd0] sm:$0xff]
  %v748 = vld [vmem:[%s1 + $0xd8] sm:$0xff]
  %v749 = vld [vmem:[%s1 + $0xe0] sm:$0xff]
  %v750 = vld [vmem:[%s1 + $0xe8] sm:$0xff]
  %v751 = vld [vmem:[%s1 + $0xf0] sm:$0xff]
  %v752 = vld [vmem:[%s1 + $0xf8] sm:$0xff]
  %v753 = vld [vmem:[%s1 + $0x100] sm:$0xff]
  %v754 = vld [vmem:[%s1 + $0x108] sm:$0xff]
  %v755 = vld [vmem:[%s1 + $0x110] sm:$0xff]
  %v756 = vld [vmem:[%s1 + $0x118] sm:$0xff]
  %v757 = vld [vmem:[%s1 + $0x120] sm:$0xff]
  %v758 = vld [vmem:[%s1 + $0x128] sm:$0xff]
  %v759 = vld [vmem:[%s1 + $0x130] sm:$0xff]
  %v760 = vld [vmem:[%s1 + $0x138] sm:$0xff]
  %v761 = vld [vmem:[%s1 + $0x140] sm:$0xff]
  %v762 = vld [vmem:[%s1 + $0x148] sm:$0xff]
  %v763 = vld [vmem:[%s1 + $0x150] sm:$0xff]
  %v764 = vld [vmem:[%s1 + $0x158] sm:$0xff]
  %v765 = vld [vmem:[%s1 + $0x160] sm:$0xff]
  %v766 = vld [vmem:[%s1 + $0x168] sm:$0xff]
  %v767 = vld [vmem:[%s1 + $0x170] sm:$0xff]
  %v768 = vld [vmem:[%s1 + $0x178] sm:$0xff]
  %v769 = vld [vmem:[%s1 + $0x180] sm:$0xff]
  %v770 = vld [vmem:[%s1 + $0x188] sm:$0xff]
  %v771 = vld [vmem:[%s1 + $0x190] sm:$0xff]
  %v772 = vld [vmem:[%s1 + $0x198] sm:$0xff]
  %v773 = vld [vmem:[%s1 + $0x1a0] sm:$0xff]
  %v774 = vld [vmem:[%s1 + $0x1a8] sm:$0xff]
  %v775 = vld [vmem:[%s1 + $0x1b0] sm:$0xff]
  %v776 = vld [vmem:[%s1 + $0x1b8] sm:$0xff]
  %v777 = vld [vmem:[%s1 + $0x1c0] sm:$0xff]
  %v778 = vld [vmem:[%s1 + $0x1c8] sm:$0xff]
  %v779 = vld [vmem:[%s1 + $0x1d0] sm:$0xff]
  %v780 = vld [vmem:[%s1 + $0x1d8] sm:$0xff]
  %v781 = vld [vmem:[%s1 + $0x1e0] sm:$0xff]
  %v782 = vld [vmem:[%s1 + $0x1e8] sm:$0xff]
  %v783 = vld [vmem:[%s1 + $0x1f0] sm:$0xff]
  %v784 = vld [vmem:[%s1 + $0x1f8] sm:$0xff]
  %s785 = scalar_lea.vmem %s0, 96
  %v786 = vld [vmem:[%s785] sm:$0xff]
  %v787 = vld [vmem:[%s785 + $0x8] sm:$0xff]
  %v788 = vld [vmem:[%s785 + $0x10] sm:$0xff]
  %v789 = vld [vmem:[%s785 + $0x18] sm:$0xff]
  %790 = vmatprep.subr.mxu0 %v782
  %791 = vmatpush1.msra.mxu0 %v781
  %792 = vmatprep.subr.mxu0 %v778
  %793 = vmatpush1.msra.mxu0 %v777
  %794 = vmatprep.subr.mxu0 %v774
  %795 = vmatpush1.msra.mxu0 %v773
  %796 = vmatprep.subr.mxu0 %v770
  %797 = vmatpush1.msra.mxu0 %v769
  %798 = vmatprep.subr.mxu0 %v766
  %799 = vmatpush1.msra.mxu0 %v765
  %800 = vmatprep.subr.mxu0 %v762
  %801 = vmatpush1.msra.mxu0 %v761
  %802 = vmatprep.subr.mxu0 %v758
  %803 = vmatpush1.msra.mxu0 %v757
  %804 = vmatprep.subr.mxu0 %v754
  %805 = vmatpush1.msra.mxu0 %v753
  %806 = vmatprep.subr.mxu0 %v750
  %807 = vmatpush1.msra.mxu0 %v749
  %808 = vmatprep.subr.mxu0 %v746
  %809 = vmatpush1.msra.mxu0 %v745
  %810 = vmatprep.subr.mxu0 %v742
  %811 = vmatpush1.msra.mxu0 %v741
  %812 = vmatprep.subr.mxu0 %v738
  %813 = vmatpush1.msra.mxu0 %v737
  %814 = vmatprep.subr.mxu0 %v734
  %815 = vmatpush1.msra.mxu0 %v733
  %816 = vmatprep.subr.mxu0 %v730
  %817 = vmatpush1.msra.mxu0 %v729
  %818 = vmatprep.subr.mxu0 %v726
  %819 = vmatpush1.msra.mxu0 %v725
  %820 = vmatprep.subr.mxu0 %v722
  %821 = vmatpush1.msra.mxu0 %v721
  %822 = vmatprep.subr.mxu0 0.0
  %823 = vmatpush2.msra.mxu0 0.0
  %824 = vmatprep.subr.mxu0 0.0
  %825 = vmatpush2.msra.mxu0 0.0
  %826 = vmatprep.subr.mxu0 0.0
  %827 = vmatpush2.msra.mxu0 0.0
  %828 = vmatprep.subr.mxu0 0.0
  %829 = vmatpush2.msra.mxu0 0.0
  %830 = vmatprep.subr.mxu0 0.0
  %831 = vmatpush2.msra.mxu0 0.0
  %832 = vmatprep.subr.mxu0 0.0
  %833 = vmatpush2.msra.mxu0 0.0
  %834 = vmatprep.subr.mxu0 0.0
  %835 = vmatpush2.msra.mxu0 0.0
  %836 = vmatprep.subr.mxu0 0.0
  %837 = vmatpush2.msra.mxu0 0.0
  %838 = vmatprep.subr.mxu0 0.0
  %839 = vmatpush2.msra.mxu0 0.0
  %840 = vmatprep.subr.mxu0 0.0
  %841 = vmatpush2.msra.mxu0 0.0
  %842 = vmatprep.subr.mxu0 0.0
  %843 = vmatpush2.msra.mxu0 0.0
  %844 = vmatprep.subr.mxu0 0.0
  %845 = vmatpush2.msra.mxu0 0.0
  %846 = vmatprep.subr.mxu0 0.0
  %847 = vmatpush2.msra.mxu0 0.0
  %848 = vmatprep.subr.mxu0 0.0
  %849 = vmatpush2.msra.mxu0 0.0
  %850 = vmatprep.subr.mxu0 0.0
  %851 = vmatpush2.msra.mxu0 0.0
  %852 = vmatprep.subr.mxu0 0.0
  %853 = vmatpush2.msra.mxu0 0.0
  %854 = vmatprep.mubr.f32.mxu0 0.0
  %855 = vmatmul.mubr.f32.gmra.mxu0 %v720
  %v856 = vpop.f32.mrf.mxu0
  %v857 = vadd.f32 %v786, %v856
  %v858 = vpop.f32.mrf.mxu0
  %v859 = vadd.f32 %v787, %v858
  %860 = vdwg.mxu0
  %861 = vmatprep.subr.mxu0 %v784
  %862 = vmatpush1.msra.mxu0 %v783
  %863 = vmatprep.subr.mxu0 %v780
  %864 = vmatpush1.msra.mxu0 %v779
  %865 = vmatprep.subr.mxu0 %v776
  %866 = vmatpush1.msra.mxu0 %v775
  %867 = vmatprep.subr.mxu0 %v772
  %868 = vmatpush1.msra.mxu0 %v771
  %869 = vmatprep.subr.mxu0 %v768
  %870 = vmatpush1.msra.mxu0 %v767
  %871 = vmatprep.subr.mxu0 %v764
  %872 = vmatpush1.msra.mxu0 %v763
  %873 = vmatprep.subr.mxu0 %v760
  %874 = vmatpush1.msra.mxu0 %v759
  %875 = vmatprep.subr.mxu0 %v756
  %876 = vmatpush1.msra.mxu0 %v755
  %877 = vmatprep.subr.mxu0 %v752
  %878 = vmatpush1.msra.mxu0 %v751
  %879 = vmatprep.subr.mxu0 %v748
  %880 = vmatpush1.msra.mxu0 %v747
  %881 = vmatprep.subr.mxu0 %v744
  %882 = vmatpush1.msra.mxu0 %v743
  %883 = vmatprep.subr.mxu0 %v740
  %884 = vmatpush1.msra.mxu0 %v739
  %885 = vmatprep.subr.mxu0 %v736
  %886 = vmatpush1.msra.mxu0 %v735
  %887 = vmatprep.subr.mxu0 %v732
  %888 = vmatpush1.msra.mxu0 %v731
  %889 = vmatprep.subr.mxu0 %v728
  %890 = vmatpush1.msra.mxu0 %v727
  %891 = vmatprep.subr.mxu0 %v724
  %892 = vmatpush1.msra.mxu0 %v723
  %893 = vmatprep.subr.mxu0 0.0
  %894 = vmatpush2.msra.mxu0 0.0
  %895 = vmatprep.subr.mxu0 0.0
  %896 = vmatpush2.msra.mxu0 0.0
  %897 = vmatprep.subr.mxu0 0.0
  %898 = vmatpush2.msra.mxu0 0.0
  %899 = vmatprep.subr.mxu0 0.0
  %900 = vmatpush2.msra.mxu0 0.0
  %901 = vmatprep.subr.mxu0 0.0
  %902 = vmatpush2.msra.mxu0 0.0
  %903 = vmatprep.subr.mxu0 0.0
  %904 = vmatpush2.msra.mxu0 0.0
  %905 = vmatprep.subr.mxu0 0.0
  %906 = vmatpush2.msra.mxu0 0.0
  %907 = vmatprep.subr.mxu0 0.0
  %908 = vmatpush2.msra.mxu0 0.0
  %909 = vmatprep.subr.mxu0 0.0
  %910 = vmatpush2.msra.mxu0 0.0
  %911 = vmatprep.subr.mxu0 0.0
  %912 = vmatpush2.msra.mxu0 0.0
  %913 = vmatprep.subr.mxu0 0.0
  %914 = vmatpush2.msra.mxu0 0.0
  %915 = vmatprep.subr.mxu0 0.0
  %916 = vmatpush2.msra.mxu0 0.0
  %917 = vmatprep.subr.mxu0 0.0
  %918 = vmatpush2.msra.mxu0 0.0
  %919 = vmatprep.subr.mxu0 0.0
  %920 = vmatpush2.msra.mxu0 0.0
  %921 = vmatprep.subr.mxu0 0.0
  %922 = vmatpush2.msra.mxu0 0.0
  %923 = vmatprep.subr.mxu0 0.0
  %924 = vmatpush2.msra.mxu0 0.0
  %925 = vmatprep.mubr.f32.mxu0 0.0
  %926 = vmatmul.mubr.f32.gmra.mxu0 %v720
  %v927 = vpop.f32.mrf.mxu0
  %v928 = vadd.f32 %v788, %v927
  %v929 = vpop.f32.mrf.mxu0
  %v930 = vadd.f32 %v789, %v929
  %931 = vdwg.mxu0
  %v932 = vmul.f32 %v857, 0.5
  %v933 = vtanh.pop %v932
  %v934 = vmul.f32 %v933, 0.5
  %v935 = vadd.f32 %v934, 0.5
  %v936 = vmul.f32 %v859, 0.5
  %v937 = vtanh.pop %v936
  %v938 = vmul.f32 %v937, 0.5
  %v939 = vadd.f32 %v938, 0.5
  %v940 = vtanh.pop %v928
  %v941 = vmul.f32 %v930, 0.5
  %v942 = vtanh.pop %v941
  %v943 = vmul.f32 %v942, 0.5
  %v944 = vadd.f32 %v943, 0.5
  %v945 = vld [vmem:[#allocation3] sm:$0xff]
  %v946 = vmul.f32 %v939, %v945
  %v947 = vmul.f32 %v935, %v940
  %v948 = vadd.f32 %v946, %v947
  %v949 = vtanh.pop %v948
  %v950 = vmul.f32 %v944, %v949
  %951 = vst [vmem:[#allocation3] sm:$0xff] %v948
  %952 = vst [vmem:[#allocation2] sm:$0xff] %v950
  %s953 = scalar_lea.vmem %s2, 24
  %954 = vst [vmem:[%s953] sm:$0xff] %v950
  %v955 = vld [vmem:[#allocation2] sm:$0xff]
  %v956 = vld [vmem:[%s1] sm:$0xff]
  %v957 = vld [vmem:[%s1 + $0x8] sm:$0xff]
  %v958 = vld [vmem:[%s1 + $0x10] sm:$0xff]
  %v959 = vld [vmem:[%s1 + $0x18] sm:$0xff]
  %v960 = vld [vmem:[%s1 + $0x20] sm:$0xff]
  %v961 = vld [vmem:[%s1 + $0x28] sm:$0xff]
  %v962 = vld [vmem:[%s1 + $0x30] sm:$0xff]
  %v963 = vld [vmem:[%s1 + $0x38] sm:$0xff]
  %v964 = vld [vmem:[%s1 + $0x40] sm:$0xff]
  %v965 = vld [vmem:[%s1 + $0x48] sm:$0xff]
  %v966 = vld [vmem:[%s1 + $0x50] sm:$0xff]
  %v967 = vld [vmem:[%s1 + $0x58] sm:$0xff]
  %v968 = vld [vmem:[%s1 + $0x60] sm:$0xff]
  %v969 = vld [vmem:[%s1 + $0x68] sm:$0xff]
  %v970 = vld [vmem:[%s1 + $0x70] sm:$0xff]
  %v971 = vld [vmem:[%s1 + $0x78] sm:$0xff]
  %v972 = vld [vmem:[%s1 + $0x80] sm:$0xff]
  %v973 = vld [vmem:[%s1 + $0x88] sm:$0xff]
  %v974 = vld [vmem:[%s1 + $0x90] sm:$0xff]
  %v975 = vld [vmem:[%s1 + $0x98] sm:$0xff]
  %v976 = vld [vmem:[%s1 + $0xa0] sm:$0xff]
  %v977 = vld [vmem:[%s1 + $0xa8] sm:$0xff]
  %v978 = vld [vmem:[%s1 + $0xb0] sm:$0xff]
  %v979 = vld [vmem:[%s1 + $0xb8] sm:$0xff]
  %v980 = vld [vmem:[%s1 + $0xc0] sm:$0xff]
  %v981 = vld [vmem:[%s1 + $0xc8] sm:$0xff]
  %v982 = vld [vmem:[%s1 + $0xd0] sm:$0xff]
  %v983 = vld [vmem:[%s1 + $0xd8] sm:$0xff]
  %v984 = vld [vmem:[%s1 + $0xe0] sm:$0xff]
  %v985 = vld [vmem:[%s1 + $0xe8] sm:$0xff]
  %v986 = vld [vmem:[%s1 + $0xf0] sm:$0xff]
  %v987 = vld [vmem:[%s1 + $0xf8] sm:$0xff]
  %v988 = vld [vmem:[%s1 + $0x100] sm:$0xff]
  %v989 = vld [vmem:[%s1 + $0x108] sm:$0xff]
  %v990 = vld [vmem:[%s1 + $0x110] sm:$0xff]
  %v991 = vld [vmem:[%s1 + $0x118] sm:$0xff]
  %v992 = vld [vmem:[%s1 + $0x120] sm:$0xff]
  %v993 = vld [vmem:[%s1 + $0x128] sm:$0xff]
  %v994 = vld [vmem:[%s1 + $0x130] sm:$0xff]
  %v995 = vld [vmem:[%s1 + $0x138] sm:$0xff]
  %v996 = vld [vmem:[%s1 + $0x140] sm:$0xff]
  %v997 = vld [vmem:[%s1 + $0x148] sm:$0xff]
  %v998 = vld [vmem:[%s1 + $0x150] sm:$0xff]
  %v999 = vld [vmem:[%s1 + $0x158] sm:$0xff]
  %v1000 = vld [vmem:[%s1 + $0x160] sm:$0xff]
  %v1001 = vld [vmem:[%s1 + $0x168] sm:$0xff]
  %v1002 = vld [vmem:[%s1 + $0x170] sm:$0xff]
  %v1003 = vld [vmem:[%s1 + $0x178] sm:$0xff]
  %v1004 = vld [vmem:[%s1 + $0x180] sm:$0xff]
  %v1005 = vld [vmem:[%s1 + $0x188] sm:$0xff]
  %v1006 = vld [vmem:[%s1 + $0x190] sm:$0xff]
  %v1007 = vld [vmem:[%s1 + $0x198] sm:$0xff]
  %v1008 = vld [vmem:[%s1 + $0x1a0] sm:$0xff]
  %v1009 = vld [vmem:[%s1 + $0x1a8] sm:$0xff]
  %v1010 = vld [vmem:[%s1 + $0x1b0] sm:$0xff]
  %v1011 = vld [vmem:[%s1 + $0x1b8] sm:$0xff]
  %v1012 = vld [vmem:[%s1 + $0x1c0] sm:$0xff]
  %v1013 = vld [vmem:[%s1 + $0x1c8] sm:$0xff]
  %v1014 = vld [vmem:[%s1 + $0x1d0] sm:$0xff]
  %v1015 = vld [vmem:[%s1 + $0x1d8] sm:$0xff]
  %v1016 = vld [vmem:[%s1 + $0x1e0] sm:$0xff]
  %v1017 = vld [vmem:[%s1 + $0x1e8] sm:$0xff]
  %v1018 = vld [vmem:[%s1 + $0x1f0] sm:$0xff]
  %v1019 = vld [vmem:[%s1 + $0x1f8] sm:$0xff]
  %s1020 = scalar_lea.vmem %s0, 128
  %v1021 = vld [vmem:[%s1020] sm:$0xff]
  %v1022 = vld [vmem:[%s1020 + $0x8] sm:$0xff]
  %v1023 = vld [vmem:[%s1020 + $0x10] sm:$0xff]
  %v1024 = vld [vmem:[%s1020 + $0x18] sm:$0xff]
  %1025 = vmatprep.subr.mxu0 %v1017
  %1026 = vmatpush1.msra.mxu0 %v1016
  %1027 = vmatprep.subr.mxu0 %v1013
  %1028 = vmatpush1.msra.mxu0 %v1012
  %1029 = vmatprep.subr.mxu0 %v1009
  %1030 = vmatpush1.msra.mxu0 %v1008
  %1031 = vmatprep.subr.mxu0 %v1005
  %1032 = vmatpush1.msra.mxu0 %v1004
  %1033 = vmatprep.subr.mxu0 %v1001
  %1034 = vmatpush1.msra.mxu0 %v1000
  %1035 = vmatprep.subr.mxu0 %v997
  %1036 = vmatpush1.msra.mxu0 %v996
  %1037 = vmatprep.subr.mxu0 %v993
  %1038 = vmatpush1.msra.mxu0 %v992
  %1039 = vmatprep.subr.mxu0 %v989
  %1040 = vmatpush1.msra.mxu0 %v988
  %1041 = vmatprep.subr.mxu0 %v985
  %1042 = vmatpush1.msra.mxu0 %v984
  %1043 = vmatprep.subr.mxu0 %v981
  %1044 = vmatpush1.msra.mxu0 %v980
  %1045 = vmatprep.subr.mxu0 %v977
  %1046 = vmatpush1.msra.mxu0 %v976
  %1047 = vmatprep.subr.mxu0 %v973
  %1048 = vmatpush1.msra.mxu0 %v972
  %1049 = vmatprep.subr.mxu0 %v969
  %1050 = vmatpush1.msra.mxu0 %v968
  %1051 = vmatprep.subr.mxu0 %v965
  %1052 = vmatpush1.msra.mxu0 %v964
  %1053 = vmatprep.subr.mxu0 %v961
  %1054 = vmatpush1.msra.mxu0 %v960
  %1055 = vmatprep.subr.mxu0 %v957
  %1056 = vmatpush1.msra.mxu0 %v956
  %1057 = vmatprep.subr.mxu0 0.0
  %1058 = vmatpush2.msra.mxu0 0.0
  %1059 = vmatprep.subr.mxu0 0.0
  %1060 = vmatpush2.msra.mxu0 0.0
  %1061 = vmatprep.subr.mxu0 0.0
  %1062 = vmatpush2.msra.mxu0 0.0
  %1063 = vmatprep.subr.mxu0 0.0
  %1064 = vmatpush2.msra.mxu0 0.0
  %1065 = vmatprep.subr.mxu0 0.0
  %1066 = vmatpush2.msra.mxu0 0.0
  %1067 = vmatprep.subr.mxu0 0.0
  %1068 = vmatpush2.msra.mxu0 0.0
  %1069 = vmatprep.subr.mxu0 0.0
  %1070 = vmatpush2.msra.mxu0 0.0
  %1071 = vmatprep.subr.mxu0 0.0
  %1072 = vmatpush2.msra.mxu0 0.0
  %1073 = vmatprep.subr.mxu0 0.0
  %1074 = vmatpush2.msra.mxu0 0.0
  %1075 = vmatprep.subr.mxu0 0.0
  %1076 = vmatpush2.msra.mxu0 0.0
  %1077 = vmatprep.subr.mxu0 0.0
  %1078 = vmatpush2.msra.mxu0 0.0
  %1079 = vmatprep.subr.mxu0 0.0
  %1080 = vmatpush2.msra.mxu0 0.0
  %1081 = vmatprep.subr.mxu0 0.0
  %1082 = vmatpush2.msra.mxu0 0.0
  %1083 = vmatprep.subr.mxu0 0.0
  %1084 = vmatpush2.msra.mxu0 0.0
  %1085 = vmatprep.subr.mxu0 0.0
  %1086 = vmatpush2.msra.mxu0 0.0
  %1087 = vmatprep.subr.mxu0 0.0
  %1088 = vmatpush2.msra.mxu0 0.0
  %1089 = vmatprep.mubr.f32.mxu0 0.0
  %1090 = vmatmul.mubr.f32.gmra.mxu0 %v955
  %v1091 = vpop.f32.mrf.mxu0
  %v1092 = vadd.f32 %v1021, %v1091
  %v1093 = vpop.f32.mrf.mxu0
  %v1094 = vadd.f32 %v1022, %v1093
  %1095 = vdwg.mxu0
  %1096 = vmatprep.subr.mxu0 %v1019
  %1097 = vmatpush1.msra.mxu0 %v1018
  %1098 = vmatprep.subr.mxu0 %v1015
  %1099 = vmatpush1.msra.mxu0 %v1014
  %1100 = vmatprep.subr.mxu0 %v1011
  %1101 = vmatpush1.msra.mxu0 %v1010
  %1102 = vmatprep.subr.mxu0 %v1007
  %1103 = vmatpush1.msra.mxu0 %v1006
  %1104 = vmatprep.subr.mxu0 %v1003
  %1105 = vmatpush1.msra.mxu0 %v1002
  %1106 = vmatprep.subr.mxu0 %v999
  %1107 = vmatpush1.msra.mxu0 %v998
  %1108 = vmatprep.subr.mxu0 %v995
  %1109 = vmatpush1.msra.mxu0 %v994
  %1110 = vmatprep.subr.mxu0 %v991
  %1111 = vmatpush1.msra.mxu0 %v990
  %1112 = vmatprep.subr.mxu0 %v987
  %1113 = vmatpush1.msra.mxu0 %v986
  %1114 = vmatprep.subr.mxu0 %v983
  %1115 = vmatpush1.msra.mxu0 %v982
  %1116 = vmatprep.subr.mxu0 %v979
  %1117 = vmatpush1.msra.mxu0 %v978
  %1118 = vmatprep.subr.mxu0 %v975
  %1119 = vmatpush1.msra.mxu0 %v974
  %1120 = vmatprep.subr.mxu0 %v971
  %1121 = vmatpush1.msra.mxu0 %v970
  %1122 = vmatprep.subr.mxu0 %v967
  %1123 = vmatpush1.msra.mxu0 %v966
  %1124 = vmatprep.subr.mxu0 %v963
  %1125 = vmatpush1.msra.mxu0 %v962
  %1126 = vmatprep.subr.mxu0 %v959
  %1127 = vmatpush1.msra.mxu0 %v958
  %1128 = vmatprep.subr.mxu0 0.0
  %1129 = vmatpush2.msra.mxu0 0.0
  %1130 = vmatprep.subr.mxu0 0.0
  %1131 = vmatpush2.msra.mxu0 0.0
  %1132 = vmatprep.subr.mxu0 0.0
  %1133 = vmatpush2.msra.mxu0 0.0
  %1134 = vmatprep.subr.mxu0 0.0
  %1135 = vmatpush2.msra.mxu0 0.0
  %1136 = vmatprep.subr.mxu0 0.0
  %1137 = vmatpush2.msra.mxu0 0.0
  %1138 = vmatprep.subr.mxu0 0.0
  %1139 = vmatpush2.msra.mxu0 0.0
  %1140 = vmatprep.subr.mxu0 0.0
  %1141 = vmatpush2.msra.mxu0 0.0
  %1142 = vmatprep.subr.mxu0 0.0
  %1143 = vmatpush2.msra.mxu0 0.0
  %1144 = vmatprep.subr.mxu0 0.0
  %1145 = vmatpush2.msra.mxu0 0.0
  %1146 = vmatprep.subr.mxu0 0.0
  %1147 = vmatpush2.msra.mxu0 0.0
  %1148 = vmatprep.subr.mxu0 0.0
  %1149 = vmatpush2.msra.mxu0 0.0
  %1150 = vmatprep.subr.mxu0 0.0
  %1151 = vmatpush2.msra.mxu0 0.0
  %1152 = vmatprep.subr.mxu0 0.0
  %1153 = vmatpush2.msra.mxu0 0.0
  %1154 = vmatprep.subr.mxu0 0.0
  %1155 = vmatpush2.msra.mxu0 0.0
  %1156 = vmatprep.subr.mxu0 0.0
  %1157 = vmatpush2.msra.mxu0 0.0
  %1158 = vmatprep.subr.mxu0 0.0
  %1159 = vmatpush2.msra.mxu0 0.0
  %1160 = vmatprep.mubr.f32.mxu0 0.0
  %1161 = vmatmul.mubr.f32.gmra.mxu0 %v955
  %v1162 = vpop.f32.mrf.mxu0
  %v1163 = vadd.f32 %v1023, %v1162
  %v1164 = vpop.f32.mrf.mxu0
  %v1165 = vadd.f32 %v1024, %v1164
  %1166 = vdwg.mxu0
  %v1167 = vmul.f32 %v1092, 0.5
  %v1168 = vtanh.pop %v1167
  %v1169 = vmul.f32 %v1168, 0.5
  %v1170 = vadd.f32 %v1169, 0.5
  %v1171 = vmul.f32 %v1094, 0.5
  %v1172 = vtanh.pop %v1171
  %v1173 = vmul.f32 %v1172, 0.5
  %v1174 = vadd.f32 %v1173, 0.5
  %v1175 = vtanh.pop %v1163
  %v1176 = vmul.f32 %v1165, 0.5
  %v1177 = vtanh.pop %v1176
  %v1178 = vmul.f32 %v1177, 0.5
  %v1179 = vadd.f32 %v1178, 0.5
  %v1180 = vld [vmem:[#allocation3] sm:$0xff]
  %v1181 = vmul.f32 %v1174, %v1180
  %v1182 = vmul.f32 %v1170, %v1175
  %v1183 = vadd.f32 %v1181, %v1182
  %v1184 = vtanh.pop %v1183
  %v1185 = vmul.f32 %v1179, %v1184
  %1186 = vst [vmem:[#allocation3] sm:$0xff] %v1183
  %1187 = vst [vmem:[#allocation2] sm:$0xff] %v1185
  %s1188 = scalar_lea.vmem %s2, 32
  %1189 = vst [vmem:[%s1188] sm:$0xff] %v1185
  %v1190 = vld [vmem:[#allocation2] sm:$0xff]
  %v1191 = vld [vmem:[%s1] sm:$0xff]
  %v1192 = vld [vmem:[%s1 + $0x8] sm:$0xff]
  %v1193 = vld [vmem:[%s1 + $0x10] sm:$0xff]
  %v1194 = vld [vmem:[%s1 + $0x18] sm:$0xff]
  %v1195 = vld [vmem:[%s1 + $0x20] sm:$0xff]
  %v1196 = vld [vmem:[%s1 + $0x28] sm:$0xff]
  %v1197 = vld [vmem:[%s1 + $0x30] sm:$0xff]
  %v1198 = vld [vmem:[%s1 + $0x38] sm:$0xff]
  %v1199 = vld [vmem:[%s1 + $0x40] sm:$0xff]
  %v1200 = vld [vmem:[%s1 + $0x48] sm:$0xff]
  %v1201 = vld [vmem:[%s1 + $0x50] sm:$0xff]
  %v1202 = vld [vmem:[%s1 + $0x58] sm:$0xff]
  %v1203 = vld [vmem:[%s1 + $0x60] sm:$0xff]
  %v1204 = vld [vmem:[%s1 + $0x68] sm:$0xff]
  %v1205 = vld [vmem:[%s1 + $0x70] sm:$0xff]
  %v1206 = vld [vmem:[%s1 + $0x78] sm:$0xff]
  %v1207 = vld [vmem:[%s1 + $0x80] sm:$0xff]
  %v1208 = vld [vmem:[%s1 + $0x88] sm:$0xff]
  %v1209 = vld [vmem:[%s1 + $0x90] sm:$0xff]
  %v1210 = vld [vmem:[%s1 + $0x98] sm:$0xff]
  %v1211 = vld [vmem:[%s1 + $0xa0] sm:$0xff]
  %v1212 = vld [vmem:[%s1 + $0xa8] sm:$0xff]
  %v1213 = vld [vmem:[%s1 + $0xb0] sm:$0xff]
  %v1214 = vld [vmem:[%s1 + $0xb8] sm:$0xff]
  %v1215 = vld [vmem:[%s1 + $0xc0] sm:$0xff]
  %v1216 = vld [vmem:[%s1 + $0xc8] sm:$0xff]
  %v1217 = vld [vmem:[%s1 + $0xd0] sm:$0xff]
  %v1218 = vld [vmem:[%s1 + $0xd8] sm:$0xff]
  %v1219 = vld [vmem:[%s1 + $0xe0] sm:$0xff]
  %v1220 = vld [vmem:[%s1 + $0xe8] sm:$0xff]
  %v1221 = vld [vmem:[%s1 + $0xf0] sm:$0xff]
  %v1222 = vld [vmem:[%s1 + $0xf8] sm:$0xff]
  %v1223 = vld [vmem:[%s1 + $0x100] sm:$0xff]
  %v1224 = vld [vmem:[%s1 + $0x108] sm:$0xff]
  %v1225 = vld [vmem:[%s1 + $0x110] sm:$0xff]
  %v1226 = vld [vmem:[%s1 + $0x118] sm:$0xff]
  %v1227 = vld [vmem:[%s1 + $0x120] sm:$0xff]
  %v1228 = vld [vmem:[%s1 + $0x128] sm:$0xff]
  %v1229 = vld [vmem:[%s1 + $0x130] sm:$0xff]
  %v1230 = vld [vmem:[%s1 + $0x138] sm:$0xff]
  %v1231 = vld [vmem:[%s1 + $0x140] sm:$0xff]
  %v1232 = vld [vmem:[%s1 + $0x148] sm:$0xff]
  %v1233 = vld [vmem:[%s1 + $0x150] sm:$0xff]
  %v1234 = vld [vmem:[%s1 + $0x158] sm:$0xff]
  %v1235 = vld [vmem:[%s1 + $0x160] sm:$0xff]
  %v1236 = vld [vmem:[%s1 + $0x168] sm:$0xff]
  %v1237 = vld [vmem:[%s1 + $0x170] sm:$0xff]
  %v1238 = vld [vmem:[%s1 + $0x178] sm:$0xff]
  %v1239 = vld [vmem:[%s1 + $0x180] sm:$0xff]
  %v1240 = vld [vmem:[%s1 + $0x188] sm:$0xff]
  %v1241 = vld [vmem:[%s1 + $0x190] sm:$0xff]
  %v1242 = vld [vmem:[%s1 + $0x198] sm:$0xff]
  %v1243 = vld [vmem:[%s1 + $0x1a0] sm:$0xff]
  %v1244 = vld [vmem:[%s1 + $0x1a8] sm:$0xff]
  %v1245 = vld [vmem:[%s1 + $0x1b0] sm:$0xff]
  %v1246 = vld [vmem:[%s1 + $0x1b8] sm:$0xff]
  %v1247 = vld [vmem:[%s1 + $0x1c0] sm:$0xff]
  %v1248 = vld [vmem:[%s1 + $0x1c8] sm:$0xff]
  %v1249 = vld [vmem:[%s1 + $0x1d0] sm:$0xff]
  %v1250 = vld [vmem:[%s1 + $0x1d8] sm:$0xff]
  %v1251 = vld [vmem:[%s1 + $0x1e0] sm:$0xff]
  %v1252 = vld [vmem:[%s1 + $0x1e8] sm:$0xff]
  %v1253 = vld [vmem:[%s1 + $0x1f0] sm:$0xff]
  %v1254 = vld [vmem:[%s1 + $0x1f8] sm:$0xff]
  %s1255 = scalar_lea.vmem %s0, 160
  %v1256 = vld [vmem:[%s1255] sm:$0xff]
  %v1257 = vld [vmem:[%s1255 + $0x8] sm:$0xff]
  %v1258 = vld [vmem:[%s1255 + $0x10] sm:$0xff]
  %v1259 = vld [vmem:[%s1255 + $0x18] sm:$0xff]
  %1260 = vmatprep.subr.mxu0 %v1252
  %1261 = vmatpush1.msra.mxu0 %v1251
  %1262 = vmatprep.subr.mxu0 %v1248
  %1263 = vmatpush1.msra.mxu0 %v1247
  %1264 = vmatprep.subr.mxu0 %v1244
  %1265 = vmatpush1.msra.mxu0 %v1243
  %1266 = vmatprep.subr.mxu0 %v1240
  %1267 = vmatpush1.msra.mxu0 %v1239
  %1268 = vmatprep.subr.mxu0 %v1236
  %1269 = vmatpush1.msra.mxu0 %v1235
  %1270 = vmatprep.subr.mxu0 %v1232
  %1271 = vmatpush1.msra.mxu0 %v1231
  %1272 = vmatprep.subr.mxu0 %v1228
  %1273 = vmatpush1.msra.mxu0 %v1227
  %1274 = vmatprep.subr.mxu0 %v1224
  %1275 = vmatpush1.msra.mxu0 %v1223
  %1276 = vmatprep.subr.mxu0 %v1220
  %1277 = vmatpush1.msra.mxu0 %v1219
  %1278 = vmatprep.subr.mxu0 %v1216
  %1279 = vmatpush1.msra.mxu0 %v1215
  %1280 = vmatprep.subr.mxu0 %v1212
  %1281 = vmatpush1.msra.mxu0 %v1211
  %1282 = vmatprep.subr.mxu0 %v1208
  %1283 = vmatpush1.msra.mxu0 %v1207
  %1284 = vmatprep.subr.mxu0 %v1204
  %1285 = vmatpush1.msra.mxu0 %v1203
  %1286 = vmatprep.subr.mxu0 %v1200
  %1287 = vmatpush1.msra.mxu0 %v1199
  %1288 = vmatprep.subr.mxu0 %v1196
  %1289 = vmatpush1.msra.mxu0 %v1195
  %1290 = vmatprep.subr.mxu0 %v1192
  %1291 = vmatpush1.msra.mxu0 %v1191
  %1292 = vmatprep.subr.mxu0 0.0
  %1293 = vmatpush2.msra.mxu0 0.0
  %1294 = vmatprep.subr.mxu0 0.0
  %1295 = vmatpush2.msra.mxu0 0.0
  %1296 = vmatprep.subr.mxu0 0.0
  %1297 = vmatpush2.msra.mxu0 0.0
  %1298 = vmatprep.subr.mxu0 0.0
  %1299 = vmatpush2.msra.mxu0 0.0
  %1300 = vmatprep.subr.mxu0 0.0
  %1301 = vmatpush2.msra.mxu0 0.0
  %1302 = vmatprep.subr.mxu0 0.0
  %1303 = vmatpush2.msra.mxu0 0.0
  %1304 = vmatprep.subr.mxu0 0.0
  %1305 = vmatpush2.msra.mxu0 0.0
  %1306 = vmatprep.subr.mxu0 0.0
  %1307 = vmatpush2.msra.mxu0 0.0
  %1308 = vmatprep.subr.mxu0 0.0
  %1309 = vmatpush2.msra.mxu0 0.0
  %1310 = vmatprep.subr.mxu0 0.0
  %1311 = vmatpush2.msra.mxu0 0.0
  %1312 = vmatprep.subr.mxu0 0.0
  %1313 = vmatpush2.msra.mxu0 0.0
  %1314 = vmatprep.subr.mxu0 0.0
  %1315 = vmatpush2.msra.mxu0 0.0
  %1316 = vmatprep.subr.mxu0 0.0
  %1317 = vmatpush2.msra.mxu0 0.0
  %1318 = vmatprep.subr.mxu0 0.0
  %1319 = vmatpush2.msra.mxu0 0.0
  %1320 = vmatprep.subr.mxu0 0.0
  %1321 = vmatpush2.msra.mxu0 0.0
  %1322 = vmatprep.subr.mxu0 0.0
  %1323 = vmatpush2.msra.mxu0 0.0
  %1324 = vmatprep.mubr.f32.mxu0 0.0
  %1325 = vmatmul.mubr.f32.gmra.mxu0 %v1190
  %v1326 = vpop.f32.mrf.mxu0
  %v1327 = vadd.f32 %v1256, %v1326
  %v1328 = vpop.f32.mrf.mxu0
  %v1329 = vadd.f32 %v1257, %v1328
  %1330 = vdwg.mxu0
  %1331 = vmatprep.subr.mxu0 %v1254
  %1332 = vmatpush1.msra.mxu0 %v1253
  %1333 = vmatprep.subr.mxu0 %v1250
  %1334 = vmatpush1.msra.mxu0 %v1249
  %1335 = vmatprep.subr.mxu0 %v1246
  %1336 = vmatpush1.msra.mxu0 %v1245
  %1337 = vmatprep.subr.mxu0 %v1242
  %1338 = vmatpush1.msra.mxu0 %v1241
  %1339 = vmatprep.subr.mxu0 %v1238
  %1340 = vmatpush1.msra.mxu0 %v1237
  %1341 = vmatprep.subr.mxu0 %v1234
  %1342 = vmatpush1.msra.mxu0 %v1233
  %1343 = vmatprep.subr.mxu0 %v1230
  %1344 = vmatpush1.msra.mxu0 %v1229
  %1345 = vmatprep.subr.mxu0 %v1226
  %1346 = vmatpush1.msra.mxu0 %v1225
  %1347 = vmatprep.subr.mxu0 %v1222
  %1348 = vmatpush1.msra.mxu0 %v1221
  %1349 = vmatprep.subr.mxu0 %v1218
  %1350 = vmatpush1.msra.mxu0 %v1217
  %1351 = vmatprep.subr.mxu0 %v1214
  %1352 = vmatpush1.msra.mxu0 %v1213
  %1353 = vmatprep.subr.mxu0 %v1210
  %1354 = vmatpush1.msra.mxu0 %v1209
  %1355 = vmatprep.subr.mxu0 %v1206
  %1356 = vmatpush1.msra.mxu0 %v1205
  %1357 = vmatprep.subr.mxu0 %v1202
  %1358 = vmatpush1.msra.mxu0 %v1201
  %1359 = vmatprep.subr.mxu0 %v1198
  %1360 = vmatpush1.msra.mxu0 %v1197
  %1361 = vmatprep.subr.mxu0 %v1194
  %1362 = vmatpush1.msra.mxu0 %v1193
  %1363 = vmatprep.subr.mxu0 0.0
  %1364 = vmatpush2.msra.mxu0 0.0
  %1365 = vmatprep.subr.mxu0 0.0
  %1366 = vmatpush2.msra.mxu0 0.0
  %1367 = vmatprep.subr.mxu0 0.0
  %1368 = vmatpush2.msra.mxu0 0.0
  %1369 = vmatprep.subr.mxu0 0.0
  %1370 = vmatpush2.msra.mxu0 0.0
  %1371 = vmatprep.subr.mxu0 0.0
  %1372 = vmatpush2.msra.mxu0 0.0
  %1373 = vmatprep.subr.mxu0 0.0
  %1374 = vmatpush2.msra.mxu0 0.0
  %1375 = vmatprep.subr.mxu0 0.0
  %1376 = vmatpush2.msra.mxu0 0.0
  %1377 = vmatprep.subr.mxu0 0.0
  %1378 = vmatpush2.msra.mxu0 0.0
  %1379 = vmatprep.subr.mxu0 0.0
  %1380 = vmatpush2.msra.mxu0 0.0
  %1381 = vmatprep.subr.mxu0 0.0
  %1382 = vmatpush2.msra.mxu0 0.0
  %1383 = vmatprep.subr.mxu0 0.0
  %1384 = vmatpush2.msra.mxu0 0.0
  %1385 = vmatprep.subr.mxu0 0.0
  %1386 = vmatpush2.msra.mxu0 0.0
  %1387 = vmatprep.subr.mxu0 0.0
  %1388 = vmatpush2.msra.mxu0 0.0
  %1389 = vmatprep.subr.mxu0 0.0
  %1390 = vmatpush2.msra.mxu0 0.0
  %1391 = vmatprep.subr.mxu0 0.0
  %1392 = vmatpush2.msra.mxu0 0.0
  %1393 = vmatprep.subr.mxu0 0.0
  %1394 = vmatpush2.msra.mxu0 0.0
  %1395 = vmatprep.mubr.f32.mxu0 0.0
  %1396 = vmatmul.mubr.f32.gmra.mxu0 %v1190
  %v1397 = vpop.f32.mrf.mxu0
  %v1398 = vadd.f32 %v1258, %v1397
  %v1399 = vpop.f32.mrf.mxu0
  %v1400 = vadd.f32 %v1259, %v1399
  %1401 = vdwg.mxu0
  %v1402 = vmul.f32 %v1327, 0.5
  %v1403 = vtanh.pop %v1402
  %v1404 = vmul.f32 %v1403, 0.5
  %v1405 = vadd.f32 %v1404, 0.5
  %v1406 = vmul.f32 %v1329, 0.5
  %v1407 = vtanh.pop %v1406
  %v1408 = vmul.f32 %v1407, 0.5
  %v1409 = vadd.f32 %v1408, 0.5
  %v1410 = vtanh.pop %v1398
  %v1411 = vmul.f32 %v1400, 0.5
  %v1412 = vtanh.pop %v1411
  %v1413 = vmul.f32 %v1412, 0.5
  %v1414 = vadd.f32 %v1413, 0.5
  %v1415 = vld [vmem:[#allocation3] sm:$0xff]
  %v1416 = vmul.f32 %v1409, %v1415
  %v1417 = vmul.f32 %v1405, %v1410
  %v1418 = vadd.f32 %v1416, %v1417
  %v1419 = vtanh.pop %v1418
  %v1420 = vmul.f32 %v1414, %v1419
  %1421 = vst [vmem:[#allocation3] sm:$0xff] %v1418
  %1422 = vst [vmem:[#allocation2] sm:$0xff] %v1420
  %s1423 = scalar_lea.vmem %s2, 40
  %1424 = vst [vmem:[%s1423] sm:$0xff] %v1420
  %v1425 = vld [vmem:[#allocation2] sm:$0xff]
  %v1426 = vld [vmem:[%s1] sm:$0xff]
  %v1427 = vld [vmem:[%s1 + $0x8] sm:$0xff]
  %v1428 = vld [vmem:[%s1 + $0x10] sm:$0xff]
  %v1429 = vld [vmem:[%s1 + $0x18] sm:$0xff]
  %v1430 = vld [vmem:[%s1 + $0x20] sm:$0xff]
  %v1431 = vld [vmem:[%s1 + $0x28] sm:$0xff]
  %v1432 = vld [vmem:[%s1 + $0x30] sm:$0xff]
  %v1433 = vld [vmem:[%s1 + $0x38] sm:$0xff]
  %v1434 = vld [vmem:[%s1 + $0x40] sm:$0xff]
  %v1435 = vld [vmem:[%s1 + $0x48] sm:$0xff]
  %v1436 = vld [vmem:[%s1 + $0x50] sm:$0xff]
  %v1437 = vld [vmem:[%s1 + $0x58] sm:$0xff]
  %v1438 = vld [vmem:[%s1 + $0x60] sm:$0xff]
  %v1439 = vld [vmem:[%s1 + $0x68] sm:$0xff]
  %v1440 = vld [vmem:[%s1 + $0x70] sm:$0xff]
  %v1441 = vld [vmem:[%s1 + $0x78] sm:$0xff]
  %v1442 = vld [vmem:[%s1 + $0x80] sm:$0xff]
  %v1443 = vld [vmem:[%s1 + $0x88] sm:$0xff]
  %v1444 = vld [vmem:[%s1 + $0x90] sm:$0xff]
  %v1445 = vld [vmem:[%s1 + $0x98] sm:$0xff]
  %v1446 = vld [vmem:[%s1 + $0xa0] sm:$0xff]
  %v1447 = vld [vmem:[%s1 + $0xa8] sm:$0xff]
  %v1448 = vld [vmem:[%s1 + $0xb0] sm:$0xff]
  %v1449 = vld [vmem:[%s1 + $0xb8] sm:$0xff]
  %v1450 = vld [vmem:[%s1 + $0xc0] sm:$0xff]
  %v1451 = vld [vmem:[%s1 + $0xc8] sm:$0xff]
  %v1452 = vld [vmem:[%s1 + $0xd0] sm:$0xff]
  %v1453 = vld [vmem:[%s1 + $0xd8] sm:$0xff]
  %v1454 = vld [vmem:[%s1 + $0xe0] sm:$0xff]
  %v1455 = vld [vmem:[%s1 + $0xe8] sm:$0xff]
  %v1456 = vld [vmem:[%s1 + $0xf0] sm:$0xff]
  %v1457 = vld [vmem:[%s1 + $0xf8] sm:$0xff]
  %v1458 = vld [vmem:[%s1 + $0x100] sm:$0xff]
  %v1459 = vld [vmem:[%s1 + $0x108] sm:$0xff]
  %v1460 = vld [vmem:[%s1 + $0x110] sm:$0xff]
  %v1461 = vld [vmem:[%s1 + $0x118] sm:$0xff]
  %v1462 = vld [vmem:[%s1 + $0x120] sm:$0xff]
  %v1463 = vld [vmem:[%s1 + $0x128] sm:$0xff]
  %v1464 = vld [vmem:[%s1 + $0x130] sm:$0xff]
  %v1465 = vld [vmem:[%s1 + $0x138] sm:$0xff]
  %v1466 = vld [vmem:[%s1 + $0x140] sm:$0xff]
  %v1467 = vld [vmem:[%s1 + $0x148] sm:$0xff]
  %v1468 = vld [vmem:[%s1 + $0x150] sm:$0xff]
  %v1469 = vld [vmem:[%s1 + $0x158] sm:$0xff]
  %v1470 = vld [vmem:[%s1 + $0x160] sm:$0xff]
  %v1471 = vld [vmem:[%s1 + $0x168] sm:$0xff]
  %v1472 = vld [vmem:[%s1 + $0x170] sm:$0xff]
  %v1473 = vld [vmem:[%s1 + $0x178] sm:$0xff]
  %v1474 = vld [vmem:[%s1 + $0x180] sm:$0xff]
  %v1475 = vld [vmem:[%s1 + $0x188] sm:$0xff]
  %v1476 = vld [vmem:[%s1 + $0x190] sm:$0xff]
  %v1477 = vld [vmem:[%s1 + $0x198] sm:$0xff]
  %v1478 = vld [vmem:[%s1 + $0x1a0] sm:$0xff]
  %v1479 = vld [vmem:[%s1 + $0x1a8] sm:$0xff]
  %v1480 = vld [vmem:[%s1 + $0x1b0] sm:$0xff]
  %v1481 = vld [vmem:[%s1 + $0x1b8] sm:$0xff]
  %v1482 = vld [vmem:[%s1 + $0x1c0] sm:$0xff]
  %v1483 = vld [vmem:[%s1 + $0x1c8] sm:$0xff]
  %v1484 = vld [vmem:[%s1 + $0x1d0] sm:$0xff]
  %v1485 = vld [vmem:[%s1 + $0x1d8] sm:$0xff]
  %v1486 = vld [vmem:[%s1 + $0x1e0] sm:$0xff]
  %v1487 = vld [vmem:[%s1 + $0x1e8] sm:$0xff]
  %v1488 = vld [vmem:[%s1 + $0x1f0] sm:$0xff]
  %v1489 = vld [vmem:[%s1 + $0x1f8] sm:$0xff]
  %s1490 = scalar_lea.vmem %s0, 192
  %v1491 = vld [vmem:[%s1490] sm:$0xff]
  %v1492 = vld [vmem:[%s1490 + $0x8] sm:$0xff]
  %v1493 = vld [vmem:[%s1490 + $0x10] sm:$0xff]
  %v1494 = vld [vmem:[%s1490 + $0x18] sm:$0xff]
  %1495 = vmatprep.subr.mxu0 %v1487
  %1496 = vmatpush1.msra.mxu0 %v1486
  %1497 = vmatprep.subr.mxu0 %v1483
  %1498 = vmatpush1.msra.mxu0 %v1482
  %1499 = vmatprep.subr.mxu0 %v1479
  %1500 = vmatpush1.msra.mxu0 %v1478
  %1501 = vmatprep.subr.mxu0 %v1475
  %1502 = vmatpush1.msra.mxu0 %v1474
  %1503 = vmatprep.subr.mxu0 %v1471
  %1504 = vmatpush1.msra.mxu0 %v1470
  %1505 = vmatprep.subr.mxu0 %v1467
  %1506 = vmatpush1.msra.mxu0 %v1466
  %1507 = vmatprep.subr.mxu0 %v1463
  %1508 = vmatpush1.msra.mxu0 %v1462
  %1509 = vmatprep.subr.mxu0 %v1459
  %1510 = vmatpush1.msra.mxu0 %v1458
  %1511 = vmatprep.subr.mxu0 %v1455
  %1512 = vmatpush1.msra.mxu0 %v1454
  %1513 = vmatprep.subr.mxu0 %v1451
  %1514 = vmatpush1.msra.mxu0 %v1450
  %1515 = vmatprep.subr.mxu0 %v1447
  %1516 = vmatpush1.msra.mxu0 %v1446
  %1517 = vmatprep.subr.mxu0 %v1443
  %1518 = vmatpush1.msra.mxu0 %v1442
  %1519 = vmatprep.subr.mxu0 %v1439
  %1520 = vmatpush1.msra.mxu0 %v1438
  %1521 = vmatprep.subr.mxu0 %v1435
  %1522 = vmatpush1.msra.mxu0 %v1434
  %1523 = vmatprep.subr.mxu0 %v1431
  %1524 = vmatpush1.msra.mxu0 %v1430
  %1525 = vmatprep.subr.mxu0 %v1427
  %1526 = vmatpush1.msra.mxu0 %v1426
  %1527 = vmatprep.subr.mxu0 0.0
  %1528 = vmatpush2.msra.mxu0 0.0
  %1529 = vmatprep.subr.mxu0 0.0
  %1530 = vmatpush2.msra.mxu0 0.0
  %1531 = vmatprep.subr.mxu0 0.0
  %1532 = vmatpush2.msra.mxu0 0.0
  %1533 = vmatprep.subr.mxu0 0.0
  %1534 = vmatpush2.msra.mxu0 0.0
  %1535 = vmatprep.subr.mxu0 0.0
  %1536 = vmatpush2.msra.mxu0 0.0
  %1537 = vmatprep.subr.mxu0 0.0
  %1538 = vmatpush2.msra.mxu0 0.0
  %1539 = vmatprep.subr.mxu0 0.0
  %1540 = vmatpush2.msra.mxu0 0.0
  %1541 = vmatprep.subr.mxu0 0.0
  %1542 = vmatpush2.msra.mxu0 0.0
  %1543 = vmatprep.subr.mxu0 0.0
  %1544 = vmatpush2.msra.mxu0 0.0
  %1545 = vmatprep.subr.mxu0 0.0
  %1546 = vmatpush2.msra.mxu0 0.0
  %1547 = vmatprep.subr.mxu0 0.0
  %1548 = vmatpush2.msra.mxu0 0.0
  %1549 = vmatprep.subr.mxu0 0.0
  %1550 = vmatpush2.msra.mxu0 0.0
  %1551 = vmatprep.subr.mxu0 0.0
  %1552 = vmatpush2.msra.mxu0 0.0
  %1553 = vmatprep.subr.mxu0 0.0
  %1554 = vmatpush2.msra.mxu0 0.0
  %1555 = vmatprep.subr.mxu0 0.0
  %1556 = vmatpush2.msra.mxu0 0.0
  %1557 = vmatprep.subr.mxu0 0.0
  %1558 = vmatpush2.msra.mxu0 0.0
  %1559 = vmatprep.mubr.f32.mxu0 0.0
  %1560 = vmatmul.mubr.f32.gmra.mxu0 %v1425
  %v1561 = vpop.f32.mrf.mxu0
  %v1562 = vadd.f32 %v1491, %v1561
  %v1563 = vpop.f32.mrf.mxu0
  %v1564 = vadd.f32 %v1492, %v1563
  %1565 = vdwg.mxu0
  %1566 = vmatprep.subr.mxu0 %v1489
  %1567 = vmatpush1.msra.mxu0 %v1488
  %1568 = vmatprep.subr.mxu0 %v1485
  %1569 = vmatpush1.msra.mxu0 %v1484
  %1570 = vmatprep.subr.mxu0 %v1481
  %1571 = vmatpush1.msra.mxu0 %v1480
  %1572 = vmatprep.subr.mxu0 %v1477
  %1573 = vmatpush1.msra.mxu0 %v1476
  %1574 = vmatprep.subr.mxu0 %v1473
  %1575 = vmatpush1.msra.mxu0 %v1472
  %1576 = vmatprep.subr.mxu0 %v1469
  %1577 = vmatpush1.msra.mxu0 %v1468
  %1578 = vmatprep.subr.mxu0 %v1465
  %1579 = vmatpush1.msra.mxu0 %v1464
  %1580 = vmatprep.subr.mxu0 %v1461
  %1581 = vmatpush1.msra.mxu0 %v1460
  %1582 = vmatprep.subr.mxu0 %v1457
  %1583 = vmatpush1.msra.mxu0 %v1456
  %1584 = vmatprep.subr.mxu0 %v1453
  %1585 = vmatpush1.msra.mxu0 %v1452
  %1586 = vmatprep.subr.mxu0 %v1449
  %1587 = vmatpush1.msra.mxu0 %v1448
  %1588 = vmatprep.subr.mxu0 %v1445
  %1589 = vmatpush1.msra.mxu0 %v1444
  %1590 = vmatprep.subr.mxu0 %v1441
  %1591 = vmatpush1.msra.mxu0 %v1440
  %1592 = vmatprep.subr.mxu0 %v1437
  %1593 = vmatpush1.msra.mxu0 %v1436
  %1594 = vmatprep.subr.mxu0 %v1433
  %1595 = vmatpush1.msra.mxu0 %v1432
  %1596 = vmatprep.subr.mxu0 %v1429
  %1597 = vmatpush1.msra.mxu0 %v1428
  %1598 = vmatprep.subr.mxu0 0.0
  %1599 = vmatpush2.msra.mxu0 0.0
  %1600 = vmatprep.subr.mxu0 0.0
  %1601 = vmatpush2.msra.mxu0 0.0
  %1602 = vmatprep.subr.mxu0 0.0
  %1603 = vmatpush2.msra.mxu0 0.0
  %1604 = vmatprep.subr.mxu0 0.0
  %1605 = vmatpush2.msra.mxu0 0.0
  %1606 = vmatprep.subr.mxu0 0.0
  %1607 = vmatpush2.msra.mxu0 0.0
  %1608 = vmatprep.subr.mxu0 0.0
  %1609 = vmatpush2.msra.mxu0 0.0
  %1610 = vmatprep.subr.mxu0 0.0
  %1611 = vmatpush2.msra.mxu0 0.0
  %1612 = vmatprep.subr.mxu0 0.0
  %1613 = vmatpush2.msra.mxu0 0.0
  %1614 = vmatprep.subr.mxu0 0.0
  %1615 = vmatpush2.msra.mxu0 0.0
  %1616 = vmatprep.subr.mxu0 0.0
  %1617 = vmatpush2.msra.mxu0 0.0
  %1618 = vmatprep.subr.mxu0 0.0
  %1619 = vmatpush2.msra.mxu0 0.0
  %1620 = vmatprep.subr.mxu0 0.0
  %1621 = vmatpush2.msra.mxu0 0.0
  %1622 = vmatprep.subr.mxu0 0.0
  %1623 = vmatpush2.msra.mxu0 0.0
  %1624 = vmatprep.subr.mxu0 0.0
  %1625 = vmatpush2.msra.mxu0 0.0
  %1626 = vmatprep.subr.mxu0 0.0
  %1627 = vmatpush2.msra.mxu0 0.0
  %1628 = vmatprep.subr.mxu0 0.0
  %1629 = vmatpush2.msra.mxu0 0.0
  %1630 = vmatprep.mubr.f32.mxu0 0.0
  %1631 = vmatmul.mubr.f32.gmra.mxu0 %v1425
  %v1632 = vpop.f32.mrf.mxu0
  %v1633 = vadd.f32 %v1493, %v1632
  %v1634 = vpop.f32.mrf.mxu0
  %v1635 = vadd.f32 %v1494, %v1634
  %1636 = vdwg.mxu0
  %v1637 = vmul.f32 %v1562, 0.5
  %v1638 = vtanh.pop %v1637
  %v1639 = vmul.f32 %v1638, 0.5
  %v1640 = vadd.f32 %v1639, 0.5
  %v1641 = vmul.f32 %v1564, 0.5
  %v1642 = vtanh.pop %v1641
  %v1643 = vmul.f32 %v1642, 0.5
  %v1644 = vadd.f32 %v1643, 0.5
  %v1645 = vtanh.pop %v1633
  %v1646 = vmul.f32 %v1635, 0.5
  %v1647 = vtanh.pop %v1646
  %v1648 = vmul.f32 %v1647, 0.5
  %v1649 = vadd.f32 %v1648, 0.5
  %v1650 = vld [vmem:[#allocation3] sm:$0xff]
  %v1651 = vmul.f32 %v1644, %v1650
  %v1652 = vmul.f32 %v1640, %v1645
  %v1653 = vadd.f32 %v1651, %v1652
  %v1654 = vtanh.pop %v1653
  %v1655 = vmul.f32 %v1649, %v1654
  %1656 = vst [vmem:[#allocation3] sm:$0xff] %v1653
  %1657 = vst [vmem:[#allocation2] sm:$0xff] %v1655
  %s1658 = scalar_lea.vmem %s2, 48
  %1659 = vst [vmem:[%s1658] sm:$0xff] %v1655
  %v1660 = vld [vmem:[#allocation2] sm:$0xff]
  %v1661 = vld [vmem:[%s1] sm:$0xff]
  %v1662 = vld [vmem:[%s1 + $0x8] sm:$0xff]
  %v1663 = vld [vmem:[%s1 + $0x10] sm:$0xff]
  %v1664 = vld [vmem:[%s1 + $0x18] sm:$0xff]
  %v1665 = vld [vmem:[%s1 + $0x20] sm:$0xff]
  %v1666 = vld [vmem:[%s1 + $0x28] sm:$0xff]
  %v1667 = vld [vmem:[%s1 + $0x30] sm:$0xff]
  %v1668 = vld [vmem:[%s1 + $0x38] sm:$0xff]
  %v1669 = vld [vmem:[%s1 + $0x40] sm:$0xff]
  %v1670 = vld [vmem:[%s1 + $0x48] sm:$0xff]
  %v1671 = vld [vmem:[%s1 + $0x50] sm:$0xff]
  %v1672 = vld [vmem:[%s1 + $0x58] sm:$0xff]
  %v1673 = vld [vmem:[%s1 + $0x60] sm:$0xff]
  %v1674 = vld [vmem:[%s1 + $0x68] sm:$0xff]
  %v1675 = vld [vmem:[%s1 + $0x70] sm:$0xff]
  %v1676 = vld [vmem:[%s1 + $0x78] sm:$0xff]
  %v1677 = vld [vmem:[%s1 + $0x80] sm:$0xff]
  %v1678 = vld [vmem:[%s1 + $0x88] sm:$0xff]
  %v1679 = vld [vmem:[%s1 + $0x90] sm:$0xff]
  %v1680 = vld [vmem:[%s1 + $0x98] sm:$0xff]
  %v1681 = vld [vmem:[%s1 + $0xa0] sm:$0xff]
  %v1682 = vld [vmem:[%s1 + $0xa8] sm:$0xff]
  %v1683 = vld [vmem:[%s1 + $0xb0] sm:$0xff]
  %v1684 = vld [vmem:[%s1 + $0xb8] sm:$0xff]
  %v1685 = vld [vmem:[%s1 + $0xc0] sm:$0xff]
  %v1686 = vld [vmem:[%s1 + $0xc8] sm:$0xff]
  %v1687 = vld [vmem:[%s1 + $0xd0] sm:$0xff]
  %v1688 = vld [vmem:[%s1 + $0xd8] sm:$0xff]
  %v1689 = vld [vmem:[%s1 + $0xe0] sm:$0xff]
  %v1690 = vld [vmem:[%s1 + $0xe8] sm:$0xff]
  %v1691 = vld [vmem:[%s1 + $0xf0] sm:$0xff]
  %v1692 = vld [vmem:[%s1 + $0xf8] sm:$0xff]
  %v1693 = vld [vmem:[%s1 + $0x100] sm:$0xff]
  %v1694 = vld [vmem:[%s1 + $0x108] sm:$0xff]
  %v1695 = vld [vmem:[%s1 + $0x110] sm:$0xff]
  %v1696 = vld [vmem:[%s1 + $0x118] sm:$0xff]
  %v1697 = vld [vmem:[%s1 + $0x120] sm:$0xff]
  %v1698 = vld [vmem:[%s1 + $0x128] sm:$0xff]
  %v1699 = vld [vmem:[%s1 + $0x130] sm:$0xff]
  %v1700 = vld [vmem:[%s1 + $0x138] sm:$0xff]
  %v1701 = vld [vmem:[%s1 + $0x140] sm:$0xff]
  %v1702 = vld [vmem:[%s1 + $0x148] sm:$0xff]
  %v1703 = vld [vmem:[%s1 + $0x150] sm:$0xff]
  %v1704 = vld [vmem:[%s1 + $0x158] sm:$0xff]
  %v1705 = vld [vmem:[%s1 + $0x160] sm:$0xff]
  %v1706 = vld [vmem:[%s1 + $0x168] sm:$0xff]
  %v1707 = vld [vmem:[%s1 + $0x170] sm:$0xff]
  %v1708 = vld [vmem:[%s1 + $0x178] sm:$0xff]
  %v1709 = vld [vmem:[%s1 + $0x180] sm:$0xff]
  %v1710 = vld [vmem:[%s1 + $0x188] sm:$0xff]
  %v1711 = vld [vmem:[%s1 + $0x190] sm:$0xff]
  %v1712 = vld [vmem:[%s1 + $0x198] sm:$0xff]
  %v1713 = vld [vmem:[%s1 + $0x1a0] sm:$0xff]
  %v1714 = vld [vmem:[%s1 + $0x1a8] sm:$0xff]
  %v1715 = vld [vmem:[%s1 + $0x1b0] sm:$0xff]
  %v1716 = vld [vmem:[%s1 + $0x1b8] sm:$0xff]
  %v1717 = vld [vmem:[%s1 + $0x1c0] sm:$0xff]
  %v1718 = vld [vmem:[%s1 + $0x1c8] sm:$0xff]
  %v1719 = vld [vmem:[%s1 + $0x1d0] sm:$0xff]
  %v1720 = vld [vmem:[%s1 + $0x1d8] sm:$0xff]
  %v1721 = vld [vmem:[%s1 + $0x1e0] sm:$0xff]
  %v1722 = vld [vmem:[%s1 + $0x1e8] sm:$0xff]
  %v1723 = vld [vmem:[%s1 + $0x1f0] sm:$0xff]
  %v1724 = vld [vmem:[%s1 + $0x1f8] sm:$0xff]
  %s1725 = scalar_lea.vmem %s0, 224
  %v1726 = vld [vmem:[%s1725] sm:$0xff]
  %v1727 = vld [vmem:[%s1725 + $0x8] sm:$0xff]
  %v1728 = vld [vmem:[%s1725 + $0x10] sm:$0xff]
  %v1729 = vld [vmem:[%s1725 + $0x18] sm:$0xff]
  %1730 = vmatprep.subr.mxu0 %v1722
  %1731 = vmatpush1.msra.mxu0 %v1721
  %1732 = vmatprep.subr.mxu0 %v1718
  %1733 = vmatpush1.msra.mxu0 %v1717
  %1734 = vmatprep.subr.mxu0 %v1714
  %1735 = vmatpush1.msra.mxu0 %v1713
  %1736 = vmatprep.subr.mxu0 %v1710
  %1737 = vmatpush1.msra.mxu0 %v1709
  %1738 = vmatprep.subr.mxu0 %v1706
  %1739 = vmatpush1.msra.mxu0 %v1705
  %1740 = vmatprep.subr.mxu0 %v1702
  %1741 = vmatpush1.msra.mxu0 %v1701
  %1742 = vmatprep.subr.mxu0 %v1698
  %1743 = vmatpush1.msra.mxu0 %v1697
  %1744 = vmatprep.subr.mxu0 %v1694
  %1745 = vmatpush1.msra.mxu0 %v1693
  %1746 = vmatprep.subr.mxu0 %v1690
  %1747 = vmatpush1.msra.mxu0 %v1689
  %1748 = vmatprep.subr.mxu0 %v1686
  %1749 = vmatpush1.msra.mxu0 %v1685
  %1750 = vmatprep.subr.mxu0 %v1682
  %1751 = vmatpush1.msra.mxu0 %v1681
  %1752 = vmatprep.subr.mxu0 %v1678
  %1753 = vmatpush1.msra.mxu0 %v1677
  %1754 = vmatprep.subr.mxu0 %v1674
  %1755 = vmatpush1.msra.mxu0 %v1673
  %1756 = vmatprep.subr.mxu0 %v1670
  %1757 = vmatpush1.msra.mxu0 %v1669
  %1758 = vmatprep.subr.mxu0 %v1666
  %1759 = vmatpush1.msra.mxu0 %v1665
  %1760 = vmatprep.subr.mxu0 %v1662
  %1761 = vmatpush1.msra.mxu0 %v1661
  %1762 = vmatprep.subr.mxu0 0.0
  %1763 = vmatpush2.msra.mxu0 0.0
  %1764 = vmatprep.subr.mxu0 0.0
  %1765 = vmatpush2.msra.mxu0 0.0
  %1766 = vmatprep.subr.mxu0 0.0
  %1767 = vmatpush2.msra.mxu0 0.0
  %1768 = vmatprep.subr.mxu0 0.0
  %1769 = vmatpush2.msra.mxu0 0.0
  %1770 = vmatprep.subr.mxu0 0.0
  %1771 = vmatpush2.msra.mxu0 0.0
  %1772 = vmatprep.subr.mxu0 0.0
  %1773 = vmatpush2.msra.mxu0 0.0
  %1774 = vmatprep.subr.mxu0 0.0
  %1775 = vmatpush2.msra.mxu0 0.0
  %1776 = vmatprep.subr.mxu0 0.0
  %1777 = vmatpush2.msra.mxu0 0.0
  %1778 = vmatprep.subr.mxu0 0.0
  %1779 = vmatpush2.msra.mxu0 0.0
  %1780 = vmatprep.subr.mxu0 0.0
  %1781 = vmatpush2.msra.mxu0 0.0
  %1782 = vmatprep.subr.mxu0 0.0
  %1783 = vmatpush2.msra.mxu0 0.0
  %1784 = vmatprep.subr.mxu0 0.0
  %1785 = vmatpush2.msra.mxu0 0.0
  %1786 = vmatprep.subr.mxu0 0.0
  %1787 = vmatpush2.msra.mxu0 0.0
  %1788 = vmatprep.subr.mxu0 0.0
  %1789 = vmatpush2.msra.mxu0 0.0
  %1790 = vmatprep.subr.mxu0 0.0
  %1791 = vmatpush2.msra.mxu0 0.0
  %1792 = vmatprep.subr.mxu0 0.0
  %1793 = vmatpush2.msra.mxu0 0.0
  %1794 = vmatprep.mubr.f32.mxu0 0.0
  %1795 = vmatmul.mubr.f32.gmra.mxu0 %v1660
  %v1796 = vpop.f32.mrf.mxu0
  %v1797 = vadd.f32 %v1726, %v1796
  %v1798 = vpop.f32.mrf.mxu0
  %v1799 = vadd.f32 %v1727, %v1798
  %1800 = vdwg.mxu0
  %1801 = vmatprep.subr.mxu0 %v1724
  %1802 = vmatpush1.msra.mxu0 %v1723
  %1803 = vmatprep.subr.mxu0 %v1720
  %1804 = vmatpush1.msra.mxu0 %v1719
  %1805 = vmatprep.subr.mxu0 %v1716
  %1806 = vmatpush1.msra.mxu0 %v1715
  %1807 = vmatprep.subr.mxu0 %v1712
  %1808 = vmatpush1.msra.mxu0 %v1711
  %1809 = vmatprep.subr.mxu0 %v1708
  %1810 = vmatpush1.msra.mxu0 %v1707
  %1811 = vmatprep.subr.mxu0 %v1704
  %1812 = vmatpush1.msra.mxu0 %v1703
  %1813 = vmatprep.subr.mxu0 %v1700
  %1814 = vmatpush1.msra.mxu0 %v1699
  %1815 = vmatprep.subr.mxu0 %v1696
  %1816 = vmatpush1.msra.mxu0 %v1695
  %1817 = vmatprep.subr.mxu0 %v1692
  %1818 = vmatpush1.msra.mxu0 %v1691
  %1819 = vmatprep.subr.mxu0 %v1688
  %1820 = vmatpush1.msra.mxu0 %v1687
  %1821 = vmatprep.subr.mxu0 %v1684
  %1822 = vmatpush1.msra.mxu0 %v1683
  %1823 = vmatprep.subr.mxu0 %v1680
  %1824 = vmatpush1.msra.mxu0 %v1679
  %1825 = vmatprep.subr.mxu0 %v1676
  %1826 = vmatpush1.msra.mxu0 %v1675
  %1827 = vmatprep.subr.mxu0 %v1672
  %1828 = vmatpush1.msra.mxu0 %v1671
  %1829 = vmatprep.subr.mxu0 %v1668
  %1830 = vmatpush1.msra.mxu0 %v1667
  %1831 = vmatprep.subr.mxu0 %v1664
  %1832 = vmatpush1.msra.mxu0 %v1663
  %1833 = vmatprep.subr.mxu0 0.0
  %1834 = vmatpush2.msra.mxu0 0.0
  %1835 = vmatprep.subr.mxu0 0.0
  %1836 = vmatpush2.msra.mxu0 0.0
  %1837 = vmatprep.subr.mxu0 0.0
  %1838 = vmatpush2.msra.mxu0 0.0
  %1839 = vmatprep.subr.mxu0 0.0
  %1840 = vmatpush2.msra.mxu0 0.0
  %1841 = vmatprep.subr.mxu0 0.0
  %1842 = vmatpush2.msra.mxu0 0.0
  %1843 = vmatprep.subr.mxu0 0.0
  %1844 = vmatpush2.msra.mxu0 0.0
  %1845 = vmatprep.subr.mxu0 0.0
  %1846 = vmatpush2.msra.mxu0 0.0
  %1847 = vmatprep.subr.mxu0 0.0
  %1848 = vmatpush2.msra.mxu0 0.0
  %1849 = vmatprep.subr.mxu0 0.0
  %1850 = vmatpush2.msra.mxu0 0.0
  %1851 = vmatprep.subr.mxu0 0.0
  %1852 = vmatpush2.msra.mxu0 0.0
  %1853 = vmatprep.subr.mxu0 0.0
  %1854 = vmatpush2.msra.mxu0 0.0
  %1855 = vmatprep.subr.mxu0 0.0
  %1856 = vmatpush2.msra.mxu0 0.0
  %1857 = vmatprep.subr.mxu0 0.0
  %1858 = vmatpush2.msra.mxu0 0.0
  %1859 = vmatprep.subr.mxu0 0.0
  %1860 = vmatpush2.msra.mxu0 0.0
  %1861 = vmatprep.subr.mxu0 0.0
  %1862 = vmatpush2.msra.mxu0 0.0
  %1863 = vmatprep.subr.mxu0 0.0
  %1864 = vmatpush2.msra.mxu0 0.0
  %1865 = vmatprep.mubr.f32.mxu0 0.0
  %1866 = vmatmul.mubr.f32.gmra.mxu0 %v1660
  %v1867 = vpop.f32.mrf.mxu0
  %v1868 = vadd.f32 %v1728, %v1867
  %v1869 = vpop.f32.mrf.mxu0
  %v1870 = vadd.f32 %v1729, %v1869
  %1871 = vdwg.mxu0
  %v1872 = vmul.f32 %v1797, 0.5
  %v1873 = vtanh.pop %v1872
  %v1874 = vmul.f32 %v1873, 0.5
  %v1875 = vadd.f32 %v1874, 0.5
  %v1876 = vmul.f32 %v1799, 0.5
  %v1877 = vtanh.pop %v1876
  %v1878 = vmul.f32 %v1877, 0.5
  %v1879 = vadd.f32 %v1878, 0.5
  %v1880 = vtanh.pop %v1868
  %v1881 = vmul.f32 %v1870, 0.5
  %v1882 = vtanh.pop %v1881
  %v1883 = vmul.f32 %v1882, 0.5
  %v1884 = vadd.f32 %v1883, 0.5
  %v1885 = vld [vmem:[#allocation3] sm:$0xff]
  %v1886 = vmul.f32 %v1879, %v1885
  %v1887 = vmul.f32 %v1875, %v1880
  %v1888 = vadd.f32 %v1886, %v1887
  %v1889 = vtanh.pop %v1888
  %v1890 = vmul.f32 %v1884, %v1889
  %1891 = vst [vmem:[#allocation3] sm:$0xff] %v1888
  %1892 = vst [vmem:[#allocation2] sm:$0xff] %v1890
  %s1893 = scalar_lea.vmem %s2, 56
  %1894 = vst [vmem:[%s1893] sm:$0xff] %v1890
  // Predicated region
  $region14: #{lstm_model_forward.4} parent=0 // pred_check
    _
  $region15: #{lstm_model_forward.4} parent=0 // pred_check_branch
    %1896 = sbr.rel (0) target = $region17
  $region16: #{lstm_model_forward.4} parent=0 // pred_region
    _
  $region17: #{lstm_model_forward.4} parent=0 // pred_fallthru
    _
  // Predicated region
  $region18: #{lstm_model_forward.4} parent=0 // pred_check
    _
  $region19: #{lstm_model_forward.4} parent=0 // pred_check_branch
    %1898 = sbr.rel (0) target = $region21
  $region20: #{lstm_model_forward.4} parent=0 // pred_region
    _
  $region21: #{lstm_model_forward.4} parent=0 // pred_fallthru
    _

// kernel: lstm_model_forward.5
$region0: #{lstm_model_forward.5}
  #allocation0 [shape = 'u32[]', space=smem, size = 0x4, offset = 0x4, fixed_abs, tag = 'smem constant byte address 0x4 - core index']
  #allocation1 [shape = 'u32[144,128]{1,0:T(1,128)}', space=vmem, size = 0x12000, scoped, tag = 'internal scratch']
  #allocation2 [shape = 'f32[8,128]{1,0:T(8,128)}', space=vmem, size = 0x1000, scoped, tag = 'scratch operand']
  #allocation3 [shape = 'f32[8,128]{1,0:T(8,128)}', space=vmem, size = 0x1000, scoped, tag = 'scratch operand']
  #allocation4 [shape = 'f32[64,512]{1,0:T(8,128)}', space=vmem, size = 0x20000, scoped, tag = 'scratch operand']
  %s0 = inlined_call_operand.vmem [shape: f32[8,8,128], index: 0, kind: input, shape index: {}]
  %s1 = inlined_call_operand.vmem [shape: f32[128,512], index: 1, kind: input, shape index: {}]
  %s2 = inlined_call_operand.vmem [shape: f32[128,512], index: 2, kind: input, shape index: {}]
  %s3 = inlined_call_operand.vmem [shape: f32[1,512], index: 3, kind: input, shape index: {}]
  %s4 = inlined_call_operand.vmem [shape: f32[8,8,128], index: 4, kind: output, shape index: {}]
  %s5 = sld [smem:[#allocation0]]
  $region30: #{lstm_model_forward.5} parent=0
    _
  %s7 = ssub.s32 1, %s5
  %s8 = scalar_select 0, %s7, %s5
  // Predicated region
  $region2: #{lstm_model_forward.5} parent=0 // pred_check
    _
  $region3: #{lstm_model_forward.5} parent=0 // pred_check_branch
    %10 = sbr.rel (0) target = $region5
  $region4: #{lstm_model_forward.5} parent=0 // pred_region
    _
  $region5: #{lstm_model_forward.5} parent=0 // pred_fallthru
    _
  // Predicated region
  $region6: #{lstm_model_forward.5} parent=0 // pred_check
    _
  $region7: #{lstm_model_forward.5} parent=0 // pred_check_branch
    %12 = sbr.rel (0) target = $region9
  $region8: #{lstm_model_forward.5} parent=0 // pred_region
    _
  $region9: #{lstm_model_forward.5} parent=0 // pred_fallthru
    _
  // Predicated region
  $region10: #{lstm_model_forward.5} parent=0 // pred_check
    _
  $region11: #{lstm_model_forward.5} parent=0 // pred_check_branch
    %14 = sbr.rel (0) target = $region13
  $region12: #{lstm_model_forward.5} parent=0 // pred_region
    _
  $region13: #{lstm_model_forward.5} parent=0 // pred_fallthru
    _
  // Predicated region
  $region14: #{lstm_model_forward.5} parent=0 // pred_check
    _
  $region15: #{lstm_model_forward.5} parent=0 // pred_check_branch
    %16 = sbr.rel (0) target = $region17
  $region16: #{lstm_model_forward.5} parent=0 // pred_region
    _
  $region17: #{lstm_model_forward.5} parent=0 // pred_fallthru
    _
  %p17 = scmp.eq.s32.totalorder 0, 0
  // Predicated region
  $region18: #{lstm_model_forward.5} parent=0 // pred_check
    %p18 = pneg %p17
  $region19: #{lstm_model_forward.5} parent=0 // pred_check_branch
    %20 = sbr.rel (%p18) target = $region21
  $region20: #{lstm_model_forward.5} parent=0 // pred_region
    %21 = vst [vmem:[#allocation2] sm:$0xff] 0.0
    %22 = vst [vmem:[#allocation3] sm:$0xff] 0.0
  $region21: #{lstm_model_forward.5} parent=0 // pred_fallthru
    _
  %v23 = vld [vmem:[%s0] sm:$0xff]
  %v24 = vld [vmem:[%s0 + $0x8] sm:$0xff]
  %v25 = vld [vmem:[%s0 + $0x10] sm:$0xff]
  %v26 = vld [vmem:[%s0 + $0x18] sm:$0xff]
  %v27 = vld [vmem:[%s0 + $0x20] sm:$0xff]
  %v28 = vld [vmem:[%s0 + $0x28] sm:$0xff]
  %v29 = vld [vmem:[%s0 + $0x30] sm:$0xff]
  %v30 = vld [vmem:[%s0 + $0x38] sm:$0xff]
  %v31 = vld [vmem:[%s1] sm:$0xff]
  %v32 = vld [vmem:[%s1 + $0x8] sm:$0xff]
  %v33 = vld [vmem:[%s1 + $0x10] sm:$0xff]
  %v34 = vld [vmem:[%s1 + $0x18] sm:$0xff]
  %v35 = vld [vmem:[%s1 + $0x20] sm:$0xff]
  %v36 = vld [vmem:[%s1 + $0x28] sm:$0xff]
  %v37 = vld [vmem:[%s1 + $0x30] sm:$0xff]
  %v38 = vld [vmem:[%s1 + $0x38] sm:$0xff]
  %v39 = vld [vmem:[%s1 + $0x40] sm:$0xff]
  %v40 = vld [vmem:[%s1 + $0x48] sm:$0xff]
  %v41 = vld [vmem:[%s1 + $0x50] sm:$0xff]
  %v42 = vld [vmem:[%s1 + $0x58] sm:$0xff]
  %v43 = vld [vmem:[%s1 + $0x60] sm:$0xff]
  %v44 = vld [vmem:[%s1 + $0x68] sm:$0xff]
  %v45 = vld [vmem:[%s1 + $0x70] sm:$0xff]
  %v46 = vld [vmem:[%s1 + $0x78] sm:$0xff]
  %v47 = vld [vmem:[%s1 + $0x80] sm:$0xff]
  %v48 = vld [vmem:[%s1 + $0x88] sm:$0xff]
  %v49 = vld [vmem:[%s1 + $0x90] sm:$0xff]
  %v50 = vld [vmem:[%s1 + $0x98] sm:$0xff]
  %v51 = vld [vmem:[%s1 + $0xa0] sm:$0xff]
  %v52 = vld [vmem:[%s1 + $0xa8] sm:$0xff]
  %v53 = vld [vmem:[%s1 + $0xb0] sm:$0xff]
  %v54 = vld [vmem:[%s1 + $0xb8] sm:$0xff]
  %v55 = vld [vmem:[%s1 + $0xc0] sm:$0xff]
  %v56 = vld [vmem:[%s1 + $0xc8] sm:$0xff]
  %v57 = vld [vmem:[%s1 + $0xd0] sm:$0xff]
  %v58 = vld [vmem:[%s1 + $0xd8] sm:$0xff]
  %v59 = vld [vmem:[%s1 + $0xe0] sm:$0xff]
  %v60 = vld [vmem:[%s1 + $0xe8] sm:$0xff]
  %v61 = vld [vmem:[%s1 + $0xf0] sm:$0xff]
  %v62 = vld [vmem:[%s1 + $0xf8] sm:$0xff]
  %v63 = vld [vmem:[%s1 + $0x100] sm:$0xff]
  %v64 = vld [vmem:[%s1 + $0x108] sm:$0xff]
  %v65 = vld [vmem:[%s1 + $0x110] sm:$0xff]
  %v66 = vld [vmem:[%s1 + $0x118] sm:$0xff]
  %v67 = vld [vmem:[%s1 + $0x120] sm:$0xff]
  %v68 = vld [vmem:[%s1 + $0x128] sm:$0xff]
  %v69 = vld [vmem:[%s1 + $0x130] sm:$0xff]
  %v70 = vld [vmem:[%s1 + $0x138] sm:$0xff]
  %v71 = vld [vmem:[%s1 + $0x140] sm:$0xff]
  %v72 = vld [vmem:[%s1 + $0x148] sm:$0xff]
  %v73 = vld [vmem:[%s1 + $0x150] sm:$0xff]
  %v74 = vld [vmem:[%s1 + $0x158] sm:$0xff]
  %v75 = vld [vmem:[%s1 + $0x160] sm:$0xff]
  %v76 = vld [vmem:[%s1 + $0x168] sm:$0xff]
  %v77 = vld [vmem:[%s1 + $0x170] sm:$0xff]
  %v78 = vld [vmem:[%s1 + $0x178] sm:$0xff]
  %v79 = vld [vmem:[%s1 + $0x180] sm:$0xff]
  %v80 = vld [vmem:[%s1 + $0x188] sm:$0xff]
  %v81 = vld [vmem:[%s1 + $0x190] sm:$0xff]
  %v82 = vld [vmem:[%s1 + $0x198] sm:$0xff]
  %v83 = vld [vmem:[%s1 + $0x1a0] sm:$0xff]
  %v84 = vld [vmem:[%s1 + $0x1a8] sm:$0xff]
  %v85 = vld [vmem:[%s1 + $0x1b0] sm:$0xff]
  %v86 = vld [vmem:[%s1 + $0x1b8] sm:$0xff]
  %v87 = vld [vmem:[%s1 + $0x1c0] sm:$0xff]
  %v88 = vld [vmem:[%s1 + $0x1c8] sm:$0xff]
  %v89 = vld [vmem:[%s1 + $0x1d0] sm:$0xff]
  %v90 = vld [vmem:[%s1 + $0x1d8] sm:$0xff]
  %v91 = vld [vmem:[%s1 + $0x1e0] sm:$0xff]
  %v92 = vld [vmem:[%s1 + $0x1e8] sm:$0xff]
  %v93 = vld [vmem:[%s1 + $0x1f0] sm:$0xff]
  %v94 = vld [vmem:[%s1 + $0x1f8] sm:$0xff]
  %v95 = vld [vmem:[%s3] sm:$0xf]
  %v97 = vlaneseq
  %v98 = vshrl.u32 %v97, 7
  %v99 = vsub.s32 0, %v98
  %v100 = vrot.slane %v95, %v99
  %v101 = vlaneseq
  %v102 = vshrl.u32 %v101, 7
  %v103 = vsub.s32 1, %v102
  %v104 = vrot.slane %v95, %v103
  %v105 = vlaneseq
  %v106 = vshrl.u32 %v105, 7
  %v107 = vsub.s32 2, %v106
  %v108 = vrot.slane %v95, %v107
  %v109 = vlaneseq
  %v110 = vshrl.u32 %v109, 7
  %v111 = vsub.s32 3, %v110
  %v112 = vrot.slane %v95, %v111
  %117 = vmatprep.subr.mxu0 %v92
  %118 = vmatpush1.msra.mxu0 %v91
  %119 = vmatprep.subr.mxu0 %v88
  %120 = vmatpush1.msra.mxu0 %v87
  %121 = vmatprep.subr.mxu0 %v84
  %122 = vmatpush1.msra.mxu0 %v83
  %123 = vmatprep.subr.mxu0 %v80
  %124 = vmatpush1.msra.mxu0 %v79
  %125 = vmatprep.subr.mxu0 %v76
  %126 = vmatpush1.msra.mxu0 %v75
  %127 = vmatprep.subr.mxu0 %v72
  %128 = vmatpush1.msra.mxu0 %v71
  %129 = vmatprep.subr.mxu0 %v68
  %130 = vmatpush1.msra.mxu0 %v67
  %131 = vmatprep.subr.mxu0 %v64
  %132 = vmatpush1.msra.mxu0 %v63
  %133 = vmatprep.subr.mxu0 %v60
  %134 = vmatpush1.msra.mxu0 %v59
  %135 = vmatprep.subr.mxu0 %v56
  %136 = vmatpush1.msra.mxu0 %v55
  %137 = vmatprep.subr.mxu0 %v52
  %138 = vmatpush1.msra.mxu0 %v51
  %139 = vmatprep.subr.mxu0 %v48
  %140 = vmatpush1.msra.mxu0 %v47
  %141 = vmatprep.subr.mxu0 %v44
  %142 = vmatpush1.msra.mxu0 %v43
  %143 = vmatprep.subr.mxu0 %v40
  %144 = vmatpush1.msra.mxu0 %v39
  %145 = vmatprep.subr.mxu0 %v36
  %146 = vmatpush1.msra.mxu0 %v35
  %147 = vmatprep.subr.mxu0 %v32
  %148 = vmatpush1.msra.mxu0 %v31
  %149 = vmatprep.subr.mxu0 0.0
  %150 = vmatpush2.msra.mxu0 0.0
  %151 = vmatprep.subr.mxu0 0.0
  %152 = vmatpush2.msra.mxu0 0.0
  %153 = vmatprep.subr.mxu0 0.0
  %154 = vmatpush2.msra.mxu0 0.0
  %155 = vmatprep.subr.mxu0 0.0
  %156 = vmatpush2.msra.mxu0 0.0
  %157 = vmatprep.subr.mxu0 0.0
  %158 = vmatpush2.msra.mxu0 0.0
  %159 = vmatprep.subr.mxu0 0.0
  %160 = vmatpush2.msra.mxu0 0.0
  %161 = vmatprep.subr.mxu0 0.0
  %162 = vmatpush2.msra.mxu0 0.0
  %163 = vmatprep.subr.mxu0 0.0
  %164 = vmatpush2.msra.mxu0 0.0
  %165 = vmatprep.subr.mxu0 0.0
  %166 = vmatpush2.msra.mxu0 0.0
  %167 = vmatprep.subr.mxu0 0.0
  %168 = vmatpush2.msra.mxu0 0.0
  %169 = vmatprep.subr.mxu0 0.0
  %170 = vmatpush2.msra.mxu0 0.0
  %171 = vmatprep.subr.mxu0 0.0
  %172 = vmatpush2.msra.mxu0 0.0
  %173 = vmatprep.subr.mxu0 0.0
  %174 = vmatpush2.msra.mxu0 0.0
  %175 = vmatprep.subr.mxu0 0.0
  %176 = vmatpush2.msra.mxu0 0.0
  %177 = vmatprep.subr.mxu0 0.0
  %178 = vmatpush2.msra.mxu0 0.0
  %179 = vmatprep.subr.mxu0 0.0
  %180 = vmatpush2.msra.mxu0 0.0
  %181 = vmatprep.mubr.f32.mxu0 0.0
  %182 = vmatmul.mubr.f32.gmra.mxu0 %v23
  %v183 = vpop.f32.mrf.mxu0
  %v184 = vadd.f32 %v100, %v183
  %v185 = vpop.f32.mrf.mxu0
  %v186 = vadd.f32 %v104, %v185
  %187 = vmatprep.mubr.f32.mxu0 0.0
  %188 = vmatmul.mubr.f32.gmra.mxu0 %v24
  %v189 = vpop.f32.mrf.mxu0
  %v190 = vadd.f32 %v100, %v189
  %v191 = vpop.f32.mrf.mxu0
  %v192 = vadd.f32 %v104, %v191
  %193 = vmatprep.mubr.f32.mxu0 0.0
  %194 = vmatmul.mubr.f32.gmra.mxu0 %v25
  %v195 = vpop.f32.mrf.mxu0
  %v196 = vadd.f32 %v100, %v195
  %v197 = vpop.f32.mrf.mxu0
  %v198 = vadd.f32 %v104, %v197
  %199 = vmatprep.mubr.f32.mxu0 0.0
  %200 = vmatmul.mubr.f32.gmra.mxu0 %v26
  %v201 = vpop.f32.mrf.mxu0
  %v202 = vadd.f32 %v100, %v201
  %v203 = vpop.f32.mrf.mxu0
  %v204 = vadd.f32 %v104, %v203
  %205 = vmatprep.mubr.f32.mxu0 0.0
  %206 = vmatmul.mubr.f32.gmra.mxu0 %v27
  %v207 = vpop.f32.mrf.mxu0
  %v208 = vadd.f32 %v100, %v207
  %v209 = vpop.f32.mrf.mxu0
  %v210 = vadd.f32 %v104, %v209
  %211 = vmatprep.mubr.f32.mxu0 0.0
  %212 = vmatmul.mubr.f32.gmra.mxu0 %v28
  %v213 = vpop.f32.mrf.mxu0
  %v214 = vadd.f32 %v100, %v213
  %v215 = vpop.f32.mrf.mxu0
  %v216 = vadd.f32 %v104, %v215
  %217 = vmatprep.mubr.f32.mxu0 0.0
  %218 = vmatmul.mubr.f32.gmra.mxu0 %v29
  %v219 = vpop.f32.mrf.mxu0
  %v220 = vadd.f32 %v100, %v219
  %v221 = vpop.f32.mrf.mxu0
  %v222 = vadd.f32 %v104, %v221
  %223 = vmatprep.mubr.f32.mxu0 0.0
  %224 = vmatmul.mubr.f32.gmra.mxu0 %v30
  %v225 = vpop.f32.mrf.mxu0
  %v226 = vadd.f32 %v100, %v225
  %v227 = vpop.f32.mrf.mxu0
  %v228 = vadd.f32 %v104, %v227
  %229 = vdwg.mxu0
  %230 = vmatprep.subr.mxu0 %v94
  %231 = vmatpush1.msra.mxu0 %v93
  %232 = vmatprep.subr.mxu0 %v90
  %233 = vmatpush1.msra.mxu0 %v89
  %234 = vmatprep.subr.mxu0 %v86
  %235 = vmatpush1.msra.mxu0 %v85
  %236 = vmatprep.subr.mxu0 %v82
  %237 = vmatpush1.msra.mxu0 %v81
  %238 = vmatprep.subr.mxu0 %v78
  %239 = vmatpush1.msra.mxu0 %v77
  %240 = vmatprep.subr.mxu0 %v74
  %241 = vmatpush1.msra.mxu0 %v73
  %242 = vmatprep.subr.mxu0 %v70
  %243 = vmatpush1.msra.mxu0 %v69
  %244 = vmatprep.subr.mxu0 %v66
  %245 = vmatpush1.msra.mxu0 %v65
  %246 = vmatprep.subr.mxu0 %v62
  %247 = vmatpush1.msra.mxu0 %v61
  %248 = vmatprep.subr.mxu0 %v58
  %249 = vmatpush1.msra.mxu0 %v57
  %250 = vmatprep.subr.mxu0 %v54
  %251 = vmatpush1.msra.mxu0 %v53
  %252 = vmatprep.subr.mxu0 %v50
  %253 = vmatpush1.msra.mxu0 %v49
  %254 = vmatprep.subr.mxu0 %v46
  %255 = vmatpush1.msra.mxu0 %v45
  %256 = vmatprep.subr.mxu0 %v42
  %257 = vmatpush1.msra.mxu0 %v41
  %258 = vmatprep.subr.mxu0 %v38
  %259 = vmatpush1.msra.mxu0 %v37
  %260 = vmatprep.subr.mxu0 %v34
  %261 = vmatpush1.msra.mxu0 %v33
  %262 = vmatprep.subr.mxu0 0.0
  %263 = vmatpush2.msra.mxu0 0.0
  %264 = vmatprep.subr.mxu0 0.0
  %265 = vmatpush2.msra.mxu0 0.0
  %266 = vmatprep.subr.mxu0 0.0
  %267 = vmatpush2.msra.mxu0 0.0
  %268 = vmatprep.subr.mxu0 0.0
  %269 = vmatpush2.msra.mxu0 0.0
  %270 = vmatprep.subr.mxu0 0.0
  %271 = vmatpush2.msra.mxu0 0.0
  %272 = vmatprep.subr.mxu0 0.0
  %273 = vmatpush2.msra.mxu0 0.0
  %274 = vmatprep.subr.mxu0 0.0
  %275 = vmatpush2.msra.mxu0 0.0
  %276 = vmatprep.subr.mxu0 0.0
  %277 = vmatpush2.msra.mxu0 0.0
  %278 = vmatprep.subr.mxu0 0.0
  %279 = vmatpush2.msra.mxu0 0.0
  %280 = vmatprep.subr.mxu0 0.0
  %281 = vmatpush2.msra.mxu0 0.0
  %282 = vmatprep.subr.mxu0 0.0
  %283 = vmatpush2.msra.mxu0 0.0
  %284 = vmatprep.subr.mxu0 0.0
  %285 = vmatpush2.msra.mxu0 0.0
  %286 = vmatprep.subr.mxu0 0.0
  %287 = vmatpush2.msra.mxu0 0.0
  %288 = vmatprep.subr.mxu0 0.0
  %289 = vmatpush2.msra.mxu0 0.0
  %290 = vmatprep.subr.mxu0 0.0
  %291 = vmatpush2.msra.mxu0 0.0
  %292 = vmatprep.subr.mxu0 0.0
  %293 = vmatpush2.msra.mxu0 0.0
  %294 = vmatprep.mubr.f32.mxu0 0.0
  %295 = vmatmul.mubr.f32.gmra.mxu0 %v23
  %v296 = vpop.f32.mrf.mxu0
  %v297 = vadd.f32 %v108, %v296
  %v298 = vpop.f32.mrf.mxu0
  %v299 = vadd.f32 %v112, %v298
  %300 = vmatprep.mubr.f32.mxu0 0.0
  %301 = vmatmul.mubr.f32.gmra.mxu0 %v24
  %v302 = vpop.f32.mrf.mxu0
  %v303 = vadd.f32 %v108, %v302
  %v304 = vpop.f32.mrf.mxu0
  %v305 = vadd.f32 %v112, %v304
  %306 = vmatprep.mubr.f32.mxu0 0.0
  %307 = vmatmul.mubr.f32.gmra.mxu0 %v25
  %v308 = vpop.f32.mrf.mxu0
  %v309 = vadd.f32 %v108, %v308
  %v310 = vpop.f32.mrf.mxu0
  %v311 = vadd.f32 %v112, %v310
  %312 = vmatprep.mubr.f32.mxu0 0.0
  %313 = vmatmul.mubr.f32.gmra.mxu0 %v26
  %v314 = vpop.f32.mrf.mxu0
  %v315 = vadd.f32 %v108, %v314
  %v316 = vpop.f32.mrf.mxu0
  %v317 = vadd.f32 %v112, %v316
  %318 = vmatprep.mubr.f32.mxu0 0.0
  %319 = vmatmul.mubr.f32.gmra.mxu0 %v27
  %v320 = vpop.f32.mrf.mxu0
  %v321 = vadd.f32 %v108, %v320
  %v322 = vpop.f32.mrf.mxu0
  %v323 = vadd.f32 %v112, %v322
  %324 = vmatprep.mubr.f32.mxu0 0.0
  %325 = vmatmul.mubr.f32.gmra.mxu0 %v28
  %v326 = vpop.f32.mrf.mxu0
  %v327 = vadd.f32 %v108, %v326
  %v328 = vpop.f32.mrf.mxu0
  %v329 = vadd.f32 %v112, %v328
  %330 = vmatprep.mubr.f32.mxu0 0.0
  %331 = vmatmul.mubr.f32.gmra.mxu0 %v29
  %v332 = vpop.f32.mrf.mxu0
  %v333 = vadd.f32 %v108, %v332
  %v334 = vpop.f32.mrf.mxu0
  %v335 = vadd.f32 %v112, %v334
  %336 = vmatprep.mubr.f32.mxu0 0.0
  %337 = vmatmul.mubr.f32.gmra.mxu0 %v30
  %v338 = vpop.f32.mrf.mxu0
  %v339 = vadd.f32 %v108, %v338
  %v340 = vpop.f32.mrf.mxu0
  %v341 = vadd.f32 %v112, %v340
  %342 = vdwg.mxu0
  %343 = vst [vmem:[#allocation4] sm:$0xff] %v184
  %344 = vst [vmem:[#allocation4 + $0x8] sm:$0xff] %v186
  %345 = vst [vmem:[#allocation4 + $0x10] sm:$0xff] %v297
  %346 = vst [vmem:[#allocation4 + $0x18] sm:$0xff] %v299
  %347 = vst [vmem:[#allocation4 + $0x20] sm:$0xff] %v190
  %348 = vst [vmem:[#allocation4 + $0x28] sm:$0xff] %v192
  %349 = vst [vmem:[#allocation4 + $0x30] sm:$0xff] %v303
  %350 = vst [vmem:[#allocation4 + $0x38] sm:$0xff] %v305
  %351 = vst [vmem:[#allocation4 + $0x40] sm:$0xff] %v196
  %352 = vst [vmem:[#allocation4 + $0x48] sm:$0xff] %v198
  %353 = vst [vmem:[#allocation4 + $0x50] sm:$0xff] %v309
  %354 = vst [vmem:[#allocation4 + $0x58] sm:$0xff] %v311
  %355 = vst [vmem:[#allocation4 + $0x60] sm:$0xff] %v202
  %356 = vst [vmem:[#allocation4 + $0x68] sm:$0xff] %v204
  %357 = vst [vmem:[#allocation4 + $0x70] sm:$0xff] %v315
  %358 = vst [vmem:[#allocation4 + $0x78] sm:$0xff] %v317
  %359 = vst [vmem:[#allocation4 + $0x80] sm:$0xff] %v208
  %360 = vst [vmem:[#allocation4 + $0x88] sm:$0xff] %v210
  %361 = vst [vmem:[#allocation4 + $0x90] sm:$0xff] %v321
  %362 = vst [vmem:[#allocation4 + $0x98] sm:$0xff] %v323
  %363 = vst [vmem:[#allocation4 + $0xa0] sm:$0xff] %v214
  %364 = vst [vmem:[#allocation4 + $0xa8] sm:$0xff] %v216
  %365 = vst [vmem:[#allocation4 + $0xb0] sm:$0xff] %v327
  %366 = vst [vmem:[#allocation4 + $0xb8] sm:$0xff] %v329
  %367 = vst [vmem:[#allocation4 + $0xc0] sm:$0xff] %v220
  %368 = vst [vmem:[#allocation4 + $0xc8] sm:$0xff] %v222
  %369 = vst [vmem:[#allocation4 + $0xd0] sm:$0xff] %v333
  %370 = vst [vmem:[#allocation4 + $0xd8] sm:$0xff] %v335
  %371 = vst [vmem:[#allocation4 + $0xe0] sm:$0xff] %v226
  %372 = vst [vmem:[#allocation4 + $0xe8] sm:$0xff] %v228
  %373 = vst [vmem:[#allocation4 + $0xf0] sm:$0xff] %v339
  %374 = vst [vmem:[#allocation4 + $0xf8] sm:$0xff] %v341
  %v375 = vld [vmem:[#allocation2] sm:$0xff]
  %v376 = vld [vmem:[%s2] sm:$0xff]
  %v377 = vld [vmem:[%s2 + $0x8] sm:$0xff]
  %v378 = vld [vmem:[%s2 + $0x10] sm:$0xff]
  %v379 = vld [vmem:[%s2 + $0x18] sm:$0xff]
  %v380 = vld [vmem:[%s2 + $0x20] sm:$0xff]
  %v381 = vld [vmem:[%s2 + $0x28] sm:$0xff]
  %v382 = vld [vmem:[%s2 + $0x30] sm:$0xff]
  %v383 = vld [vmem:[%s2 + $0x38] sm:$0xff]
  %v384 = vld [vmem:[%s2 + $0x40] sm:$0xff]
  %v385 = vld [vmem:[%s2 + $0x48] sm:$0xff]
  %v386 = vld [vmem:[%s2 + $0x50] sm:$0xff]
  %v387 = vld [vmem:[%s2 + $0x58] sm:$0xff]
  %v388 = vld [vmem:[%s2 + $0x60] sm:$0xff]
  %v389 = vld [vmem:[%s2 + $0x68] sm:$0xff]
  %v390 = vld [vmem:[%s2 + $0x70] sm:$0xff]
  %v391 = vld [vmem:[%s2 + $0x78] sm:$0xff]
  %v392 = vld [vmem:[%s2 + $0x80] sm:$0xff]
  %v393 = vld [vmem:[%s2 + $0x88] sm:$0xff]
  %v394 = vld [vmem:[%s2 + $0x90] sm:$0xff]
  %v395 = vld [vmem:[%s2 + $0x98] sm:$0xff]
  %v396 = vld [vmem:[%s2 + $0xa0] sm:$0xff]
  %v397 = vld [vmem:[%s2 + $0xa8] sm:$0xff]
  %v398 = vld [vmem:[%s2 + $0xb0] sm:$0xff]
  %v399 = vld [vmem:[%s2 + $0xb8] sm:$0xff]
  %v400 = vld [vmem:[%s2 + $0xc0] sm:$0xff]
  %v401 = vld [vmem:[%s2 + $0xc8] sm:$0xff]
  %v402 = vld [vmem:[%s2 + $0xd0] sm:$0xff]
  %v403 = vld [vmem:[%s2 + $0xd8] sm:$0xff]
  %v404 = vld [vmem:[%s2 + $0xe0] sm:$0xff]
  %v405 = vld [vmem:[%s2 + $0xe8] sm:$0xff]
  %v406 = vld [vmem:[%s2 + $0xf0] sm:$0xff]
  %v407 = vld [vmem:[%s2 + $0xf8] sm:$0xff]
  %v408 = vld [vmem:[%s2 + $0x100] sm:$0xff]
  %v409 = vld [vmem:[%s2 + $0x108] sm:$0xff]
  %v410 = vld [vmem:[%s2 + $0x110] sm:$0xff]
  %v411 = vld [vmem:[%s2 + $0x118] sm:$0xff]
  %v412 = vld [vmem:[%s2 + $0x120] sm:$0xff]
  %v413 = vld [vmem:[%s2 + $0x128] sm:$0xff]
  %v414 = vld [vmem:[%s2 + $0x130] sm:$0xff]
  %v415 = vld [vmem:[%s2 + $0x138] sm:$0xff]
  %v416 = vld [vmem:[%s2 + $0x140] sm:$0xff]
  %v417 = vld [vmem:[%s2 + $0x148] sm:$0xff]
  %v418 = vld [vmem:[%s2 + $0x150] sm:$0xff]
  %v419 = vld [vmem:[%s2 + $0x158] sm:$0xff]
  %v420 = vld [vmem:[%s2 + $0x160] sm:$0xff]
  %v421 = vld [vmem:[%s2 + $0x168] sm:$0xff]
  %v422 = vld [vmem:[%s2 + $0x170] sm:$0xff]
  %v423 = vld [vmem:[%s2 + $0x178] sm:$0xff]
  %v424 = vld [vmem:[%s2 + $0x180] sm:$0xff]
  %v425 = vld [vmem:[%s2 + $0x188] sm:$0xff]
  %v426 = vld [vmem:[%s2 + $0x190] sm:$0xff]
  %v427 = vld [vmem:[%s2 + $0x198] sm:$0xff]
  %v428 = vld [vmem:[%s2 + $0x1a0] sm:$0xff]
  %v429 = vld [vmem:[%s2 + $0x1a8] sm:$0xff]
  %v430 = vld [vmem:[%s2 + $0x1b0] sm:$0xff]
  %v431 = vld [vmem:[%s2 + $0x1b8] sm:$0xff]
  %v432 = vld [vmem:[%s2 + $0x1c0] sm:$0xff]
  %v433 = vld [vmem:[%s2 + $0x1c8] sm:$0xff]
  %v434 = vld [vmem:[%s2 + $0x1d0] sm:$0xff]
  %v435 = vld [vmem:[%s2 + $0x1d8] sm:$0xff]
  %v436 = vld [vmem:[%s2 + $0x1e0] sm:$0xff]
  %v437 = vld [vmem:[%s2 + $0x1e8] sm:$0xff]
  %v438 = vld [vmem:[%s2 + $0x1f0] sm:$0xff]
  %v439 = vld [vmem:[%s2 + $0x1f8] sm:$0xff]
  %s440 = smul.u32 0, 4
  %s441 = smul.addr %s440, 8
  %s442 = scalar_lea.vmem [#allocation4], %s441
  %v443 = vld [vmem:[%s442] sm:$0xff]
  %v444 = vld [vmem:[%s442 + $0x8] sm:$0xff]
  %v445 = vld [vmem:[%s442 + $0x10] sm:$0xff]
  %v446 = vld [vmem:[%s442 + $0x18] sm:$0xff]
  %447 = vmatprep.subr.mxu0 %v437
  %448 = vmatpush1.msra.mxu0 %v436
  %449 = vmatprep.subr.mxu0 %v433
  %450 = vmatpush1.msra.mxu0 %v432
  %451 = vmatprep.subr.mxu0 %v429
  %452 = vmatpush1.msra.mxu0 %v428
  %453 = vmatprep.subr.mxu0 %v425
  %454 = vmatpush1.msra.mxu0 %v424
  %455 = vmatprep.subr.mxu0 %v421
  %456 = vmatpush1.msra.mxu0 %v420
  %457 = vmatprep.subr.mxu0 %v417
  %458 = vmatpush1.msra.mxu0 %v416
  %459 = vmatprep.subr.mxu0 %v413
  %460 = vmatpush1.msra.mxu0 %v412
  %461 = vmatprep.subr.mxu0 %v409
  %462 = vmatpush1.msra.mxu0 %v408
  %463 = vmatprep.subr.mxu0 %v405
  %464 = vmatpush1.msra.mxu0 %v404
  %465 = vmatprep.subr.mxu0 %v401
  %466 = vmatpush1.msra.mxu0 %v400
  %467 = vmatprep.subr.mxu0 %v397
  %468 = vmatpush1.msra.mxu0 %v396
  %469 = vmatprep.subr.mxu0 %v393
  %470 = vmatpush1.msra.mxu0 %v392
  %471 = vmatprep.subr.mxu0 %v389
  %472 = vmatpush1.msra.mxu0 %v388
  %473 = vmatprep.subr.mxu0 %v385
  %474 = vmatpush1.msra.mxu0 %v384
  %475 = vmatprep.subr.mxu0 %v381
  %476 = vmatpush1.msra.mxu0 %v380
  %477 = vmatprep.subr.mxu0 %v377
  %478 = vmatpush1.msra.mxu0 %v376
  %479 = vmatprep.subr.mxu0 0.0
  %480 = vmatpush2.msra.mxu0 0.0
  %481 = vmatprep.subr.mxu0 0.0
  %482 = vmatpush2.msra.mxu0 0.0
  %483 = vmatprep.subr.mxu0 0.0
  %484 = vmatpush2.msra.mxu0 0.0
  %485 = vmatprep.subr.mxu0 0.0
  %486 = vmatpush2.msra.mxu0 0.0
  %487 = vmatprep.subr.mxu0 0.0
  %488 = vmatpush2.msra.mxu0 0.0
  %489 = vmatprep.subr.mxu0 0.0
  %490 = vmatpush2.msra.mxu0 0.0
  %491 = vmatprep.subr.mxu0 0.0
  %492 = vmatpush2.msra.mxu0 0.0
  %493 = vmatprep.subr.mxu0 0.0
  %494 = vmatpush2.msra.mxu0 0.0
  %495 = vmatprep.subr.mxu0 0.0
  %496 = vmatpush2.msra.mxu0 0.0
  %497 = vmatprep.subr.mxu0 0.0
  %498 = vmatpush2.msra.mxu0 0.0
  %499 = vmatprep.subr.mxu0 0.0
  %500 = vmatpush2.msra.mxu0 0.0
  %501 = vmatprep.subr.mxu0 0.0
  %502 = vmatpush2.msra.mxu0 0.0
  %503 = vmatprep.subr.mxu0 0.0
  %504 = vmatpush2.msra.mxu0 0.0
  %505 = vmatprep.subr.mxu0 0.0
  %506 = vmatpush2.msra.mxu0 0.0
  %507 = vmatprep.subr.mxu0 0.0
  %508 = vmatpush2.msra.mxu0 0.0
  %509 = vmatprep.subr.mxu0 0.0
  %510 = vmatpush2.msra.mxu0 0.0
  %511 = vmatprep.mubr.f32.mxu0 0.0
  %512 = vmatmul.mubr.f32.gmra.mxu0 %v375
  %v513 = vpop.f32.mrf.mxu0
  %v514 = vadd.f32 %v443, %v513
  %v515 = vpop.f32.mrf.mxu0
  %v516 = vadd.f32 %v444, %v515
  %517 = vdwg.mxu0
  %518 = vmatprep.subr.mxu0 %v439
  %519 = vmatpush1.msra.mxu0 %v438
  %520 = vmatprep.subr.mxu0 %v435
  %521 = vmatpush1.msra.mxu0 %v434
  %522 = vmatprep.subr.mxu0 %v431
  %523 = vmatpush1.msra.mxu0 %v430
  %524 = vmatprep.subr.mxu0 %v427
  %525 = vmatpush1.msra.mxu0 %v426
  %526 = vmatprep.subr.mxu0 %v423
  %527 = vmatpush1.msra.mxu0 %v422
  %528 = vmatprep.subr.mxu0 %v419
  %529 = vmatpush1.msra.mxu0 %v418
  %530 = vmatprep.subr.mxu0 %v415
  %531 = vmatpush1.msra.mxu0 %v414
  %532 = vmatprep.subr.mxu0 %v411
  %533 = vmatpush1.msra.mxu0 %v410
  %534 = vmatprep.subr.mxu0 %v407
  %535 = vmatpush1.msra.mxu0 %v406
  %536 = vmatprep.subr.mxu0 %v403
  %537 = vmatpush1.msra.mxu0 %v402
  %538 = vmatprep.subr.mxu0 %v399
  %539 = vmatpush1.msra.mxu0 %v398
  %540 = vmatprep.subr.mxu0 %v395
  %541 = vmatpush1.msra.mxu0 %v394
  %542 = vmatprep.subr.mxu0 %v391
  %543 = vmatpush1.msra.mxu0 %v390
  %544 = vmatprep.subr.mxu0 %v387
  %545 = vmatpush1.msra.mxu0 %v386
  %546 = vmatprep.subr.mxu0 %v383
  %547 = vmatpush1.msra.mxu0 %v382
  %548 = vmatprep.subr.mxu0 %v379
  %549 = vmatpush1.msra.mxu0 %v378
  %550 = vmatprep.subr.mxu0 0.0
  %551 = vmatpush2.msra.mxu0 0.0
  %552 = vmatprep.subr.mxu0 0.0
  %553 = vmatpush2.msra.mxu0 0.0
  %554 = vmatprep.subr.mxu0 0.0
  %555 = vmatpush2.msra.mxu0 0.0
  %556 = vmatprep.subr.mxu0 0.0
  %557 = vmatpush2.msra.mxu0 0.0
  %558 = vmatprep.subr.mxu0 0.0
  %559 = vmatpush2.msra.mxu0 0.0
  %560 = vmatprep.subr.mxu0 0.0
  %561 = vmatpush2.msra.mxu0 0.0
  %562 = vmatprep.subr.mxu0 0.0
  %563 = vmatpush2.msra.mxu0 0.0
  %564 = vmatprep.subr.mxu0 0.0
  %565 = vmatpush2.msra.mxu0 0.0
  %566 = vmatprep.subr.mxu0 0.0
  %567 = vmatpush2.msra.mxu0 0.0
  %568 = vmatprep.subr.mxu0 0.0
  %569 = vmatpush2.msra.mxu0 0.0
  %570 = vmatprep.subr.mxu0 0.0
  %571 = vmatpush2.msra.mxu0 0.0
  %572 = vmatprep.subr.mxu0 0.0
  %573 = vmatpush2.msra.mxu0 0.0
  %574 = vmatprep.subr.mxu0 0.0
  %575 = vmatpush2.msra.mxu0 0.0
  %576 = vmatprep.subr.mxu0 0.0
  %577 = vmatpush2.msra.mxu0 0.0
  %578 = vmatprep.subr.mxu0 0.0
  %579 = vmatpush2.msra.mxu0 0.0
  %580 = vmatprep.subr.mxu0 0.0
  %581 = vmatpush2.msra.mxu0 0.0
  %582 = vmatprep.mubr.f32.mxu0 0.0
  %583 = vmatmul.mubr.f32.gmra.mxu0 %v375
  %v584 = vpop.f32.mrf.mxu0
  %v585 = vadd.f32 %v445, %v584
  %v586 = vpop.f32.mrf.mxu0
  %v587 = vadd.f32 %v446, %v586
  %588 = vdwg.mxu0
  %v589 = vmul.f32 %v514, 0.5
  %v590 = vtanh.pop %v589
  %v591 = vmul.f32 %v590, 0.5
  %v592 = vadd.f32 %v591, 0.5
  %v593 = vmul.f32 %v516, 0.5
  %v594 = vtanh.pop %v593
  %v595 = vmul.f32 %v594, 0.5
  %v596 = vadd.f32 %v595, 0.5
  %v597 = vtanh.pop %v585
  %v598 = vmul.f32 %v587, 0.5
  %v599 = vtanh.pop %v598
  %v600 = vmul.f32 %v599, 0.5
  %v601 = vadd.f32 %v600, 0.5
  %v602 = vld [vmem:[#allocation3] sm:$0xff]
  %v603 = vmul.f32 %v596, %v602
  %v604 = vmul.f32 %v592, %v597
  %v605 = vadd.f32 %v603, %v604
  %v606 = vtanh.pop %v605
  %v607 = vmul.f32 %v601, %v606
  %608 = vst [vmem:[#allocation3] sm:$0xff] %v605
  %609 = vst [vmem:[#allocation2] sm:$0xff] %v607
  %610 = vst [vmem:[%s4] sm:$0xff] %v607
  %v611 = vld [vmem:[#allocation2] sm:$0xff]
  %v612 = vld [vmem:[%s2] sm:$0xff]
  %v613 = vld [vmem:[%s2 + $0x8] sm:$0xff]
  %v614 = vld [vmem:[%s2 + $0x10] sm:$0xff]
  %v615 = vld [vmem:[%s2 + $0x18] sm:$0xff]
  %v616 = vld [vmem:[%s2 + $0x20] sm:$0xff]
  %v617 = vld [vmem:[%s2 + $0x28] sm:$0xff]
  %v618 = vld [vmem:[%s2 + $0x30] sm:$0xff]
  %v619 = vld [vmem:[%s2 + $0x38] sm:$0xff]
  %v620 = vld [vmem:[%s2 + $0x40] sm:$0xff]
  %v621 = vld [vmem:[%s2 + $0x48] sm:$0xff]
  %v622 = vld [vmem:[%s2 + $0x50] sm:$0xff]
  %v623 = vld [vmem:[%s2 + $0x58] sm:$0xff]
  %v624 = vld [vmem:[%s2 + $0x60] sm:$0xff]
  %v625 = vld [vmem:[%s2 + $0x68] sm:$0xff]
  %v626 = vld [vmem:[%s2 + $0x70] sm:$0xff]
  %v627 = vld [vmem:[%s2 + $0x78] sm:$0xff]
  %v628 = vld [vmem:[%s2 + $0x80] sm:$0xff]
  %v629 = vld [vmem:[%s2 + $0x88] sm:$0xff]
  %v630 = vld [vmem:[%s2 + $0x90] sm:$0xff]
  %v631 = vld [vmem:[%s2 + $0x98] sm:$0xff]
  %v632 = vld [vmem:[%s2 + $0xa0] sm:$0xff]
  %v633 = vld [vmem:[%s2 + $0xa8] sm:$0xff]
  %v634 = vld [vmem:[%s2 + $0xb0] sm:$0xff]
  %v635 = vld [vmem:[%s2 + $0xb8] sm:$0xff]
  %v636 = vld [vmem:[%s2 + $0xc0] sm:$0xff]
  %v637 = vld [vmem:[%s2 + $0xc8] sm:$0xff]
  %v638 = vld [vmem:[%s2 + $0xd0] sm:$0xff]
  %v639 = vld [vmem:[%s2 + $0xd8] sm:$0xff]
  %v640 = vld [vmem:[%s2 + $0xe0] sm:$0xff]
  %v641 = vld [vmem:[%s2 + $0xe8] sm:$0xff]
  %v642 = vld [vmem:[%s2 + $0xf0] sm:$0xff]
  %v643 = vld [vmem:[%s2 + $0xf8] sm:$0xff]
  %v644 = vld [vmem:[%s2 + $0x100] sm:$0xff]
  %v645 = vld [vmem:[%s2 + $0x108] sm:$0xff]
  %v646 = vld [vmem:[%s2 + $0x110] sm:$0xff]
  %v647 = vld [vmem:[%s2 + $0x118] sm:$0xff]
  %v648 = vld [vmem:[%s2 + $0x120] sm:$0xff]
  %v649 = vld [vmem:[%s2 + $0x128] sm:$0xff]
  %v650 = vld [vmem:[%s2 + $0x130] sm:$0xff]
  %v651 = vld [vmem:[%s2 + $0x138] sm:$0xff]
  %v652 = vld [vmem:[%s2 + $0x140] sm:$0xff]
  %v653 = vld [vmem:[%s2 + $0x148] sm:$0xff]
  %v654 = vld [vmem:[%s2 + $0x150] sm:$0xff]
  %v655 = vld [vmem:[%s2 + $0x158] sm:$0xff]
  %v656 = vld [vmem:[%s2 + $0x160] sm:$0xff]
  %v657 = vld [vmem:[%s2 + $0x168] sm:$0xff]
  %v658 = vld [vmem:[%s2 + $0x170] sm:$0xff]
  %v659 = vld [vmem:[%s2 + $0x178] sm:$0xff]
  %v660 = vld [vmem:[%s2 + $0x180] sm:$0xff]
  %v661 = vld [vmem:[%s2 + $0x188] sm:$0xff]
  %v662 = vld [vmem:[%s2 + $0x190] sm:$0xff]
  %v663 = vld [vmem:[%s2 + $0x198] sm:$0xff]
  %v664 = vld [vmem:[%s2 + $0x1a0] sm:$0xff]
  %v665 = vld [vmem:[%s2 + $0x1a8] sm:$0xff]
  %v666 = vld [vmem:[%s2 + $0x1b0] sm:$0xff]
  %v667 = vld [vmem:[%s2 + $0x1b8] sm:$0xff]
  %v668 = vld [vmem:[%s2 + $0x1c0] sm:$0xff]
  %v669 = vld [vmem:[%s2 + $0x1c8] sm:$0xff]
  %v670 = vld [vmem:[%s2 + $0x1d0] sm:$0xff]
  %v671 = vld [vmem:[%s2 + $0x1d8] sm:$0xff]
  %v672 = vld [vmem:[%s2 + $0x1e0] sm:$0xff]
  %v673 = vld [vmem:[%s2 + $0x1e8] sm:$0xff]
  %v674 = vld [vmem:[%s2 + $0x1f0] sm:$0xff]
  %v675 = vld [vmem:[%s2 + $0x1f8] sm:$0xff]
  %s676 = smul.u32 1, 4
  %s677 = smul.addr %s676, 8
  %s678 = scalar_lea.vmem [#allocation4], %s677
  %v679 = vld [vmem:[%s678] sm:$0xff]
  %v680 = vld [vmem:[%s678 + $0x8] sm:$0xff]
  %v681 = vld [vmem:[%s678 + $0x10] sm:$0xff]
  %v682 = vld [vmem:[%s678 + $0x18] sm:$0xff]
  %683 = vmatprep.subr.mxu0 %v673
  %684 = vmatpush1.msra.mxu0 %v672
  %685 = vmatprep.subr.mxu0 %v669
  %686 = vmatpush1.msra.mxu0 %v668
  %687 = vmatprep.subr.mxu0 %v665
  %688 = vmatpush1.msra.mxu0 %v664
  %689 = vmatprep.subr.mxu0 %v661
  %690 = vmatpush1.msra.mxu0 %v660
  %691 = vmatprep.subr.mxu0 %v657
  %692 = vmatpush1.msra.mxu0 %v656
  %693 = vmatprep.subr.mxu0 %v653
  %694 = vmatpush1.msra.mxu0 %v652
  %695 = vmatprep.subr.mxu0 %v649
  %696 = vmatpush1.msra.mxu0 %v648
  %697 = vmatprep.subr.mxu0 %v645
  %698 = vmatpush1.msra.mxu0 %v644
  %699 = vmatprep.subr.mxu0 %v641
  %700 = vmatpush1.msra.mxu0 %v640
  %701 = vmatprep.subr.mxu0 %v637
  %702 = vmatpush1.msra.mxu0 %v636
  %703 = vmatprep.subr.mxu0 %v633
  %704 = vmatpush1.msra.mxu0 %v632
  %705 = vmatprep.subr.mxu0 %v629
  %706 = vmatpush1.msra.mxu0 %v628
  %707 = vmatprep.subr.mxu0 %v625
  %708 = vmatpush1.msra.mxu0 %v624
  %709 = vmatprep.subr.mxu0 %v621
  %710 = vmatpush1.msra.mxu0 %v620
  %711 = vmatprep.subr.mxu0 %v617
  %712 = vmatpush1.msra.mxu0 %v616
  %713 = vmatprep.subr.mxu0 %v613
  %714 = vmatpush1.msra.mxu0 %v612
  %715 = vmatprep.subr.mxu0 0.0
  %716 = vmatpush2.msra.mxu0 0.0
  %717 = vmatprep.subr.mxu0 0.0
  %718 = vmatpush2.msra.mxu0 0.0
  %719 = vmatprep.subr.mxu0 0.0
  %720 = vmatpush2.msra.mxu0 0.0
  %721 = vmatprep.subr.mxu0 0.0
  %722 = vmatpush2.msra.mxu0 0.0
  %723 = vmatprep.subr.mxu0 0.0
  %724 = vmatpush2.msra.mxu0 0.0
  %725 = vmatprep.subr.mxu0 0.0
  %726 = vmatpush2.msra.mxu0 0.0
  %727 = vmatprep.subr.mxu0 0.0
  %728 = vmatpush2.msra.mxu0 0.0
  %729 = vmatprep.subr.mxu0 0.0
  %730 = vmatpush2.msra.mxu0 0.0
  %731 = vmatprep.subr.mxu0 0.0
  %732 = vmatpush2.msra.mxu0 0.0
  %733 = vmatprep.subr.mxu0 0.0
  %734 = vmatpush2.msra.mxu0 0.0
  %735 = vmatprep.subr.mxu0 0.0
  %736 = vmatpush2.msra.mxu0 0.0
  %737 = vmatprep.subr.mxu0 0.0
  %738 = vmatpush2.msra.mxu0 0.0
  %739 = vmatprep.subr.mxu0 0.0
  %740 = vmatpush2.msra.mxu0 0.0
  %741 = vmatprep.subr.mxu0 0.0
  %742 = vmatpush2.msra.mxu0 0.0
  %743 = vmatprep.subr.mxu0 0.0
  %744 = vmatpush2.msra.mxu0 0.0
  %745 = vmatprep.subr.mxu0 0.0
  %746 = vmatpush2.msra.mxu0 0.0
  %747 = vmatprep.mubr.f32.mxu0 0.0
  %748 = vmatmul.mubr.f32.gmra.mxu0 %v611
  %v749 = vpop.f32.mrf.mxu0
  %v750 = vadd.f32 %v679, %v749
  %v751 = vpop.f32.mrf.mxu0
  %v752 = vadd.f32 %v680, %v751
  %753 = vdwg.mxu0
  %754 = vmatprep.subr.mxu0 %v675
  %755 = vmatpush1.msra.mxu0 %v674
  %756 = vmatprep.subr.mxu0 %v671
  %757 = vmatpush1.msra.mxu0 %v670
  %758 = vmatprep.subr.mxu0 %v667
  %759 = vmatpush1.msra.mxu0 %v666
  %760 = vmatprep.subr.mxu0 %v663
  %761 = vmatpush1.msra.mxu0 %v662
  %762 = vmatprep.subr.mxu0 %v659
  %763 = vmatpush1.msra.mxu0 %v658
  %764 = vmatprep.subr.mxu0 %v655
  %765 = vmatpush1.msra.mxu0 %v654
  %766 = vmatprep.subr.mxu0 %v651
  %767 = vmatpush1.msra.mxu0 %v650
  %768 = vmatprep.subr.mxu0 %v647
  %769 = vmatpush1.msra.mxu0 %v646
  %770 = vmatprep.subr.mxu0 %v643
  %771 = vmatpush1.msra.mxu0 %v642
  %772 = vmatprep.subr.mxu0 %v639
  %773 = vmatpush1.msra.mxu0 %v638
  %774 = vmatprep.subr.mxu0 %v635
  %775 = vmatpush1.msra.mxu0 %v634
  %776 = vmatprep.subr.mxu0 %v631
  %777 = vmatpush1.msra.mxu0 %v630
  %778 = vmatprep.subr.mxu0 %v627
  %779 = vmatpush1.msra.mxu0 %v626
  %780 = vmatprep.subr.mxu0 %v623
  %781 = vmatpush1.msra.mxu0 %v622
  %782 = vmatprep.subr.mxu0 %v619
  %783 = vmatpush1.msra.mxu0 %v618
  %784 = vmatprep.subr.mxu0 %v615
  %785 = vmatpush1.msra.mxu0 %v614
  %786 = vmatprep.subr.mxu0 0.0
  %787 = vmatpush2.msra.mxu0 0.0
  %788 = vmatprep.subr.mxu0 0.0
  %789 = vmatpush2.msra.mxu0 0.0
  %790 = vmatprep.subr.mxu0 0.0
  %791 = vmatpush2.msra.mxu0 0.0
  %792 = vmatprep.subr.mxu0 0.0
  %793 = vmatpush2.msra.mxu0 0.0
  %794 = vmatprep.subr.mxu0 0.0
  %795 = vmatpush2.msra.mxu0 0.0
  %796 = vmatprep.subr.mxu0 0.0
  %797 = vmatpush2.msra.mxu0 0.0
  %798 = vmatprep.subr.mxu0 0.0
  %799 = vmatpush2.msra.mxu0 0.0
  %800 = vmatprep.subr.mxu0 0.0
  %801 = vmatpush2.msra.mxu0 0.0
  %802 = vmatprep.subr.mxu0 0.0
  %803 = vmatpush2.msra.mxu0 0.0
  %804 = vmatprep.subr.mxu0 0.0
  %805 = vmatpush2.msra.mxu0 0.0
  %806 = vmatprep.subr.mxu0 0.0
  %807 = vmatpush2.msra.mxu0 0.0
  %808 = vmatprep.subr.mxu0 0.0
  %809 = vmatpush2.msra.mxu0 0.0
  %810 = vmatprep.subr.mxu0 0.0
  %811 = vmatpush2.msra.mxu0 0.0
  %812 = vmatprep.subr.mxu0 0.0
  %813 = vmatpush2.msra.mxu0 0.0
  %814 = vmatprep.subr.mxu0 0.0
  %815 = vmatpush2.msra.mxu0 0.0
  %816 = vmatprep.subr.mxu0 0.0
  %817 = vmatpush2.msra.mxu0 0.0
  %818 = vmatprep.mubr.f32.mxu0 0.0
  %819 = vmatmul.mubr.f32.gmra.mxu0 %v611
  %v820 = vpop.f32.mrf.mxu0
  %v821 = vadd.f32 %v681, %v820
  %v822 = vpop.f32.mrf.mxu0
  %v823 = vadd.f32 %v682, %v822
  %824 = vdwg.mxu0
  %v825 = vmul.f32 %v750, 0.5
  %v826 = vtanh.pop %v825
  %v827 = vmul.f32 %v826, 0.5
  %v828 = vadd.f32 %v827, 0.5
  %v829 = vmul.f32 %v752, 0.5
  %v830 = vtanh.pop %v829
  %v831 = vmul.f32 %v830, 0.5
  %v832 = vadd.f32 %v831, 0.5
  %v833 = vtanh.pop %v821
  %v834 = vmul.f32 %v823, 0.5
  %v835 = vtanh.pop %v834
  %v836 = vmul.f32 %v835, 0.5
  %v837 = vadd.f32 %v836, 0.5
  %v838 = vld [vmem:[#allocation3] sm:$0xff]
  %v839 = vmul.f32 %v832, %v838
  %v840 = vmul.f32 %v828, %v833
  %v841 = vadd.f32 %v839, %v840
  %v842 = vtanh.pop %v841
  %v843 = vmul.f32 %v837, %v842
  %844 = vst [vmem:[#allocation3] sm:$0xff] %v841
  %845 = vst [vmem:[#allocation2] sm:$0xff] %v843
  %s846 = scalar_lea.vmem %s4, 8
  %847 = vst [vmem:[%s846] sm:$0xff] %v843
  %v848 = vld [vmem:[#allocation2] sm:$0xff]
  %v849 = vld [vmem:[%s2] sm:$0xff]
  %v850 = vld [vmem:[%s2 + $0x8] sm:$0xff]
  %v851 = vld [vmem:[%s2 + $0x10] sm:$0xff]
  %v852 = vld [vmem:[%s2 + $0x18] sm:$0xff]
  %v853 = vld [vmem:[%s2 + $0x20] sm:$0xff]
  %v854 = vld [vmem:[%s2 + $0x28] sm:$0xff]
  %v855 = vld [vmem:[%s2 + $0x30] sm:$0xff]
  %v856 = vld [vmem:[%s2 + $0x38] sm:$0xff]
  %v857 = vld [vmem:[%s2 + $0x40] sm:$0xff]
  %v858 = vld [vmem:[%s2 + $0x48] sm:$0xff]
  %v859 = vld [vmem:[%s2 + $0x50] sm:$0xff]
  %v860 = vld [vmem:[%s2 + $0x58] sm:$0xff]
  %v861 = vld [vmem:[%s2 + $0x60] sm:$0xff]
  %v862 = vld [vmem:[%s2 + $0x68] sm:$0xff]
  %v863 = vld [vmem:[%s2 + $0x70] sm:$0xff]
  %v864 = vld [vmem:[%s2 + $0x78] sm:$0xff]
  %v865 = vld [vmem:[%s2 + $0x80] sm:$0xff]
  %v866 = vld [vmem:[%s2 + $0x88] sm:$0xff]
  %v867 = vld [vmem:[%s2 + $0x90] sm:$0xff]
  %v868 = vld [vmem:[%s2 + $0x98] sm:$0xff]
  %v869 = vld [vmem:[%s2 + $0xa0] sm:$0xff]
  %v870 = vld [vmem:[%s2 + $0xa8] sm:$0xff]
  %v871 = vld [vmem:[%s2 + $0xb0] sm:$0xff]
  %v872 = vld [vmem:[%s2 + $0xb8] sm:$0xff]
  %v873 = vld [vmem:[%s2 + $0xc0] sm:$0xff]
  %v874 = vld [vmem:[%s2 + $0xc8] sm:$0xff]
  %v875 = vld [vmem:[%s2 + $0xd0] sm:$0xff]
  %v876 = vld [vmem:[%s2 + $0xd8] sm:$0xff]
  %v877 = vld [vmem:[%s2 + $0xe0] sm:$0xff]
  %v878 = vld [vmem:[%s2 + $0xe8] sm:$0xff]
  %v879 = vld [vmem:[%s2 + $0xf0] sm:$0xff]
  %v880 = vld [vmem:[%s2 + $0xf8] sm:$0xff]
  %v881 = vld [vmem:[%s2 + $0x100] sm:$0xff]
  %v882 = vld [vmem:[%s2 + $0x108] sm:$0xff]
  %v883 = vld [vmem:[%s2 + $0x110] sm:$0xff]
  %v884 = vld [vmem:[%s2 + $0x118] sm:$0xff]
  %v885 = vld [vmem:[%s2 + $0x120] sm:$0xff]
  %v886 = vld [vmem:[%s2 + $0x128] sm:$0xff]
  %v887 = vld [vmem:[%s2 + $0x130] sm:$0xff]
  %v888 = vld [vmem:[%s2 + $0x138] sm:$0xff]
  %v889 = vld [vmem:[%s2 + $0x140] sm:$0xff]
  %v890 = vld [vmem:[%s2 + $0x148] sm:$0xff]
  %v891 = vld [vmem:[%s2 + $0x150] sm:$0xff]
  %v892 = vld [vmem:[%s2 + $0x158] sm:$0xff]
  %v893 = vld [vmem:[%s2 + $0x160] sm:$0xff]
  %v894 = vld [vmem:[%s2 + $0x168] sm:$0xff]
  %v895 = vld [vmem:[%s2 + $0x170] sm:$0xff]
  %v896 = vld [vmem:[%s2 + $0x178] sm:$0xff]
  %v897 = vld [vmem:[%s2 + $0x180] sm:$0xff]
  %v898 = vld [vmem:[%s2 + $0x188] sm:$0xff]
  %v899 = vld [vmem:[%s2 + $0x190] sm:$0xff]
  %v900 = vld [vmem:[%s2 + $0x198] sm:$0xff]
  %v901 = vld [vmem:[%s2 + $0x1a0] sm:$0xff]
  %v902 = vld [vmem:[%s2 + $0x1a8] sm:$0xff]
  %v903 = vld [vmem:[%s2 + $0x1b0] sm:$0xff]
  %v904 = vld [vmem:[%s2 + $0x1b8] sm:$0xff]
  %v905 = vld [vmem:[%s2 + $0x1c0] sm:$0xff]
  %v906 = vld [vmem:[%s2 + $0x1c8] sm:$0xff]
  %v907 = vld [vmem:[%s2 + $0x1d0] sm:$0xff]
  %v908 = vld [vmem:[%s2 + $0x1d8] sm:$0xff]
  %v909 = vld [vmem:[%s2 + $0x1e0] sm:$0xff]
  %v910 = vld [vmem:[%s2 + $0x1e8] sm:$0xff]
  %v911 = vld [vmem:[%s2 + $0x1f0] sm:$0xff]
  %v912 = vld [vmem:[%s2 + $0x1f8] sm:$0xff]
  %s913 = smul.u32 2, 4
  %s914 = smul.addr %s913, 8
  %s915 = scalar_lea.vmem [#allocation4], %s914
  %v916 = vld [vmem:[%s915] sm:$0xff]
  %v917 = vld [vmem:[%s915 + $0x8] sm:$0xff]
  %v918 = vld [vmem:[%s915 + $0x10] sm:$0xff]
  %v919 = vld [vmem:[%s915 + $0x18] sm:$0xff]
  %920 = vmatprep.subr.mxu0 %v910
  %921 = vmatpush1.msra.mxu0 %v909
  %922 = vmatprep.subr.mxu0 %v906
  %923 = vmatpush1.msra.mxu0 %v905
  %924 = vmatprep.subr.mxu0 %v902
  %925 = vmatpush1.msra.mxu0 %v901
  %926 = vmatprep.subr.mxu0 %v898
  %927 = vmatpush1.msra.mxu0 %v897
  %928 = vmatprep.subr.mxu0 %v894
  %929 = vmatpush1.msra.mxu0 %v893
  %930 = vmatprep.subr.mxu0 %v890
  %931 = vmatpush1.msra.mxu0 %v889
  %932 = vmatprep.subr.mxu0 %v886
  %933 = vmatpush1.msra.mxu0 %v885
  %934 = vmatprep.subr.mxu0 %v882
  %935 = vmatpush1.msra.mxu0 %v881
  %936 = vmatprep.subr.mxu0 %v878
  %937 = vmatpush1.msra.mxu0 %v877
  %938 = vmatprep.subr.mxu0 %v874
  %939 = vmatpush1.msra.mxu0 %v873
  %940 = vmatprep.subr.mxu0 %v870
  %941 = vmatpush1.msra.mxu0 %v869
  %942 = vmatprep.subr.mxu0 %v866
  %943 = vmatpush1.msra.mxu0 %v865
  %944 = vmatprep.subr.mxu0 %v862
  %945 = vmatpush1.msra.mxu0 %v861
  %946 = vmatprep.subr.mxu0 %v858
  %947 = vmatpush1.msra.mxu0 %v857
  %948 = vmatprep.subr.mxu0 %v854
  %949 = vmatpush1.msra.mxu0 %v853
  %950 = vmatprep.subr.mxu0 %v850
  %951 = vmatpush1.msra.mxu0 %v849
  %952 = vmatprep.subr.mxu0 0.0
  %953 = vmatpush2.msra.mxu0 0.0
  %954 = vmatprep.subr.mxu0 0.0
  %955 = vmatpush2.msra.mxu0 0.0
  %956 = vmatprep.subr.mxu0 0.0
  %957 = vmatpush2.msra.mxu0 0.0
  %958 = vmatprep.subr.mxu0 0.0
  %959 = vmatpush2.msra.mxu0 0.0
  %960 = vmatprep.subr.mxu0 0.0
  %961 = vmatpush2.msra.mxu0 0.0
  %962 = vmatprep.subr.mxu0 0.0
  %963 = vmatpush2.msra.mxu0 0.0
  %964 = vmatprep.subr.mxu0 0.0
  %965 = vmatpush2.msra.mxu0 0.0
  %966 = vmatprep.subr.mxu0 0.0
  %967 = vmatpush2.msra.mxu0 0.0
  %968 = vmatprep.subr.mxu0 0.0
  %969 = vmatpush2.msra.mxu0 0.0
  %970 = vmatprep.subr.mxu0 0.0
  %971 = vmatpush2.msra.mxu0 0.0
  %972 = vmatprep.subr.mxu0 0.0
  %973 = vmatpush2.msra.mxu0 0.0
  %974 = vmatprep.subr.mxu0 0.0
  %975 = vmatpush2.msra.mxu0 0.0
  %976 = vmatprep.subr.mxu0 0.0
  %977 = vmatpush2.msra.mxu0 0.0
  %978 = vmatprep.subr.mxu0 0.0
  %979 = vmatpush2.msra.mxu0 0.0
  %980 = vmatprep.subr.mxu0 0.0
  %981 = vmatpush2.msra.mxu0 0.0
  %982 = vmatprep.subr.mxu0 0.0
  %983 = vmatpush2.msra.mxu0 0.0
  %984 = vmatprep.mubr.f32.mxu0 0.0
  %985 = vmatmul.mubr.f32.gmra.mxu0 %v848
  %v986 = vpop.f32.mrf.mxu0
  %v987 = vadd.f32 %v916, %v986
  %v988 = vpop.f32.mrf.mxu0
  %v989 = vadd.f32 %v917, %v988
  %990 = vdwg.mxu0
  %991 = vmatprep.subr.mxu0 %v912
  %992 = vmatpush1.msra.mxu0 %v911
  %993 = vmatprep.subr.mxu0 %v908
  %994 = vmatpush1.msra.mxu0 %v907
  %995 = vmatprep.subr.mxu0 %v904
  %996 = vmatpush1.msra.mxu0 %v903
  %997 = vmatprep.subr.mxu0 %v900
  %998 = vmatpush1.msra.mxu0 %v899
  %999 = vmatprep.subr.mxu0 %v896
  %1000 = vmatpush1.msra.mxu0 %v895
  %1001 = vmatprep.subr.mxu0 %v892
  %1002 = vmatpush1.msra.mxu0 %v891
  %1003 = vmatprep.subr.mxu0 %v888
  %1004 = vmatpush1.msra.mxu0 %v887
  %1005 = vmatprep.subr.mxu0 %v884
  %1006 = vmatpush1.msra.mxu0 %v883
  %1007 = vmatprep.subr.mxu0 %v880
  %1008 = vmatpush1.msra.mxu0 %v879
  %1009 = vmatprep.subr.mxu0 %v876
  %1010 = vmatpush1.msra.mxu0 %v875
  %1011 = vmatprep.subr.mxu0 %v872
  %1012 = vmatpush1.msra.mxu0 %v871
  %1013 = vmatprep.subr.mxu0 %v868
  %1014 = vmatpush1.msra.mxu0 %v867
  %1015 = vmatprep.subr.mxu0 %v864
  %1016 = vmatpush1.msra.mxu0 %v863
  %1017 = vmatprep.subr.mxu0 %v860
  %1018 = vmatpush1.msra.mxu0 %v859
  %1019 = vmatprep.subr.mxu0 %v856
  %1020 = vmatpush1.msra.mxu0 %v855
  %1021 = vmatprep.subr.mxu0 %v852
  %1022 = vmatpush1.msra.mxu0 %v851
  %1023 = vmatprep.subr.mxu0 0.0
  %1024 = vmatpush2.msra.mxu0 0.0
  %1025 = vmatprep.subr.mxu0 0.0
  %1026 = vmatpush2.msra.mxu0 0.0
  %1027 = vmatprep.subr.mxu0 0.0
  %1028 = vmatpush2.msra.mxu0 0.0
  %1029 = vmatprep.subr.mxu0 0.0
  %1030 = vmatpush2.msra.mxu0 0.0
  %1031 = vmatprep.subr.mxu0 0.0
  %1032 = vmatpush2.msra.mxu0 0.0
  %1033 = vmatprep.subr.mxu0 0.0
  %1034 = vmatpush2.msra.mxu0 0.0
  %1035 = vmatprep.subr.mxu0 0.0
  %1036 = vmatpush2.msra.mxu0 0.0
  %1037 = vmatprep.subr.mxu0 0.0
  %1038 = vmatpush2.msra.mxu0 0.0
  %1039 = vmatprep.subr.mxu0 0.0
  %1040 = vmatpush2.msra.mxu0 0.0
  %1041 = vmatprep.subr.mxu0 0.0
  %1042 = vmatpush2.msra.mxu0 0.0
  %1043 = vmatprep.subr.mxu0 0.0
  %1044 = vmatpush2.msra.mxu0 0.0
  %1045 = vmatprep.subr.mxu0 0.0
  %1046 = vmatpush2.msra.mxu0 0.0
  %1047 = vmatprep.subr.mxu0 0.0
  %1048 = vmatpush2.msra.mxu0 0.0
  %1049 = vmatprep.subr.mxu0 0.0
  %1050 = vmatpush2.msra.mxu0 0.0
  %1051 = vmatprep.subr.mxu0 0.0
  %1052 = vmatpush2.msra.mxu0 0.0
  %1053 = vmatprep.subr.mxu0 0.0
  %1054 = vmatpush2.msra.mxu0 0.0
  %1055 = vmatprep.mubr.f32.mxu0 0.0
  %1056 = vmatmul.mubr.f32.gmra.mxu0 %v848
  %v1057 = vpop.f32.mrf.mxu0
  %v1058 = vadd.f32 %v918, %v1057
  %v1059 = vpop.f32.mrf.mxu0
  %v1060 = vadd.f32 %v919, %v1059
  %1061 = vdwg.mxu0
  %v1062 = vmul.f32 %v987, 0.5
  %v1063 = vtanh.pop %v1062
  %v1064 = vmul.f32 %v1063, 0.5
  %v1065 = vadd.f32 %v1064, 0.5
  %v1066 = vmul.f32 %v989, 0.5
  %v1067 = vtanh.pop %v1066
  %v1068 = vmul.f32 %v1067, 0.5
  %v1069 = vadd.f32 %v1068, 0.5
  %v1070 = vtanh.pop %v1058
  %v1071 = vmul.f32 %v1060, 0.5
  %v1072 = vtanh.pop %v1071
  %v1073 = vmul.f32 %v1072, 0.5
  %v1074 = vadd.f32 %v1073, 0.5
  %v1075 = vld [vmem:[#allocation3] sm:$0xff]
  %v1076 = vmul.f32 %v1069, %v1075
  %v1077 = vmul.f32 %v1065, %v1070
  %v1078 = vadd.f32 %v1076, %v1077
  %v1079 = vtanh.pop %v1078
  %v1080 = vmul.f32 %v1074, %v1079
  %1081 = vst [vmem:[#allocation3] sm:$0xff] %v1078
  %1082 = vst [vmem:[#allocation2] sm:$0xff] %v1080
  %s1083 = scalar_lea.vmem %s4, 16
  %1084 = vst [vmem:[%s1083] sm:$0xff] %v1080
  %v1085 = vld [vmem:[#allocation2] sm:$0xff]
  %v1086 = vld [vmem:[%s2] sm:$0xff]
  %v1087 = vld [vmem:[%s2 + $0x8] sm:$0xff]
  %v1088 = vld [vmem:[%s2 + $0x10] sm:$0xff]
  %v1089 = vld [vmem:[%s2 + $0x18] sm:$0xff]
  %v1090 = vld [vmem:[%s2 + $0x20] sm:$0xff]
  %v1091 = vld [vmem:[%s2 + $0x28] sm:$0xff]
  %v1092 = vld [vmem:[%s2 + $0x30] sm:$0xff]
  %v1093 = vld [vmem:[%s2 + $0x38] sm:$0xff]
  %v1094 = vld [vmem:[%s2 + $0x40] sm:$0xff]
  %v1095 = vld [vmem:[%s2 + $0x48] sm:$0xff]
  %v1096 = vld [vmem:[%s2 + $0x50] sm:$0xff]
  %v1097 = vld [vmem:[%s2 + $0x58] sm:$0xff]
  %v1098 = vld [vmem:[%s2 + $0x60] sm:$0xff]
  %v1099 = vld [vmem:[%s2 + $0x68] sm:$0xff]
  %v1100 = vld [vmem:[%s2 + $0x70] sm:$0xff]
  %v1101 = vld [vmem:[%s2 + $0x78] sm:$0xff]
  %v1102 = vld [vmem:[%s2 + $0x80] sm:$0xff]
  %v1103 = vld [vmem:[%s2 + $0x88] sm:$0xff]
  %v1104 = vld [vmem:[%s2 + $0x90] sm:$0xff]
  %v1105 = vld [vmem:[%s2 + $0x98] sm:$0xff]
  %v1106 = vld [vmem:[%s2 + $0xa0] sm:$0xff]
  %v1107 = vld [vmem:[%s2 + $0xa8] sm:$0xff]
  %v1108 = vld [vmem:[%s2 + $0xb0] sm:$0xff]
  %v1109 = vld [vmem:[%s2 + $0xb8] sm:$0xff]
  %v1110 = vld [vmem:[%s2 + $0xc0] sm:$0xff]
  %v1111 = vld [vmem:[%s2 + $0xc8] sm:$0xff]
  %v1112 = vld [vmem:[%s2 + $0xd0] sm:$0xff]
  %v1113 = vld [vmem:[%s2 + $0xd8] sm:$0xff]
  %v1114 = vld [vmem:[%s2 + $0xe0] sm:$0xff]
  %v1115 = vld [vmem:[%s2 + $0xe8] sm:$0xff]
  %v1116 = vld [vmem:[%s2 + $0xf0] sm:$0xff]
  %v1117 = vld [vmem:[%s2 + $0xf8] sm:$0xff]
  %v1118 = vld [vmem:[%s2 + $0x100] sm:$0xff]
  %v1119 = vld [vmem:[%s2 + $0x108] sm:$0xff]
  %v1120 = vld [vmem:[%s2 + $0x110] sm:$0xff]
  %v1121 = vld [vmem:[%s2 + $0x118] sm:$0xff]
  %v1122 = vld [vmem:[%s2 + $0x120] sm:$0xff]
  %v1123 = vld [vmem:[%s2 + $0x128] sm:$0xff]
  %v1124 = vld [vmem:[%s2 + $0x130] sm:$0xff]
  %v1125 = vld [vmem:[%s2 + $0x138] sm:$0xff]
  %v1126 = vld [vmem:[%s2 + $0x140] sm:$0xff]
  %v1127 = vld [vmem:[%s2 + $0x148] sm:$0xff]
  %v1128 = vld [vmem:[%s2 + $0x150] sm:$0xff]
  %v1129 = vld [vmem:[%s2 + $0x158] sm:$0xff]
  %v1130 = vld [vmem:[%s2 + $0x160] sm:$0xff]
  %v1131 = vld [vmem:[%s2 + $0x168] sm:$0xff]
  %v1132 = vld [vmem:[%s2 + $0x170] sm:$0xff]
  %v1133 = vld [vmem:[%s2 + $0x178] sm:$0xff]
  %v1134 = vld [vmem:[%s2 + $0x180] sm:$0xff]
  %v1135 = vld [vmem:[%s2 + $0x188] sm:$0xff]
  %v1136 = vld [vmem:[%s2 + $0x190] sm:$0xff]
  %v1137 = vld [vmem:[%s2 + $0x198] sm:$0xff]
  %v1138 = vld [vmem:[%s2 + $0x1a0] sm:$0xff]
  %v1139 = vld [vmem:[%s2 + $0x1a8] sm:$0xff]
  %v1140 = vld [vmem:[%s2 + $0x1b0] sm:$0xff]
  %v1141 = vld [vmem:[%s2 + $0x1b8] sm:$0xff]
  %v1142 = vld [vmem:[%s2 + $0x1c0] sm:$0xff]
  %v1143 = vld [vmem:[%s2 + $0x1c8] sm:$0xff]
  %v1144 = vld [vmem:[%s2 + $0x1d0] sm:$0xff]
  %v1145 = vld [vmem:[%s2 + $0x1d8] sm:$0xff]
  %v1146 = vld [vmem:[%s2 + $0x1e0] sm:$0xff]
  %v1147 = vld [vmem:[%s2 + $0x1e8] sm:$0xff]
  %v1148 = vld [vmem:[%s2 + $0x1f0] sm:$0xff]
  %v1149 = vld [vmem:[%s2 + $0x1f8] sm:$0xff]
  %s1150 = smul.u32 3, 4
  %s1151 = smul.addr %s1150, 8
  %s1152 = scalar_lea.vmem [#allocation4], %s1151
  %v1153 = vld [vmem:[%s1152] sm:$0xff]
  %v1154 = vld [vmem:[%s1152 + $0x8] sm:$0xff]
  %v1155 = vld [vmem:[%s1152 + $0x10] sm:$0xff]
  %v1156 = vld [vmem:[%s1152 + $0x18] sm:$0xff]
  %1157 = vmatprep.subr.mxu0 %v1147
  %1158 = vmatpush1.msra.mxu0 %v1146
  %1159 = vmatprep.subr.mxu0 %v1143
  %1160 = vmatpush1.msra.mxu0 %v1142
  %1161 = vmatprep.subr.mxu0 %v1139
  %1162 = vmatpush1.msra.mxu0 %v1138
  %1163 = vmatprep.subr.mxu0 %v1135
  %1164 = vmatpush1.msra.mxu0 %v1134
  %1165 = vmatprep.subr.mxu0 %v1131
  %1166 = vmatpush1.msra.mxu0 %v1130
  %1167 = vmatprep.subr.mxu0 %v1127
  %1168 = vmatpush1.msra.mxu0 %v1126
  %1169 = vmatprep.subr.mxu0 %v1123
  %1170 = vmatpush1.msra.mxu0 %v1122
  %1171 = vmatprep.subr.mxu0 %v1119
  %1172 = vmatpush1.msra.mxu0 %v1118
  %1173 = vmatprep.subr.mxu0 %v1115
  %1174 = vmatpush1.msra.mxu0 %v1114
  %1175 = vmatprep.subr.mxu0 %v1111
  %1176 = vmatpush1.msra.mxu0 %v1110
  %1177 = vmatprep.subr.mxu0 %v1107
  %1178 = vmatpush1.msra.mxu0 %v1106
  %1179 = vmatprep.subr.mxu0 %v1103
  %1180 = vmatpush1.msra.mxu0 %v1102
  %1181 = vmatprep.subr.mxu0 %v1099
  %1182 = vmatpush1.msra.mxu0 %v1098
  %1183 = vmatprep.subr.mxu0 %v1095
  %1184 = vmatpush1.msra.mxu0 %v1094
  %1185 = vmatprep.subr.mxu0 %v1091
  %1186 = vmatpush1.msra.mxu0 %v1090
  %1187 = vmatprep.subr.mxu0 %v1087
  %1188 = vmatpush1.msra.mxu0 %v1086
  %1189 = vmatprep.subr.mxu0 0.0
  %1190 = vmatpush2.msra.mxu0 0.0
  %1191 = vmatprep.subr.mxu0 0.0
  %1192 = vmatpush2.msra.mxu0 0.0
  %1193 = vmatprep.subr.mxu0 0.0
  %1194 = vmatpush2.msra.mxu0 0.0
  %1195 = vmatprep.subr.mxu0 0.0
  %1196 = vmatpush2.msra.mxu0 0.0
  %1197 = vmatprep.subr.mxu0 0.0
  %1198 = vmatpush2.msra.mxu0 0.0
  %1199 = vmatprep.subr.mxu0 0.0
  %1200 = vmatpush2.msra.mxu0 0.0
  %1201 = vmatprep.subr.mxu0 0.0
  %1202 = vmatpush2.msra.mxu0 0.0
  %1203 = vmatprep.subr.mxu0 0.0
  %1204 = vmatpush2.msra.mxu0 0.0
  %1205 = vmatprep.subr.mxu0 0.0
  %1206 = vmatpush2.msra.mxu0 0.0
  %1207 = vmatprep.subr.mxu0 0.0
  %1208 = vmatpush2.msra.mxu0 0.0
  %1209 = vmatprep.subr.mxu0 0.0
  %1210 = vmatpush2.msra.mxu0 0.0
  %1211 = vmatprep.subr.mxu0 0.0
  %1212 = vmatpush2.msra.mxu0 0.0
  %1213 = vmatprep.subr.mxu0 0.0
  %1214 = vmatpush2.msra.mxu0 0.0
  %1215 = vmatprep.subr.mxu0 0.0
  %1216 = vmatpush2.msra.mxu0 0.0
  %1217 = vmatprep.subr.mxu0 0.0
  %1218 = vmatpush2.msra.mxu0 0.0
  %1219 = vmatprep.subr.mxu0 0.0
  %1220 = vmatpush2.msra.mxu0 0.0
  %1221 = vmatprep.mubr.f32.mxu0 0.0
  %1222 = vmatmul.mubr.f32.gmra.mxu0 %v1085
  %v1223 = vpop.f32.mrf.mxu0
  %v1224 = vadd.f32 %v1153, %v1223
  %v1225 = vpop.f32.mrf.mxu0
  %v1226 = vadd.f32 %v1154, %v1225
  %1227 = vdwg.mxu0
  %1228 = vmatprep.subr.mxu0 %v1149
  %1229 = vmatpush1.msra.mxu0 %v1148
  %1230 = vmatprep.subr.mxu0 %v1145
  %1231 = vmatpush1.msra.mxu0 %v1144
  %1232 = vmatprep.subr.mxu0 %v1141
  %1233 = vmatpush1.msra.mxu0 %v1140
  %1234 = vmatprep.subr.mxu0 %v1137
  %1235 = vmatpush1.msra.mxu0 %v1136
  %1236 = vmatprep.subr.mxu0 %v1133
  %1237 = vmatpush1.msra.mxu0 %v1132
  %1238 = vmatprep.subr.mxu0 %v1129
  %1239 = vmatpush1.msra.mxu0 %v1128
  %1240 = vmatprep.subr.mxu0 %v1125
  %1241 = vmatpush1.msra.mxu0 %v1124
  %1242 = vmatprep.subr.mxu0 %v1121
  %1243 = vmatpush1.msra.mxu0 %v1120
  %1244 = vmatprep.subr.mxu0 %v1117
  %1245 = vmatpush1.msra.mxu0 %v1116
  %1246 = vmatprep.subr.mxu0 %v1113
  %1247 = vmatpush1.msra.mxu0 %v1112
  %1248 = vmatprep.subr.mxu0 %v1109
  %1249 = vmatpush1.msra.mxu0 %v1108
  %1250 = vmatprep.subr.mxu0 %v1105
  %1251 = vmatpush1.msra.mxu0 %v1104
  %1252 = vmatprep.subr.mxu0 %v1101
  %1253 = vmatpush1.msra.mxu0 %v1100
  %1254 = vmatprep.subr.mxu0 %v1097
  %1255 = vmatpush1.msra.mxu0 %v1096
  %1256 = vmatprep.subr.mxu0 %v1093
  %1257 = vmatpush1.msra.mxu0 %v1092
  %1258 = vmatprep.subr.mxu0 %v1089
  %1259 = vmatpush1.msra.mxu0 %v1088
  %1260 = vmatprep.subr.mxu0 0.0
  %1261 = vmatpush2.msra.mxu0 0.0
  %1262 = vmatprep.subr.mxu0 0.0
  %1263 = vmatpush2.msra.mxu0 0.0
  %1264 = vmatprep.subr.mxu0 0.0
  %1265 = vmatpush2.msra.mxu0 0.0
  %1266 = vmatprep.subr.mxu0 0.0
  %1267 = vmatpush2.msra.mxu0 0.0
  %1268 = vmatprep.subr.mxu0 0.0
  %1269 = vmatpush2.msra.mxu0 0.0
  %1270 = vmatprep.subr.mxu0 0.0
  %1271 = vmatpush2.msra.mxu0 0.0
  %1272 = vmatprep.subr.mxu0 0.0
  %1273 = vmatpush2.msra.mxu0 0.0
  %1274 = vmatprep.subr.mxu0 0.0
  %1275 = vmatpush2.msra.mxu0 0.0
  %1276 = vmatprep.subr.mxu0 0.0
  %1277 = vmatpush2.msra.mxu0 0.0
  %1278 = vmatprep.subr.mxu0 0.0
  %1279 = vmatpush2.msra.mxu0 0.0
  %1280 = vmatprep.subr.mxu0 0.0
  %1281 = vmatpush2.msra.mxu0 0.0
  %1282 = vmatprep.subr.mxu0 0.0
  %1283 = vmatpush2.msra.mxu0 0.0
  %1284 = vmatprep.subr.mxu0 0.0
  %1285 = vmatpush2.msra.mxu0 0.0
  %1286 = vmatprep.subr.mxu0 0.0
  %1287 = vmatpush2.msra.mxu0 0.0
  %1288 = vmatprep.subr.mxu0 0.0
  %1289 = vmatpush2.msra.mxu0 0.0
  %1290 = vmatprep.subr.mxu0 0.0
  %1291 = vmatpush2.msra.mxu0 0.0
  %1292 = vmatprep.mubr.f32.mxu0 0.0
  %1293 = vmatmul.mubr.f32.gmra.mxu0 %v1085
  %v1294 = vpop.f32.mrf.mxu0
  %v1295 = vadd.f32 %v1155, %v1294
  %v1296 = vpop.f32.mrf.mxu0
  %v1297 = vadd.f32 %v1156, %v1296
  %1298 = vdwg.mxu0
  %v1299 = vmul.f32 %v1224, 0.5
  %v1300 = vtanh.pop %v1299
  %v1301 = vmul.f32 %v1300, 0.5
  %v1302 = vadd.f32 %v1301, 0.5
  %v1303 = vmul.f32 %v1226, 0.5
  %v1304 = vtanh.pop %v1303
  %v1305 = vmul.f32 %v1304, 0.5
  %v1306 = vadd.f32 %v1305, 0.5
  %v1307 = vtanh.pop %v1295
  %v1308 = vmul.f32 %v1297, 0.5
  %v1309 = vtanh.pop %v1308
  %v1310 = vmul.f32 %v1309, 0.5
  %v1311 = vadd.f32 %v1310, 0.5
  %v1312 = vld [vmem:[#allocation3] sm:$0xff]
  %v1313 = vmul.f32 %v1306, %v1312
  %v1314 = vmul.f32 %v1302, %v1307
  %v1315 = vadd.f32 %v1313, %v1314
  %v1316 = vtanh.pop %v1315
  %v1317 = vmul.f32 %v1311, %v1316
  %1318 = vst [vmem:[#allocation3] sm:$0xff] %v1315
  %1319 = vst [vmem:[#allocation2] sm:$0xff] %v1317
  %s1320 = scalar_lea.vmem %s4, 24
  %1321 = vst [vmem:[%s1320] sm:$0xff] %v1317
  %v1322 = vld [vmem:[#allocation2] sm:$0xff]
  %v1323 = vld [vmem:[%s2] sm:$0xff]
  %v1324 = vld [vmem:[%s2 + $0x8] sm:$0xff]
  %v1325 = vld [vmem:[%s2 + $0x10] sm:$0xff]
  %v1326 = vld [vmem:[%s2 + $0x18] sm:$0xff]
  %v1327 = vld [vmem:[%s2 + $0x20] sm:$0xff]
  %v1328 = vld [vmem:[%s2 + $0x28] sm:$0xff]
  %v1329 = vld [vmem:[%s2 + $0x30] sm:$0xff]
  %v1330 = vld [vmem:[%s2 + $0x38] sm:$0xff]
  %v1331 = vld [vmem:[%s2 + $0x40] sm:$0xff]
  %v1332 = vld [vmem:[%s2 + $0x48] sm:$0xff]
  %v1333 = vld [vmem:[%s2 + $0x50] sm:$0xff]
  %v1334 = vld [vmem:[%s2 + $0x58] sm:$0xff]
  %v1335 = vld [vmem:[%s2 + $0x60] sm:$0xff]
  %v1336 = vld [vmem:[%s2 + $0x68] sm:$0xff]
  %v1337 = vld [vmem:[%s2 + $0x70] sm:$0xff]
  %v1338 = vld [vmem:[%s2 + $0x78] sm:$0xff]
  %v1339 = vld [vmem:[%s2 + $0x80] sm:$0xff]
  %v1340 = vld [vmem:[%s2 + $0x88] sm:$0xff]
  %v1341 = vld [vmem:[%s2 + $0x90] sm:$0xff]
  %v1342 = vld [vmem:[%s2 + $0x98] sm:$0xff]
  %v1343 = vld [vmem:[%s2 + $0xa0] sm:$0xff]
  %v1344 = vld [vmem:[%s2 + $0xa8] sm:$0xff]
  %v1345 = vld [vmem:[%s2 + $0xb0] sm:$0xff]
  %v1346 = vld [vmem:[%s2 + $0xb8] sm:$0xff]
  %v1347 = vld [vmem:[%s2 + $0xc0] sm:$0xff]
  %v1348 = vld [vmem:[%s2 + $0xc8] sm:$0xff]
  %v1349 = vld [vmem:[%s2 + $0xd0] sm:$0xff]
  %v1350 = vld [vmem:[%s2 + $0xd8] sm:$0xff]
  %v1351 = vld [vmem:[%s2 + $0xe0] sm:$0xff]
  %v1352 = vld [vmem:[%s2 + $0xe8] sm:$0xff]
  %v1353 = vld [vmem:[%s2 + $0xf0] sm:$0xff]
  %v1354 = vld [vmem:[%s2 + $0xf8] sm:$0xff]
  %v1355 = vld [vmem:[%s2 + $0x100] sm:$0xff]
  %v1356 = vld [vmem:[%s2 + $0x108] sm:$0xff]
  %v1357 = vld [vmem:[%s2 + $0x110] sm:$0xff]
  %v1358 = vld [vmem:[%s2 + $0x118] sm:$0xff]
  %v1359 = vld [vmem:[%s2 + $0x120] sm:$0xff]
  %v1360 = vld [vmem:[%s2 + $0x128] sm:$0xff]
  %v1361 = vld [vmem:[%s2 + $0x130] sm:$0xff]
  %v1362 = vld [vmem:[%s2 + $0x138] sm:$0xff]
  %v1363 = vld [vmem:[%s2 + $0x140] sm:$0xff]
  %v1364 = vld [vmem:[%s2 + $0x148] sm:$0xff]
  %v1365 = vld [vmem:[%s2 + $0x150] sm:$0xff]
  %v1366 = vld [vmem:[%s2 + $0x158] sm:$0xff]
  %v1367 = vld [vmem:[%s2 + $0x160] sm:$0xff]
  %v1368 = vld [vmem:[%s2 + $0x168] sm:$0xff]
  %v1369 = vld [vmem:[%s2 + $0x170] sm:$0xff]
  %v1370 = vld [vmem:[%s2 + $0x178] sm:$0xff]
  %v1371 = vld [vmem:[%s2 + $0x180] sm:$0xff]
  %v1372 = vld [vmem:[%s2 + $0x188] sm:$0xff]
  %v1373 = vld [vmem:[%s2 + $0x190] sm:$0xff]
  %v1374 = vld [vmem:[%s2 + $0x198] sm:$0xff]
  %v1375 = vld [vmem:[%s2 + $0x1a0] sm:$0xff]
  %v1376 = vld [vmem:[%s2 + $0x1a8] sm:$0xff]
  %v1377 = vld [vmem:[%s2 + $0x1b0] sm:$0xff]
  %v1378 = vld [vmem:[%s2 + $0x1b8] sm:$0xff]
  %v1379 = vld [vmem:[%s2 + $0x1c0] sm:$0xff]
  %v1380 = vld [vmem:[%s2 + $0x1c8] sm:$0xff]
  %v1381 = vld [vmem:[%s2 + $0x1d0] sm:$0xff]
  %v1382 = vld [vmem:[%s2 + $0x1d8] sm:$0xff]
  %v1383 = vld [vmem:[%s2 + $0x1e0] sm:$0xff]
  %v1384 = vld [vmem:[%s2 + $0x1e8] sm:$0xff]
  %v1385 = vld [vmem:[%s2 + $0x1f0] sm:$0xff]
  %v1386 = vld [vmem:[%s2 + $0x1f8] sm:$0xff]
  %s1387 = smul.u32 4, 4
  %s1388 = smul.addr %s1387, 8
  %s1389 = scalar_lea.vmem [#allocation4], %s1388
  %v1390 = vld [vmem:[%s1389] sm:$0xff]
  %v1391 = vld [vmem:[%s1389 + $0x8] sm:$0xff]
  %v1392 = vld [vmem:[%s1389 + $0x10] sm:$0xff]
  %v1393 = vld [vmem:[%s1389 + $0x18] sm:$0xff]
  %1394 = vmatprep.subr.mxu0 %v1384
  %1395 = vmatpush1.msra.mxu0 %v1383
  %1396 = vmatprep.subr.mxu0 %v1380
  %1397 = vmatpush1.msra.mxu0 %v1379
  %1398 = vmatprep.subr.mxu0 %v1376
  %1399 = vmatpush1.msra.mxu0 %v1375
  %1400 = vmatprep.subr.mxu0 %v1372
  %1401 = vmatpush1.msra.mxu0 %v1371
  %1402 = vmatprep.subr.mxu0 %v1368
  %1403 = vmatpush1.msra.mxu0 %v1367
  %1404 = vmatprep.subr.mxu0 %v1364
  %1405 = vmatpush1.msra.mxu0 %v1363
  %1406 = vmatprep.subr.mxu0 %v1360
  %1407 = vmatpush1.msra.mxu0 %v1359
  %1408 = vmatprep.subr.mxu0 %v1356
  %1409 = vmatpush1.msra.mxu0 %v1355
  %1410 = vmatprep.subr.mxu0 %v1352
  %1411 = vmatpush1.msra.mxu0 %v1351
  %1412 = vmatprep.subr.mxu0 %v1348
  %1413 = vmatpush1.msra.mxu0 %v1347
  %1414 = vmatprep.subr.mxu0 %v1344
  %1415 = vmatpush1.msra.mxu0 %v1343
  %1416 = vmatprep.subr.mxu0 %v1340
  %1417 = vmatpush1.msra.mxu0 %v1339
  %1418 = vmatprep.subr.mxu0 %v1336
  %1419 = vmatpush1.msra.mxu0 %v1335
  %1420 = vmatprep.subr.mxu0 %v1332
  %1421 = vmatpush1.msra.mxu0 %v1331
  %1422 = vmatprep.subr.mxu0 %v1328
  %1423 = vmatpush1.msra.mxu0 %v1327
  %1424 = vmatprep.subr.mxu0 %v1324
  %1425 = vmatpush1.msra.mxu0 %v1323
  %1426 = vmatprep.subr.mxu0 0.0
  %1427 = vmatpush2.msra.mxu0 0.0
  %1428 = vmatprep.subr.mxu0 0.0
  %1429 = vmatpush2.msra.mxu0 0.0
  %1430 = vmatprep.subr.mxu0 0.0
  %1431 = vmatpush2.msra.mxu0 0.0
  %1432 = vmatprep.subr.mxu0 0.0
  %1433 = vmatpush2.msra.mxu0 0.0
  %1434 = vmatprep.subr.mxu0 0.0
  %1435 = vmatpush2.msra.mxu0 0.0
  %1436 = vmatprep.subr.mxu0 0.0
  %1437 = vmatpush2.msra.mxu0 0.0
  %1438 = vmatprep.subr.mxu0 0.0
  %1439 = vmatpush2.msra.mxu0 0.0
  %1440 = vmatprep.subr.mxu0 0.0
  %1441 = vmatpush2.msra.mxu0 0.0
  %1442 = vmatprep.subr.mxu0 0.0
  %1443 = vmatpush2.msra.mxu0 0.0
  %1444 = vmatprep.subr.mxu0 0.0
  %1445 = vmatpush2.msra.mxu0 0.0
  %1446 = vmatprep.subr.mxu0 0.0
  %1447 = vmatpush2.msra.mxu0 0.0
  %1448 = vmatprep.subr.mxu0 0.0
  %1449 = vmatpush2.msra.mxu0 0.0
  %1450 = vmatprep.subr.mxu0 0.0
  %1451 = vmatpush2.msra.mxu0 0.0
  %1452 = vmatprep.subr.mxu0 0.0
  %1453 = vmatpush2.msra.mxu0 0.0
  %1454 = vmatprep.subr.mxu0 0.0
  %1455 = vmatpush2.msra.mxu0 0.0
  %1456 = vmatprep.subr.mxu0 0.0
  %1457 = vmatpush2.msra.mxu0 0.0
  %1458 = vmatprep.mubr.f32.mxu0 0.0
  %1459 = vmatmul.mubr.f32.gmra.mxu0 %v1322
  %v1460 = vpop.f32.mrf.mxu0
  %v1461 = vadd.f32 %v1390, %v1460
  %v1462 = vpop.f32.mrf.mxu0
  %v1463 = vadd.f32 %v1391, %v1462
  %1464 = vdwg.mxu0
  %1465 = vmatprep.subr.mxu0 %v1386
  %1466 = vmatpush1.msra.mxu0 %v1385
  %1467 = vmatprep.subr.mxu0 %v1382
  %1468 = vmatpush1.msra.mxu0 %v1381
  %1469 = vmatprep.subr.mxu0 %v1378
  %1470 = vmatpush1.msra.mxu0 %v1377
  %1471 = vmatprep.subr.mxu0 %v1374
  %1472 = vmatpush1.msra.mxu0 %v1373
  %1473 = vmatprep.subr.mxu0 %v1370
  %1474 = vmatpush1.msra.mxu0 %v1369
  %1475 = vmatprep.subr.mxu0 %v1366
  %1476 = vmatpush1.msra.mxu0 %v1365
  %1477 = vmatprep.subr.mxu0 %v1362
  %1478 = vmatpush1.msra.mxu0 %v1361
  %1479 = vmatprep.subr.mxu0 %v1358
  %1480 = vmatpush1.msra.mxu0 %v1357
  %1481 = vmatprep.subr.mxu0 %v1354
  %1482 = vmatpush1.msra.mxu0 %v1353
  %1483 = vmatprep.subr.mxu0 %v1350
  %1484 = vmatpush1.msra.mxu0 %v1349
  %1485 = vmatprep.subr.mxu0 %v1346
  %1486 = vmatpush1.msra.mxu0 %v1345
  %1487 = vmatprep.subr.mxu0 %v1342
  %1488 = vmatpush1.msra.mxu0 %v1341
  %1489 = vmatprep.subr.mxu0 %v1338
  %1490 = vmatpush1.msra.mxu0 %v1337
  %1491 = vmatprep.subr.mxu0 %v1334
  %1492 = vmatpush1.msra.mxu0 %v1333
  %1493 = vmatprep.subr.mxu0 %v1330
  %1494 = vmatpush1.msra.mxu0 %v1329
  %1495 = vmatprep.subr.mxu0 %v1326
  %1496 = vmatpush1.msra.mxu0 %v1325
  %1497 = vmatprep.subr.mxu0 0.0
  %1498 = vmatpush2.msra.mxu0 0.0
  %1499 = vmatprep.subr.mxu0 0.0
  %1500 = vmatpush2.msra.mxu0 0.0
  %1501 = vmatprep.subr.mxu0 0.0
  %1502 = vmatpush2.msra.mxu0 0.0
  %1503 = vmatprep.subr.mxu0 0.0
  %1504 = vmatpush2.msra.mxu0 0.0
  %1505 = vmatprep.subr.mxu0 0.0
  %1506 = vmatpush2.msra.mxu0 0.0
  %1507 = vmatprep.subr.mxu0 0.0
  %1508 = vmatpush2.msra.mxu0 0.0
  %1509 = vmatprep.subr.mxu0 0.0
  %1510 = vmatpush2.msra.mxu0 0.0
  %1511 = vmatprep.subr.mxu0 0.0
  %1512 = vmatpush2.msra.mxu0 0.0
  %1513 = vmatprep.subr.mxu0 0.0
  %1514 = vmatpush2.msra.mxu0 0.0
  %1515 = vmatprep.subr.mxu0 0.0
  %1516 = vmatpush2.msra.mxu0 0.0
  %1517 = vmatprep.subr.mxu0 0.0
  %1518 = vmatpush2.msra.mxu0 0.0
  %1519 = vmatprep.subr.mxu0 0.0
  %1520 = vmatpush2.msra.mxu0 0.0
  %1521 = vmatprep.subr.mxu0 0.0
  %1522 = vmatpush2.msra.mxu0 0.0
  %1523 = vmatprep.subr.mxu0 0.0
  %1524 = vmatpush2.msra.mxu0 0.0
  %1525 = vmatprep.subr.mxu0 0.0
  %1526 = vmatpush2.msra.mxu0 0.0
  %1527 = vmatprep.subr.mxu0 0.0
  %1528 = vmatpush2.msra.mxu0 0.0
  %1529 = vmatprep.mubr.f32.mxu0 0.0
  %1530 = vmatmul.mubr.f32.gmra.mxu0 %v1322
  %v1531 = vpop.f32.mrf.mxu0
  %v1532 = vadd.f32 %v1392, %v1531
  %v1533 = vpop.f32.mrf.mxu0
  %v1534 = vadd.f32 %v1393, %v1533
  %1535 = vdwg.mxu0
  %v1536 = vmul.f32 %v1461, 0.5
  %v1537 = vtanh.pop %v1536
  %v1538 = vmul.f32 %v1537, 0.5
  %v1539 = vadd.f32 %v1538, 0.5
  %v1540 = vmul.f32 %v1463, 0.5
  %v1541 = vtanh.pop %v1540
  %v1542 = vmul.f32 %v1541, 0.5
  %v1543 = vadd.f32 %v1542, 0.5
  %v1544 = vtanh.pop %v1532
  %v1545 = vmul.f32 %v1534, 0.5
  %v1546 = vtanh.pop %v1545
  %v1547 = vmul.f32 %v1546, 0.5
  %v1548 = vadd.f32 %v1547, 0.5
  %v1549 = vld [vmem:[#allocation3] sm:$0xff]
  %v1550 = vmul.f32 %v1543, %v1549
  %v1551 = vmul.f32 %v1539, %v1544
  %v1552 = vadd.f32 %v1550, %v1551
  %v1553 = vtanh.pop %v1552
  %v1554 = vmul.f32 %v1548, %v1553
  %1555 = vst [vmem:[#allocation3] sm:$0xff] %v1552
  %1556 = vst [vmem:[#allocation2] sm:$0xff] %v1554
  %s1557 = scalar_lea.vmem %s4, 32
  %1558 = vst [vmem:[%s1557] sm:$0xff] %v1554
  %v1559 = vld [vmem:[#allocation2] sm:$0xff]
  %v1560 = vld [vmem:[%s2] sm:$0xff]
  %v1561 = vld [vmem:[%s2 + $0x8] sm:$0xff]
  %v1562 = vld [vmem:[%s2 + $0x10] sm:$0xff]
  %v1563 = vld [vmem:[%s2 + $0x18] sm:$0xff]
  %v1564 = vld [vmem:[%s2 + $0x20] sm:$0xff]
  %v1565 = vld [vmem:[%s2 + $0x28] sm:$0xff]
  %v1566 = vld [vmem:[%s2 + $0x30] sm:$0xff]
  %v1567 = vld [vmem:[%s2 + $0x38] sm:$0xff]
  %v1568 = vld [vmem:[%s2 + $0x40] sm:$0xff]
  %v1569 = vld [vmem:[%s2 + $0x48] sm:$0xff]
  %v1570 = vld [vmem:[%s2 + $0x50] sm:$0xff]
  %v1571 = vld [vmem:[%s2 + $0x58] sm:$0xff]
  %v1572 = vld [vmem:[%s2 + $0x60] sm:$0xff]
  %v1573 = vld [vmem:[%s2 + $0x68] sm:$0xff]
  %v1574 = vld [vmem:[%s2 + $0x70] sm:$0xff]
  %v1575 = vld [vmem:[%s2 + $0x78] sm:$0xff]
  %v1576 = vld [vmem:[%s2 + $0x80] sm:$0xff]
  %v1577 = vld [vmem:[%s2 + $0x88] sm:$0xff]
  %v1578 = vld [vmem:[%s2 + $0x90] sm:$0xff]
  %v1579 = vld [vmem:[%s2 + $0x98] sm:$0xff]
  %v1580 = vld [vmem:[%s2 + $0xa0] sm:$0xff]
  %v1581 = vld [vmem:[%s2 + $0xa8] sm:$0xff]
  %v1582 = vld [vmem:[%s2 + $0xb0] sm:$0xff]
  %v1583 = vld [vmem:[%s2 + $0xb8] sm:$0xff]
  %v1584 = vld [vmem:[%s2 + $0xc0] sm:$0xff]
  %v1585 = vld [vmem:[%s2 + $0xc8] sm:$0xff]
  %v1586 = vld [vmem:[%s2 + $0xd0] sm:$0xff]
  %v1587 = vld [vmem:[%s2 + $0xd8] sm:$0xff]
  %v1588 = vld [vmem:[%s2 + $0xe0] sm:$0xff]
  %v1589 = vld [vmem:[%s2 + $0xe8] sm:$0xff]
  %v1590 = vld [vmem:[%s2 + $0xf0] sm:$0xff]
  %v1591 = vld [vmem:[%s2 + $0xf8] sm:$0xff]
  %v1592 = vld [vmem:[%s2 + $0x100] sm:$0xff]
  %v1593 = vld [vmem:[%s2 + $0x108] sm:$0xff]
  %v1594 = vld [vmem:[%s2 + $0x110] sm:$0xff]
  %v1595 = vld [vmem:[%s2 + $0x118] sm:$0xff]
  %v1596 = vld [vmem:[%s2 + $0x120] sm:$0xff]
  %v1597 = vld [vmem:[%s2 + $0x128] sm:$0xff]
  %v1598 = vld [vmem:[%s2 + $0x130] sm:$0xff]
  %v1599 = vld [vmem:[%s2 + $0x138] sm:$0xff]
  %v1600 = vld [vmem:[%s2 + $0x140] sm:$0xff]
  %v1601 = vld [vmem:[%s2 + $0x148] sm:$0xff]
  %v1602 = vld [vmem:[%s2 + $0x150] sm:$0xff]
  %v1603 = vld [vmem:[%s2 + $0x158] sm:$0xff]
  %v1604 = vld [vmem:[%s2 + $0x160] sm:$0xff]
  %v1605 = vld [vmem:[%s2 + $0x168] sm:$0xff]
  %v1606 = vld [vmem:[%s2 + $0x170] sm:$0xff]
  %v1607 = vld [vmem:[%s2 + $0x178] sm:$0xff]
  %v1608 = vld [vmem:[%s2 + $0x180] sm:$0xff]
  %v1609 = vld [vmem:[%s2 + $0x188] sm:$0xff]
  %v1610 = vld [vmem:[%s2 + $0x190] sm:$0xff]
  %v1611 = vld [vmem:[%s2 + $0x198] sm:$0xff]
  %v1612 = vld [vmem:[%s2 + $0x1a0] sm:$0xff]
  %v1613 = vld [vmem:[%s2 + $0x1a8] sm:$0xff]
  %v1614 = vld [vmem:[%s2 + $0x1b0] sm:$0xff]
  %v1615 = vld [vmem:[%s2 + $0x1b8] sm:$0xff]
  %v1616 = vld [vmem:[%s2 + $0x1c0] sm:$0xff]
  %v1617 = vld [vmem:[%s2 + $0x1c8] sm:$0xff]
  %v1618 = vld [vmem:[%s2 + $0x1d0] sm:$0xff]
  %v1619 = vld [vmem:[%s2 + $0x1d8] sm:$0xff]
  %v1620 = vld [vmem:[%s2 + $0x1e0] sm:$0xff]
  %v1621 = vld [vmem:[%s2 + $0x1e8] sm:$0xff]
  %v1622 = vld [vmem:[%s2 + $0x1f0] sm:$0xff]
  %v1623 = vld [vmem:[%s2 + $0x1f8] sm:$0xff]
  %s1624 = smul.u32 5, 4
  %s1625 = smul.addr %s1624, 8
  %s1626 = scalar_lea.vmem [#allocation4], %s1625
  %v1627 = vld [vmem:[%s1626] sm:$0xff]
  %v1628 = vld [vmem:[%s1626 + $0x8] sm:$0xff]
  %v1629 = vld [vmem:[%s1626 + $0x10] sm:$0xff]
  %v1630 = vld [vmem:[%s1626 + $0x18] sm:$0xff]
  %1631 = vmatprep.subr.mxu0 %v1621
  %1632 = vmatpush1.msra.mxu0 %v1620
  %1633 = vmatprep.subr.mxu0 %v1617
  %1634 = vmatpush1.msra.mxu0 %v1616
  %1635 = vmatprep.subr.mxu0 %v1613
  %1636 = vmatpush1.msra.mxu0 %v1612
  %1637 = vmatprep.subr.mxu0 %v1609
  %1638 = vmatpush1.msra.mxu0 %v1608
  %1639 = vmatprep.subr.mxu0 %v1605
  %1640 = vmatpush1.msra.mxu0 %v1604
  %1641 = vmatprep.subr.mxu0 %v1601
  %1642 = vmatpush1.msra.mxu0 %v1600
  %1643 = vmatprep.subr.mxu0 %v1597
  %1644 = vmatpush1.msra.mxu0 %v1596
  %1645 = vmatprep.subr.mxu0 %v1593
  %1646 = vmatpush1.msra.mxu0 %v1592
  %1647 = vmatprep.subr.mxu0 %v1589
  %1648 = vmatpush1.msra.mxu0 %v1588
  %1649 = vmatprep.subr.mxu0 %v1585
  %1650 = vmatpush1.msra.mxu0 %v1584
  %1651 = vmatprep.subr.mxu0 %v1581
  %1652 = vmatpush1.msra.mxu0 %v1580
  %1653 = vmatprep.subr.mxu0 %v1577
  %1654 = vmatpush1.msra.mxu0 %v1576
  %1655 = vmatprep.subr.mxu0 %v1573
  %1656 = vmatpush1.msra.mxu0 %v1572
  %1657 = vmatprep.subr.mxu0 %v1569
  %1658 = vmatpush1.msra.mxu0 %v1568
  %1659 = vmatprep.subr.mxu0 %v1565
  %1660 = vmatpush1.msra.mxu0 %v1564
  %1661 = vmatprep.subr.mxu0 %v1561
  %1662 = vmatpush1.msra.mxu0 %v1560
  %1663 = vmatprep.subr.mxu0 0.0
  %1664 = vmatpush2.msra.mxu0 0.0
  %1665 = vmatprep.subr.mxu0 0.0
  %1666 = vmatpush2.msra.mxu0 0.0
  %1667 = vmatprep.subr.mxu0 0.0
  %1668 = vmatpush2.msra.mxu0 0.0
  %1669 = vmatprep.subr.mxu0 0.0
  %1670 = vmatpush2.msra.mxu0 0.0
  %1671 = vmatprep.subr.mxu0 0.0
  %1672 = vmatpush2.msra.mxu0 0.0
  %1673 = vmatprep.subr.mxu0 0.0
  %1674 = vmatpush2.msra.mxu0 0.0
  %1675 = vmatprep.subr.mxu0 0.0
  %1676 = vmatpush2.msra.mxu0 0.0
  %1677 = vmatprep.subr.mxu0 0.0
  %1678 = vmatpush2.msra.mxu0 0.0
  %1679 = vmatprep.subr.mxu0 0.0
  %1680 = vmatpush2.msra.mxu0 0.0
  %1681 = vmatprep.subr.mxu0 0.0
  %1682 = vmatpush2.msra.mxu0 0.0
  %1683 = vmatprep.subr.mxu0 0.0
  %1684 = vmatpush2.msra.mxu0 0.0
  %1685 = vmatprep.subr.mxu0 0.0
  %1686 = vmatpush2.msra.mxu0 0.0
  %1687 = vmatprep.subr.mxu0 0.0
  %1688 = vmatpush2.msra.mxu0 0.0
  %1689 = vmatprep.subr.mxu0 0.0
  %1690 = vmatpush2.msra.mxu0 0.0
  %1691 = vmatprep.subr.mxu0 0.0
  %1692 = vmatpush2.msra.mxu0 0.0
  %1693 = vmatprep.subr.mxu0 0.0
  %1694 = vmatpush2.msra.mxu0 0.0
  %1695 = vmatprep.mubr.f32.mxu0 0.0
  %1696 = vmatmul.mubr.f32.gmra.mxu0 %v1559
  %v1697 = vpop.f32.mrf.mxu0
  %v1698 = vadd.f32 %v1627, %v1697
  %v1699 = vpop.f32.mrf.mxu0
  %v1700 = vadd.f32 %v1628, %v1699
  %1701 = vdwg.mxu0
  %1702 = vmatprep.subr.mxu0 %v1623
  %1703 = vmatpush1.msra.mxu0 %v1622
  %1704 = vmatprep.subr.mxu0 %v1619
  %1705 = vmatpush1.msra.mxu0 %v1618
  %1706 = vmatprep.subr.mxu0 %v1615
  %1707 = vmatpush1.msra.mxu0 %v1614
  %1708 = vmatprep.subr.mxu0 %v1611
  %1709 = vmatpush1.msra.mxu0 %v1610
  %1710 = vmatprep.subr.mxu0 %v1607
  %1711 = vmatpush1.msra.mxu0 %v1606
  %1712 = vmatprep.subr.mxu0 %v1603
  %1713 = vmatpush1.msra.mxu0 %v1602
  %1714 = vmatprep.subr.mxu0 %v1599
  %1715 = vmatpush1.msra.mxu0 %v1598
  %1716 = vmatprep.subr.mxu0 %v1595
  %1717 = vmatpush1.msra.mxu0 %v1594
  %1718 = vmatprep.subr.mxu0 %v1591
  %1719 = vmatpush1.msra.mxu0 %v1590
  %1720 = vmatprep.subr.mxu0 %v1587
  %1721 = vmatpush1.msra.mxu0 %v1586
  %1722 = vmatprep.subr.mxu0 %v1583
  %1723 = vmatpush1.msra.mxu0 %v1582
  %1724 = vmatprep.subr.mxu0 %v1579
  %1725 = vmatpush1.msra.mxu0 %v1578
  %1726 = vmatprep.subr.mxu0 %v1575
  %1727 = vmatpush1.msra.mxu0 %v1574
  %1728 = vmatprep.subr.mxu0 %v1571
  %1729 = vmatpush1.msra.mxu0 %v1570
  %1730 = vmatprep.subr.mxu0 %v1567
  %1731 = vmatpush1.msra.mxu0 %v1566
  %1732 = vmatprep.subr.mxu0 %v1563
  %1733 = vmatpush1.msra.mxu0 %v1562
  %1734 = vmatprep.subr.mxu0 0.0
  %1735 = vmatpush2.msra.mxu0 0.0
  %1736 = vmatprep.subr.mxu0 0.0
  %1737 = vmatpush2.msra.mxu0 0.0
  %1738 = vmatprep.subr.mxu0 0.0
  %1739 = vmatpush2.msra.mxu0 0.0
  %1740 = vmatprep.subr.mxu0 0.0
  %1741 = vmatpush2.msra.mxu0 0.0
  %1742 = vmatprep.subr.mxu0 0.0
  %1743 = vmatpush2.msra.mxu0 0.0
  %1744 = vmatprep.subr.mxu0 0.0
  %1745 = vmatpush2.msra.mxu0 0.0
  %1746 = vmatprep.subr.mxu0 0.0
  %1747 = vmatpush2.msra.mxu0 0.0
  %1748 = vmatprep.subr.mxu0 0.0
  %1749 = vmatpush2.msra.mxu0 0.0
  %1750 = vmatprep.subr.mxu0 0.0
  %1751 = vmatpush2.msra.mxu0 0.0
  %1752 = vmatprep.subr.mxu0 0.0
  %1753 = vmatpush2.msra.mxu0 0.0
  %1754 = vmatprep.subr.mxu0 0.0
  %1755 = vmatpush2.msra.mxu0 0.0
  %1756 = vmatprep.subr.mxu0 0.0
  %1757 = vmatpush2.msra.mxu0 0.0
  %1758 = vmatprep.subr.mxu0 0.0
  %1759 = vmatpush2.msra.mxu0 0.0
  %1760 = vmatprep.subr.mxu0 0.0
  %1761 = vmatpush2.msra.mxu0 0.0
  %1762 = vmatprep.subr.mxu0 0.0
  %1763 = vmatpush2.msra.mxu0 0.0
  %1764 = vmatprep.subr.mxu0 0.0
  %1765 = vmatpush2.msra.mxu0 0.0
  %1766 = vmatprep.mubr.f32.mxu0 0.0
  %1767 = vmatmul.mubr.f32.gmra.mxu0 %v1559
  %v1768 = vpop.f32.mrf.mxu0
  %v1769 = vadd.f32 %v1629, %v1768
  %v1770 = vpop.f32.mrf.mxu0
  %v1771 = vadd.f32 %v1630, %v1770
  %1772 = vdwg.mxu0
  %v1773 = vmul.f32 %v1698, 0.5
  %v1774 = vtanh.pop %v1773
  %v1775 = vmul.f32 %v1774, 0.5
  %v1776 = vadd.f32 %v1775, 0.5
  %v1777 = vmul.f32 %v1700, 0.5
  %v1778 = vtanh.pop %v1777
  %v1779 = vmul.f32 %v1778, 0.5
  %v1780 = vadd.f32 %v1779, 0.5
  %v1781 = vtanh.pop %v1769
  %v1782 = vmul.f32 %v1771, 0.5
  %v1783 = vtanh.pop %v1782
  %v1784 = vmul.f32 %v1783, 0.5
  %v1785 = vadd.f32 %v1784, 0.5
  %v1786 = vld [vmem:[#allocation3] sm:$0xff]
  %v1787 = vmul.f32 %v1780, %v1786
  %v1788 = vmul.f32 %v1776, %v1781
  %v1789 = vadd.f32 %v1787, %v1788
  %v1790 = vtanh.pop %v1789
  %v1791 = vmul.f32 %v1785, %v1790
  %1792 = vst [vmem:[#allocation3] sm:$0xff] %v1789
  %1793 = vst [vmem:[#allocation2] sm:$0xff] %v1791
  %s1794 = scalar_lea.vmem %s4, 40
  %1795 = vst [vmem:[%s1794] sm:$0xff] %v1791
  %v1796 = vld [vmem:[#allocation2] sm:$0xff]
  %v1797 = vld [vmem:[%s2] sm:$0xff]
  %v1798 = vld [vmem:[%s2 + $0x8] sm:$0xff]
  %v1799 = vld [vmem:[%s2 + $0x10] sm:$0xff]
  %v1800 = vld [vmem:[%s2 + $0x18] sm:$0xff]
  %v1801 = vld [vmem:[%s2 + $0x20] sm:$0xff]
  %v1802 = vld [vmem:[%s2 + $0x28] sm:$0xff]
  %v1803 = vld [vmem:[%s2 + $0x30] sm:$0xff]
  %v1804 = vld [vmem:[%s2 + $0x38] sm:$0xff]
  %v1805 = vld [vmem:[%s2 + $0x40] sm:$0xff]
  %v1806 = vld [vmem:[%s2 + $0x48] sm:$0xff]
  %v1807 = vld [vmem:[%s2 + $0x50] sm:$0xff]
  %v1808 = vld [vmem:[%s2 + $0x58] sm:$0xff]
  %v1809 = vld [vmem:[%s2 + $0x60] sm:$0xff]
  %v1810 = vld [vmem:[%s2 + $0x68] sm:$0xff]
  %v1811 = vld [vmem:[%s2 + $0x70] sm:$0xff]
  %v1812 = vld [vmem:[%s2 + $0x78] sm:$0xff]
  %v1813 = vld [vmem:[%s2 + $0x80] sm:$0xff]
  %v1814 = vld [vmem:[%s2 + $0x88] sm:$0xff]
  %v1815 = vld [vmem:[%s2 + $0x90] sm:$0xff]
  %v1816 = vld [vmem:[%s2 + $0x98] sm:$0xff]
  %v1817 = vld [vmem:[%s2 + $0xa0] sm:$0xff]
  %v1818 = vld [vmem:[%s2 + $0xa8] sm:$0xff]
  %v1819 = vld [vmem:[%s2 + $0xb0] sm:$0xff]
  %v1820 = vld [vmem:[%s2 + $0xb8] sm:$0xff]
  %v1821 = vld [vmem:[%s2 + $0xc0] sm:$0xff]
  %v1822 = vld [vmem:[%s2 + $0xc8] sm:$0xff]
  %v1823 = vld [vmem:[%s2 + $0xd0] sm:$0xff]
  %v1824 = vld [vmem:[%s2 + $0xd8] sm:$0xff]
  %v1825 = vld [vmem:[%s2 + $0xe0] sm:$0xff]
  %v1826 = vld [vmem:[%s2 + $0xe8] sm:$0xff]
  %v1827 = vld [vmem:[%s2 + $0xf0] sm:$0xff]
  %v1828 = vld [vmem:[%s2 + $0xf8] sm:$0xff]
  %v1829 = vld [vmem:[%s2 + $0x100] sm:$0xff]
  %v1830 = vld [vmem:[%s2 + $0x108] sm:$0xff]
  %v1831 = vld [vmem:[%s2 + $0x110] sm:$0xff]
  %v1832 = vld [vmem:[%s2 + $0x118] sm:$0xff]
  %v1833 = vld [vmem:[%s2 + $0x120] sm:$0xff]
  %v1834 = vld [vmem:[%s2 + $0x128] sm:$0xff]
  %v1835 = vld [vmem:[%s2 + $0x130] sm:$0xff]
  %v1836 = vld [vmem:[%s2 + $0x138] sm:$0xff]
  %v1837 = vld [vmem:[%s2 + $0x140] sm:$0xff]
  %v1838 = vld [vmem:[%s2 + $0x148] sm:$0xff]
  %v1839 = vld [vmem:[%s2 + $0x150] sm:$0xff]
  %v1840 = vld [vmem:[%s2 + $0x158] sm:$0xff]
  %v1841 = vld [vmem:[%s2 + $0x160] sm:$0xff]
  %v1842 = vld [vmem:[%s2 + $0x168] sm:$0xff]
  %v1843 = vld [vmem:[%s2 + $0x170] sm:$0xff]
  %v1844 = vld [vmem:[%s2 + $0x178] sm:$0xff]
  %v1845 = vld [vmem:[%s2 + $0x180] sm:$0xff]
  %v1846 = vld [vmem:[%s2 + $0x188] sm:$0xff]
  %v1847 = vld [vmem:[%s2 + $0x190] sm:$0xff]
  %v1848 = vld [vmem:[%s2 + $0x198] sm:$0xff]
  %v1849 = vld [vmem:[%s2 + $0x1a0] sm:$0xff]
  %v1850 = vld [vmem:[%s2 + $0x1a8] sm:$0xff]
  %v1851 = vld [vmem:[%s2 + $0x1b0] sm:$0xff]
  %v1852 = vld [vmem:[%s2 + $0x1b8] sm:$0xff]
  %v1853 = vld [vmem:[%s2 + $0x1c0] sm:$0xff]
  %v1854 = vld [vmem:[%s2 + $0x1c8] sm:$0xff]
  %v1855 = vld [vmem:[%s2 + $0x1d0] sm:$0xff]
  %v1856 = vld [vmem:[%s2 + $0x1d8] sm:$0xff]
  %v1857 = vld [vmem:[%s2 + $0x1e0] sm:$0xff]
  %v1858 = vld [vmem:[%s2 + $0x1e8] sm:$0xff]
  %v1859 = vld [vmem:[%s2 + $0x1f0] sm:$0xff]
  %v1860 = vld [vmem:[%s2 + $0x1f8] sm:$0xff]
  %s1861 = smul.u32 6, 4
  %s1862 = smul.addr %s1861, 8
  %s1863 = scalar_lea.vmem [#allocation4], %s1862
  %v1864 = vld [vmem:[%s1863] sm:$0xff]
  %v1865 = vld [vmem:[%s1863 + $0x8] sm:$0xff]
  %v1866 = vld [vmem:[%s1863 + $0x10] sm:$0xff]
  %v1867 = vld [vmem:[%s1863 + $0x18] sm:$0xff]
  %1868 = vmatprep.subr.mxu0 %v1858
  %1869 = vmatpush1.msra.mxu0 %v1857
  %1870 = vmatprep.subr.mxu0 %v1854
  %1871 = vmatpush1.msra.mxu0 %v1853
  %1872 = vmatprep.subr.mxu0 %v1850
  %1873 = vmatpush1.msra.mxu0 %v1849
  %1874 = vmatprep.subr.mxu0 %v1846
  %1875 = vmatpush1.msra.mxu0 %v1845
  %1876 = vmatprep.subr.mxu0 %v1842
  %1877 = vmatpush1.msra.mxu0 %v1841
  %1878 = vmatprep.subr.mxu0 %v1838
  %1879 = vmatpush1.msra.mxu0 %v1837
  %1880 = vmatprep.subr.mxu0 %v1834
  %1881 = vmatpush1.msra.mxu0 %v1833
  %1882 = vmatprep.subr.mxu0 %v1830
  %1883 = vmatpush1.msra.mxu0 %v1829
  %1884 = vmatprep.subr.mxu0 %v1826
  %1885 = vmatpush1.msra.mxu0 %v1825
  %1886 = vmatprep.subr.mxu0 %v1822
  %1887 = vmatpush1.msra.mxu0 %v1821
  %1888 = vmatprep.subr.mxu0 %v1818
  %1889 = vmatpush1.msra.mxu0 %v1817
  %1890 = vmatprep.subr.mxu0 %v1814
  %1891 = vmatpush1.msra.mxu0 %v1813
  %1892 = vmatprep.subr.mxu0 %v1810
  %1893 = vmatpush1.msra.mxu0 %v1809
  %1894 = vmatprep.subr.mxu0 %v1806
  %1895 = vmatpush1.msra.mxu0 %v1805
  %1896 = vmatprep.subr.mxu0 %v1802
  %1897 = vmatpush1.msra.mxu0 %v1801
  %1898 = vmatprep.subr.mxu0 %v1798
  %1899 = vmatpush1.msra.mxu0 %v1797
  %1900 = vmatprep.subr.mxu0 0.0
  %1901 = vmatpush2.msra.mxu0 0.0
  %1902 = vmatprep.subr.mxu0 0.0
  %1903 = vmatpush2.msra.mxu0 0.0
  %1904 = vmatprep.subr.mxu0 0.0
  %1905 = vmatpush2.msra.mxu0 0.0
  %1906 = vmatprep.subr.mxu0 0.0
  %1907 = vmatpush2.msra.mxu0 0.0
  %1908 = vmatprep.subr.mxu0 0.0
  %1909 = vmatpush2.msra.mxu0 0.0
  %1910 = vmatprep.subr.mxu0 0.0
  %1911 = vmatpush2.msra.mxu0 0.0
  %1912 = vmatprep.subr.mxu0 0.0
  %1913 = vmatpush2.msra.mxu0 0.0
  %1914 = vmatprep.subr.mxu0 0.0
  %1915 = vmatpush2.msra.mxu0 0.0
  %1916 = vmatprep.subr.mxu0 0.0
  %1917 = vmatpush2.msra.mxu0 0.0
  %1918 = vmatprep.subr.mxu0 0.0
  %1919 = vmatpush2.msra.mxu0 0.0
  %1920 = vmatprep.subr.mxu0 0.0
  %1921 = vmatpush2.msra.mxu0 0.0
  %1922 = vmatprep.subr.mxu0 0.0
  %1923 = vmatpush2.msra.mxu0 0.0
  %1924 = vmatprep.subr.mxu0 0.0
  %1925 = vmatpush2.msra.mxu0 0.0
  %1926 = vmatprep.subr.mxu0 0.0
  %1927 = vmatpush2.msra.mxu0 0.0
  %1928 = vmatprep.subr.mxu0 0.0
  %1929 = vmatpush2.msra.mxu0 0.0
  %1930 = vmatprep.subr.mxu0 0.0
  %1931 = vmatpush2.msra.mxu0 0.0
  %1932 = vmatprep.mubr.f32.mxu0 0.0
  %1933 = vmatmul.mubr.f32.gmra.mxu0 %v1796
  %v1934 = vpop.f32.mrf.mxu0
  %v1935 = vadd.f32 %v1864, %v1934
  %v1936 = vpop.f32.mrf.mxu0
  %v1937 = vadd.f32 %v1865, %v1936
  %1938 = vdwg.mxu0
  %1939 = vmatprep.subr.mxu0 %v1860
  %1940 = vmatpush1.msra.mxu0 %v1859
  %1941 = vmatprep.subr.mxu0 %v1856
  %1942 = vmatpush1.msra.mxu0 %v1855
  %1943 = vmatprep.subr.mxu0 %v1852
  %1944 = vmatpush1.msra.mxu0 %v1851
  %1945 = vmatprep.subr.mxu0 %v1848
  %1946 = vmatpush1.msra.mxu0 %v1847
  %1947 = vmatprep.subr.mxu0 %v1844
  %1948 = vmatpush1.msra.mxu0 %v1843
  %1949 = vmatprep.subr.mxu0 %v1840
  %1950 = vmatpush1.msra.mxu0 %v1839
  %1951 = vmatprep.subr.mxu0 %v1836
  %1952 = vmatpush1.msra.mxu0 %v1835
  %1953 = vmatprep.subr.mxu0 %v1832
  %1954 = vmatpush1.msra.mxu0 %v1831
  %1955 = vmatprep.subr.mxu0 %v1828
  %1956 = vmatpush1.msra.mxu0 %v1827
  %1957 = vmatprep.subr.mxu0 %v1824
  %1958 = vmatpush1.msra.mxu0 %v1823
  %1959 = vmatprep.subr.mxu0 %v1820
  %1960 = vmatpush1.msra.mxu0 %v1819
  %1961 = vmatprep.subr.mxu0 %v1816
  %1962 = vmatpush1.msra.mxu0 %v1815
  %1963 = vmatprep.subr.mxu0 %v1812
  %1964 = vmatpush1.msra.mxu0 %v1811
  %1965 = vmatprep.subr.mxu0 %v1808
  %1966 = vmatpush1.msra.mxu0 %v1807
  %1967 = vmatprep.subr.mxu0 %v1804
  %1968 = vmatpush1.msra.mxu0 %v1803
  %1969 = vmatprep.subr.mxu0 %v1800
  %1970 = vmatpush1.msra.mxu0 %v1799
  %1971 = vmatprep.subr.mxu0 0.0
  %1972 = vmatpush2.msra.mxu0 0.0
  %1973 = vmatprep.subr.mxu0 0.0
  %1974 = vmatpush2.msra.mxu0 0.0
  %1975 = vmatprep.subr.mxu0 0.0
  %1976 = vmatpush2.msra.mxu0 0.0
  %1977 = vmatprep.subr.mxu0 0.0
  %1978 = vmatpush2.msra.mxu0 0.0
  %1979 = vmatprep.subr.mxu0 0.0
  %1980 = vmatpush2.msra.mxu0 0.0
  %1981 = vmatprep.subr.mxu0 0.0
  %1982 = vmatpush2.msra.mxu0 0.0
  %1983 = vmatprep.subr.mxu0 0.0
  %1984 = vmatpush2.msra.mxu0 0.0
  %1985 = vmatprep.subr.mxu0 0.0
  %1986 = vmatpush2.msra.mxu0 0.0
  %1987 = vmatprep.subr.mxu0 0.0
  %1988 = vmatpush2.msra.mxu0 0.0
  %1989 = vmatprep.subr.mxu0 0.0
  %1990 = vmatpush2.msra.mxu0 0.0
  %1991 = vmatprep.subr.mxu0 0.0
  %1992 = vmatpush2.msra.mxu0 0.0
  %1993 = vmatprep.subr.mxu0 0.0
  %1994 = vmatpush2.msra.mxu0 0.0
  %1995 = vmatprep.subr.mxu0 0.0
  %1996 = vmatpush2.msra.mxu0 0.0
  %1997 = vmatprep.subr.mxu0 0.0
  %1998 = vmatpush2.msra.mxu0 0.0
  %1999 = vmatprep.subr.mxu0 0.0
  %2000 = vmatpush2.msra.mxu0 0.0
  %2001 = vmatprep.subr.mxu0 0.0
  %2002 = vmatpush2.msra.mxu0 0.0
  %2003 = vmatprep.mubr.f32.mxu0 0.0
  %2004 = vmatmul.mubr.f32.gmra.mxu0 %v1796
  %v2005 = vpop.f32.mrf.mxu0
  %v2006 = vadd.f32 %v1866, %v2005
  %v2007 = vpop.f32.mrf.mxu0
  %v2008 = vadd.f32 %v1867, %v2007
  %2009 = vdwg.mxu0
  %v2010 = vmul.f32 %v1935, 0.5
  %v2011 = vtanh.pop %v2010
  %v2012 = vmul.f32 %v2011, 0.5
  %v2013 = vadd.f32 %v2012, 0.5
  %v2014 = vmul.f32 %v1937, 0.5
  %v2015 = vtanh.pop %v2014
  %v2016 = vmul.f32 %v2015, 0.5
  %v2017 = vadd.f32 %v2016, 0.5
  %v2018 = vtanh.pop %v2006
  %v2019 = vmul.f32 %v2008, 0.5
  %v2020 = vtanh.pop %v2019
  %v2021 = vmul.f32 %v2020, 0.5
  %v2022 = vadd.f32 %v2021, 0.5
  %v2023 = vld [vmem:[#allocation3] sm:$0xff]
  %v2024 = vmul.f32 %v2017, %v2023
  %v2025 = vmul.f32 %v2013, %v2018
  %v2026 = vadd.f32 %v2024, %v2025
  %v2027 = vtanh.pop %v2026
  %v2028 = vmul.f32 %v2022, %v2027
  %2029 = vst [vmem:[#allocation3] sm:$0xff] %v2026
  %2030 = vst [vmem:[#allocation2] sm:$0xff] %v2028
  %s2031 = scalar_lea.vmem %s4, 48
  %2032 = vst [vmem:[%s2031] sm:$0xff] %v2028
  %v2033 = vld [vmem:[#allocation2] sm:$0xff]
  %v2034 = vld [vmem:[%s2] sm:$0xff]
  %v2035 = vld [vmem:[%s2 + $0x8] sm:$0xff]
  %v2036 = vld [vmem:[%s2 + $0x10] sm:$0xff]
  %v2037 = vld [vmem:[%s2 + $0x18] sm:$0xff]
  %v2038 = vld [vmem:[%s2 + $0x20] sm:$0xff]
  %v2039 = vld [vmem:[%s2 + $0x28] sm:$0xff]
  %v2040 = vld [vmem:[%s2 + $0x30] sm:$0xff]
  %v2041 = vld [vmem:[%s2 + $0x38] sm:$0xff]
  %v2042 = vld [vmem:[%s2 + $0x40] sm:$0xff]
  %v2043 = vld [vmem:[%s2 + $0x48] sm:$0xff]
  %v2044 = vld [vmem:[%s2 + $0x50] sm:$0xff]
  %v2045 = vld [vmem:[%s2 + $0x58] sm:$0xff]
  %v2046 = vld [vmem:[%s2 + $0x60] sm:$0xff]
  %v2047 = vld [vmem:[%s2 + $0x68] sm:$0xff]
  %v2048 = vld [vmem:[%s2 + $0x70] sm:$0xff]
  %v2049 = vld [vmem:[%s2 + $0x78] sm:$0xff]
  %v2050 = vld [vmem:[%s2 + $0x80] sm:$0xff]
  %v2051 = vld [vmem:[%s2 + $0x88] sm:$0xff]
  %v2052 = vld [vmem:[%s2 + $0x90] sm:$0xff]
  %v2053 = vld [vmem:[%s2 + $0x98] sm:$0xff]
  %v2054 = vld [vmem:[%s2 + $0xa0] sm:$0xff]
  %v2055 = vld [vmem:[%s2 + $0xa8] sm:$0xff]
  %v2056 = vld [vmem:[%s2 + $0xb0] sm:$0xff]
  %v2057 = vld [vmem:[%s2 + $0xb8] sm:$0xff]
  %v2058 = vld [vmem:[%s2 + $0xc0] sm:$0xff]
  %v2059 = vld [vmem:[%s2 + $0xc8] sm:$0xff]
  %v2060 = vld [vmem:[%s2 + $0xd0] sm:$0xff]
  %v2061 = vld [vmem:[%s2 + $0xd8] sm:$0xff]
  %v2062 = vld [vmem:[%s2 + $0xe0] sm:$0xff]
  %v2063 = vld [vmem:[%s2 + $0xe8] sm:$0xff]
  %v2064 = vld [vmem:[%s2 + $0xf0] sm:$0xff]
  %v2065 = vld [vmem:[%s2 + $0xf8] sm:$0xff]
  %v2066 = vld [vmem:[%s2 + $0x100] sm:$0xff]
  %v2067 = vld [vmem:[%s2 + $0x108] sm:$0xff]
  %v2068 = vld [vmem:[%s2 + $0x110] sm:$0xff]
  %v2069 = vld [vmem:[%s2 + $0x118] sm:$0xff]
  %v2070 = vld [vmem:[%s2 + $0x120] sm:$0xff]
  %v2071 = vld [vmem:[%s2 + $0x128] sm:$0xff]
  %v2072 = vld [vmem:[%s2 + $0x130] sm:$0xff]
  %v2073 = vld [vmem:[%s2 + $0x138] sm:$0xff]
  %v2074 = vld [vmem:[%s2 + $0x140] sm:$0xff]
  %v2075 = vld [vmem:[%s2 + $0x148] sm:$0xff]
  %v2076 = vld [vmem:[%s2 + $0x150] sm:$0xff]
  %v2077 = vld [vmem:[%s2 + $0x158] sm:$0xff]
  %v2078 = vld [vmem:[%s2 + $0x160] sm:$0xff]
  %v2079 = vld [vmem:[%s2 + $0x168] sm:$0xff]
  %v2080 = vld [vmem:[%s2 + $0x170] sm:$0xff]
  %v2081 = vld [vmem:[%s2 + $0x178] sm:$0xff]
  %v2082 = vld [vmem:[%s2 + $0x180] sm:$0xff]
  %v2083 = vld [vmem:[%s2 + $0x188] sm:$0xff]
  %v2084 = vld [vmem:[%s2 + $0x190] sm:$0xff]
  %v2085 = vld [vmem:[%s2 + $0x198] sm:$0xff]
  %v2086 = vld [vmem:[%s2 + $0x1a0] sm:$0xff]
  %v2087 = vld [vmem:[%s2 + $0x1a8] sm:$0xff]
  %v2088 = vld [vmem:[%s2 + $0x1b0] sm:$0xff]
  %v2089 = vld [vmem:[%s2 + $0x1b8] sm:$0xff]
  %v2090 = vld [vmem:[%s2 + $0x1c0] sm:$0xff]
  %v2091 = vld [vmem:[%s2 + $0x1c8] sm:$0xff]
  %v2092 = vld [vmem:[%s2 + $0x1d0] sm:$0xff]
  %v2093 = vld [vmem:[%s2 + $0x1d8] sm:$0xff]
  %v2094 = vld [vmem:[%s2 + $0x1e0] sm:$0xff]
  %v2095 = vld [vmem:[%s2 + $0x1e8] sm:$0xff]
  %v2096 = vld [vmem:[%s2 + $0x1f0] sm:$0xff]
  %v2097 = vld [vmem:[%s2 + $0x1f8] sm:$0xff]
  %s2098 = smul.u32 7, 4
  %s2099 = smul.addr %s2098, 8
  %s2100 = scalar_lea.vmem [#allocation4], %s2099
  %v2101 = vld [vmem:[%s2100] sm:$0xff]
  %v2102 = vld [vmem:[%s2100 + $0x8] sm:$0xff]
  %v2103 = vld [vmem:[%s2100 + $0x10] sm:$0xff]
  %v2104 = vld [vmem:[%s2100 + $0x18] sm:$0xff]
  %2105 = vmatprep.subr.mxu0 %v2095
  %2106 = vmatpush1.msra.mxu0 %v2094
  %2107 = vmatprep.subr.mxu0 %v2091
  %2108 = vmatpush1.msra.mxu0 %v2090
  %2109 = vmatprep.subr.mxu0 %v2087
  %2110 = vmatpush1.msra.mxu0 %v2086
  %2111 = vmatprep.subr.mxu0 %v2083
  %2112 = vmatpush1.msra.mxu0 %v2082
  %2113 = vmatprep.subr.mxu0 %v2079
  %2114 = vmatpush1.msra.mxu0 %v2078
  %2115 = vmatprep.subr.mxu0 %v2075
  %2116 = vmatpush1.msra.mxu0 %v2074
  %2117 = vmatprep.subr.mxu0 %v2071
  %2118 = vmatpush1.msra.mxu0 %v2070
  %2119 = vmatprep.subr.mxu0 %v2067
  %2120 = vmatpush1.msra.mxu0 %v2066
  %2121 = vmatprep.subr.mxu0 %v2063
  %2122 = vmatpush1.msra.mxu0 %v2062
  %2123 = vmatprep.subr.mxu0 %v2059
  %2124 = vmatpush1.msra.mxu0 %v2058
  %2125 = vmatprep.subr.mxu0 %v2055
  %2126 = vmatpush1.msra.mxu0 %v2054
  %2127 = vmatprep.subr.mxu0 %v2051
  %2128 = vmatpush1.msra.mxu0 %v2050
  %2129 = vmatprep.subr.mxu0 %v2047
  %2130 = vmatpush1.msra.mxu0 %v2046
  %2131 = vmatprep.subr.mxu0 %v2043
  %2132 = vmatpush1.msra.mxu0 %v2042
  %2133 = vmatprep.subr.mxu0 %v2039
  %2134 = vmatpush1.msra.mxu0 %v2038
  %2135 = vmatprep.subr.mxu0 %v2035
  %2136 = vmatpush1.msra.mxu0 %v2034
  %2137 = vmatprep.subr.mxu0 0.0
  %2138 = vmatpush2.msra.mxu0 0.0
  %2139 = vmatprep.subr.mxu0 0.0
  %2140 = vmatpush2.msra.mxu0 0.0
  %2141 = vmatprep.subr.mxu0 0.0
  %2142 = vmatpush2.msra.mxu0 0.0
  %2143 = vmatprep.subr.mxu0 0.0
  %2144 = vmatpush2.msra.mxu0 0.0
  %2145 = vmatprep.subr.mxu0 0.0
  %2146 = vmatpush2.msra.mxu0 0.0
  %2147 = vmatprep.subr.mxu0 0.0
  %2148 = vmatpush2.msra.mxu0 0.0
  %2149 = vmatprep.subr.mxu0 0.0
  %2150 = vmatpush2.msra.mxu0 0.0
  %2151 = vmatprep.subr.mxu0 0.0
  %2152 = vmatpush2.msra.mxu0 0.0
  %2153 = vmatprep.subr.mxu0 0.0
  %2154 = vmatpush2.msra.mxu0 0.0
  %2155 = vmatprep.subr.mxu0 0.0
  %2156 = vmatpush2.msra.mxu0 0.0
  %2157 = vmatprep.subr.mxu0 0.0
  %2158 = vmatpush2.msra.mxu0 0.0
  %2159 = vmatprep.subr.mxu0 0.0
  %2160 = vmatpush2.msra.mxu0 0.0
  %2161 = vmatprep.subr.mxu0 0.0
  %2162 = vmatpush2.msra.mxu0 0.0
  %2163 = vmatprep.subr.mxu0 0.0
  %2164 = vmatpush2.msra.mxu0 0.0
  %2165 = vmatprep.subr.mxu0 0.0
  %2166 = vmatpush2.msra.mxu0 0.0
  %2167 = vmatprep.subr.mxu0 0.0
  %2168 = vmatpush2.msra.mxu0 0.0
  %2169 = vmatprep.mubr.f32.mxu0 0.0
  %2170 = vmatmul.mubr.f32.gmra.mxu0 %v2033
  %v2171 = vpop.f32.mrf.mxu0
  %v2172 = vadd.f32 %v2101, %v2171
  %v2173 = vpop.f32.mrf.mxu0
  %v2174 = vadd.f32 %v2102, %v2173
  %2175 = vdwg.mxu0
  %2176 = vmatprep.subr.mxu0 %v2097
  %2177 = vmatpush1.msra.mxu0 %v2096
  %2178 = vmatprep.subr.mxu0 %v2093
  %2179 = vmatpush1.msra.mxu0 %v2092
  %2180 = vmatprep.subr.mxu0 %v2089
  %2181 = vmatpush1.msra.mxu0 %v2088
  %2182 = vmatprep.subr.mxu0 %v2085
  %2183 = vmatpush1.msra.mxu0 %v2084
  %2184 = vmatprep.subr.mxu0 %v2081
  %2185 = vmatpush1.msra.mxu0 %v2080
  %2186 = vmatprep.subr.mxu0 %v2077
  %2187 = vmatpush1.msra.mxu0 %v2076
  %2188 = vmatprep.subr.mxu0 %v2073
  %2189 = vmatpush1.msra.mxu0 %v2072
  %2190 = vmatprep.subr.mxu0 %v2069
  %2191 = vmatpush1.msra.mxu0 %v2068
  %2192 = vmatprep.subr.mxu0 %v2065
  %2193 = vmatpush1.msra.mxu0 %v2064
  %2194 = vmatprep.subr.mxu0 %v2061
  %2195 = vmatpush1.msra.mxu0 %v2060
  %2196 = vmatprep.subr.mxu0 %v2057
  %2197 = vmatpush1.msra.mxu0 %v2056
  %2198 = vmatprep.subr.mxu0 %v2053
  %2199 = vmatpush1.msra.mxu0 %v2052
  %2200 = vmatprep.subr.mxu0 %v2049
  %2201 = vmatpush1.msra.mxu0 %v2048
  %2202 = vmatprep.subr.mxu0 %v2045
  %2203 = vmatpush1.msra.mxu0 %v2044
  %2204 = vmatprep.subr.mxu0 %v2041
  %2205 = vmatpush1.msra.mxu0 %v2040
  %2206 = vmatprep.subr.mxu0 %v2037
  %2207 = vmatpush1.msra.mxu0 %v2036
  %2208 = vmatprep.subr.mxu0 0.0
  %2209 = vmatpush2.msra.mxu0 0.0
  %2210 = vmatprep.subr.mxu0 0.0
  %2211 = vmatpush2.msra.mxu0 0.0
  %2212 = vmatprep.subr.mxu0 0.0
  %2213 = vmatpush2.msra.mxu0 0.0
  %2214 = vmatprep.subr.mxu0 0.0
  %2215 = vmatpush2.msra.mxu0 0.0
  %2216 = vmatprep.subr.mxu0 0.0
  %2217 = vmatpush2.msra.mxu0 0.0
  %2218 = vmatprep.subr.mxu0 0.0
  %2219 = vmatpush2.msra.mxu0 0.0
  %2220 = vmatprep.subr.mxu0 0.0
  %2221 = vmatpush2.msra.mxu0 0.0
  %2222 = vmatprep.subr.mxu0 0.0
  %2223 = vmatpush2.msra.mxu0 0.0
  %2224 = vmatprep.subr.mxu0 0.0
  %2225 = vmatpush2.msra.mxu0 0.0
  %2226 = vmatprep.subr.mxu0 0.0
  %2227 = vmatpush2.msra.mxu0 0.0
  %2228 = vmatprep.subr.mxu0 0.0
  %2229 = vmatpush2.msra.mxu0 0.0
  %2230 = vmatprep.subr.mxu0 0.0
  %2231 = vmatpush2.msra.mxu0 0.0
  %2232 = vmatprep.subr.mxu0 0.0
  %2233 = vmatpush2.msra.mxu0 0.0
  %2234 = vmatprep.subr.mxu0 0.0
  %2235 = vmatpush2.msra.mxu0 0.0
  %2236 = vmatprep.subr.mxu0 0.0
  %2237 = vmatpush2.msra.mxu0 0.0
  %2238 = vmatprep.subr.mxu0 0.0
  %2239 = vmatpush2.msra.mxu0 0.0
  %2240 = vmatprep.mubr.f32.mxu0 0.0
  %2241 = vmatmul.mubr.f32.gmra.mxu0 %v2033
  %v2242 = vpop.f32.mrf.mxu0
  %v2243 = vadd.f32 %v2103, %v2242
  %v2244 = vpop.f32.mrf.mxu0
  %v2245 = vadd.f32 %v2104, %v2244
  %2246 = vdwg.mxu0
  %v2247 = vmul.f32 %v2172, 0.5
  %v2248 = vtanh.pop %v2247
  %v2249 = vmul.f32 %v2248, 0.5
  %v2250 = vadd.f32 %v2249, 0.5
  %v2251 = vmul.f32 %v2174, 0.5
  %v2252 = vtanh.pop %v2251
  %v2253 = vmul.f32 %v2252, 0.5
  %v2254 = vadd.f32 %v2253, 0.5
  %v2255 = vtanh.pop %v2243
  %v2256 = vmul.f32 %v2245, 0.5
  %v2257 = vtanh.pop %v2256
  %v2258 = vmul.f32 %v2257, 0.5
  %v2259 = vadd.f32 %v2258, 0.5
  %v2260 = vld [vmem:[#allocation3] sm:$0xff]
  %v2261 = vmul.f32 %v2254, %v2260
  %v2262 = vmul.f32 %v2250, %v2255
  %v2263 = vadd.f32 %v2261, %v2262
  %v2264 = vtanh.pop %v2263
  %v2265 = vmul.f32 %v2259, %v2264
  %2266 = vst [vmem:[#allocation3] sm:$0xff] %v2263
  %2267 = vst [vmem:[#allocation2] sm:$0xff] %v2265
  %s2268 = scalar_lea.vmem %s4, 56
  %2269 = vst [vmem:[%s2268] sm:$0xff] %v2265
  // Predicated region
  $region22: #{lstm_model_forward.5} parent=0 // pred_check
    _
  $region23: #{lstm_model_forward.5} parent=0 // pred_check_branch
    %2271 = sbr.rel (0) target = $region25
  $region24: #{lstm_model_forward.5} parent=0 // pred_region
    _
  $region25: #{lstm_model_forward.5} parent=0 // pred_fallthru
    _
  // Predicated region
  $region26: #{lstm_model_forward.5} parent=0 // pred_check
    _
  $region27: #{lstm_model_forward.5} parent=0 // pred_check_branch
    %2273 = sbr.rel (0) target = $region29
  $region28: #{lstm_model_forward.5} parent=0 // pred_region
    _
  $region29: #{lstm_model_forward.5} parent=0 // pred_fallthru
    _

</llo_original>
